<compile_context>
chip_gen: v7x
topology: tpu7x:2x2x1
jax: 0.10.0
libtpu: 0.0.40
codegen_flags: <defaults>
</compile_context>

<pallas_src>
import functools

import jax
import jax.numpy as jnp
from jax.experimental import pallas as pl
from jax.experimental.pallas import tpu as pltpu

NEG_SLOPE = 0.2

# Tile targets (re-derived for 256x256 MXU on v6e/v7x; fine on v5e as well).
_TM = 256
_TN = 256
_TK = 512
_VMEM_LIMIT = 32 * 1024 * 1024  # explicit scoped-VMEM budget (safe on v5e/v6e/v7x)


# -----------------------------------------------------------------------------
# Tiling helpers
# -----------------------------------------------------------------------------
def _round_up(x, m):
    return ((x + m - 1) // m) * m


def _pick_tm(m):
    if m >= _TM:
        return _TM, _round_up(m, _TM)
    mp = _round_up(m, 8)
    return mp, mp


def _pick_tn(n):
    if n % _TN == 0:
        return _TN, n
    if n % 128 == 0:
        return 128, n
    if n <= 128:
        return n, n
    return 128, _round_up(n, 128)


def _pick_tk(k):
    """K tile must be a multiple of 128 (lane dim) or cover the whole (padded) K."""
    if k <= _TK:
        return k, k
    best = None
    for t in (512, 384, 256, 128):
        padded = _round_up(k, t)
        if best is None or padded < best[1]:
            best = (t, padded)
    return best


def _pad2(a, rows, cols):
    r, c = a.shape
    if r == rows and c == cols:
        return a
    return jnp.pad(a, ((0, rows - r), (0, cols - c)))


def _bytes(*arrays):
    total = 0
    for a in arrays:
        total += a.size * a.dtype.itemsize
    return int(total)


# -----------------------------------------------------------------------------
# Pallas kernels
# -----------------------------------------------------------------------------
def _matmul_kernel(act, neg_slope, x_ref, w_ref, b_ref, o_ref, acc_ref):
    """out = [leaky](x @ w + b), K-tiled with f32 accumulator."""
    k = pl.program_id(2)

    @pl.when(k == 0)
    def _():
        acc_ref[...] = jnp.zeros_like(acc_ref)

    acc_ref[...] += jnp.dot(x_ref[...], w_ref[...],
                            preferred_element_type=jnp.float32)

    @pl.when(k == pl.num_programs(2) - 1)
    def _():
        y = acc_ref[...] + b_ref[...]
        if act:
            y = jnp.where(y >= 0, y, neg_slope * y)
        o_ref[...] = y.astype(o_ref.dtype)


def _dual_matmul_kernel(nk1, neg_slope, x1_ref, w1_ref, b1_ref,
                        x2_ref, w2_ref, b2_ref, o_ref, acc1_ref, acc2_ref):
    """out = leaky(x1 @ w1 + b1) + leaky(x2 @ w2 + b2).

    The K grid axis first sweeps x1's K blocks (k < nk1), then x2's.  Each
    input keeps its own accumulator; LeakyReLU is applied to each branch
    before the residual add, matching BlockD's `leaky(Conv2(...)) + leaky(Skip(x))`.
    """
    k = pl.program_id(2)

    @pl.when(k == 0)
    def _():
        acc1_ref[...] = jnp.zeros_like(acc1_ref)
        acc2_ref[...] = jnp.zeros_like(acc2_ref)

    @pl.when(k < nk1)
    def _():
        acc1_ref[...] += jnp.dot(x1_ref[...], w1_ref[...],
                                 preferred_element_type=jnp.float32)

    @pl.when(k >= nk1)
    def _():
        acc2_ref[...] += jnp.dot(x2_ref[...], w2_ref[...],
                                 preferred_element_type=jnp.float32)

    @pl.when(k == pl.num_programs(2) - 1)
    def _():
        y1 = acc1_ref[...] + b1_ref[...]
        y1 = jnp.where(y1 >= 0, y1, neg_slope * y1)
        y2 = acc2_ref[...] + b2_ref[...]
        y2 = jnp.where(y2 >= 0, y2, neg_slope * y2)
        o_ref[...] = (y1 + y2).astype(o_ref.dtype)


# -----------------------------------------------------------------------------
# Kernel wrappers
# -----------------------------------------------------------------------------
def matmul_bias(x, w, b, *, act=False, out_dtype=jnp.float32,
                neg_slope=NEG_SLOPE):
    """x: (M, K), w: (K, N), b: (N,).  Returns (M, N) in out_dtype."""
    M, K = x.shape
    Kw, N = w.shape
    assert K == Kw
    TM, Mp = _pick_tm(M)
    TN, Np = _pick_tn(N)
    TK, Kp = _pick_tk(K)

    xb = _pad2(x.astype(jnp.bfloat16), Mp, Kp)
    wb = _pad2(w.astype(jnp.bfloat16), Kp, Np)
    bb = _pad2(b.reshape(1, N).astype(jnp.float32), 1, Np)

    grid = (Mp // TM, Np // TN, Kp // TK)
    out_bytes = Mp * Np * (2 if out_dtype == jnp.bfloat16 else 4)
    cost = pl.CostEstimate(flops=2 * Mp * Kp * Np, transcendentals=0,
                           bytes_accessed=_bytes(xb, wb, bb) + out_bytes)

    out = pl.pallas_call(
        functools.partial(_matmul_kernel, act, neg_slope),
        out_shape=jax.ShapeDtypeStruct((Mp, Np), out_dtype),
        grid=grid,
        in_specs=[
            pl.BlockSpec((TM, TK), lambda i, j, k: (i, k)),
            pl.BlockSpec((TK, TN), lambda i, j, k: (k, j)),
            pl.BlockSpec((1, TN), lambda i, j, k: (0, j)),
        ],
        out_specs=pl.BlockSpec((TM, TN), lambda i, j, k: (i, j)),
        scratch_shapes=[pltpu.VMEM((TM, TN), jnp.float32)],
        compiler_params=pltpu.CompilerParams(
            dimension_semantics=("parallel", "parallel", "arbitrary"),
            vmem_limit_bytes=_VMEM_LIMIT),
        cost_estimate=cost,
    )(xb, wb, bb)
    return out[:M, :N]


def dual_matmul_leaky_add(x1, w1, b1, x2, w2, b2, *, out_dtype=jnp.bfloat16,
                          neg_slope=NEG_SLOPE):
    """leaky(x1 @ w1 + b1) + leaky(x2 @ w2 + b2) in one fused kernel."""
    M, K1 = x1.shape
    M2, K2 = x2.shape
    assert M == M2
    N = w1.shape[1]
    assert w1.shape[0] == K1 and w2.shape == (K2, N)

    TM, Mp = _pick_tm(M)
    TN, Np = _pick_tn(N)
    TK1, K1p = _pick_tk(K1)
    TK2, K2p = _pick_tk(K2)
    nk1 = K1p // TK1
    nk2 = K2p // TK2

    x1b = _pad2(x1.astype(jnp.bfloat16), Mp, K1p)
    w1b = _pad2(w1.astype(jnp.bfloat16), K1p, Np)
    b1b = _pad2(b1.reshape(1, N).astype(jnp.float32), 1, Np)
    x2b = _pad2(x2.astype(jnp.bfloat16), Mp, K2p)
    w2b = _pad2(w2.astype(jnp.bfloat16), K2p, Np)
    b2b = _pad2(b2.reshape(1, N).astype(jnp.float32), 1, Np)

    grid = (Mp // TM, Np // TN, nk1 + nk2)

    # Clamped index maps: while one branch's K blocks are being consumed, the
    # other branch's block index stays constant, so Pallas does not re-DMA it.
    def x1_map(i, j, k):
        return (i, jnp.minimum(k, nk1 - 1))

    def w1_map(i, j, k):
        return (jnp.minimum(k, nk1 - 1), j)

    def x2_map(i, j, k):
        return (i, jnp.maximum(k - nk1, 0))

    def w2_map(i, j, k):
        return (jnp.maximum(k - nk1, 0), j)

    out_bytes = Mp * Np * (2 if out_dtype == jnp.bfloat16 else 4)
    cost = pl.CostEstimate(
        flops=2 * Mp * (K1p + K2p) * Np, transcendentals=0,
        bytes_accessed=_bytes(x1b, w1b, b1b, x2b, w2b, b2b) + out_bytes)

    out = pl.pallas_call(
        functools.partial(_dual_matmul_kernel, nk1, neg_slope),
        out_shape=jax.ShapeDtypeStruct((Mp, Np), out_dtype),
        grid=grid,
        in_specs=[
            pl.BlockSpec((TM, TK1), x1_map),
            pl.BlockSpec((TK1, TN), w1_map),
            pl.BlockSpec((1, TN), lambda i, j, k: (0, j)),
            pl.BlockSpec((TM, TK2), x2_map),
            pl.BlockSpec((TK2, TN), w2_map),
            pl.BlockSpec((1, TN), lambda i, j, k: (0, j)),
        ],
        out_specs=pl.BlockSpec((TM, TN), lambda i, j, k: (i, j)),
        scratch_shapes=[pltpu.VMEM((TM, TN), jnp.float32),
                        pltpu.VMEM((TM, TN), jnp.float32)],
        compiler_params=pltpu.CompilerParams(
            dimension_semantics=("parallel", "parallel", "arbitrary"),
            vmem_limit_bytes=_VMEM_LIMIT),
        cost_estimate=cost,
    )(x1b, w1b, b1b, x2b, w2b, b2b)
    return out[:M, :N]


# -----------------------------------------------------------------------------
# JAX glue: im2col for 3x3 conv, padding=1, stride in {1, 2}
# -----------------------------------------------------------------------------
def im2col3x3(x, stride):
    """x: (N, H, W, C) -> (N*Ho*Wo, 9*C), Ho, Wo.  K ordering: (kh, kw, cin)."""
    N, H, W, C = x.shape
    xp = jnp.pad(x, ((0, 0), (1, 1), (1, 1), (0, 0)))
    Ho = (H + 2 - 3) // stride + 1
    Wo = (W + 2 - 3) // stride + 1
    cols = []
    for kh in range(3):
        for kw in range(3):
            cols.append(
                xp[:, kh:kh + stride * (Ho - 1) + 1:stride,
                      kw:kw + stride * (Wo - 1) + 1:stride, :])
    p = jnp.stack(cols, axis=3)                 # (N, Ho, Wo, 9, C)
    return p.reshape(N * Ho * Wo, 9 * C), Ho, Wo


# -----------------------------------------------------------------------------
# Parameter initialization (deterministic, matches the module's __init__ shapes)
# -----------------------------------------------------------------------------
def generate_map_channels(out_res, start_res=4, max_channels=512):
    base = 16 * 1024
    mc = {}
    k = start_res
    while k <= out_res:
        mc[k] = min(base // k, max_channels)
        k *= 2
    return mc


def _xavier_normal(key, shape, fan_in, fan_out):
    std = (2.0 / (fan_in + fan_out)) ** 0.5
    return std * jax.random.normal(key, shape, dtype=jnp.float32)


def init_discriminator_params(key, res, rgb=True, last_res=4, max_channels=512):
    in_ch = 3 if rgb else 1
    mc = generate_map_channels(res, last_res, max_channels)
    keys = iter(jax.random.split(key, 64))
    params = {}

    # fRGB: 1x1 conv (in_ch -> mc[res]); stored as (Cin, Cout)
    params["fRGB_w"] = _xavier_normal(next(keys), (in_ch, mc[res]),
                                      fan_in=in_ch, fan_out=mc[res])
    params["fRGB_b"] = jnp.zeros((mc[res],), jnp.float32)

    blocks = []
    to_res = res // 2
    while to_res >= last_res:
        cur = 2 * to_res
        cin, cout = mc[cur], mc[to_res]
        blk = {
            # Conv weights stored (kh, kw, Cin, Cout) to match im2col ordering.
            # (A PyTorch checkpoint, shaped (Cout, Cin, kh, kw), would be
            # transposed once at load time.)
            "conv1_w": _xavier_normal(next(keys), (3, 3, cin, cout), cin * 9, cout * 9),
            "conv1_b": jnp.zeros((cout,), jnp.float32),
            "conv2_w": _xavier_normal(next(keys), (3, 3, cout, cout), cout * 9, cout * 9),
            "conv2_b": jnp.zeros((cout,), jnp.float32),
            "skip_w": _xavier_normal(next(keys), (3, 3, cin, cout), cin * 9, cout * 9),
            "skip_b": jnp.zeros((cout,), jnp.float32),
        }
        blocks.append(blk)
        to_res //= 2
    params["blocks"] = blocks

    # Final Linear weight stored with rows in NHWC-flatten order (h, w, c) so
    # the activation needs no transpose; a PyTorch checkpoint (c, h, w rows)
    # would be permuted once at load time.  Same xavier distribution.
    feat = mc[last_res] * last_res ** 2
    params["lin_w"] = _xavier_normal(next(keys), (feat, 1), fan_in=feat, fan_out=1)
    params["lin_b"] = jnp.zeros((1,), jnp.float32)
    return params


# -----------------------------------------------------------------------------
# Forward pass
# -----------------------------------------------------------------------------
def block_forward(blk, x):
    """BlockD: out = leaky(Conv2(leaky(Conv1(x)))) + leaky(Skip(x)).  x: NHWC bf16."""
    N, H, W, Cin = x.shape
    Cout = blk["conv1_b"].shape[0]

    # Conv1 (3x3, stride 1, pad 1) + LeakyReLU
    p1, H1, W1 = im2col3x3(x, stride=1)
    a = matmul_bias(p1, blk["conv1_w"].reshape(9 * Cin, Cout), blk["conv1_b"],
                    act=True, out_dtype=jnp.bfloat16)
    a = a.reshape(N, H1, W1, Cout)

    # Conv2 (stride 2) and Skip (stride 2) fused: leaky(conv2) + leaky(skip).
    p2, Ho, Wo = im2col3x3(a, stride=2)          # main branch patches (K = 9*Cout)
    ps, _, _ = im2col3x3(x, stride=2)            # skip branch patches (K = 9*Cin)
    out = dual_matmul_leaky_add(
        p2, blk["conv2_w"].reshape(9 * Cout, Cout), blk["conv2_b"],
        ps, blk["skip_w"].reshape(9 * Cin, Cout), blk["skip_b"],
        out_dtype=jnp.bfloat16)
    return out.reshape(N, Ho, Wo, Cout)


@jax.jit
def discriminator_forward(params, img_nchw):
    """img_nchw: (N, C, res, res) float32 (PyTorch NCHW).  Returns (N, 1) f32."""
    N, C, H, W = img_nchw.shape
    x = jnp.transpose(img_nchw, (0, 2, 3, 1)).astype(jnp.bfloat16)   # -> NHWC bf16

    # fRGB: 1x1 conv == per-pixel matmul (no activation, as in the module).
    xm = x.reshape(N * H * W, C)
    y = matmul_bias(xm, params["fRGB_w"], params["fRGB_b"], act=False,
                    out_dtype=jnp.bfloat16)
    x = y.reshape(N, H, W, -1)

    for blk in params["blocks"]:
        x = block_forward(blk, x)

    # Final Linear: lin_w rows are already in NHWC-flatten order, so no
    # activation transpose is needed.
    flat = x.reshape(N, -1)
    return matmul_bias(flat, params["lin_w"], params["lin_b"], act=False,
                       out_dtype=jnp.float32)


# -----------------------------------------------------------------------------
if __name__ == "__main__":
    key = jax.random.PRNGKey(0)
    kp, kx = jax.random.split(key)

    RES = 16
    MAX_CH = 32  # small synthetic width (max_channels); architecture identical
    params = init_discriminator_params(kp, res=RES, rgb=True,
                                       last_res=4, max_channels=MAX_CH)

    img = jax.random.normal(kx, (2, 3, RES, RES), dtype=jnp.float32)

    out = discriminator_forward(params, img)
    jax.block_until_ready(out)
    assert out.shape == (2, 1), out.shape
    assert out.dtype == jnp.float32
    print("KERNEL_OK")
</pallas_src>

<mosaic_0001>
module attributes {stable_mosaic.version = 11 : i64} {
  func.func @_matmul_kernel(%arg0: i32, %arg1: i32, %arg2: i32, %arg3: memref<256x3xbf16, #tpu.memory_space<vmem>>, %arg4: memref<3x32xbf16, #tpu.memory_space<vmem>>, %arg5: memref<1x32xf32, #tpu.memory_space<vmem>>, %arg6: memref<256x32xbf16, #tpu.memory_space<vmem>>, %arg7: memref<256x32xf32, #tpu.memory_space<vmem>>) attributes {dimension_semantics = [#tpu.dimension_semantics<parallel>, #tpu.dimension_semantics<parallel>, #tpu.dimension_semantics<arbitrary>], iteration_bounds = array<i64: 2, 1, 1>, scalar_prefetch = 0 : i64, scratch_operands = 1 : i64, tpu.core_type = #tpu.core_type<tc>, window_params = [{transform_indices = @transform_0, window_bounds = array<i64: 256, 3>}, {transform_indices = @transform_1, window_bounds = array<i64: 3, 32>}, {transform_indices = @transform_2, window_bounds = array<i64: 1, 32>}, {transform_indices = @transform_3, window_bounds = array<i64: 256, 32>}]} {
    %c0_i32 = arith.constant 0 : i32
    %0 = arith.cmpi eq, %arg2, %c0_i32 : i32
    %1 = arith.extui %0 : i1 to i32
    %c0_i32_0 = arith.constant 0 : i32
    %2 = arith.cmpi ne, %1, %c0_i32_0 : i32
    scf.if %2 {
      %cst_10 = arith.constant 0.000000e+00 : f32
      %12 = vector.broadcast %cst_10 : f32 to vector<256x32xf32>
      %c0_11 = arith.constant 0 : index
      %c0_12 = arith.constant 0 : index
      %13 = vector.load %arg7[%c0_11, %c0_12] : memref<256x32xf32, #tpu.memory_space<vmem>>, vector<256x32xf32>
      tpu.vector_store %arg7[%c0_11, %c0_12], %12 {strides = array<i32>} : memref<256x32xf32, #tpu.memory_space<vmem>>, vector<256x32xf32>,
    } else {
    }
    %c0 = arith.constant 0 : index
    %c0_1 = arith.constant 0 : index
    %3 = vector.load %arg7[%c0, %c0_1] : memref<256x32xf32, #tpu.memory_space<vmem>>, vector<256x32xf32>
    %c0_2 = arith.constant 0 : index
    %c0_3 = arith.constant 0 : index
    %4 = vector.load %arg3[%c0_2, %c0_3] : memref<256x3xbf16, #tpu.memory_space<vmem>>, vector<256x3xbf16>
    %c0_4 = arith.constant 0 : index
    %c0_5 = arith.constant 0 : index
    %5 = vector.load %arg4[%c0_4, %c0_5] : memref<3x32xbf16, #tpu.memory_space<vmem>>, vector<3x32xbf16>
    %cst = arith.constant dense<0.000000e+00> : vector<256x32xf32>
    %6 = tpu.matmul %4, %5, %cst {dimension_numbers = #tpu.dot_dimension_numbers<[1], [0], [0], [1], [0, 0, 1, 1], [], []>} : vector<256x3xbf16>, vector<3x32xbf16>, vector<256x32xf32> -> vector<256x32xf32>
    %7 = arith.addf %3, %6 : vector<256x32xf32>
    %c0_6 = arith.constant 0 : index
    %c0_7 = arith.constant 0 : index
    %8 = vector.load %arg7[%c0_6, %c0_7] : memref<256x32xf32, #tpu.memory_space<vmem>>, vector<256x32xf32>
    tpu.vector_store %arg7[%c0_6, %c0_7], %7 {strides = array<i32>} : memref<256x32xf32, #tpu.memory_space<vmem>>, vector<256x32xf32>,
    %c0_i32_8 = arith.constant 0 : i32
    %9 = arith.cmpi eq, %arg2, %c0_i32_8 : i32
    %10 = arith.extui %9 : i1 to i32
    %c0_i32_9 = arith.constant 0 : i32
    %11 = arith.cmpi ne, %10, %c0_i32_9 : i32
    scf.if %11 {
      %c0_10 = arith.constant 0 : index
      %c0_11 = arith.constant 0 : index
      %12 = vector.load %arg7[%c0_10, %c0_11] : memref<256x32xf32, #tpu.memory_space<vmem>>, vector<256x32xf32>
      %c0_12 = arith.constant 0 : index
      %c0_13 = arith.constant 0 : index
      %13 = vector.load %arg5[%c0_12, %c0_13] : memref<1x32xf32, #tpu.memory_space<vmem>>, vector<1x32xf32>
      %14 = vector.broadcast %13 : vector<1x32xf32> to vector<256x32xf32>
      %15 = arith.addf %12, %14 : vector<256x32xf32>
      %16 = arith.truncf %15 : vector<256x32xf32> to vector<256x32xbf16>
      %c0_14 = arith.constant 0 : index
      %c0_15 = arith.constant 0 : index
      %17 = vector.load %arg6[%c0_14, %c0_15] : memref<256x32xbf16, #tpu.memory_space<vmem>>, vector<256x32xbf16>
      tpu.vector_store %arg6[%c0_14, %c0_15], %16 {strides = array<i32>} : memref<256x32xbf16, #tpu.memory_space<vmem>>, vector<256x32xbf16>,
    } else {
    }
    return
  }
  func.func @transform_0(%arg0: i32, %arg1: i32, %arg2: i32) -> (i32, i32) {
    %c0_i32 = arith.constant 0 : i32
    return %arg0, %arg2 : i32, i32
  }
  func.func @transform_1(%arg0: i32, %arg1: i32, %arg2: i32) -> (i32, i32) {
    %c0_i32 = arith.constant 0 : i32
    return %arg2, %arg1 : i32, i32
  }
  func.func @transform_2(%arg0: i32, %arg1: i32, %arg2: i32) -> (i32, i32) {
    %c0_i32 = arith.constant 0 : i32
    %c0_i32_0 = arith.constant 0 : i32
    return %c0_i32, %arg1 : i32, i32
  }
  func.func @transform_3(%arg0: i32, %arg1: i32, %arg2: i32) -> (i32, i32) {
    %c0_i32 = arith.constant 0 : i32
    return %arg0, %arg1 : i32, i32
  }
}

module attributes {stable_mosaic.version = 11 : i64} {
  func.func @_matmul_kernel(%arg0: i32, %arg1: i32, %arg2: i32, %arg3: memref<256x288xbf16, #tpu.memory_space<vmem>>, %arg4: memref<288x32xbf16, #tpu.memory_space<vmem>>, %arg5: memref<1x32xf32, #tpu.memory_space<vmem>>, %arg6: memref<256x32xbf16, #tpu.memory_space<vmem>>, %arg7: memref<256x32xf32, #tpu.memory_space<vmem>>) attributes {dimension_semantics = [#tpu.dimension_semantics<parallel>, #tpu.dimension_semantics<parallel>, #tpu.dimension_semantics<arbitrary>], iteration_bounds = array<i64: 2, 1, 1>, scalar_prefetch = 0 : i64, scratch_operands = 1 : i64, tpu.core_type = #tpu.core_type<tc>, window_params = [{transform_indices = @transform_0, window_bounds = array<i64: 256, 288>}, {transform_indices = @transform_1, window_bounds = array<i64: 288, 32>}, {transform_indices = @transform_2, window_bounds = array<i64: 1, 32>}, {transform_indices = @transform_3, window_bounds = array<i64: 256, 32>}]} {
    %c0_i32 = arith.constant 0 : i32
    %0 = arith.cmpi eq, %arg2, %c0_i32 : i32
    %1 = arith.extui %0 : i1 to i32
    %c0_i32_0 = arith.constant 0 : i32
    %2 = arith.cmpi ne, %1, %c0_i32_0 : i32
    scf.if %2 {
      %cst_10 = arith.constant 0.000000e+00 : f32
      %12 = vector.broadcast %cst_10 : f32 to vector<256x32xf32>
      %c0_11 = arith.constant 0 : index
      %c0_12 = arith.constant 0 : index
      %13 = vector.load %arg7[%c0_11, %c0_12] : memref<256x32xf32, #tpu.memory_space<vmem>>, vector<256x32xf32>
      tpu.vector_store %arg7[%c0_11, %c0_12], %12 {strides = array<i32>} : memref<256x32xf32, #tpu.memory_space<vmem>>, vector<256x32xf32>,
    } else {
    }
    %c0 = arith.constant 0 : index
    %c0_1 = arith.constant 0 : index
    %3 = vector.load %arg7[%c0, %c0_1] : memref<256x32xf32, #tpu.memory_space<vmem>>, vector<256x32xf32>
    %c0_2 = arith.constant 0 : index
    %c0_3 = arith.constant 0 : index
    %4 = vector.load %arg3[%c0_2, %c0_3] : memref<256x288xbf16, #tpu.memory_space<vmem>>, vector<256x288xbf16>
    %c0_4 = arith.constant 0 : index
    %c0_5 = arith.constant 0 : index
    %5 = vector.load %arg4[%c0_4, %c0_5] : memref<288x32xbf16, #tpu.memory_space<vmem>>, vector<288x32xbf16>
    %cst = arith.constant dense<0.000000e+00> : vector<256x32xf32>
    %6 = tpu.matmul %4, %5, %cst {dimension_numbers = #tpu.dot_dimension_numbers<[1], [0], [0], [1], [0, 0, 1, 1], [], []>} : vector<256x288xbf16>, vector<288x32xbf16>, vector<256x32xf32> -> vector<256x32xf32>
    %7 = arith.addf %3, %6 : vector<256x32xf32>
    %c0_6 = arith.constant 0 : index
    %c0_7 = arith.constant 0 : index
    %8 = vector.load %arg7[%c0_6, %c0_7] : memref<256x32xf32, #tpu.memory_space<vmem>>, vector<256x32xf32>
    tpu.vector_store %arg7[%c0_6, %c0_7], %7 {strides = array<i32>} : memref<256x32xf32, #tpu.memory_space<vmem>>, vector<256x32xf32>,
    %c0_i32_8 = arith.constant 0 : i32
    %9 = arith.cmpi eq, %arg2, %c0_i32_8 : i32
    %10 = arith.extui %9 : i1 to i32
    %c0_i32_9 = arith.constant 0 : i32
    %11 = arith.cmpi ne, %10, %c0_i32_9 : i32
    scf.if %11 {
      %c0_10 = arith.constant 0 : index
      %c0_11 = arith.constant 0 : index
      %12 = vector.load %arg7[%c0_10, %c0_11] : memref<256x32xf32, #tpu.memory_space<vmem>>, vector<256x32xf32>
      %c0_12 = arith.constant 0 : index
      %c0_13 = arith.constant 0 : index
      %13 = vector.load %arg5[%c0_12, %c0_13] : memref<1x32xf32, #tpu.memory_space<vmem>>, vector<1x32xf32>
      %14 = vector.broadcast %13 : vector<1x32xf32> to vector<256x32xf32>
      %15 = arith.addf %12, %14 : vector<256x32xf32>
      %cst_14 = arith.constant 0.000000e+00 : f32
      %16 = vector.broadcast %cst_14 : f32 to vector<256x32xf32>
      %17 = arith.cmpf oge, %15, %16 : vector<256x32xf32>
      %cst_15 = arith.constant 2.000000e-01 : f32
      %18 = vector.broadcast %cst_15 : f32 to vector<256x32xf32>
      %19 = arith.mulf %18, %15 : vector<256x32xf32>
      %20 = arith.select %17, %15, %19 : vector<256x32xi1>, vector<256x32xf32>
      %21 = arith.truncf %20 : vector<256x32xf32> to vector<256x32xbf16>
      %c0_16 = arith.constant 0 : index
      %c0_17 = arith.constant 0 : index
      %22 = vector.load %arg6[%c0_16, %c0_17] : memref<256x32xbf16, #tpu.memory_space<vmem>>, vector<256x32xbf16>
      tpu.vector_store %arg6[%c0_16, %c0_17], %21 {strides = array<i32>} : memref<256x32xbf16, #tpu.memory_space<vmem>>, vector<256x32xbf16>,
    } else {
    }
    return
  }
  func.func @transform_0(%arg0: i32, %arg1: i32, %arg2: i32) -> (i32, i32) {
    %c0_i32 = arith.constant 0 : i32
    return %arg0, %arg2 : i32, i32
  }
  func.func @transform_1(%arg0: i32, %arg1: i32, %arg2: i32) -> (i32, i32) {
    %c0_i32 = arith.constant 0 : i32
    return %arg2, %arg1 : i32, i32
  }
  func.func @transform_2(%arg0: i32, %arg1: i32, %arg2: i32) -> (i32, i32) {
    %c0_i32 = arith.constant 0 : i32
    %c0_i32_0 = arith.constant 0 : i32
    return %c0_i32, %arg1 : i32, i32
  }
  func.func @transform_3(%arg0: i32, %arg1: i32, %arg2: i32) -> (i32, i32) {
    %c0_i32 = arith.constant 0 : i32
    return %arg0, %arg1 : i32, i32
  }
}

module attributes {stable_mosaic.version = 11 : i64} {
  func.func @_dual_matmul_kernel(%arg0: i32, %arg1: i32, %arg2: i32, %arg3: memref<128x288xbf16, #tpu.memory_space<vmem>>, %arg4: memref<288x32xbf16, #tpu.memory_space<vmem>>, %arg5: memref<1x32xf32, #tpu.memory_space<vmem>>, %arg6: memref<128x288xbf16, #tpu.memory_space<vmem>>, %arg7: memref<288x32xbf16, #tpu.memory_space<vmem>>, %arg8: memref<1x32xf32, #tpu.memory_space<vmem>>, %arg9: memref<128x32xbf16, #tpu.memory_space<vmem>>, %arg10: memref<128x32xf32, #tpu.memory_space<vmem>>, %arg11: memref<128x32xf32, #tpu.memory_space<vmem>>) attributes {dimension_semantics = [#tpu.dimension_semantics<parallel>, #tpu.dimension_semantics<parallel>, #tpu.dimension_semantics<arbitrary>], iteration_bounds = array<i64: 1, 1, 2>, scalar_prefetch = 0 : i64, scratch_operands = 2 : i64, tpu.core_type = #tpu.core_type<tc>, window_params = [{transform_indices = @transform_0, window_bounds = array<i64: 128, 288>}, {transform_indices = @transform_1, window_bounds = array<i64: 288, 32>}, {transform_indices = @transform_2, window_bounds = array<i64: 1, 32>}, {transform_indices = @transform_3, window_bounds = array<i64: 128, 288>}, {transform_indices = @transform_4, window_bounds = array<i64: 288, 32>}, {transform_indices = @transform_5, window_bounds = array<i64: 1, 32>}, {transform_indices = @transform_6, window_bounds = array<i64: 128, 32>}]} {
    %c0_i32 = arith.constant 0 : i32
    %0 = arith.cmpi eq, %arg2, %c0_i32 : i32
    %1 = arith.extui %0 : i1 to i32
    %c0_i32_0 = arith.constant 0 : i32
    %2 = arith.cmpi ne, %1, %c0_i32_0 : i32
    scf.if %2 {
      %cst = arith.constant 0.000000e+00 : f32
      %12 = vector.broadcast %cst : f32 to vector<128x32xf32>
      %c0 = arith.constant 0 : index
      %c0_6 = arith.constant 0 : index
      %13 = vector.load %arg10[%c0, %c0_6] : memref<128x32xf32, #tpu.memory_space<vmem>>, vector<128x32xf32>
      tpu.vector_store %arg10[%c0, %c0_6], %12 {strides = array<i32>} : memref<128x32xf32, #tpu.memory_space<vmem>>, vector<128x32xf32>,
      %cst_7 = arith.constant 0.000000e+00 : f32
      %14 = vector.broadcast %cst_7 : f32 to vector<128x32xf32>
      %c0_8 = arith.constant 0 : index
      %c0_9 = arith.constant 0 : index
      %15 = vector.load %arg11[%c0_8, %c0_9] : memref<128x32xf32, #tpu.memory_space<vmem>>, vector<128x32xf32>
      tpu.vector_store %arg11[%c0_8, %c0_9], %14 {strides = array<i32>} : memref<128x32xf32, #tpu.memory_space<vmem>>, vector<128x32xf32>,
    } else {
    }
    %c1_i32 = arith.constant 1 : i32
    %3 = arith.cmpi slt, %arg2, %c1_i32 : i32
    %4 = arith.extui %3 : i1 to i32
    %c0_i32_1 = arith.constant 0 : i32
    %5 = arith.cmpi ne, %4, %c0_i32_1 : i32
    scf.if %5 {
      %c0 = arith.constant 0 : index
      %c0_6 = arith.constant 0 : index
      %12 = vector.load %arg10[%c0, %c0_6] : memref<128x32xf32, #tpu.memory_space<vmem>>, vector<128x32xf32>
      %c0_7 = arith.constant 0 : index
      %c0_8 = arith.constant 0 : index
      %13 = vector.load %arg3[%c0_7, %c0_8] : memref<128x288xbf16, #tpu.memory_space<vmem>>, vector<128x288xbf16>
      %c0_9 = arith.constant 0 : index
      %c0_10 = arith.constant 0 : index
      %14 = vector.load %arg4[%c0_9, %c0_10] : memref<288x32xbf16, #tpu.memory_space<vmem>>, vector<288x32xbf16>
      %cst = arith.constant dense<0.000000e+00> : vector<128x32xf32>
      %15 = tpu.matmul %13, %14, %cst {dimension_numbers = #tpu.dot_dimension_numbers<[1], [0], [0], [1], [0, 0, 1, 1], [], []>} : vector<128x288xbf16>, vector<288x32xbf16>, vector<128x32xf32> -> vector<128x32xf32>
      %16 = arith.addf %12, %15 : vector<128x32xf32>
      %c0_11 = arith.constant 0 : index
      %c0_12 = arith.constant 0 : index
      %17 = vector.load %arg10[%c0_11, %c0_12] : memref<128x32xf32, #tpu.memory_space<vmem>>, vector<128x32xf32>
      tpu.vector_store %arg10[%c0_11, %c0_12], %16 {strides = array<i32>} : memref<128x32xf32, #tpu.memory_space<vmem>>, vector<128x32xf32>,
    } else {
    }
    %c1_i32_2 = arith.constant 1 : i32
    %6 = arith.cmpi sge, %arg2, %c1_i32_2 : i32
    %7 = arith.extui %6 : i1 to i32
    %c0_i32_3 = arith.constant 0 : i32
    %8 = arith.cmpi ne, %7, %c0_i32_3 : i32
    scf.if %8 {
      %c0 = arith.constant 0 : index
      %c0_6 = arith.constant 0 : index
      %12 = vector.load %arg11[%c0, %c0_6] : memref<128x32xf32, #tpu.memory_space<vmem>>, vector<128x32xf32>
      %c0_7 = arith.constant 0 : index
      %c0_8 = arith.constant 0 : index
      %13 = vector.load %arg6[%c0_7, %c0_8] : memref<128x288xbf16, #tpu.memory_space<vmem>>, vector<128x288xbf16>
      %c0_9 = arith.constant 0 : index
      %c0_10 = arith.constant 0 : index
      %14 = vector.load %arg7[%c0_9, %c0_10] : memref<288x32xbf16, #tpu.memory_space<vmem>>, vector<288x32xbf16>
      %cst = arith.constant dense<0.000000e+00> : vector<128x32xf32>
      %15 = tpu.matmul %13, %14, %cst {dimension_numbers = #tpu.dot_dimension_numbers<[1], [0], [0], [1], [0, 0, 1, 1], [], []>} : vector<128x288xbf16>, vector<288x32xbf16>, vector<128x32xf32> -> vector<128x32xf32>
      %16 = arith.addf %12, %15 : vector<128x32xf32>
      %c0_11 = arith.constant 0 : index
      %c0_12 = arith.constant 0 : index
      %17 = vector.load %arg11[%c0_11, %c0_12] : memref<128x32xf32, #tpu.memory_space<vmem>>, vector<128x32xf32>
      tpu.vector_store %arg11[%c0_11, %c0_12], %16 {strides = array<i32>} : memref<128x32xf32, #tpu.memory_space<vmem>>, vector<128x32xf32>,
    } else {
    }
    %c1_i32_4 = arith.constant 1 : i32
    %9 = arith.cmpi eq, %arg2, %c1_i32_4 : i32
    %10 = arith.extui %9 : i1 to i32
    %c0_i32_5 = arith.constant 0 : i32
    %11 = arith.cmpi ne, %10, %c0_i32_5 : i32
    scf.if %11 {
      %c0 = arith.constant 0 : index
      %c0_6 = arith.constant 0 : index
      %12 = vector.load %arg10[%c0, %c0_6] : memref<128x32xf32, #tpu.memory_space<vmem>>, vector<128x32xf32>
      %c0_7 = arith.constant 0 : index
      %c0_8 = arith.constant 0 : index
      %13 = vector.load %arg5[%c0_7, %c0_8] : memref<1x32xf32, #tpu.memory_space<vmem>>, vector<1x32xf32>
      %14 = vector.broadcast %13 : vector<1x32xf32> to vector<128x32xf32>
      %15 = arith.addf %12, %14 : vector<128x32xf32>
      %cst = arith.constant 0.000000e+00 : f32
      %16 = vector.broadcast %cst : f32 to vector<128x32xf32>
      %17 = arith.cmpf oge, %15, %16 : vector<128x32xf32>
      %cst_9 = arith.constant 2.000000e-01 : f32
      %18 = vector.broadcast %cst_9 : f32 to vector<128x32xf32>
      %19 = arith.mulf %18, %15 : vector<128x32xf32>
      %20 = arith.select %17, %15, %19 : vector<128x32xi1>, vector<128x32xf32>
      %c0_10 = arith.constant 0 : index
      %c0_11 = arith.constant 0 : index
      %21 = vector.load %arg11[%c0_10, %c0_11] : memref<128x32xf32, #tpu.memory_space<vmem>>, vector<128x32xf32>
      %c0_12 = arith.constant 0 : index
      %c0_13 = arith.constant 0 : index
      %22 = vector.load %arg8[%c0_12, %c0_13] : memref<1x32xf32, #tpu.memory_space<vmem>>, vector<1x32xf32>
      %23 = vector.broadcast %22 : vector<1x32xf32> to vector<128x32xf32>
      %24 = arith.addf %21, %23 : vector<128x32xf32>
      %cst_14 = arith.constant 0.000000e+00 : f32
      %25 = vector.broadcast %cst_14 : f32 to vector<128x32xf32>
      %26 = arith.cmpf oge, %24, %25 : vector<128x32xf32>
      %cst_15 = arith.constant 2.000000e-01 : f32
      %27 = vector.broadcast %cst_15 : f32 to vector<128x32xf32>
      %28 = arith.mulf %27, %24 : vector<128x32xf32>
      %29 = arith.select %26, %24, %28 : vector<128x32xi1>, vector<128x32xf32>
      %30 = arith.addf %20, %29 : vector<128x32xf32>
      %31 = arith.truncf %30 : vector<128x32xf32> to vector<128x32xbf16>
      %c0_16 = arith.constant 0 : index
      %c0_17 = arith.constant 0 : index
      %32 = vector.load %arg9[%c0_16, %c0_17] : memref<128x32xbf16, #tpu.memory_space<vmem>>, vector<128x32xbf16>
      tpu.vector_store %arg9[%c0_16, %c0_17], %31 {strides = array<i32>} : memref<128x32xbf16, #tpu.memory_space<vmem>>, vector<128x32xbf16>,
    } else {
    }
    return
  }
  func.func @transform_0(%arg0: i32, %arg1: i32, %arg2: i32) -> (i32, i32) {
    %c0_i32 = arith.constant 0 : i32
    %0 = arith.minsi %arg2, %c0_i32 : i32
    %c0_i32_0 = arith.constant 0 : i32
    return %arg0, %0 : i32, i32
  }
  func.func @transform_1(%arg0: i32, %arg1: i32, %arg2: i32) -> (i32, i32) {
    %c0_i32 = arith.constant 0 : i32
    %0 = arith.minsi %arg2, %c0_i32 : i32
    %c0_i32_0 = arith.constant 0 : i32
    return %0, %arg1 : i32, i32
  }
  func.func @transform_2(%arg0: i32, %arg1: i32, %arg2: i32) -> (i32, i32) {
    %c0_i32 = arith.constant 0 : i32
    %c0_i32_0 = arith.constant 0 : i32
    return %c0_i32, %arg1 : i32, i32
  }
  func.func @transform_3(%arg0: i32, %arg1: i32, %arg2: i32) -> (i32, i32) {
    %c1_i32 = arith.constant 1 : i32
    %0 = arith.subi %arg2, %c1_i32 : i32
    %c0_i32 = arith.constant 0 : i32
    %1 = arith.maxsi %0, %c0_i32 : i32
    %c0_i32_0 = arith.constant 0 : i32
    return %arg0, %1 : i32, i32
  }
  func.func @transform_4(%arg0: i32, %arg1: i32, %arg2: i32) -> (i32, i32) {
    %c1_i32 = arith.constant 1 : i32
    %0 = arith.subi %arg2, %c1_i32 : i32
    %c0_i32 = arith.constant 0 : i32
    %1 = arith.maxsi %0, %c0_i32 : i32
    %c0_i32_0 = arith.constant 0 : i32
    return %1, %arg1 : i32, i32
  }
  func.func @transform_5(%arg0: i32, %arg1: i32, %arg2: i32) -> (i32, i32) {
    %c0_i32 = arith.constant 0 : i32
    %c0_i32_0 = arith.constant 0 : i32
    return %c0_i32, %arg1 : i32, i32
  }
  func.func @transform_6(%arg0: i32, %arg1: i32, %arg2: i32) -> (i32, i32) {
    %c0_i32 = arith.constant 0 : i32
    return %arg0, %arg1 : i32, i32
  }
}

module attributes {stable_mosaic.version = 11 : i64} {
  func.func @_matmul_kernel(%arg0: i32, %arg1: i32, %arg2: i32, %arg3: memref<128x288xbf16, #tpu.memory_space<vmem>>, %arg4: memref<288x32xbf16, #tpu.memory_space<vmem>>, %arg5: memref<1x32xf32, #tpu.memory_space<vmem>>, %arg6: memref<128x32xbf16, #tpu.memory_space<vmem>>, %arg7: memref<128x32xf32, #tpu.memory_space<vmem>>) attributes {dimension_semantics = [#tpu.dimension_semantics<parallel>, #tpu.dimension_semantics<parallel>, #tpu.dimension_semantics<arbitrary>], iteration_bounds = array<i64: 1, 1, 1>, scalar_prefetch = 0 : i64, scratch_operands = 1 : i64, tpu.core_type = #tpu.core_type<tc>, window_params = [{transform_indices = @transform_0, window_bounds = array<i64: 128, 288>}, {transform_indices = @transform_1, window_bounds = array<i64: 288, 32>}, {transform_indices = @transform_2, window_bounds = array<i64: 1, 32>}, {transform_indices = @transform_3, window_bounds = array<i64: 128, 32>}]} {
    %c0_i32 = arith.constant 0 : i32
    %0 = arith.cmpi eq, %arg2, %c0_i32 : i32
    %1 = arith.extui %0 : i1 to i32
    %c0_i32_0 = arith.constant 0 : i32
    %2 = arith.cmpi ne, %1, %c0_i32_0 : i32
    scf.if %2 {
      %cst_10 = arith.constant 0.000000e+00 : f32
      %12 = vector.broadcast %cst_10 : f32 to vector<128x32xf32>
      %c0_11 = arith.constant 0 : index
      %c0_12 = arith.constant 0 : index
      %13 = vector.load %arg7[%c0_11, %c0_12] : memref<128x32xf32, #tpu.memory_space<vmem>>, vector<128x32xf32>
      tpu.vector_store %arg7[%c0_11, %c0_12], %12 {strides = array<i32>} : memref<128x32xf32, #tpu.memory_space<vmem>>, vector<128x32xf32>,
    } else {
    }
    %c0 = arith.constant 0 : index
    %c0_1 = arith.constant 0 : index
    %3 = vector.load %arg7[%c0, %c0_1] : memref<128x32xf32, #tpu.memory_space<vmem>>, vector<128x32xf32>
    %c0_2 = arith.constant 0 : index
    %c0_3 = arith.constant 0 : index
    %4 = vector.load %arg3[%c0_2, %c0_3] : memref<128x288xbf16, #tpu.memory_space<vmem>>, vector<128x288xbf16>
    %c0_4 = arith.constant 0 : index
    %c0_5 = arith.constant 0 : index
    %5 = vector.load %arg4[%c0_4, %c0_5] : memref<288x32xbf16, #tpu.memory_space<vmem>>, vector<288x32xbf16>
    %cst = arith.constant dense<0.000000e+00> : vector<128x32xf32>
    %6 = tpu.matmul %4, %5, %cst {dimension_numbers = #tpu.dot_dimension_numbers<[1], [0], [0], [1], [0, 0, 1, 1], [], []>} : vector<128x288xbf16>, vector<288x32xbf16>, vector<128x32xf32> -> vector<128x32xf32>
    %7 = arith.addf %3, %6 : vector<128x32xf32>
    %c0_6 = arith.constant 0 : index
    %c0_7 = arith.constant 0 : index
    %8 = vector.load %arg7[%c0_6, %c0_7] : memref<128x32xf32, #tpu.memory_space<vmem>>, vector<128x32xf32>
    tpu.vector_store %arg7[%c0_6, %c0_7], %7 {strides = array<i32>} : memref<128x32xf32, #tpu.memory_space<vmem>>, vector<128x32xf32>,
    %c0_i32_8 = arith.constant 0 : i32
    %9 = arith.cmpi eq, %arg2, %c0_i32_8 : i32
    %10 = arith.extui %9 : i1 to i32
    %c0_i32_9 = arith.constant 0 : i32
    %11 = arith.cmpi ne, %10, %c0_i32_9 : i32
    scf.if %11 {
      %c0_10 = arith.constant 0 : index
      %c0_11 = arith.constant 0 : index
      %12 = vector.load %arg7[%c0_10, %c0_11] : memref<128x32xf32, #tpu.memory_space<vmem>>, vector<128x32xf32>
      %c0_12 = arith.constant 0 : index
      %c0_13 = arith.constant 0 : index
      %13 = vector.load %arg5[%c0_12, %c0_13] : memref<1x32xf32, #tpu.memory_space<vmem>>, vector<1x32xf32>
      %14 = vector.broadcast %13 : vector<1x32xf32> to vector<128x32xf32>
      %15 = arith.addf %12, %14 : vector<128x32xf32>
      %cst_14 = arith.constant 0.000000e+00 : f32
      %16 = vector.broadcast %cst_14 : f32 to vector<128x32xf32>
      %17 = arith.cmpf oge, %15, %16 : vector<128x32xf32>
      %cst_15 = arith.constant 2.000000e-01 : f32
      %18 = vector.broadcast %cst_15 : f32 to vector<128x32xf32>
      %19 = arith.mulf %18, %15 : vector<128x32xf32>
      %20 = arith.select %17, %15, %19 : vector<128x32xi1>, vector<128x32xf32>
      %21 = arith.truncf %20 : vector<128x32xf32> to vector<128x32xbf16>
      %c0_16 = arith.constant 0 : index
      %c0_17 = arith.constant 0 : index
      %22 = vector.load %arg6[%c0_16, %c0_17] : memref<128x32xbf16, #tpu.memory_space<vmem>>, vector<128x32xbf16>
      tpu.vector_store %arg6[%c0_16, %c0_17], %21 {strides = array<i32>} : memref<128x32xbf16, #tpu.memory_space<vmem>>, vector<128x32xbf16>,
    } else {
    }
    return
  }
  func.func @transform_0(%arg0: i32, %arg1: i32, %arg2: i32) -> (i32, i32) {
    %c0_i32 = arith.constant 0 : i32
    return %arg0, %arg2 : i32, i32
  }
  func.func @transform_1(%arg0: i32, %arg1: i32, %arg2: i32) -> (i32, i32) {
    %c0_i32 = arith.constant 0 : i32
    return %arg2, %arg1 : i32, i32
  }
  func.func @transform_2(%arg0: i32, %arg1: i32, %arg2: i32) -> (i32, i32) {
    %c0_i32 = arith.constant 0 : i32
    %c0_i32_0 = arith.constant 0 : i32
    return %c0_i32, %arg1 : i32, i32
  }
  func.func @transform_3(%arg0: i32, %arg1: i32, %arg2: i32) -> (i32, i32) {
    %c0_i32 = arith.constant 0 : i32
    return %arg0, %arg1 : i32, i32
  }
}

module attributes {stable_mosaic.version = 11 : i64} {
  func.func @_dual_matmul_kernel(%arg0: i32, %arg1: i32, %arg2: i32, %arg3: memref<32x288xbf16, #tpu.memory_space<vmem>>, %arg4: memref<288x32xbf16, #tpu.memory_space<vmem>>, %arg5: memref<1x32xf32, #tpu.memory_space<vmem>>, %arg6: memref<32x288xbf16, #tpu.memory_space<vmem>>, %arg7: memref<288x32xbf16, #tpu.memory_space<vmem>>, %arg8: memref<1x32xf32, #tpu.memory_space<vmem>>, %arg9: memref<32x32xbf16, #tpu.memory_space<vmem>>, %arg10: memref<32x32xf32, #tpu.memory_space<vmem>>, %arg11: memref<32x32xf32, #tpu.memory_space<vmem>>) attributes {dimension_semantics = [#tpu.dimension_semantics<parallel>, #tpu.dimension_semantics<parallel>, #tpu.dimension_semantics<arbitrary>], iteration_bounds = array<i64: 1, 1, 2>, scalar_prefetch = 0 : i64, scratch_operands = 2 : i64, tpu.core_type = #tpu.core_type<tc>, window_params = [{transform_indices = @transform_0, window_bounds = array<i64: 32, 288>}, {transform_indices = @transform_1, window_bounds = array<i64: 288, 32>}, {transform_indices = @transform_2, window_bounds = array<i64: 1, 32>}, {transform_indices = @transform_3, window_bounds = array<i64: 32, 288>}, {transform_indices = @transform_4, window_bounds = array<i64: 288, 32>}, {transform_indices = @transform_5, window_bounds = array<i64: 1, 32>}, {transform_indices = @transform_6, window_bounds = array<i64: 32, 32>}]} {
    %c0_i32 = arith.constant 0 : i32
    %0 = arith.cmpi eq, %arg2, %c0_i32 : i32
    %1 = arith.extui %0 : i1 to i32
    %c0_i32_0 = arith.constant 0 : i32
    %2 = arith.cmpi ne, %1, %c0_i32_0 : i32
    scf.if %2 {
      %cst = arith.constant 0.000000e+00 : f32
      %12 = vector.broadcast %cst : f32 to vector<32x32xf32>
      %c0 = arith.constant 0 : index
      %c0_6 = arith.constant 0 : index
      %13 = vector.load %arg10[%c0, %c0_6] : memref<32x32xf32, #tpu.memory_space<vmem>>, vector<32x32xf32>
      tpu.vector_store %arg10[%c0, %c0_6], %12 {strides = array<i32>} : memref<32x32xf32, #tpu.memory_space<vmem>>, vector<32x32xf32>,
      %cst_7 = arith.constant 0.000000e+00 : f32
      %14 = vector.broadcast %cst_7 : f32 to vector<32x32xf32>
      %c0_8 = arith.constant 0 : index
      %c0_9 = arith.constant 0 : index
      %15 = vector.load %arg11[%c0_8, %c0_9] : memref<32x32xf32, #tpu.memory_space<vmem>>, vector<32x32xf32>
      tpu.vector_store %arg11[%c0_8, %c0_9], %14 {strides = array<i32>} : memref<32x32xf32, #tpu.memory_space<vmem>>, vector<32x32xf32>,
    } else {
    }
    %c1_i32 = arith.constant 1 : i32
    %3 = arith.cmpi slt, %arg2, %c1_i32 : i32
    %4 = arith.extui %3 : i1 to i32
    %c0_i32_1 = arith.constant 0 : i32
    %5 = arith.cmpi ne, %4, %c0_i32_1 : i32
    scf.if %5 {
      %c0 = arith.constant 0 : index
      %c0_6 = arith.constant 0 : index
      %12 = vector.load %arg10[%c0, %c0_6] : memref<32x32xf32, #tpu.memory_space<vmem>>, vector<32x32xf32>
      %c0_7 = arith.constant 0 : index
      %c0_8 = arith.constant 0 : index
      %13 = vector.load %arg3[%c0_7, %c0_8] : memref<32x288xbf16, #tpu.memory_space<vmem>>, vector<32x288xbf16>
      %c0_9 = arith.constant 0 : index
      %c0_10 = arith.constant 0 : index
      %14 = vector.load %arg4[%c0_9, %c0_10] : memref<288x32xbf16, #tpu.memory_space<vmem>>, vector<288x32xbf16>
      %cst = arith.constant dense<0.000000e+00> : vector<32x32xf32>
      %15 = tpu.matmul %13, %14, %cst {dimension_numbers = #tpu.dot_dimension_numbers<[1], [0], [0], [1], [0, 0, 1, 1], [], []>} : vector<32x288xbf16>, vector<288x32xbf16>, vector<32x32xf32> -> vector<32x32xf32>
      %16 = arith.addf %12, %15 : vector<32x32xf32>
      %c0_11 = arith.constant 0 : index
      %c0_12 = arith.constant 0 : index
      %17 = vector.load %arg10[%c0_11, %c0_12] : memref<32x32xf32, #tpu.memory_space<vmem>>, vector<32x32xf32>
      tpu.vector_store %arg10[%c0_11, %c0_12], %16 {strides = array<i32>} : memref<32x32xf32, #tpu.memory_space<vmem>>, vector<32x32xf32>,
    } else {
    }
    %c1_i32_2 = arith.constant 1 : i32
    %6 = arith.cmpi sge, %arg2, %c1_i32_2 : i32
    %7 = arith.extui %6 : i1 to i32
    %c0_i32_3 = arith.constant 0 : i32
    %8 = arith.cmpi ne, %7, %c0_i32_3 : i32
    scf.if %8 {
      %c0 = arith.constant 0 : index
      %c0_6 = arith.constant 0 : index
      %12 = vector.load %arg11[%c0, %c0_6] : memref<32x32xf32, #tpu.memory_space<vmem>>, vector<32x32xf32>
      %c0_7 = arith.constant 0 : index
      %c0_8 = arith.constant 0 : index
      %13 = vector.load %arg6[%c0_7, %c0_8] : memref<32x288xbf16, #tpu.memory_space<vmem>>, vector<32x288xbf16>
      %c0_9 = arith.constant 0 : index
      %c0_10 = arith.constant 0 : index
      %14 = vector.load %arg7[%c0_9, %c0_10] : memref<288x32xbf16, #tpu.memory_space<vmem>>, vector<288x32xbf16>
      %cst = arith.constant dense<0.000000e+00> : vector<32x32xf32>
      %15 = tpu.matmul %13, %14, %cst {dimension_numbers = #tpu.dot_dimension_numbers<[1], [0], [0], [1], [0, 0, 1, 1], [], []>} : vector<32x288xbf16>, vector<288x32xbf16>, vector<32x32xf32> -> vector<32x32xf32>
      %16 = arith.addf %12, %15 : vector<32x32xf32>
      %c0_11 = arith.constant 0 : index
      %c0_12 = arith.constant 0 : index
      %17 = vector.load %arg11[%c0_11, %c0_12] : memref<32x32xf32, #tpu.memory_space<vmem>>, vector<32x32xf32>
      tpu.vector_store %arg11[%c0_11, %c0_12], %16 {strides = array<i32>} : memref<32x32xf32, #tpu.memory_space<vmem>>, vector<32x32xf32>,
    } else {
    }
    %c1_i32_4 = arith.constant 1 : i32
    %9 = arith.cmpi eq, %arg2, %c1_i32_4 : i32
    %10 = arith.extui %9 : i1 to i32
    %c0_i32_5 = arith.constant 0 : i32
    %11 = arith.cmpi ne, %10, %c0_i32_5 : i32
    scf.if %11 {
      %c0 = arith.constant 0 : index
      %c0_6 = arith.constant 0 : index
      %12 = vector.load %arg10[%c0, %c0_6] : memref<32x32xf32, #tpu.memory_space<vmem>>, vector<32x32xf32>
      %c0_7 = arith.constant 0 : index
      %c0_8 = arith.constant 0 : index
      %13 = vector.load %arg5[%c0_7, %c0_8] : memref<1x32xf32, #tpu.memory_space<vmem>>, vector<1x32xf32>
      %14 = vector.broadcast %13 : vector<1x32xf32> to vector<32x32xf32>
      %15 = arith.addf %12, %14 : vector<32x32xf32>
      %cst = arith.constant 0.000000e+00 : f32
      %16 = vector.broadcast %cst : f32 to vector<32x32xf32>
      %17 = arith.cmpf oge, %15, %16 : vector<32x32xf32>
      %cst_9 = arith.constant 2.000000e-01 : f32
      %18 = vector.broadcast %cst_9 : f32 to vector<32x32xf32>
      %19 = arith.mulf %18, %15 : vector<32x32xf32>
      %20 = arith.select %17, %15, %19 : vector<32x32xi1>, vector<32x32xf32>
      %c0_10 = arith.constant 0 : index
      %c0_11 = arith.constant 0 : index
      %21 = vector.load %arg11[%c0_10, %c0_11] : memref<32x32xf32, #tpu.memory_space<vmem>>, vector<32x32xf32>
      %c0_12 = arith.constant 0 : index
      %c0_13 = arith.constant 0 : index
      %22 = vector.load %arg8[%c0_12, %c0_13] : memref<1x32xf32, #tpu.memory_space<vmem>>, vector<1x32xf32>
      %23 = vector.broadcast %22 : vector<1x32xf32> to vector<32x32xf32>
      %24 = arith.addf %21, %23 : vector<32x32xf32>
      %cst_14 = arith.constant 0.000000e+00 : f32
      %25 = vector.broadcast %cst_14 : f32 to vector<32x32xf32>
      %26 = arith.cmpf oge, %24, %25 : vector<32x32xf32>
      %cst_15 = arith.constant 2.000000e-01 : f32
      %27 = vector.broadcast %cst_15 : f32 to vector<32x32xf32>
      %28 = arith.mulf %27, %24 : vector<32x32xf32>
      %29 = arith.select %26, %24, %28 : vector<32x32xi1>, vector<32x32xf32>
      %30 = arith.addf %20, %29 : vector<32x32xf32>
      %31 = arith.truncf %30 : vector<32x32xf32> to vector<32x32xbf16>
      %c0_16 = arith.constant 0 : index
      %c0_17 = arith.constant 0 : index
      %32 = vector.load %arg9[%c0_16, %c0_17] : memref<32x32xbf16, #tpu.memory_space<vmem>>, vector<32x32xbf16>
      tpu.vector_store %arg9[%c0_16, %c0_17], %31 {strides = array<i32>} : memref<32x32xbf16, #tpu.memory_space<vmem>>, vector<32x32xbf16>,
    } else {
    }
    return
  }
  func.func @transform_0(%arg0: i32, %arg1: i32, %arg2: i32) -> (i32, i32) {
    %c0_i32 = arith.constant 0 : i32
    %0 = arith.minsi %arg2, %c0_i32 : i32
    %c0_i32_0 = arith.constant 0 : i32
    return %arg0, %0 : i32, i32
  }
  func.func @transform_1(%arg0: i32, %arg1: i32, %arg2: i32) -> (i32, i32) {
    %c0_i32 = arith.constant 0 : i32
    %0 = arith.minsi %arg2, %c0_i32 : i32
    %c0_i32_0 = arith.constant 0 : i32
    return %0, %arg1 : i32, i32
  }
  func.func @transform_2(%arg0: i32, %arg1: i32, %arg2: i32) -> (i32, i32) {
    %c0_i32 = arith.constant 0 : i32
    %c0_i32_0 = arith.constant 0 : i32
    return %c0_i32, %arg1 : i32, i32
  }
  func.func @transform_3(%arg0: i32, %arg1: i32, %arg2: i32) -> (i32, i32) {
    %c1_i32 = arith.constant 1 : i32
    %0 = arith.subi %arg2, %c1_i32 : i32
    %c0_i32 = arith.constant 0 : i32
    %1 = arith.maxsi %0, %c0_i32 : i32
    %c0_i32_0 = arith.constant 0 : i32
    return %arg0, %1 : i32, i32
  }
  func.func @transform_4(%arg0: i32, %arg1: i32, %arg2: i32) -> (i32, i32) {
    %c1_i32 = arith.constant 1 : i32
    %0 = arith.subi %arg2, %c1_i32 : i32
    %c0_i32 = arith.constant 0 : i32
    %1 = arith.maxsi %0, %c0_i32 : i32
    %c0_i32_0 = arith.constant 0 : i32
    return %1, %arg1 : i32, i32
  }
  func.func @transform_5(%arg0: i32, %arg1: i32, %arg2: i32) -> (i32, i32) {
    %c0_i32 = arith.constant 0 : i32
    %c0_i32_0 = arith.constant 0 : i32
    return %c0_i32, %arg1 : i32, i32
  }
  func.func @transform_6(%arg0: i32, %arg1: i32, %arg2: i32) -> (i32, i32) {
    %c0_i32 = arith.constant 0 : i32
    return %arg0, %arg1 : i32, i32
  }
}

module attributes {stable_mosaic.version = 11 : i64} {
  func.func @_matmul_kernel(%arg0: i32, %arg1: i32, %arg2: i32, %arg3: memref<8x512xbf16, #tpu.memory_space<vmem>>, %arg4: memref<512x1xbf16, #tpu.memory_space<vmem>>, %arg5: memref<1x1xf32, #tpu.memory_space<vmem>>, %arg6: memref<8x1xf32, #tpu.memory_space<vmem>>, %arg7: memref<8x1xf32, #tpu.memory_space<vmem>>) attributes {dimension_semantics = [#tpu.dimension_semantics<parallel>, #tpu.dimension_semantics<parallel>, #tpu.dimension_semantics<arbitrary>], iteration_bounds = array<i64: 1, 1, 1>, scalar_prefetch = 0 : i64, scratch_operands = 1 : i64, tpu.core_type = #tpu.core_type<tc>, window_params = [{transform_indices = @transform_0, window_bounds = array<i64: 8, 512>}, {transform_indices = @transform_1, window_bounds = array<i64: 512, 1>}, {transform_indices = @transform_2, window_bounds = array<i64: 1, 1>}, {transform_indices = @transform_3, window_bounds = array<i64: 8, 1>}]} {
    %c0_i32 = arith.constant 0 : i32
    %0 = arith.cmpi eq, %arg2, %c0_i32 : i32
    %1 = arith.extui %0 : i1 to i32
    %c0_i32_0 = arith.constant 0 : i32
    %2 = arith.cmpi ne, %1, %c0_i32_0 : i32
    scf.if %2 {
      %cst_10 = arith.constant 0.000000e+00 : f32
      %12 = vector.broadcast %cst_10 : f32 to vector<8x1xf32>
      %c0_11 = arith.constant 0 : index
      %c0_12 = arith.constant 0 : index
      %13 = vector.load %arg7[%c0_11, %c0_12] : memref<8x1xf32, #tpu.memory_space<vmem>>, vector<8x1xf32>
      tpu.vector_store %arg7[%c0_11, %c0_12], %12 {strides = array<i32>} : memref<8x1xf32, #tpu.memory_space<vmem>>, vector<8x1xf32>,
    } else {
    }
    %c0 = arith.constant 0 : index
    %c0_1 = arith.constant 0 : index
    %3 = vector.load %arg7[%c0, %c0_1] : memref<8x1xf32, #tpu.memory_space<vmem>>, vector<8x1xf32>
    %c0_2 = arith.constant 0 : index
    %c0_3 = arith.constant 0 : index
    %4 = vector.load %arg3[%c0_2, %c0_3] : memref<8x512xbf16, #tpu.memory_space<vmem>>, vector<8x512xbf16>
    %c0_4 = arith.constant 0 : index
    %c0_5 = arith.constant 0 : index
    %5 = vector.load %arg4[%c0_4, %c0_5] : memref<512x1xbf16, #tpu.memory_space<vmem>>, vector<512x1xbf16>
    %cst = arith.constant dense<0.000000e+00> : vector<8x1xf32>
    %6 = tpu.matmul %4, %5, %cst {dimension_numbers = #tpu.dot_dimension_numbers<[1], [0], [0], [1], [0, 0, 1, 1], [], []>} : vector<8x512xbf16>, vector<512x1xbf16>, vector<8x1xf32> -> vector<8x1xf32>
    %7 = arith.addf %3, %6 : vector<8x1xf32>
    %c0_6 = arith.constant 0 : index
    %c0_7 = arith.constant 0 : index
    %8 = vector.load %arg7[%c0_6, %c0_7] : memref<8x1xf32, #tpu.memory_space<vmem>>, vector<8x1xf32>
    tpu.vector_store %arg7[%c0_6, %c0_7], %7 {strides = array<i32>} : memref<8x1xf32, #tpu.memory_space<vmem>>, vector<8x1xf32>,
    %c0_i32_8 = arith.constant 0 : i32
    %9 = arith.cmpi eq, %arg2, %c0_i32_8 : i32
    %10 = arith.extui %9 : i1 to i32
    %c0_i32_9 = arith.constant 0 : i32
    %11 = arith.cmpi ne, %10, %c0_i32_9 : i32
    scf.if %11 {
      %c0_10 = arith.constant 0 : index
      %c0_11 = arith.constant 0 : index
      %12 = vector.load %arg7[%c0_10, %c0_11] : memref<8x1xf32, #tpu.memory_space<vmem>>, vector<8x1xf32>
      %c0_12 = arith.constant 0 : index
      %c0_13 = arith.constant 0 : index
      %13 = vector.load %arg5[%c0_12, %c0_13] : memref<1x1xf32, #tpu.memory_space<vmem>>, vector<1x1xf32>
      %14 = vector.broadcast %13 : vector<1x1xf32> to vector<8x1xf32>
      %15 = arith.addf %12, %14 : vector<8x1xf32>
      %c0_14 = arith.constant 0 : index
      %c0_15 = arith.constant 0 : index
      %16 = vector.load %arg6[%c0_14, %c0_15] : memref<8x1xf32, #tpu.memory_space<vmem>>, vector<8x1xf32>
      tpu.vector_store %arg6[%c0_14, %c0_15], %15 {strides = array<i32>} : memref<8x1xf32, #tpu.memory_space<vmem>>, vector<8x1xf32>,
    } else {
    }
    return
  }
  func.func @transform_0(%arg0: i32, %arg1: i32, %arg2: i32) -> (i32, i32) {
    %c0_i32 = arith.constant 0 : i32
    return %arg0, %arg2 : i32, i32
  }
  func.func @transform_1(%arg0: i32, %arg1: i32, %arg2: i32) -> (i32, i32) {
    %c0_i32 = arith.constant 0 : i32
    return %arg2, %arg1 : i32, i32
  }
  func.func @transform_2(%arg0: i32, %arg1: i32, %arg2: i32) -> (i32, i32) {
    %c0_i32 = arith.constant 0 : i32
    %c0_i32_0 = arith.constant 0 : i32
    return %c0_i32, %arg1 : i32, i32
  }
  func.func @transform_3(%arg0: i32, %arg1: i32, %arg2: i32) -> (i32, i32) {
    %c0_i32 = arith.constant 0 : i32
    return %arg0, %arg1 : i32, i32
  }
}

</mosaic_0001>

<llo_original>
// kernel: discriminator_forward.6
$region0: #{discriminator_forward.6}
  #allocation0 [shape = 'u32[]', space=smem, size = 0x4, offset = 0x4, fixed_abs, tag = 'smem constant byte address 0x4 - core index']
  #allocation1 [shape = 'u32[144,128]{1,0:T(1,128)}', space=vmem, size = 0x12000, scoped, tag = 'internal scratch']
  #allocation2 [shape = 'f32[256,32]{1,0:T(8,128)}', space=vmem, size = 0x20000, scoped, tag = 'scratch operand']
  %s0 = inlined_call_operand.vmem [shape: bf16[512,3], index: 0, kind: input, shape index: {}]
  %s1 = inlined_call_operand.vmem [shape: bf16[3,32], index: 1, kind: input, shape index: {}]
  %s2 = inlined_call_operand.hbm [shape: f32[1,32], index: 2, kind: input, shape index: {}]
  %s3 = inlined_call_operand.vmem [shape: bf16[512,32], index: 3, kind: output, shape index: {}]
  %s4 = sld [smem:[#allocation0]]
  $region57: #{discriminator_forward.6} parent=0
    _
  %s6 = ssub.s32 1, %s4
  %s7 = scalar_select 0, %s6, %s4
  $region1: #{discriminator_forward.6} parent=0
    #allocation3 [shape = 'u8[512]{0}', space=vmem, size = 0x400, scoped, tag = 'input window, operand 2, single buffered']
    #allocation4 [shape = 's32[2]{0}', space=sflag, size = 0x8, scoped, tag = 'scoped memory for discriminator_forward.6']
    %8 = vsyncpa [#allocation4], 0
    loop: start=0, step=1, limit=4
    $region2: #{discriminator_forward.6} parent=1 // loop_pre_header
      _
    $region3: #{discriminator_forward.6} parent=1 // loop_header
      %s10 = sphi 0, %s14
      %p11 = scmp.ge.s32.totalorder %s10, 4
      %s17 = sphi 0, %s36
      %s18 = sphi 0, %s32
      %s19 = sphi 0, %s28
      %s20 = sphi 0, %s17
      %s21 = sphi 0, %s18
      %s22 = sphi 0, %s19
      %s23 = sphi 0, %s20
      %s24 = sphi 0, %s21
      %s25 = sphi 0, %s22
      %s41 = sphi 0, %s43
      %s44 = sphi 0, %s41
      %s45 = sphi 0, %s44
      %s61 = sphi 0, %s45
      %s69 = sphi 0, %s71
      %s72 = sphi 0, %s69
      %s73 = sphi 0, %s72
      %s89 = sphi 0, %s73
      %s95 = sphi 0, %s97
      %s98 = sphi 0, %s95
      %s99 = sphi 0, %s98
      %s115 = sphi 0, %s99
      %s123 = sphi 0, %s125
      %s126 = sphi 0, %s123
      %s127 = sphi 0, %s126
      %s143 = sphi 0, %s127
    $region4: #{discriminator_forward.6} parent=1 // loop_header_branch
      %13 = sbr.rel (%p11) target = $region8
    $region5: #{discriminator_forward.6} parent=1 // loop_body
      %s15 = ssub.s32 %s10, 1
      %s16 = ssub.s32 %s10, 2
      %s26 = sadd.s32 1, %s19
      %p27 = scmp.ge.s32.totalorder %s26, 1
      %s28 = scalar_select %p27, 0, %s26
      %s29 = sadd.s32 1, %s18
      %s30 = scalar_select %p27, %s29, %s18
      %p31 = scmp.ge.s32.totalorder %s30, 1
      %s32 = scalar_select %p31, 0, %s30
      %s33 = sadd.s32 1, %s17
      %s34 = scalar_select %p31, %s33, %s17
      %p35 = scmp.ge.s32.totalorder %s34, 2
      %s36 = scalar_select %p35, 0, %s34
      %s37 = ssub.s32 %s17, %s36
      %s38 = ssub.s32 %s19, %s28
      %s39 = sor.u32 %s37, %s38
      %p40 = scmp.eq.s32.totalorder %s39, 0
      %s42 = sadd.s32 %s41, 1
      %s43 = scalar_select %p40, %s41, %s42
      %p46 = pneg %p40
      %p47 = scmp.eq.s32.totalorder %s10, 1
      %p48 = por %p46, %p47
      %p49 = scmp.ne.s32.totalorder %s41, %s44
      %p50 = scmp.eq.s32.totalorder %s10, 0
      %p51 = por %p49, %p50
      %p52 = scmp.ne.s32.totalorder %s41, %s44
      %p53 = scmp.eq.s32.totalorder %s15, 1
      %p54 = por %p52, %p53
      %p55 = scmp.ne.s32.totalorder %s44, %s45
      %p56 = scmp.eq.s32.totalorder %s15, 0
      %p57 = por %p55, %p56
      %p58 = scmp.ne.s32.totalorder %s44, %s45
      %p59 = scmp.eq.s32.totalorder %s16, 1
      %p60 = por %p58, %p59
      %p62 = scmp.ne.s32.totalorder %s45, %s61
      %p63 = scmp.eq.s32.totalorder %s16, 0
      %p64 = por %p62, %p63
      %s65 = ssub.s32 %s19, %s28
      %s66 = ssub.s32 %s18, %s32
      %s67 = sor.u32 %s65, %s66
      %p68 = scmp.eq.s32.totalorder %s67, 0
      %s70 = sadd.s32 %s69, 1
      %s71 = scalar_select %p68, %s69, %s70
      %p74 = pneg %p68
      %p75 = scmp.eq.s32.totalorder %s10, 1
      %p76 = por %p74, %p75
      %p77 = scmp.ne.s32.totalorder %s69, %s72
      %p78 = scmp.eq.s32.totalorder %s10, 0
      %p79 = por %p77, %p78
      %p80 = scmp.ne.s32.totalorder %s69, %s72
      %p81 = scmp.eq.s32.totalorder %s15, 1
      %p82 = por %p80, %p81
      %p83 = scmp.ne.s32.totalorder %s72, %s73
      %p84 = scmp.eq.s32.totalorder %s15, 0
      %p85 = por %p83, %p84
      %p86 = scmp.ne.s32.totalorder %s72, %s73
      %p87 = scmp.eq.s32.totalorder %s16, 1
      %p88 = por %p86, %p87
      %p90 = scmp.ne.s32.totalorder %s73, %s89
      %p91 = scmp.eq.s32.totalorder %s16, 0
      %p92 = por %p90, %p91
      %s93 = ssub.s32 %s18, %s32
      %p94 = scmp.eq.s32.totalorder %s93, 0
      %s96 = sadd.s32 %s95, 1
      %s97 = scalar_select %p94, %s95, %s96
      %p100 = pneg %p94
      %p101 = scmp.eq.s32.totalorder %s10, 1
      %p102 = por %p100, %p101
      %p103 = scmp.ne.s32.totalorder %s95, %s98
      %p104 = scmp.eq.s32.totalorder %s10, 0
      %p105 = por %p103, %p104
      %p106 = scmp.ne.s32.totalorder %s95, %s98
      %p107 = scmp.eq.s32.totalorder %s15, 1
      %p108 = por %p106, %p107
      %p109 = scmp.ne.s32.totalorder %s98, %s99
      %p110 = scmp.eq.s32.totalorder %s15, 0
      %p111 = por %p109, %p110
      %p112 = scmp.ne.s32.totalorder %s98, %s99
      %p113 = scmp.eq.s32.totalorder %s16, 1
      %p114 = por %p112, %p113
      %p116 = scmp.ne.s32.totalorder %s99, %s115
      %p117 = scmp.eq.s32.totalorder %s16, 0
      %p118 = por %p116, %p117
      %s119 = ssub.s32 %s17, %s36
      %s120 = ssub.s32 %s18, %s32
      %s121 = sor.u32 %s119, %s120
      %p122 = scmp.eq.s32.totalorder %s121, 0
      %s124 = sadd.s32 %s123, 1
      %s125 = scalar_select %p122, %s123, %s124
      %p128 = pneg %p122
      %p129 = scmp.eq.s32.totalorder %s10, 1
      %p130 = por %p128, %p129
      %p131 = scmp.ne.s32.totalorder %s123, %s126
      %p132 = scmp.eq.s32.totalorder %s10, 0
      %p133 = por %p131, %p132
      %p134 = scmp.ne.s32.totalorder %s123, %s126
      %p135 = scmp.eq.s32.totalorder %s15, 1
      %p136 = por %p134, %p135
      %p137 = scmp.ne.s32.totalorder %s126, %s127
      %p138 = scmp.eq.s32.totalorder %s15, 0
      %p139 = por %p137, %p138
      %p140 = scmp.ne.s32.totalorder %s126, %s127
      %p141 = scmp.eq.s32.totalorder %s16, 1
      %p142 = por %p140, %p141
      %p144 = scmp.ne.s32.totalorder %s127, %s143
      %p145 = scmp.eq.s32.totalorder %s16, 0
      %p146 = por %p144, %p145
      %p147 = scmp.le.s32.totalorder 1, %s10
      %p148 = scmp.lt.s32.totalorder %s10, 3
      %p149 = pnand %p147, %p148
      %p150 = pneg %p149
      // Predicated region
      $region9: #{discriminator_forward.6} parent=5 // pred_check
        _
      $region10: #{discriminator_forward.6} parent=5 // pred_check_branch
        %152 = sbr.rel (%p149) target = $region12
      $region11: #{discriminator_forward.6} parent=5 // pred_region
        %s153 = ssub.s32 %s10, 1
        // Predicated region
        $region13: #{discriminator_forward.6} parent=11 // pred_check
          %p154 = pneg %p85
        $region14: #{discriminator_forward.6} parent=11 // pred_check_branch
          %156 = sbr.rel (%p154) target = $region16
        $region15: #{discriminator_forward.6} parent=11 // pred_region
          %p157 = scmp.lt.s32.totalorder %s22, 0
          %s158 = scalar_select %p157, %s22, 0
          %p159 = scmp.lt.s32.totalorder %s21, 0
          %s160 = scalar_select %p159, %s21, 0
          %s161 = sadd.s32 %s160, %s158
          %s162 = smul.addr %s161, 2
          %s163 = scalar_lea.vmem %s1, %s162
        $region16: #{discriminator_forward.6} parent=11 // pred_fallthru
          _
        // Predicated region
        $region17: #{discriminator_forward.6} parent=11 // pred_check
          %p164 = pneg %p111
        $region18: #{discriminator_forward.6} parent=11 // pred_check_branch
          %166 = sbr.rel (%p164) target = $region20
        $region19: #{discriminator_forward.6} parent=11 // pred_region
          %s168 = ssub.s32 16, 16
          %169 = vsyncadd [#allocation4], %s168
          %s170 = smul.addr %s21, 16
          %s171 = scalar_lea.hbm %s2, %s170
          %s173 = sshll.u32 [#allocation3], 4
          %s174 = int_to_ptr.vmem [resolvable:$true] %s173
          %176 = dma.hbm_to_vmem [thread:$0]  %s171, 16, %s174, [#allocation4]
        $region20: #{discriminator_forward.6} parent=11 // pred_fallthru
          _
      $region12: #{discriminator_forward.6} parent=5 // pred_fallthru
        _
      %p177 = scmp.lt.s32.totalorder %s10, 2
      // Predicated region
      $region21: #{discriminator_forward.6} parent=5 // pred_check
        %p178 = pneg %p177
      $region22: #{discriminator_forward.6} parent=5 // pred_check_branch
        %180 = sbr.rel (%p178) target = $region24
      $region23: #{discriminator_forward.6} parent=5 // pred_region
        // Predicated region
        $region25: #{discriminator_forward.6} parent=23 // pred_check
          %p181 = pneg %p51
        $region26: #{discriminator_forward.6} parent=23 // pred_check_branch
          %183 = sbr.rel (%p181) target = $region28
        $region27: #{discriminator_forward.6} parent=23 // pred_region
          %s184 = smul.u32 32, %s17
          %p185 = scmp.lt.s32.totalorder %s184, 63
          %s186 = scalar_select %p185, %s184, 63
          %p187 = scmp.lt.s32.totalorder %s19, 0
          %s188 = scalar_select %p187, %s19, 0
          %s189 = sadd.s32 %s188, %s186
          %s190 = smul.addr %s189, 4
          %s191 = scalar_lea.vmem %s0, %s190
          %s192 = smul.u32 32, %s17
        $region28: #{discriminator_forward.6} parent=23 // pred_fallthru
          _
      $region24: #{discriminator_forward.6} parent=5 // pred_fallthru
        _
      %p193 = scmp.le.s32.totalorder 1, %s10
      %p194 = scmp.lt.s32.totalorder %s10, 3
      %p195 = pnand %p193, %p194
      %p196 = pneg %p195
      // Predicated region
      $region29: #{discriminator_forward.6} parent=5 // pred_check
        _
      $region30: #{discriminator_forward.6} parent=5 // pred_check_branch
        %198 = sbr.rel (%p195) target = $region32
      $region31: #{discriminator_forward.6} parent=5 // pred_region
        %s199 = ssub.s32 %s10, 1
        // Predicated region
        $region33: #{discriminator_forward.6} parent=31 // pred_check
          %p200 = pneg %p111
        $region34: #{discriminator_forward.6} parent=31 // pred_check_branch
          %202 = sbr.rel (%p200) target = $region36
        $region35: #{discriminator_forward.6} parent=31 // pred_region
          %203 = dma.done [#allocation4], 16
        $region36: #{discriminator_forward.6} parent=31 // pred_fallthru
          _
        %s204 = smul.u32 32, %s20
        %p205 = scmp.lt.s32.totalorder %s204, 63
        %s206 = scalar_select %p205, %s204, 63
        %p207 = scmp.lt.s32.totalorder %s22, 0
        %s208 = scalar_select %p207, %s22, 0
        %s209 = sadd.s32 %s208, %s206
        %s210 = smul.addr %s209, 4
        %s211 = scalar_lea.vmem %s0, %s210
        %p212 = pneg %p57
        %p213 = pneg %p54
        %p214 = scmp.lt.s32.totalorder %s22, 0
        %s215 = scalar_select %p214, %s22, 0
        %p216 = scmp.lt.s32.totalorder %s21, 0
        %s217 = scalar_select %p216, %s21, 0
        %s218 = sadd.s32 %s217, %s215
        %s219 = smul.addr %s218, 2
        %s220 = scalar_lea.vmem %s1, %s219
        %p221 = pneg %p85
        %p222 = pneg %p82
        %p223 = pneg %p111
        %p224 = pneg %p108
        %p225 = pneg %p139
        %p226 = pneg %p136
        %s227 = smul.u32 32, %s20
        %p228 = scmp.lt.s32.totalorder %s227, 63
        %s229 = scalar_select %p228, %s227, 63
        %p230 = scmp.lt.s32.totalorder %s21, 0
        %s231 = scalar_select %p230, %s21, 0
        %s232 = sadd.s32 %s231, %s229
        %s233 = smul.addr %s232, 4
        %s234 = scalar_lea.vmem %s3, %s233
        %s235 = smul.u32 32, %s20
        %p236 = scmp.lt.s32.totalorder %s235, 63
        %s237 = scalar_select %p236, %s235, 63
        %p238 = scmp.lt.s32.totalorder %s22, 0
        %s239 = scalar_select %p238, %s22, 0
        %s240 = sadd.s32 %s239, %s237
        %s241 = smul.addr %s240, 4
        %s242 = scalar_lea.vmem %s0, %s241
        %s243 = smul.u32 32, %s20
        %p244 = scmp.lt.s32.totalorder %s22, 0
        %s245 = scalar_select %p244, %s22, 0
        %p246 = scmp.lt.s32.totalorder %s21, 0
        %s247 = scalar_select %p246, %s21, 0
        %s248 = sadd.s32 %s247, %s245
        %s249 = smul.addr %s248, 2
        %s250 = scalar_lea.vmem %s1, %s249
        %s251 = smul.u32 32, %s20
        %p252 = scmp.lt.s32.totalorder %s251, 63
        %s253 = scalar_select %p252, %s251, 63
        %p254 = scmp.lt.s32.totalorder %s21, 0
        %s255 = scalar_select %p254, %s21, 0
        %s256 = sadd.s32 %s255, %s253
        %s257 = smul.addr %s256, 4
        %s258 = scalar_lea.vmem %s3, %s257
        %s259 = smul.u32 32, %s20
        %p261 = scmp.eq.s32.totalorder %s22, 0
        // Predicated region
        $region37: #{discriminator_forward.6} parent=31 // pred_check
          %p262 = pneg %p261
        $region38: #{discriminator_forward.6} parent=31 // pred_check_branch
          %264 = sbr.rel (%p262) target = $region40
        $region39: #{discriminator_forward.6} parent=31 // pred_region
          %vm265 = vcmask 261120
          %266 = vst.msk [vmem:[#allocation2] sm:$0xff] %vm265, 0.0
          %267 = vst.msk [vmem:[#allocation2 + $0x8] sm:$0xff] %vm265, 0.0
          %268 = vst.msk [vmem:[#allocation2 + $0x10] sm:$0xff] %vm265, 0.0
          %269 = vst.msk [vmem:[#allocation2 + $0x18] sm:$0xff] %vm265, 0.0
          %270 = vst.msk [vmem:[#allocation2 + $0x20] sm:$0xff] %vm265, 0.0
          %271 = vst.msk [vmem:[#allocation2 + $0x28] sm:$0xff] %vm265, 0.0
          %272 = vst.msk [vmem:[#allocation2 + $0x30] sm:$0xff] %vm265, 0.0
          %273 = vst.msk [vmem:[#allocation2 + $0x38] sm:$0xff] %vm265, 0.0
          %274 = vst.msk [vmem:[#allocation2 + $0x40] sm:$0xff] %vm265, 0.0
          %275 = vst.msk [vmem:[#allocation2 + $0x48] sm:$0xff] %vm265, 0.0
          %276 = vst.msk [vmem:[#allocation2 + $0x50] sm:$0xff] %vm265, 0.0
          %277 = vst.msk [vmem:[#allocation2 + $0x58] sm:$0xff] %vm265, 0.0
          %278 = vst.msk [vmem:[#allocation2 + $0x60] sm:$0xff] %vm265, 0.0
          %279 = vst.msk [vmem:[#allocation2 + $0x68] sm:$0xff] %vm265, 0.0
          %280 = vst.msk [vmem:[#allocation2 + $0x70] sm:$0xff] %vm265, 0.0
          %281 = vst.msk [vmem:[#allocation2 + $0x78] sm:$0xff] %vm265, 0.0
          %282 = vst.msk [vmem:[#allocation2 + $0x80] sm:$0xff] %vm265, 0.0
          %283 = vst.msk [vmem:[#allocation2 + $0x88] sm:$0xff] %vm265, 0.0
          %284 = vst.msk [vmem:[#allocation2 + $0x90] sm:$0xff] %vm265, 0.0
          %285 = vst.msk [vmem:[#allocation2 + $0x98] sm:$0xff] %vm265, 0.0
          %286 = vst.msk [vmem:[#allocation2 + $0xa0] sm:$0xff] %vm265, 0.0
          %287 = vst.msk [vmem:[#allocation2 + $0xa8] sm:$0xff] %vm265, 0.0
          %288 = vst.msk [vmem:[#allocation2 + $0xb0] sm:$0xff] %vm265, 0.0
          %289 = vst.msk [vmem:[#allocation2 + $0xb8] sm:$0xff] %vm265, 0.0
          %290 = vst.msk [vmem:[#allocation2 + $0xc0] sm:$0xff] %vm265, 0.0
          %291 = vst.msk [vmem:[#allocation2 + $0xc8] sm:$0xff] %vm265, 0.0
          %292 = vst.msk [vmem:[#allocation2 + $0xd0] sm:$0xff] %vm265, 0.0
          %293 = vst.msk [vmem:[#allocation2 + $0xd8] sm:$0xff] %vm265, 0.0
          %294 = vst.msk [vmem:[#allocation2 + $0xe0] sm:$0xff] %vm265, 0.0
          %295 = vst.msk [vmem:[#allocation2 + $0xe8] sm:$0xff] %vm265, 0.0
          %296 = vst.msk [vmem:[#allocation2 + $0xf0] sm:$0xff] %vm265, 0.0
          %297 = vst.msk [vmem:[#allocation2 + $0xf8] sm:$0xff] %vm265, 0.0
        $region40: #{discriminator_forward.6} parent=31 // pred_fallthru
          _
        %v298 = vld [vmem:[#allocation2] sm:$0xff]
        %v299 = vld [vmem:[#allocation2 + $0x8] sm:$0xff]
        %v300 = vld [vmem:[#allocation2 + $0x10] sm:$0xff]
        %v301 = vld [vmem:[#allocation2 + $0x18] sm:$0xff]
        %v302 = vld [vmem:[#allocation2 + $0x20] sm:$0xff]
        %v303 = vld [vmem:[#allocation2 + $0x28] sm:$0xff]
        %v304 = vld [vmem:[#allocation2 + $0x30] sm:$0xff]
        %v305 = vld [vmem:[#allocation2 + $0x38] sm:$0xff]
        %v306 = vld [vmem:[#allocation2 + $0x40] sm:$0xff]
        %v307 = vld [vmem:[#allocation2 + $0x48] sm:$0xff]
        %v308 = vld [vmem:[#allocation2 + $0x50] sm:$0xff]
        %v309 = vld [vmem:[#allocation2 + $0x58] sm:$0xff]
        %v310 = vld [vmem:[#allocation2 + $0x60] sm:$0xff]
        %v311 = vld [vmem:[#allocation2 + $0x68] sm:$0xff]
        %v312 = vld [vmem:[#allocation2 + $0x70] sm:$0xff]
        %v313 = vld [vmem:[#allocation2 + $0x78] sm:$0xff]
        %v314 = vld [vmem:[#allocation2 + $0x80] sm:$0xff]
        %v315 = vld [vmem:[#allocation2 + $0x88] sm:$0xff]
        %v316 = vld [vmem:[#allocation2 + $0x90] sm:$0xff]
        %v317 = vld [vmem:[#allocation2 + $0x98] sm:$0xff]
        %v318 = vld [vmem:[#allocation2 + $0xa0] sm:$0xff]
        %v319 = vld [vmem:[#allocation2 + $0xa8] sm:$0xff]
        %v320 = vld [vmem:[#allocation2 + $0xb0] sm:$0xff]
        %v321 = vld [vmem:[#allocation2 + $0xb8] sm:$0xff]
        %v322 = vld [vmem:[#allocation2 + $0xc0] sm:$0xff]
        %v323 = vld [vmem:[#allocation2 + $0xc8] sm:$0xff]
        %v324 = vld [vmem:[#allocation2 + $0xd0] sm:$0xff]
        %v325 = vld [vmem:[#allocation2 + $0xd8] sm:$0xff]
        %v326 = vld [vmem:[#allocation2 + $0xe0] sm:$0xff]
        %v327 = vld [vmem:[#allocation2 + $0xe8] sm:$0xff]
        %v328 = vld [vmem:[#allocation2 + $0xf0] sm:$0xff]
        %v329 = vld [vmem:[#allocation2 + $0xf8] sm:$0xff]
        %v330 = vld [vmem:[%s242] sm:$0xf]
        %v331 = vld [vmem:[%s242 + $0x4] sm:$0xf]
        %v332 = vld [vmem:[%s242 + $0x8] sm:$0xf]
        %v333 = vld [vmem:[%s242 + $0xc] sm:$0xf]
        %v334 = vld [vmem:[%s242 + $0x10] sm:$0xf]
        %v335 = vld [vmem:[%s242 + $0x14] sm:$0xf]
        %v336 = vld [vmem:[%s242 + $0x18] sm:$0xf]
        %v337 = vld [vmem:[%s242 + $0x1c] sm:$0xf]
        %v338 = vld [vmem:[%s242 + $0x20] sm:$0xf]
        %v339 = vld [vmem:[%s242 + $0x24] sm:$0xf]
        %v340 = vld [vmem:[%s242 + $0x28] sm:$0xf]
        %v341 = vld [vmem:[%s242 + $0x2c] sm:$0xf]
        %v342 = vld [vmem:[%s242 + $0x30] sm:$0xf]
        %v343 = vld [vmem:[%s242 + $0x34] sm:$0xf]
        %v344 = vld [vmem:[%s242 + $0x38] sm:$0xf]
        %v345 = vld [vmem:[%s242 + $0x3c] sm:$0xf]
        %v346 = vld [vmem:[%s242 + $0x40] sm:$0xf]
        %v347 = vld [vmem:[%s242 + $0x44] sm:$0xf]
        %v348 = vld [vmem:[%s242 + $0x48] sm:$0xf]
        %v349 = vld [vmem:[%s242 + $0x4c] sm:$0xf]
        %v350 = vld [vmem:[%s242 + $0x50] sm:$0xf]
        %v351 = vld [vmem:[%s242 + $0x54] sm:$0xf]
        %v352 = vld [vmem:[%s242 + $0x58] sm:$0xf]
        %v353 = vld [vmem:[%s242 + $0x5c] sm:$0xf]
        %v354 = vld [vmem:[%s242 + $0x60] sm:$0xf]
        %v355 = vld [vmem:[%s242 + $0x64] sm:$0xf]
        %v356 = vld [vmem:[%s242 + $0x68] sm:$0xf]
        %v357 = vld [vmem:[%s242 + $0x6c] sm:$0xf]
        %v358 = vld [vmem:[%s242 + $0x70] sm:$0xf]
        %v359 = vld [vmem:[%s242 + $0x74] sm:$0xf]
        %v360 = vld [vmem:[%s242 + $0x78] sm:$0xf]
        %v361 = vld [vmem:[%s242 + $0x7c] sm:$0xf]
        %v362 = vld [vmem:[%s250] sm:$0x3]
        %v395 = vunpack.c.l.b16 %v330
        %v396 = vunpack.c.l.b16 %v331
        %v397 = vunpack.c.l.b16 %v332
        %v398 = vunpack.c.l.b16 %v333
        %v399 = vunpack.c.l.b16 %v334
        %v400 = vunpack.c.l.b16 %v335
        %v401 = vunpack.c.l.b16 %v336
        %v402 = vunpack.c.l.b16 %v337
        %v403 = vunpack.c.l.b16 %v338
        %v404 = vunpack.c.l.b16 %v339
        %v405 = vunpack.c.l.b16 %v340
        %v406 = vunpack.c.l.b16 %v341
        %v407 = vunpack.c.l.b16 %v342
        %v408 = vunpack.c.l.b16 %v343
        %v409 = vunpack.c.l.b16 %v344
        %v410 = vunpack.c.l.b16 %v345
        %v411 = vunpack.c.l.b16 %v346
        %v412 = vunpack.c.l.b16 %v347
        %v413 = vunpack.c.l.b16 %v348
        %v414 = vunpack.c.l.b16 %v349
        %v415 = vunpack.c.l.b16 %v350
        %v416 = vunpack.c.l.b16 %v351
        %v417 = vunpack.c.l.b16 %v352
        %v418 = vunpack.c.l.b16 %v353
        %v419 = vunpack.c.l.b16 %v354
        %v420 = vunpack.c.l.b16 %v355
        %v421 = vunpack.c.l.b16 %v356
        %v422 = vunpack.c.l.b16 %v357
        %v423 = vunpack.c.l.b16 %v358
        %v424 = vunpack.c.l.b16 %v359
        %v425 = vunpack.c.l.b16 %v360
        %v426 = vunpack.c.l.b16 %v361
        %v427 = vpack.c.b16 %v396, %v395
        %v428 = vpack.c.b16 %v398, %v397
        %v429 = vpack.c.b16 %v400, %v399
        %v430 = vpack.c.b16 %v402, %v401
        %v431 = vpack.c.b16 %v404, %v403
        %v432 = vpack.c.b16 %v406, %v405
        %v433 = vpack.c.b16 %v408, %v407
        %v434 = vpack.c.b16 %v410, %v409
        %v435 = vpack.c.b16 %v412, %v411
        %v436 = vpack.c.b16 %v414, %v413
        %v437 = vpack.c.b16 %v416, %v415
        %v438 = vpack.c.b16 %v418, %v417
        %v439 = vpack.c.b16 %v420, %v419
        %v440 = vpack.c.b16 %v422, %v421
        %v441 = vpack.c.b16 %v424, %v423
        %v442 = vpack.c.b16 %v426, %v425
        %vm443 = vcmask 23552
        %v445 = vsel %vm443, %v427, 0
        %v448 = vsel %vm443, %v428, 0
        %v451 = vsel %vm443, %v429, 0
        %v454 = vsel %vm443, %v430, 0
        %v457 = vsel %vm443, %v431, 0
        %v460 = vsel %vm443, %v432, 0
        %v463 = vsel %vm443, %v433, 0
        %v466 = vsel %vm443, %v434, 0
        %v469 = vsel %vm443, %v435, 0
        %v472 = vsel %vm443, %v436, 0
        %v475 = vsel %vm443, %v437, 0
        %v478 = vsel %vm443, %v438, 0
        %v481 = vsel %vm443, %v439, 0
        %v484 = vsel %vm443, %v440, 0
        %v487 = vsel %vm443, %v441, 0
        %v490 = vsel %vm443, %v442, 0
        %vm492 = vcmask 1040384
        %vm493 = vcmask 1041408
        %v494 = vsel %vm492, 4294967295, 65535
        %v495 = vsel %vm493, %v494, 0
        %v497 = vand.u32 %v362, %v495
        %499 = vmatprep.subr.bf16.mxu0 0
        %500 = vmatpush1.bf16.msra.mxu0 %v497
        %501 = vmatprep.subr.bf16.mxu0 0
        %502 = vmatpush1.bf16.msra.mxu0 0
        %503 = vmatprep.subr.bf16.mxu0 0
        %504 = vmatpush1.bf16.msra.mxu0 0
        %505 = vmatprep.subr.bf16.mxu0 0
        %506 = vmatpush1.bf16.msra.mxu0 0
        %507 = vmatprep.subr.bf16.mxu0 0
        %508 = vmatpush1.bf16.msra.mxu0 0
        %509 = vmatprep.subr.bf16.mxu0 0
        %510 = vmatpush1.bf16.msra.mxu0 0
        %511 = vmatprep.subr.bf16.mxu0 0
        %512 = vmatpush1.bf16.msra.mxu0 0
        %513 = vmatprep.subr.bf16.mxu0 0
        %514 = vmatpush1.bf16.msra.mxu0 0
        %515 = vmatprep.subr.bf16.mxu0 0
        %516 = vmatpush1.bf16.msra.mxu0 0
        %517 = vmatprep.subr.bf16.mxu0 0
        %518 = vmatpush1.bf16.msra.mxu0 0
        %519 = vmatprep.subr.bf16.mxu0 0
        %520 = vmatpush1.bf16.msra.mxu0 0
        %521 = vmatprep.subr.bf16.mxu0 0
        %522 = vmatpush1.bf16.msra.mxu0 0
        %523 = vmatprep.subr.bf16.mxu0 0
        %524 = vmatpush1.bf16.msra.mxu0 0
        %525 = vmatprep.subr.bf16.mxu0 0
        %526 = vmatpush1.bf16.msra.mxu0 0
        %527 = vmatprep.subr.bf16.mxu0 0
        %528 = vmatpush1.bf16.msra.mxu0 0
        %529 = vmatprep.subr.bf16.mxu0 0
        %530 = vmatpush1.bf16.msra.mxu0 0
        %531 = vmatprep.mubr.bf16.mxu0 0
        %532 = vmatmul.mubr.bf16.gmra.mrb[0].mxu0 %v445
        %v533 = vpop.f32.mrb[0].mxu0
        %v534 = vadd.f32 0.0, %v533
        %v535 = vpop.f32.mrb[0].mxu0
        %v536 = vpop.f32.mrb[0].mxu0
        %v537 = vadd.f32 0.0, %v536
        %v538 = vpop.f32.mrb[0].mxu0
        %539 = vmatprep.mubr.bf16.mxu0 0
        %540 = vmatmul.mubr.bf16.gmra.mrb[0].mxu0 %v448
        %v541 = vpop.f32.mrb[0].mxu0
        %v542 = vadd.f32 0.0, %v541
        %v543 = vpop.f32.mrb[0].mxu0
        %v544 = vpop.f32.mrb[0].mxu0
        %v545 = vadd.f32 0.0, %v544
        %v546 = vpop.f32.mrb[0].mxu0
        %547 = vmatprep.mubr.bf16.mxu0 0
        %548 = vmatmul.mubr.bf16.gmra.mrb[0].mxu0 %v451
        %v549 = vpop.f32.mrb[0].mxu0
        %v550 = vadd.f32 0.0, %v549
        %v551 = vpop.f32.mrb[0].mxu0
        %v552 = vpop.f32.mrb[0].mxu0
        %v553 = vadd.f32 0.0, %v552
        %v554 = vpop.f32.mrb[0].mxu0
        %555 = vmatprep.mubr.bf16.mxu0 0
        %556 = vmatmul.mubr.bf16.gmra.mrb[0].mxu0 %v454
        %v557 = vpop.f32.mrb[0].mxu0
        %v558 = vadd.f32 0.0, %v557
        %v559 = vpop.f32.mrb[0].mxu0
        %v560 = vpop.f32.mrb[0].mxu0
        %v561 = vadd.f32 0.0, %v560
        %v562 = vpop.f32.mrb[0].mxu0
        %563 = vmatprep.mubr.bf16.mxu0 0
        %564 = vmatmul.mubr.bf16.gmra.mrb[0].mxu0 %v457
        %v565 = vpop.f32.mrb[0].mxu0
        %v566 = vadd.f32 0.0, %v565
        %v567 = vpop.f32.mrb[0].mxu0
        %v568 = vpop.f32.mrb[0].mxu0
        %v569 = vadd.f32 0.0, %v568
        %v570 = vpop.f32.mrb[0].mxu0
        %571 = vmatprep.mubr.bf16.mxu0 0
        %572 = vmatmul.mubr.bf16.gmra.mrb[0].mxu0 %v460
        %v573 = vpop.f32.mrb[0].mxu0
        %v574 = vadd.f32 0.0, %v573
        %v575 = vpop.f32.mrb[0].mxu0
        %v576 = vpop.f32.mrb[0].mxu0
        %v577 = vadd.f32 0.0, %v576
        %v578 = vpop.f32.mrb[0].mxu0
        %579 = vmatprep.mubr.bf16.mxu0 0
        %580 = vmatmul.mubr.bf16.gmra.mrb[0].mxu0 %v463
        %v581 = vpop.f32.mrb[0].mxu0
        %v582 = vadd.f32 0.0, %v581
        %v583 = vpop.f32.mrb[0].mxu0
        %v584 = vpop.f32.mrb[0].mxu0
        %v585 = vadd.f32 0.0, %v584
        %v586 = vpop.f32.mrb[0].mxu0
        %587 = vmatprep.mubr.bf16.mxu0 0
        %588 = vmatmul.mubr.bf16.gmra.mrb[0].mxu0 %v466
        %v589 = vpop.f32.mrb[0].mxu0
        %v590 = vadd.f32 0.0, %v589
        %v591 = vpop.f32.mrb[0].mxu0
        %v592 = vpop.f32.mrb[0].mxu0
        %v593 = vadd.f32 0.0, %v592
        %v594 = vpop.f32.mrb[0].mxu0
        %595 = vmatprep.mubr.bf16.mxu0 0
        %596 = vmatmul.mubr.bf16.gmra.mrb[0].mxu0 %v469
        %v597 = vpop.f32.mrb[0].mxu0
        %v598 = vadd.f32 0.0, %v597
        %v599 = vpop.f32.mrb[0].mxu0
        %v600 = vpop.f32.mrb[0].mxu0
        %v601 = vadd.f32 0.0, %v600
        %v602 = vpop.f32.mrb[0].mxu0
        %603 = vmatprep.mubr.bf16.mxu0 0
        %604 = vmatmul.mubr.bf16.gmra.mrb[0].mxu0 %v472
        %v605 = vpop.f32.mrb[0].mxu0
        %v606 = vadd.f32 0.0, %v605
        %v607 = vpop.f32.mrb[0].mxu0
        %v608 = vpop.f32.mrb[0].mxu0
        %v609 = vadd.f32 0.0, %v608
        %v610 = vpop.f32.mrb[0].mxu0
        %611 = vmatprep.mubr.bf16.mxu0 0
        %612 = vmatmul.mubr.bf16.gmra.mrb[0].mxu0 %v475
        %v613 = vpop.f32.mrb[0].mxu0
        %v614 = vadd.f32 0.0, %v613
        %v615 = vpop.f32.mrb[0].mxu0
        %v616 = vpop.f32.mrb[0].mxu0
        %v617 = vadd.f32 0.0, %v616
        %v618 = vpop.f32.mrb[0].mxu0
        %619 = vmatprep.mubr.bf16.mxu0 0
        %620 = vmatmul.mubr.bf16.gmra.mrb[0].mxu0 %v478
        %v621 = vpop.f32.mrb[0].mxu0
        %v622 = vadd.f32 0.0, %v621
        %v623 = vpop.f32.mrb[0].mxu0
        %v624 = vpop.f32.mrb[0].mxu0
        %v625 = vadd.f32 0.0, %v624
        %v626 = vpop.f32.mrb[0].mxu0
        %627 = vmatprep.mubr.bf16.mxu0 0
        %628 = vmatmul.mubr.bf16.gmra.mrb[0].mxu0 %v481
        %v629 = vpop.f32.mrb[0].mxu0
        %v630 = vadd.f32 0.0, %v629
        %v631 = vpop.f32.mrb[0].mxu0
        %v632 = vpop.f32.mrb[0].mxu0
        %v633 = vadd.f32 0.0, %v632
        %v634 = vpop.f32.mrb[0].mxu0
        %635 = vmatprep.mubr.bf16.mxu0 0
        %636 = vmatmul.mubr.bf16.gmra.mrb[0].mxu0 %v484
        %v637 = vpop.f32.mrb[0].mxu0
        %v638 = vadd.f32 0.0, %v637
        %v639 = vpop.f32.mrb[0].mxu0
        %v640 = vpop.f32.mrb[0].mxu0
        %v641 = vadd.f32 0.0, %v640
        %v642 = vpop.f32.mrb[0].mxu0
        %643 = vmatprep.mubr.bf16.mxu0 0
        %644 = vmatmul.mubr.bf16.gmra.mrb[0].mxu0 %v487
        %v645 = vpop.f32.mrb[0].mxu0
        %v646 = vadd.f32 0.0, %v645
        %v647 = vpop.f32.mrb[0].mxu0
        %v648 = vpop.f32.mrb[0].mxu0
        %v649 = vadd.f32 0.0, %v648
        %v650 = vpop.f32.mrb[0].mxu0
        %651 = vmatprep.mubr.bf16.mxu0 0
        %652 = vmatmul.mubr.bf16.gmra.mrb[0].mxu0 %v490
        %v653 = vpop.f32.mrb[0].mxu0
        %v654 = vadd.f32 0.0, %v653
        %v655 = vpop.f32.mrb[0].mxu0
        %v656 = vpop.f32.mrb[0].mxu0
        %v657 = vadd.f32 0.0, %v656
        %v658 = vpop.f32.mrb[0].mxu0
        %659 = vdwg.mxu0
        %v660 = vadd.f32 %v298, %v534
        %v661 = vadd.f32 %v299, %v537
        %v662 = vadd.f32 %v300, %v542
        %v663 = vadd.f32 %v301, %v545
        %v664 = vadd.f32 %v302, %v550
        %v665 = vadd.f32 %v303, %v553
        %v666 = vadd.f32 %v304, %v558
        %v667 = vadd.f32 %v305, %v561
        %v668 = vadd.f32 %v306, %v566
        %v669 = vadd.f32 %v307, %v569
        %v670 = vadd.f32 %v308, %v574
        %v671 = vadd.f32 %v309, %v577
        %v672 = vadd.f32 %v310, %v582
        %v673 = vadd.f32 %v311, %v585
        %v674 = vadd.f32 %v312, %v590
        %v675 = vadd.f32 %v313, %v593
        %v676 = vadd.f32 %v314, %v598
        %v677 = vadd.f32 %v315, %v601
        %v678 = vadd.f32 %v316, %v606
        %v679 = vadd.f32 %v317, %v609
        %v680 = vadd.f32 %v318, %v614
        %v681 = vadd.f32 %v319, %v617
        %v682 = vadd.f32 %v320, %v622
        %v683 = vadd.f32 %v321, %v625
        %v684 = vadd.f32 %v322, %v630
        %v685 = vadd.f32 %v323, %v633
        %v686 = vadd.f32 %v324, %v638
        %v687 = vadd.f32 %v325, %v641
        %v688 = vadd.f32 %v326, %v646
        %v689 = vadd.f32 %v327, %v649
        %v690 = vadd.f32 %v328, %v654
        %v691 = vadd.f32 %v329, %v657
        %vm692 = vcmask 261120
        %693 = vst.msk [vmem:[#allocation2] sm:$0xff] %vm692, %v660
        %694 = vst.msk [vmem:[#allocation2 + $0x8] sm:$0xff] %vm692, %v661
        %695 = vst.msk [vmem:[#allocation2 + $0x10] sm:$0xff] %vm692, %v662
        %696 = vst.msk [vmem:[#allocation2 + $0x18] sm:$0xff] %vm692, %v663
        %697 = vst.msk [vmem:[#allocation2 + $0x20] sm:$0xff] %vm692, %v664
        %698 = vst.msk [vmem:[#allocation2 + $0x28] sm:$0xff] %vm692, %v665
        %699 = vst.msk [vmem:[#allocation2 + $0x30] sm:$0xff] %vm692, %v666
        %700 = vst.msk [vmem:[#allocation2 + $0x38] sm:$0xff] %vm692, %v667
        %701 = vst.msk [vmem:[#allocation2 + $0x40] sm:$0xff] %vm692, %v668
        %702 = vst.msk [vmem:[#allocation2 + $0x48] sm:$0xff] %vm692, %v669
        %703 = vst.msk [vmem:[#allocation2 + $0x50] sm:$0xff] %vm692, %v670
        %704 = vst.msk [vmem:[#allocation2 + $0x58] sm:$0xff] %vm692, %v671
        %705 = vst.msk [vmem:[#allocation2 + $0x60] sm:$0xff] %vm692, %v672
        %706 = vst.msk [vmem:[#allocation2 + $0x68] sm:$0xff] %vm692, %v673
        %707 = vst.msk [vmem:[#allocation2 + $0x70] sm:$0xff] %vm692, %v674
        %708 = vst.msk [vmem:[#allocation2 + $0x78] sm:$0xff] %vm692, %v675
        %709 = vst.msk [vmem:[#allocation2 + $0x80] sm:$0xff] %vm692, %v676
        %710 = vst.msk [vmem:[#allocation2 + $0x88] sm:$0xff] %vm692, %v677
        %711 = vst.msk [vmem:[#allocation2 + $0x90] sm:$0xff] %vm692, %v678
        %712 = vst.msk [vmem:[#allocation2 + $0x98] sm:$0xff] %vm692, %v679
        %713 = vst.msk [vmem:[#allocation2 + $0xa0] sm:$0xff] %vm692, %v680
        %714 = vst.msk [vmem:[#allocation2 + $0xa8] sm:$0xff] %vm692, %v681
        %715 = vst.msk [vmem:[#allocation2 + $0xb0] sm:$0xff] %vm692, %v682
        %716 = vst.msk [vmem:[#allocation2 + $0xb8] sm:$0xff] %vm692, %v683
        %717 = vst.msk [vmem:[#allocation2 + $0xc0] sm:$0xff] %vm692, %v684
        %718 = vst.msk [vmem:[#allocation2 + $0xc8] sm:$0xff] %vm692, %v685
        %719 = vst.msk [vmem:[#allocation2 + $0xd0] sm:$0xff] %vm692, %v686
        %720 = vst.msk [vmem:[#allocation2 + $0xd8] sm:$0xff] %vm692, %v687
        %721 = vst.msk [vmem:[#allocation2 + $0xe0] sm:$0xff] %vm692, %v688
        %722 = vst.msk [vmem:[#allocation2 + $0xe8] sm:$0xff] %vm692, %v689
        %723 = vst.msk [vmem:[#allocation2 + $0xf0] sm:$0xff] %vm692, %v690
        %724 = vst.msk [vmem:[#allocation2 + $0xf8] sm:$0xff] %vm692, %v691
        // Predicated region
        $region41: #{discriminator_forward.6} parent=31 // pred_check
          %p725 = pneg %p261
        $region42: #{discriminator_forward.6} parent=31 // pred_check_branch
          %727 = sbr.rel (%p725) target = $region44
        $region43: #{discriminator_forward.6} parent=31 // pred_region
          %v728 = vld [vmem:[#allocation2] sm:$0xff]
          %v729 = vld [vmem:[#allocation2 + $0x8] sm:$0xff]
          %v730 = vld [vmem:[#allocation2 + $0x10] sm:$0xff]
          %v731 = vld [vmem:[#allocation2 + $0x18] sm:$0xff]
          %v732 = vld [vmem:[#allocation2 + $0x20] sm:$0xff]
          %v733 = vld [vmem:[#allocation2 + $0x28] sm:$0xff]
          %v734 = vld [vmem:[#allocation2 + $0x30] sm:$0xff]
          %v735 = vld [vmem:[#allocation2 + $0x38] sm:$0xff]
          %v736 = vld [vmem:[#allocation2 + $0x40] sm:$0xff]
          %v737 = vld [vmem:[#allocation2 + $0x48] sm:$0xff]
          %v738 = vld [vmem:[#allocation2 + $0x50] sm:$0xff]
          %v739 = vld [vmem:[#allocation2 + $0x58] sm:$0xff]
          %v740 = vld [vmem:[#allocation2 + $0x60] sm:$0xff]
          %v741 = vld [vmem:[#allocation2 + $0x68] sm:$0xff]
          %v742 = vld [vmem:[#allocation2 + $0x70] sm:$0xff]
          %v743 = vld [vmem:[#allocation2 + $0x78] sm:$0xff]
          %v744 = vld [vmem:[#allocation2 + $0x80] sm:$0xff]
          %v745 = vld [vmem:[#allocation2 + $0x88] sm:$0xff]
          %v746 = vld [vmem:[#allocation2 + $0x90] sm:$0xff]
          %v747 = vld [vmem:[#allocation2 + $0x98] sm:$0xff]
          %v748 = vld [vmem:[#allocation2 + $0xa0] sm:$0xff]
          %v749 = vld [vmem:[#allocation2 + $0xa8] sm:$0xff]
          %v750 = vld [vmem:[#allocation2 + $0xb0] sm:$0xff]
          %v751 = vld [vmem:[#allocation2 + $0xb8] sm:$0xff]
          %v752 = vld [vmem:[#allocation2 + $0xc0] sm:$0xff]
          %v753 = vld [vmem:[#allocation2 + $0xc8] sm:$0xff]
          %v754 = vld [vmem:[#allocation2 + $0xd0] sm:$0xff]
          %v755 = vld [vmem:[#allocation2 + $0xd8] sm:$0xff]
          %v756 = vld [vmem:[#allocation2 + $0xe0] sm:$0xff]
          %v757 = vld [vmem:[#allocation2 + $0xe8] sm:$0xff]
          %v758 = vld [vmem:[#allocation2 + $0xf0] sm:$0xff]
          %v759 = vld [vmem:[#allocation2 + $0xf8] sm:$0xff]
          %v760 = vld [vmem:[#allocation3] sm:$0x1]
          %v762 = vlaneseq
          %v763 = vshrl.u32 %v762, 7
          %v764 = vsub.s32 0, %v763
          %v765 = vrot.slane %v760, %v764
          %v767 = vadd.f32 %v728, %v765
          %v768 = vadd.f32 %v729, %v765
          %v769 = vadd.f32 %v730, %v765
          %v770 = vadd.f32 %v731, %v765
          %v771 = vadd.f32 %v732, %v765
          %v772 = vadd.f32 %v733, %v765
          %v773 = vadd.f32 %v734, %v765
          %v774 = vadd.f32 %v735, %v765
          %v775 = vadd.f32 %v736, %v765
          %v776 = vadd.f32 %v737, %v765
          %v777 = vadd.f32 %v738, %v765
          %v778 = vadd.f32 %v739, %v765
          %v779 = vadd.f32 %v740, %v765
          %v780 = vadd.f32 %v741, %v765
          %v781 = vadd.f32 %v742, %v765
          %v782 = vadd.f32 %v743, %v765
          %v783 = vadd.f32 %v744, %v765
          %v784 = vadd.f32 %v745, %v765
          %v785 = vadd.f32 %v746, %v765
          %v786 = vadd.f32 %v747, %v765
          %v787 = vadd.f32 %v748, %v765
          %v788 = vadd.f32 %v749, %v765
          %v789 = vadd.f32 %v750, %v765
          %v790 = vadd.f32 %v751, %v765
          %v791 = vadd.f32 %v752, %v765
          %v792 = vadd.f32 %v753, %v765
          %v793 = vadd.f32 %v754, %v765
          %v794 = vadd.f32 %v755, %v765
          %v795 = vadd.f32 %v756, %v765
          %v796 = vadd.f32 %v757, %v765
          %v797 = vadd.f32 %v758, %v765
          %v798 = vadd.f32 %v759, %v765
          %v799 = vpack.c.bf16 %v768, %v767
          %v800 = vpack.c.bf16 %v770, %v769
          %v801 = vpack.c.bf16 %v772, %v771
          %v802 = vpack.c.bf16 %v774, %v773
          %v803 = vpack.c.bf16 %v776, %v775
          %v804 = vpack.c.bf16 %v778, %v777
          %v805 = vpack.c.bf16 %v780, %v779
          %v806 = vpack.c.bf16 %v782, %v781
          %v807 = vpack.c.bf16 %v784, %v783
          %v808 = vpack.c.bf16 %v786, %v785
          %v809 = vpack.c.bf16 %v788, %v787
          %v810 = vpack.c.bf16 %v790, %v789
          %v811 = vpack.c.bf16 %v792, %v791
          %v812 = vpack.c.bf16 %v794, %v793
          %v813 = vpack.c.bf16 %v796, %v795
          %v814 = vpack.c.bf16 %v798, %v797
          %v831 = vunpack.c.l.b16 %v799
          %v832 = vunpack.c.h.b16 %v799
          %v833 = vunpack.c.l.b16 %v800
          %v834 = vunpack.c.h.b16 %v800
          %v835 = vunpack.c.l.b16 %v801
          %v836 = vunpack.c.h.b16 %v801
          %v837 = vunpack.c.l.b16 %v802
          %v838 = vunpack.c.h.b16 %v802
          %v839 = vunpack.c.l.b16 %v803
          %v840 = vunpack.c.h.b16 %v803
          %v841 = vunpack.c.l.b16 %v804
          %v842 = vunpack.c.h.b16 %v804
          %v843 = vunpack.c.l.b16 %v805
          %v844 = vunpack.c.h.b16 %v805
          %v845 = vunpack.c.l.b16 %v806
          %v846 = vunpack.c.h.b16 %v806
          %v847 = vunpack.c.l.b16 %v807
          %v848 = vunpack.c.h.b16 %v807
          %v849 = vunpack.c.l.b16 %v808
          %v850 = vunpack.c.h.b16 %v808
          %v851 = vunpack.c.l.b16 %v809
          %v852 = vunpack.c.h.b16 %v809
          %v853 = vunpack.c.l.b16 %v810
          %v854 = vunpack.c.h.b16 %v810
          %v855 = vunpack.c.l.b16 %v811
          %v856 = vunpack.c.h.b16 %v811
          %v857 = vunpack.c.l.b16 %v812
          %v858 = vunpack.c.h.b16 %v812
          %v859 = vunpack.c.l.b16 %v813
          %v860 = vunpack.c.h.b16 %v813
          %v861 = vunpack.c.l.b16 %v814
          %v862 = vunpack.c.h.b16 %v814
          %v863 = vpack.c.b16 %v831, %v831
          %v864 = vpack.c.b16 %v832, %v832
          %v865 = vpack.c.b16 %v833, %v833
          %v866 = vpack.c.b16 %v834, %v834
          %v867 = vpack.c.b16 %v835, %v835
          %v868 = vpack.c.b16 %v836, %v836
          %v869 = vpack.c.b16 %v837, %v837
          %v870 = vpack.c.b16 %v838, %v838
          %v871 = vpack.c.b16 %v839, %v839
          %v872 = vpack.c.b16 %v840, %v840
          %v873 = vpack.c.b16 %v841, %v841
          %v874 = vpack.c.b16 %v842, %v842
          %v875 = vpack.c.b16 %v843, %v843
          %v876 = vpack.c.b16 %v844, %v844
          %v877 = vpack.c.b16 %v845, %v845
          %v878 = vpack.c.b16 %v846, %v846
          %v879 = vpack.c.b16 %v847, %v847
          %v880 = vpack.c.b16 %v848, %v848
          %v881 = vpack.c.b16 %v849, %v849
          %v882 = vpack.c.b16 %v850, %v850
          %v883 = vpack.c.b16 %v851, %v851
          %v884 = vpack.c.b16 %v852, %v852
          %v885 = vpack.c.b16 %v853, %v853
          %v886 = vpack.c.b16 %v854, %v854
          %v887 = vpack.c.b16 %v855, %v855
          %v888 = vpack.c.b16 %v856, %v856
          %v889 = vpack.c.b16 %v857, %v857
          %v890 = vpack.c.b16 %v858, %v858
          %v891 = vpack.c.b16 %v859, %v859
          %v892 = vpack.c.b16 %v860, %v860
          %v893 = vpack.c.b16 %v861, %v861
          %v894 = vpack.c.b16 %v862, %v862
          %vm927 = vcmask 257024
          %928 = vst.msk [vmem:[%s258] sm:$0xf] %vm927, %v863
          %929 = vst.msk [vmem:[%s258 + $0x4] sm:$0xf] %vm927, %v864
          %930 = vst.msk [vmem:[%s258 + $0x8] sm:$0xf] %vm927, %v865
          %931 = vst.msk [vmem:[%s258 + $0xc] sm:$0xf] %vm927, %v866
          %932 = vst.msk [vmem:[%s258 + $0x10] sm:$0xf] %vm927, %v867
          %933 = vst.msk [vmem:[%s258 + $0x14] sm:$0xf] %vm927, %v868
          %934 = vst.msk [vmem:[%s258 + $0x18] sm:$0xf] %vm927, %v869
          %935 = vst.msk [vmem:[%s258 + $0x1c] sm:$0xf] %vm927, %v870
          %936 = vst.msk [vmem:[%s258 + $0x20] sm:$0xf] %vm927, %v871
          %937 = vst.msk [vmem:[%s258 + $0x24] sm:$0xf] %vm927, %v872
          %938 = vst.msk [vmem:[%s258 + $0x28] sm:$0xf] %vm927, %v873
          %939 = vst.msk [vmem:[%s258 + $0x2c] sm:$0xf] %vm927, %v874
          %940 = vst.msk [vmem:[%s258 + $0x30] sm:$0xf] %vm927, %v875
          %941 = vst.msk [vmem:[%s258 + $0x34] sm:$0xf] %vm927, %v876
          %942 = vst.msk [vmem:[%s258 + $0x38] sm:$0xf] %vm927, %v877
          %943 = vst.msk [vmem:[%s258 + $0x3c] sm:$0xf] %vm927, %v878
          %944 = vst.msk [vmem:[%s258 + $0x40] sm:$0xf] %vm927, %v879
          %945 = vst.msk [vmem:[%s258 + $0x44] sm:$0xf] %vm927, %v880
          %946 = vst.msk [vmem:[%s258 + $0x48] sm:$0xf] %vm927, %v881
          %947 = vst.msk [vmem:[%s258 + $0x4c] sm:$0xf] %vm927, %v882
          %948 = vst.msk [vmem:[%s258 + $0x50] sm:$0xf] %vm927, %v883
          %949 = vst.msk [vmem:[%s258 + $0x54] sm:$0xf] %vm927, %v884
          %950 = vst.msk [vmem:[%s258 + $0x58] sm:$0xf] %vm927, %v885
          %951 = vst.msk [vmem:[%s258 + $0x5c] sm:$0xf] %vm927, %v886
          %952 = vst.msk [vmem:[%s258 + $0x60] sm:$0xf] %vm927, %v887
          %953 = vst.msk [vmem:[%s258 + $0x64] sm:$0xf] %vm927, %v888
          %954 = vst.msk [vmem:[%s258 + $0x68] sm:$0xf] %vm927, %v889
          %955 = vst.msk [vmem:[%s258 + $0x6c] sm:$0xf] %vm927, %v890
          %956 = vst.msk [vmem:[%s258 + $0x70] sm:$0xf] %vm927, %v891
          %957 = vst.msk [vmem:[%s258 + $0x74] sm:$0xf] %vm927, %v892
          %958 = vst.msk [vmem:[%s258 + $0x78] sm:$0xf] %vm927, %v893
          %959 = vst.msk [vmem:[%s258 + $0x7c] sm:$0xf] %vm927, %v894
        $region44: #{discriminator_forward.6} parent=31 // pred_fallthru
          _
        %s960 = smul.u32 32, %s20
        %p961 = scmp.lt.s32.totalorder %s960, 63
        %s962 = scalar_select %p961, %s960, 63
        %p963 = scmp.lt.s32.totalorder %s21, 0
        %s964 = scalar_select %p963, %s21, 0
        %s965 = sadd.s32 %s964, %s962
        %s966 = smul.addr %s965, 4
        %s967 = scalar_lea.vmem %s3, %s966
        // Predicated region
        $region45: #{discriminator_forward.6} parent=31 // pred_check
          %p968 = pneg %p136
        $region46: #{discriminator_forward.6} parent=31 // pred_check_branch
          %970 = sbr.rel (%p968) target = $region48
        $region47: #{discriminator_forward.6} parent=31 // pred_region
          %s971 = smul.u32 32, %s20
        $region48: #{discriminator_forward.6} parent=31 // pred_fallthru
          _
      $region32: #{discriminator_forward.6} parent=5 // pred_fallthru
        _
      %p972 = scmp.le.s32.totalorder 2, %s10
      // Predicated region
      $region49: #{discriminator_forward.6} parent=5 // pred_check
        %p973 = pneg %p972
      $region50: #{discriminator_forward.6} parent=5 // pred_check_branch
        %975 = sbr.rel (%p973) target = $region52
      $region51: #{discriminator_forward.6} parent=5 // pred_region
        %s976 = ssub.s32 %s10, 2
        // Predicated region
        $region53: #{discriminator_forward.6} parent=51 // pred_check
          %p977 = pneg %p142
        $region54: #{discriminator_forward.6} parent=51 // pred_check_branch
          %979 = sbr.rel (%p977) target = $region56
        $region55: #{discriminator_forward.6} parent=51 // pred_region
          %s980 = smul.u32 32, %s23
          %p981 = scmp.lt.s32.totalorder %s980, 63
          %s982 = scalar_select %p981, %s980, 63
          %p983 = scmp.lt.s32.totalorder %s24, 0
          %s984 = scalar_select %p983, %s24, 0
          %s985 = sadd.s32 %s984, %s982
          %s986 = smul.addr %s985, 4
          %s987 = scalar_lea.vmem %s3, %s986
        $region56: #{discriminator_forward.6} parent=51 // pred_fallthru
          _
      $region52: #{discriminator_forward.6} parent=5 // pred_fallthru
        _
    $region6: #{discriminator_forward.6} parent=1 // loop_footer
      %s14 = sadd.s32 1, %s10
    $region7: #{discriminator_forward.6} parent=1 // loop_footer_branch
      %9 = sbr.rel target = $region3
    $region8: #{discriminator_forward.6} parent=1 // loop_exit
      _
    %988 = vsyncpa [#allocation4], 1
    %s989 = scalar_lea.sflag [#allocation4], 1
    %990 = vsyncpa %s989, 1

// kernel: discriminator_forward.7
$region0: #{discriminator_forward.7}
  #allocation0 [shape = 'u32[]', space=smem, size = 0x4, offset = 0x4, fixed_abs, tag = 'smem constant byte address 0x4 - core index']
  #allocation1 [shape = 'u32[144,128]{1,0:T(1,128)}', space=vmem, size = 0x12000, scoped, tag = 'internal scratch']
  #allocation2 [shape = 'f32[256,32]{1,0:T(8,128)}', space=vmem, size = 0x20000, scoped, tag = 'scratch operand']
  %s0 = inlined_call_operand.vmem [shape: bf16[512,288], index: 0, kind: input, shape index: {}]
  %s1 = inlined_call_operand.vmem [shape: bf16[288,32], index: 1, kind: input, shape index: {}]
  %s2 = inlined_call_operand.vmem [shape: f32[1,32], index: 2, kind: input, shape index: {}]
  %s3 = inlined_call_operand.vmem [shape: bf16[512,32], index: 3, kind: output, shape index: {}]
  %s4 = sld [smem:[#allocation0]]
  $region53: #{discriminator_forward.7} parent=0
    _
  %s6 = ssub.s32 1, %s4
  %s7 = scalar_select 0, %s6, %s4
  loop: start=0, step=1, limit=4
  $region2: #{discriminator_forward.7} parent=0 // loop_pre_header
    _
  $region3: #{discriminator_forward.7} parent=0 // loop_header
    %s9 = sphi 0, %s13
    %p10 = scmp.ge.s32.totalorder %s9, 4
    %s16 = sphi 0, %s35
    %s17 = sphi 0, %s31
    %s18 = sphi 0, %s27
    %s19 = sphi 0, %s16
    %s20 = sphi 0, %s17
    %s21 = sphi 0, %s18
    %s22 = sphi 0, %s19
    %s23 = sphi 0, %s20
    %s24 = sphi 0, %s21
    %s40 = sphi 0, %s42
    %s43 = sphi 0, %s40
    %s44 = sphi 0, %s43
    %s60 = sphi 0, %s44
    %s68 = sphi 0, %s70
    %s71 = sphi 0, %s68
    %s72 = sphi 0, %s71
    %s88 = sphi 0, %s72
    %s94 = sphi 0, %s96
    %s97 = sphi 0, %s94
    %s98 = sphi 0, %s97
    %s114 = sphi 0, %s98
    %s122 = sphi 0, %s124
    %s125 = sphi 0, %s122
    %s126 = sphi 0, %s125
    %s142 = sphi 0, %s126
  $region4: #{discriminator_forward.7} parent=0 // loop_header_branch
    %12 = sbr.rel (%p10) target = $region8
  $region5: #{discriminator_forward.7} parent=0 // loop_body
    %s14 = ssub.s32 %s9, 1
    %s15 = ssub.s32 %s9, 2
    %s25 = sadd.s32 1, %s18
    %p26 = scmp.ge.s32.totalorder %s25, 1
    %s27 = scalar_select %p26, 0, %s25
    %s28 = sadd.s32 1, %s17
    %s29 = scalar_select %p26, %s28, %s17
    %p30 = scmp.ge.s32.totalorder %s29, 1
    %s31 = scalar_select %p30, 0, %s29
    %s32 = sadd.s32 1, %s16
    %s33 = scalar_select %p30, %s32, %s16
    %p34 = scmp.ge.s32.totalorder %s33, 2
    %s35 = scalar_select %p34, 0, %s33
    %s36 = ssub.s32 %s16, %s35
    %s37 = ssub.s32 %s18, %s27
    %s38 = sor.u32 %s36, %s37
    %p39 = scmp.eq.s32.totalorder %s38, 0
    %s41 = sadd.s32 %s40, 1
    %s42 = scalar_select %p39, %s40, %s41
    %p45 = pneg %p39
    %p46 = scmp.eq.s32.totalorder %s9, 1
    %p47 = por %p45, %p46
    %p48 = scmp.ne.s32.totalorder %s40, %s43
    %p49 = scmp.eq.s32.totalorder %s9, 0
    %p50 = por %p48, %p49
    %p51 = scmp.ne.s32.totalorder %s40, %s43
    %p52 = scmp.eq.s32.totalorder %s14, 1
    %p53 = por %p51, %p52
    %p54 = scmp.ne.s32.totalorder %s43, %s44
    %p55 = scmp.eq.s32.totalorder %s14, 0
    %p56 = por %p54, %p55
    %p57 = scmp.ne.s32.totalorder %s43, %s44
    %p58 = scmp.eq.s32.totalorder %s15, 1
    %p59 = por %p57, %p58
    %p61 = scmp.ne.s32.totalorder %s44, %s60
    %p62 = scmp.eq.s32.totalorder %s15, 0
    %p63 = por %p61, %p62
    %s64 = ssub.s32 %s18, %s27
    %s65 = ssub.s32 %s17, %s31
    %s66 = sor.u32 %s64, %s65
    %p67 = scmp.eq.s32.totalorder %s66, 0
    %s69 = sadd.s32 %s68, 1
    %s70 = scalar_select %p67, %s68, %s69
    %p73 = pneg %p67
    %p74 = scmp.eq.s32.totalorder %s9, 1
    %p75 = por %p73, %p74
    %p76 = scmp.ne.s32.totalorder %s68, %s71
    %p77 = scmp.eq.s32.totalorder %s9, 0
    %p78 = por %p76, %p77
    %p79 = scmp.ne.s32.totalorder %s68, %s71
    %p80 = scmp.eq.s32.totalorder %s14, 1
    %p81 = por %p79, %p80
    %p82 = scmp.ne.s32.totalorder %s71, %s72
    %p83 = scmp.eq.s32.totalorder %s14, 0
    %p84 = por %p82, %p83
    %p85 = scmp.ne.s32.totalorder %s71, %s72
    %p86 = scmp.eq.s32.totalorder %s15, 1
    %p87 = por %p85, %p86
    %p89 = scmp.ne.s32.totalorder %s72, %s88
    %p90 = scmp.eq.s32.totalorder %s15, 0
    %p91 = por %p89, %p90
    %s92 = ssub.s32 %s17, %s31
    %p93 = scmp.eq.s32.totalorder %s92, 0
    %s95 = sadd.s32 %s94, 1
    %s96 = scalar_select %p93, %s94, %s95
    %p99 = pneg %p93
    %p100 = scmp.eq.s32.totalorder %s9, 1
    %p101 = por %p99, %p100
    %p102 = scmp.ne.s32.totalorder %s94, %s97
    %p103 = scmp.eq.s32.totalorder %s9, 0
    %p104 = por %p102, %p103
    %p105 = scmp.ne.s32.totalorder %s94, %s97
    %p106 = scmp.eq.s32.totalorder %s14, 1
    %p107 = por %p105, %p106
    %p108 = scmp.ne.s32.totalorder %s97, %s98
    %p109 = scmp.eq.s32.totalorder %s14, 0
    %p110 = por %p108, %p109
    %p111 = scmp.ne.s32.totalorder %s97, %s98
    %p112 = scmp.eq.s32.totalorder %s15, 1
    %p113 = por %p111, %p112
    %p115 = scmp.ne.s32.totalorder %s98, %s114
    %p116 = scmp.eq.s32.totalorder %s15, 0
    %p117 = por %p115, %p116
    %s118 = ssub.s32 %s16, %s35
    %s119 = ssub.s32 %s17, %s31
    %s120 = sor.u32 %s118, %s119
    %p121 = scmp.eq.s32.totalorder %s120, 0
    %s123 = sadd.s32 %s122, 1
    %s124 = scalar_select %p121, %s122, %s123
    %p127 = pneg %p121
    %p128 = scmp.eq.s32.totalorder %s9, 1
    %p129 = por %p127, %p128
    %p130 = scmp.ne.s32.totalorder %s122, %s125
    %p131 = scmp.eq.s32.totalorder %s9, 0
    %p132 = por %p130, %p131
    %p133 = scmp.ne.s32.totalorder %s122, %s125
    %p134 = scmp.eq.s32.totalorder %s14, 1
    %p135 = por %p133, %p134
    %p136 = scmp.ne.s32.totalorder %s125, %s126
    %p137 = scmp.eq.s32.totalorder %s14, 0
    %p138 = por %p136, %p137
    %p139 = scmp.ne.s32.totalorder %s125, %s126
    %p140 = scmp.eq.s32.totalorder %s15, 1
    %p141 = por %p139, %p140
    %p143 = scmp.ne.s32.totalorder %s126, %s142
    %p144 = scmp.eq.s32.totalorder %s15, 0
    %p145 = por %p143, %p144
    %p146 = scmp.le.s32.totalorder 1, %s9
    %p147 = scmp.lt.s32.totalorder %s9, 3
    %p148 = pnand %p146, %p147
    %p149 = pneg %p148
    // Predicated region
    $region9: #{discriminator_forward.7} parent=5 // pred_check
      _
    $region10: #{discriminator_forward.7} parent=5 // pred_check_branch
      %151 = sbr.rel (%p148) target = $region12
    $region11: #{discriminator_forward.7} parent=5 // pred_region
      %s152 = ssub.s32 %s9, 1
      // Predicated region
      $region13: #{discriminator_forward.7} parent=11 // pred_check
        %p153 = pneg %p84
      $region14: #{discriminator_forward.7} parent=11 // pred_check_branch
        %155 = sbr.rel (%p153) target = $region16
      $region15: #{discriminator_forward.7} parent=11 // pred_region
        %s156 = smul.u32 36, %s21
        %p157 = scmp.lt.s32.totalorder %s156, 35
        %s158 = scalar_select %p157, %s156, 35
        %p159 = scmp.lt.s32.totalorder %s20, 0
        %s160 = scalar_select %p159, %s20, 0
        %s161 = sadd.s32 %s160, %s158
        %s162 = smul.addr %s161, 4
        %s163 = scalar_lea.vmem %s1, %s162
        %s164 = smul.u32 36, %s21
      $region16: #{discriminator_forward.7} parent=11 // pred_fallthru
        _
      // Predicated region
      $region17: #{discriminator_forward.7} parent=11 // pred_check
        %p165 = pneg %p110
      $region18: #{discriminator_forward.7} parent=11 // pred_check_branch
        %167 = sbr.rel (%p165) target = $region20
      $region19: #{discriminator_forward.7} parent=11 // pred_region
        %p168 = scmp.lt.s32.totalorder %s20, 0
        %s169 = scalar_select %p168, %s20, 0
        %s170 = scalar_lea.vmem %s2, %s169
      $region20: #{discriminator_forward.7} parent=11 // pred_fallthru
        _
    $region12: #{discriminator_forward.7} parent=5 // pred_fallthru
      _
    %p171 = scmp.lt.s32.totalorder %s9, 2
    // Predicated region
    $region21: #{discriminator_forward.7} parent=5 // pred_check
      %p172 = pneg %p171
    $region22: #{discriminator_forward.7} parent=5 // pred_check_branch
      %174 = sbr.rel (%p172) target = $region24
    $region23: #{discriminator_forward.7} parent=5 // pred_region
      // Predicated region
      $region25: #{discriminator_forward.7} parent=23 // pred_check
        %p175 = pneg %p50
      $region26: #{discriminator_forward.7} parent=23 // pred_check_branch
        %177 = sbr.rel (%p175) target = $region28
      $region27: #{discriminator_forward.7} parent=23 // pred_region
        %s178 = smul.u32 32, %s16
        %s179 = smul.u32 3, %s18
        %p180 = scmp.lt.s32.totalorder %s178, 63
        %s181 = scalar_select %p180, %s178, 63
        %p182 = scmp.lt.s32.totalorder %s179, 2
        %s183 = scalar_select %p182, %s179, 2
        %s184 = smul.addr %s181, 3
        %s185 = sadd.s32 %s183, %s184
        %s186 = smul.addr %s185, 4
        %s187 = scalar_lea.vmem %s0, %s186
        %s188 = smul.u32 32, %s16
        %s189 = smul.u32 3, %s18
      $region28: #{discriminator_forward.7} parent=23 // pred_fallthru
        _
    $region24: #{discriminator_forward.7} parent=5 // pred_fallthru
      _
    %p190 = scmp.le.s32.totalorder 1, %s9
    %p191 = scmp.lt.s32.totalorder %s9, 3
    %p192 = pnand %p190, %p191
    %p193 = pneg %p192
    // Predicated region
    $region29: #{discriminator_forward.7} parent=5 // pred_check
      _
    $region30: #{discriminator_forward.7} parent=5 // pred_check_branch
      %195 = sbr.rel (%p192) target = $region32
    $region31: #{discriminator_forward.7} parent=5 // pred_region
      %s196 = ssub.s32 %s9, 1
      %s197 = smul.u32 32, %s19
      %s198 = smul.u32 3, %s21
      %p199 = scmp.lt.s32.totalorder %s197, 63
      %s200 = scalar_select %p199, %s197, 63
      %p201 = scmp.lt.s32.totalorder %s198, 2
      %s202 = scalar_select %p201, %s198, 2
      %s203 = smul.addr %s200, 3
      %s204 = sadd.s32 %s202, %s203
      %s205 = smul.addr %s204, 4
      %s206 = scalar_lea.vmem %s0, %s205
      %p207 = pneg %p56
      %p208 = pneg %p53
      %s209 = smul.u32 36, %s21
      %p210 = scmp.lt.s32.totalorder %s209, 35
      %s211 = scalar_select %p210, %s209, 35
      %p212 = scmp.lt.s32.totalorder %s20, 0
      %s213 = scalar_select %p212, %s20, 0
      %s214 = sadd.s32 %s213, %s211
      %s215 = smul.addr %s214, 4
      %s216 = scalar_lea.vmem %s1, %s215
      %p217 = pneg %p84
      %p218 = pneg %p81
      %p219 = scmp.lt.s32.totalorder %s20, 0
      %s220 = scalar_select %p219, %s20, 0
      %s221 = scalar_lea.vmem %s2, %s220
      %p222 = pneg %p110
      %p223 = pneg %p107
      %p224 = pneg %p138
      %p225 = pneg %p135
      %s226 = smul.u32 32, %s19
      %p227 = scmp.lt.s32.totalorder %s226, 63
      %s228 = scalar_select %p227, %s226, 63
      %p229 = scmp.lt.s32.totalorder %s20, 0
      %s230 = scalar_select %p229, %s20, 0
      %s231 = sadd.s32 %s230, %s228
      %s232 = smul.addr %s231, 4
      %s233 = scalar_lea.vmem %s3, %s232
      %s234 = smul.u32 32, %s19
      %s235 = smul.u32 3, %s21
      %p236 = scmp.lt.s32.totalorder %s234, 63
      %s237 = scalar_select %p236, %s234, 63
      %p238 = scmp.lt.s32.totalorder %s235, 2
      %s239 = scalar_select %p238, %s235, 2
      %s240 = smul.addr %s237, 3
      %s241 = sadd.s32 %s239, %s240
      %s242 = smul.addr %s241, 4
      %s243 = scalar_lea.vmem %s0, %s242
      %s244 = smul.u32 32, %s19
      %s245 = smul.u32 3, %s21
      %s246 = smul.u32 36, %s21
      %p247 = scmp.lt.s32.totalorder %s246, 35
      %s248 = scalar_select %p247, %s246, 35
      %p249 = scmp.lt.s32.totalorder %s20, 0
      %s250 = scalar_select %p249, %s20, 0
      %s251 = sadd.s32 %s250, %s248
      %s252 = smul.addr %s251, 4
      %s253 = scalar_lea.vmem %s1, %s252
      %s254 = smul.u32 36, %s21
      %p255 = scmp.lt.s32.totalorder %s20, 0
      %s256 = scalar_select %p255, %s20, 0
      %s257 = scalar_lea.vmem %s2, %s256
      %s258 = smul.u32 32, %s19
      %p259 = scmp.lt.s32.totalorder %s258, 63
      %s260 = scalar_select %p259, %s258, 63
      %p261 = scmp.lt.s32.totalorder %s20, 0
      %s262 = scalar_select %p261, %s20, 0
      %s263 = sadd.s32 %s262, %s260
      %s264 = smul.addr %s263, 4
      %s265 = scalar_lea.vmem %s3, %s264
      %s266 = smul.u32 32, %s19
      %p268 = scmp.eq.s32.totalorder %s21, 0
      // Predicated region
      $region33: #{discriminator_forward.7} parent=31 // pred_check
        %p269 = pneg %p268
      $region34: #{discriminator_forward.7} parent=31 // pred_check_branch
        %271 = sbr.rel (%p269) target = $region36
      $region35: #{discriminator_forward.7} parent=31 // pred_region
        %vm272 = vcmask 261120
        %273 = vst.msk [vmem:[#allocation2] sm:$0xff] %vm272, 0.0
        %274 = vst.msk [vmem:[#allocation2 + $0x8] sm:$0xff] %vm272, 0.0
        %275 = vst.msk [vmem:[#allocation2 + $0x10] sm:$0xff] %vm272, 0.0
        %276 = vst.msk [vmem:[#allocation2 + $0x18] sm:$0xff] %vm272, 0.0
        %277 = vst.msk [vmem:[#allocation2 + $0x20] sm:$0xff] %vm272, 0.0
        %278 = vst.msk [vmem:[#allocation2 + $0x28] sm:$0xff] %vm272, 0.0
        %279 = vst.msk [vmem:[#allocation2 + $0x30] sm:$0xff] %vm272, 0.0
        %280 = vst.msk [vmem:[#allocation2 + $0x38] sm:$0xff] %vm272, 0.0
        %281 = vst.msk [vmem:[#allocation2 + $0x40] sm:$0xff] %vm272, 0.0
        %282 = vst.msk [vmem:[#allocation2 + $0x48] sm:$0xff] %vm272, 0.0
        %283 = vst.msk [vmem:[#allocation2 + $0x50] sm:$0xff] %vm272, 0.0
        %284 = vst.msk [vmem:[#allocation2 + $0x58] sm:$0xff] %vm272, 0.0
        %285 = vst.msk [vmem:[#allocation2 + $0x60] sm:$0xff] %vm272, 0.0
        %286 = vst.msk [vmem:[#allocation2 + $0x68] sm:$0xff] %vm272, 0.0
        %287 = vst.msk [vmem:[#allocation2 + $0x70] sm:$0xff] %vm272, 0.0
        %288 = vst.msk [vmem:[#allocation2 + $0x78] sm:$0xff] %vm272, 0.0
        %289 = vst.msk [vmem:[#allocation2 + $0x80] sm:$0xff] %vm272, 0.0
        %290 = vst.msk [vmem:[#allocation2 + $0x88] sm:$0xff] %vm272, 0.0
        %291 = vst.msk [vmem:[#allocation2 + $0x90] sm:$0xff] %vm272, 0.0
        %292 = vst.msk [vmem:[#allocation2 + $0x98] sm:$0xff] %vm272, 0.0
        %293 = vst.msk [vmem:[#allocation2 + $0xa0] sm:$0xff] %vm272, 0.0
        %294 = vst.msk [vmem:[#allocation2 + $0xa8] sm:$0xff] %vm272, 0.0
        %295 = vst.msk [vmem:[#allocation2 + $0xb0] sm:$0xff] %vm272, 0.0
        %296 = vst.msk [vmem:[#allocation2 + $0xb8] sm:$0xff] %vm272, 0.0
        %297 = vst.msk [vmem:[#allocation2 + $0xc0] sm:$0xff] %vm272, 0.0
        %298 = vst.msk [vmem:[#allocation2 + $0xc8] sm:$0xff] %vm272, 0.0
        %299 = vst.msk [vmem:[#allocation2 + $0xd0] sm:$0xff] %vm272, 0.0
        %300 = vst.msk [vmem:[#allocation2 + $0xd8] sm:$0xff] %vm272, 0.0
        %301 = vst.msk [vmem:[#allocation2 + $0xe0] sm:$0xff] %vm272, 0.0
        %302 = vst.msk [vmem:[#allocation2 + $0xe8] sm:$0xff] %vm272, 0.0
        %303 = vst.msk [vmem:[#allocation2 + $0xf0] sm:$0xff] %vm272, 0.0
        %304 = vst.msk [vmem:[#allocation2 + $0xf8] sm:$0xff] %vm272, 0.0
      $region36: #{discriminator_forward.7} parent=31 // pred_fallthru
        _
      %v305 = vld [vmem:[#allocation2] sm:$0xff]
      %v306 = vld [vmem:[#allocation2 + $0x8] sm:$0xff]
      %v307 = vld [vmem:[#allocation2 + $0x10] sm:$0xff]
      %v308 = vld [vmem:[#allocation2 + $0x18] sm:$0xff]
      %v309 = vld [vmem:[#allocation2 + $0x20] sm:$0xff]
      %v310 = vld [vmem:[#allocation2 + $0x28] sm:$0xff]
      %v311 = vld [vmem:[#allocation2 + $0x30] sm:$0xff]
      %v312 = vld [vmem:[#allocation2 + $0x38] sm:$0xff]
      %v313 = vld [vmem:[#allocation2 + $0x40] sm:$0xff]
      %v314 = vld [vmem:[#allocation2 + $0x48] sm:$0xff]
      %v315 = vld [vmem:[#allocation2 + $0x50] sm:$0xff]
      %v316 = vld [vmem:[#allocation2 + $0x58] sm:$0xff]
      %v317 = vld [vmem:[#allocation2 + $0x60] sm:$0xff]
      %v318 = vld [vmem:[#allocation2 + $0x68] sm:$0xff]
      %v319 = vld [vmem:[#allocation2 + $0x70] sm:$0xff]
      %v320 = vld [vmem:[#allocation2 + $0x78] sm:$0xff]
      %v321 = vld [vmem:[#allocation2 + $0x80] sm:$0xff]
      %v322 = vld [vmem:[#allocation2 + $0x88] sm:$0xff]
      %v323 = vld [vmem:[#allocation2 + $0x90] sm:$0xff]
      %v324 = vld [vmem:[#allocation2 + $0x98] sm:$0xff]
      %v325 = vld [vmem:[#allocation2 + $0xa0] sm:$0xff]
      %v326 = vld [vmem:[#allocation2 + $0xa8] sm:$0xff]
      %v327 = vld [vmem:[#allocation2 + $0xb0] sm:$0xff]
      %v328 = vld [vmem:[#allocation2 + $0xb8] sm:$0xff]
      %v329 = vld [vmem:[#allocation2 + $0xc0] sm:$0xff]
      %v330 = vld [vmem:[#allocation2 + $0xc8] sm:$0xff]
      %v331 = vld [vmem:[#allocation2 + $0xd0] sm:$0xff]
      %v332 = vld [vmem:[#allocation2 + $0xd8] sm:$0xff]
      %v333 = vld [vmem:[#allocation2 + $0xe0] sm:$0xff]
      %v334 = vld [vmem:[#allocation2 + $0xe8] sm:$0xff]
      %v335 = vld [vmem:[#allocation2 + $0xf0] sm:$0xff]
      %v336 = vld [vmem:[#allocation2 + $0xf8] sm:$0xff]
      %v337 = vld [vmem:[%s243] sm:$0xff]
      %v338 = vld [vmem:[%s243 + $0x8] sm:$0xf]
      %v339 = vld [vmem:[%s243 + $0xc] sm:$0xff]
      %v340 = vld [vmem:[%s243 + $0x14] sm:$0xf]
      %v341 = vld [vmem:[%s243 + $0x18] sm:$0xff]
      %v342 = vld [vmem:[%s243 + $0x20] sm:$0xf]
      %v343 = vld [vmem:[%s243 + $0x24] sm:$0xff]
      %v344 = vld [vmem:[%s243 + $0x2c] sm:$0xf]
      %v345 = vld [vmem:[%s243 + $0x30] sm:$0xff]
      %v346 = vld [vmem:[%s243 + $0x38] sm:$0xf]
      %v347 = vld [vmem:[%s243 + $0x3c] sm:$0xff]
      %v348 = vld [vmem:[%s243 + $0x44] sm:$0xf]
      %v349 = vld [vmem:[%s243 + $0x48] sm:$0xff]
      %v350 = vld [vmem:[%s243 + $0x50] sm:$0xf]
      %v351 = vld [vmem:[%s243 + $0x54] sm:$0xff]
      %v352 = vld [vmem:[%s243 + $0x5c] sm:$0xf]
      %v353 = vld [vmem:[%s243 + $0x60] sm:$0xff]
      %v354 = vld [vmem:[%s243 + $0x68] sm:$0xf]
      %v355 = vld [vmem:[%s243 + $0x6c] sm:$0xff]
      %v356 = vld [vmem:[%s243 + $0x74] sm:$0xf]
      %v357 = vld [vmem:[%s243 + $0x78] sm:$0xff]
      %v358 = vld [vmem:[%s243 + $0x80] sm:$0xf]
      %v359 = vld [vmem:[%s243 + $0x84] sm:$0xff]
      %v360 = vld [vmem:[%s243 + $0x8c] sm:$0xf]
      %v361 = vld [vmem:[%s243 + $0x90] sm:$0xff]
      %v362 = vld [vmem:[%s243 + $0x98] sm:$0xf]
      %v363 = vld [vmem:[%s243 + $0x9c] sm:$0xff]
      %v364 = vld [vmem:[%s243 + $0xa4] sm:$0xf]
      %v365 = vld [vmem:[%s243 + $0xa8] sm:$0xff]
      %v366 = vld [vmem:[%s243 + $0xb0] sm:$0xf]
      %v367 = vld [vmem:[%s243 + $0xb4] sm:$0xff]
      %v368 = vld [vmem:[%s243 + $0xbc] sm:$0xf]
      %v369 = vld [vmem:[%s243 + $0xc0] sm:$0xff]
      %v370 = vld [vmem:[%s243 + $0xc8] sm:$0xf]
      %v371 = vld [vmem:[%s243 + $0xcc] sm:$0xff]
      %v372 = vld [vmem:[%s243 + $0xd4] sm:$0xf]
      %v373 = vld [vmem:[%s243 + $0xd8] sm:$0xff]
      %v374 = vld [vmem:[%s243 + $0xe0] sm:$0xf]
      %v375 = vld [vmem:[%s243 + $0xe4] sm:$0xff]
      %v376 = vld [vmem:[%s243 + $0xec] sm:$0xf]
      %v377 = vld [vmem:[%s243 + $0xf0] sm:$0xff]
      %v378 = vld [vmem:[%s243 + $0xf8] sm:$0xf]
      %v379 = vld [vmem:[%s243 + $0xfc] sm:$0xff]
      %v380 = vld [vmem:[%s243 + $0x104] sm:$0xf]
      %v381 = vld [vmem:[%s243 + $0x108] sm:$0xff]
      %v382 = vld [vmem:[%s243 + $0x110] sm:$0xf]
      %v383 = vld [vmem:[%s243 + $0x114] sm:$0xff]
      %v384 = vld [vmem:[%s243 + $0x11c] sm:$0xf]
      %v385 = vld [vmem:[%s243 + $0x120] sm:$0xff]
      %v386 = vld [vmem:[%s243 + $0x128] sm:$0xf]
      %v387 = vld [vmem:[%s243 + $0x12c] sm:$0xff]
      %v388 = vld [vmem:[%s243 + $0x134] sm:$0xf]
      %v389 = vld [vmem:[%s243 + $0x138] sm:$0xff]
      %v390 = vld [vmem:[%s243 + $0x140] sm:$0xf]
      %v391 = vld [vmem:[%s243 + $0x144] sm:$0xff]
      %v392 = vld [vmem:[%s243 + $0x14c] sm:$0xf]
      %v393 = vld [vmem:[%s243 + $0x150] sm:$0xff]
      %v394 = vld [vmem:[%s243 + $0x158] sm:$0xf]
      %v395 = vld [vmem:[%s243 + $0x15c] sm:$0xff]
      %v396 = vld [vmem:[%s243 + $0x164] sm:$0xf]
      %v397 = vld [vmem:[%s243 + $0x168] sm:$0xff]
      %v398 = vld [vmem:[%s243 + $0x170] sm:$0xf]
      %v399 = vld [vmem:[%s243 + $0x174] sm:$0xff]
      %v400 = vld [vmem:[%s243 + $0x17c] sm:$0xf]
      %v401 = vld [vmem:[%s253] sm:$0xf]
      %v402 = vld [vmem:[%s253 + $0x4] sm:$0xf]
      %v403 = vld [vmem:[%s253 + $0x8] sm:$0xf]
      %v404 = vld [vmem:[%s253 + $0xc] sm:$0xf]
      %v405 = vld [vmem:[%s253 + $0x10] sm:$0xf]
      %v406 = vld [vmem:[%s253 + $0x14] sm:$0xf]
      %v407 = vld [vmem:[%s253 + $0x18] sm:$0xf]
      %v408 = vld [vmem:[%s253 + $0x1c] sm:$0xf]
      %v409 = vld [vmem:[%s253 + $0x20] sm:$0xf]
      %v410 = vld [vmem:[%s253 + $0x24] sm:$0xf]
      %v411 = vld [vmem:[%s253 + $0x28] sm:$0xf]
      %v412 = vld [vmem:[%s253 + $0x2c] sm:$0xf]
      %v413 = vld [vmem:[%s253 + $0x30] sm:$0xf]
      %v414 = vld [vmem:[%s253 + $0x34] sm:$0xf]
      %v415 = vld [vmem:[%s253 + $0x38] sm:$0xf]
      %v416 = vld [vmem:[%s253 + $0x3c] sm:$0xf]
      %v417 = vld [vmem:[%s253 + $0x40] sm:$0xf]
      %v418 = vld [vmem:[%s253 + $0x44] sm:$0xf]
      %v419 = vld [vmem:[%s253 + $0x48] sm:$0xf]
      %v420 = vld [vmem:[%s253 + $0x4c] sm:$0xf]
      %v421 = vld [vmem:[%s253 + $0x50] sm:$0xf]
      %v422 = vld [vmem:[%s253 + $0x54] sm:$0xf]
      %v423 = vld [vmem:[%s253 + $0x58] sm:$0xf]
      %v424 = vld [vmem:[%s253 + $0x5c] sm:$0xf]
      %v425 = vld [vmem:[%s253 + $0x60] sm:$0xf]
      %v426 = vld [vmem:[%s253 + $0x64] sm:$0xf]
      %v427 = vld [vmem:[%s253 + $0x68] sm:$0xf]
      %v428 = vld [vmem:[%s253 + $0x6c] sm:$0xf]
      %v429 = vld [vmem:[%s253 + $0x70] sm:$0xf]
      %v430 = vld [vmem:[%s253 + $0x74] sm:$0xf]
      %v431 = vld [vmem:[%s253 + $0x78] sm:$0xf]
      %v432 = vld [vmem:[%s253 + $0x7c] sm:$0xf]
      %v433 = vld [vmem:[%s253 + $0x80] sm:$0xf]
      %v434 = vld [vmem:[%s253 + $0x84] sm:$0xf]
      %v435 = vld [vmem:[%s253 + $0x88] sm:$0xf]
      %v436 = vld [vmem:[%s253 + $0x8c] sm:$0xf]
      %v501 = vunpack.c.l.b16 %v337
      %v502 = vunpack.c.h.b16 %v337
      %v503 = vunpack.c.l.b16 %v338
      %v504 = vunpack.c.l.b16 %v339
      %v505 = vunpack.c.h.b16 %v339
      %v506 = vunpack.c.l.b16 %v340
      %v507 = vunpack.c.l.b16 %v341
      %v508 = vunpack.c.h.b16 %v341
      %v509 = vunpack.c.l.b16 %v342
      %v510 = vunpack.c.l.b16 %v343
      %v511 = vunpack.c.h.b16 %v343
      %v512 = vunpack.c.l.b16 %v344
      %v513 = vunpack.c.l.b16 %v345
      %v514 = vunpack.c.h.b16 %v345
      %v515 = vunpack.c.l.b16 %v346
      %v516 = vunpack.c.l.b16 %v347
      %v517 = vunpack.c.h.b16 %v347
      %v518 = vunpack.c.l.b16 %v348
      %v519 = vunpack.c.l.b16 %v349
      %v520 = vunpack.c.h.b16 %v349
      %v521 = vunpack.c.l.b16 %v350
      %v522 = vunpack.c.l.b16 %v351
      %v523 = vunpack.c.h.b16 %v351
      %v524 = vunpack.c.l.b16 %v352
      %v525 = vunpack.c.l.b16 %v353
      %v526 = vunpack.c.h.b16 %v353
      %v527 = vunpack.c.l.b16 %v354
      %v528 = vunpack.c.l.b16 %v355
      %v529 = vunpack.c.h.b16 %v355
      %v530 = vunpack.c.l.b16 %v356
      %v531 = vunpack.c.l.b16 %v357
      %v532 = vunpack.c.h.b16 %v357
      %v533 = vunpack.c.l.b16 %v358
      %v534 = vunpack.c.l.b16 %v359
      %v535 = vunpack.c.h.b16 %v359
      %v536 = vunpack.c.l.b16 %v360
      %v537 = vunpack.c.l.b16 %v361
      %v538 = vunpack.c.h.b16 %v361
      %v539 = vunpack.c.l.b16 %v362
      %v540 = vunpack.c.l.b16 %v363
      %v541 = vunpack.c.h.b16 %v363
      %v542 = vunpack.c.l.b16 %v364
      %v543 = vunpack.c.l.b16 %v365
      %v544 = vunpack.c.h.b16 %v365
      %v545 = vunpack.c.l.b16 %v366
      %v546 = vunpack.c.l.b16 %v367
      %v547 = vunpack.c.h.b16 %v367
      %v548 = vunpack.c.l.b16 %v368
      %v549 = vunpack.c.l.b16 %v369
      %v550 = vunpack.c.h.b16 %v369
      %v551 = vunpack.c.l.b16 %v370
      %v552 = vunpack.c.l.b16 %v371
      %v553 = vunpack.c.h.b16 %v371
      %v554 = vunpack.c.l.b16 %v372
      %v555 = vunpack.c.l.b16 %v373
      %v556 = vunpack.c.h.b16 %v373
      %v557 = vunpack.c.l.b16 %v374
      %v558 = vunpack.c.l.b16 %v375
      %v559 = vunpack.c.h.b16 %v375
      %v560 = vunpack.c.l.b16 %v376
      %v561 = vunpack.c.l.b16 %v377
      %v562 = vunpack.c.h.b16 %v377
      %v563 = vunpack.c.l.b16 %v378
      %v564 = vunpack.c.l.b16 %v379
      %v565 = vunpack.c.h.b16 %v379
      %v566 = vunpack.c.l.b16 %v380
      %v567 = vunpack.c.l.b16 %v381
      %v568 = vunpack.c.h.b16 %v381
      %v569 = vunpack.c.l.b16 %v382
      %v570 = vunpack.c.l.b16 %v383
      %v571 = vunpack.c.h.b16 %v383
      %v572 = vunpack.c.l.b16 %v384
      %v573 = vunpack.c.l.b16 %v385
      %v574 = vunpack.c.h.b16 %v385
      %v575 = vunpack.c.l.b16 %v386
      %v576 = vunpack.c.l.b16 %v387
      %v577 = vunpack.c.h.b16 %v387
      %v578 = vunpack.c.l.b16 %v388
      %v579 = vunpack.c.l.b16 %v389
      %v580 = vunpack.c.h.b16 %v389
      %v581 = vunpack.c.l.b16 %v390
      %v582 = vunpack.c.l.b16 %v391
      %v583 = vunpack.c.h.b16 %v391
      %v584 = vunpack.c.l.b16 %v392
      %v585 = vunpack.c.l.b16 %v393
      %v586 = vunpack.c.h.b16 %v393
      %v587 = vunpack.c.l.b16 %v394
      %v588 = vunpack.c.l.b16 %v395
      %v589 = vunpack.c.h.b16 %v395
      %v590 = vunpack.c.l.b16 %v396
      %v591 = vunpack.c.l.b16 %v397
      %v592 = vunpack.c.h.b16 %v397
      %v593 = vunpack.c.l.b16 %v398
      %v594 = vunpack.c.l.b16 %v399
      %v595 = vunpack.c.h.b16 %v399
      %v596 = vunpack.c.l.b16 %v400
      %v597 = vpack.c.b16 %v504, %v501
      %v598 = vpack.c.b16 %v505, %v502
      %v599 = vpack.c.b16 %v506, %v503
      %v600 = vpack.c.b16 %v510, %v507
      %v601 = vpack.c.b16 %v511, %v508
      %v602 = vpack.c.b16 %v512, %v509
      %v603 = vpack.c.b16 %v516, %v513
      %v604 = vpack.c.b16 %v517, %v514
      %v605 = vpack.c.b16 %v518, %v515
      %v606 = vpack.c.b16 %v522, %v519
      %v607 = vpack.c.b16 %v523, %v520
      %v608 = vpack.c.b16 %v524, %v521
      %v609 = vpack.c.b16 %v528, %v525
      %v610 = vpack.c.b16 %v529, %v526
      %v611 = vpack.c.b16 %v530, %v527
      %v612 = vpack.c.b16 %v534, %v531
      %v613 = vpack.c.b16 %v535, %v532
      %v614 = vpack.c.b16 %v536, %v533
      %v615 = vpack.c.b16 %v540, %v537
      %v616 = vpack.c.b16 %v541, %v538
      %v617 = vpack.c.b16 %v542, %v539
      %v618 = vpack.c.b16 %v546, %v543
      %v619 = vpack.c.b16 %v547, %v544
      %v620 = vpack.c.b16 %v548, %v545
      %v621 = vpack.c.b16 %v552, %v549
      %v622 = vpack.c.b16 %v553, %v550
      %v623 = vpack.c.b16 %v554, %v551
      %v624 = vpack.c.b16 %v558, %v555
      %v625 = vpack.c.b16 %v559, %v556
      %v626 = vpack.c.b16 %v560, %v557
      %v627 = vpack.c.b16 %v564, %v561
      %v628 = vpack.c.b16 %v565, %v562
      %v629 = vpack.c.b16 %v566, %v563
      %v630 = vpack.c.b16 %v570, %v567
      %v631 = vpack.c.b16 %v571, %v568
      %v632 = vpack.c.b16 %v572, %v569
      %v633 = vpack.c.b16 %v576, %v573
      %v634 = vpack.c.b16 %v577, %v574
      %v635 = vpack.c.b16 %v578, %v575
      %v636 = vpack.c.b16 %v582, %v579
      %v637 = vpack.c.b16 %v583, %v580
      %v638 = vpack.c.b16 %v584, %v581
      %v639 = vpack.c.b16 %v588, %v585
      %v640 = vpack.c.b16 %v589, %v586
      %v641 = vpack.c.b16 %v590, %v587
      %v642 = vpack.c.b16 %v594, %v591
      %v643 = vpack.c.b16 %v595, %v592
      %v644 = vpack.c.b16 %v596, %v593
      %v713 = vunpack.c.l.b16 %v401
      %v714 = vunpack.c.l.b16 %v402
      %v715 = vunpack.c.l.b16 %v403
      %v716 = vunpack.c.l.b16 %v404
      %v717 = vunpack.c.l.b16 %v405
      %v718 = vunpack.c.l.b16 %v406
      %v719 = vunpack.c.l.b16 %v407
      %v720 = vunpack.c.l.b16 %v408
      %v721 = vunpack.c.l.b16 %v409
      %v722 = vunpack.c.l.b16 %v410
      %v723 = vunpack.c.l.b16 %v411
      %v724 = vunpack.c.l.b16 %v412
      %v725 = vunpack.c.l.b16 %v413
      %v726 = vunpack.c.l.b16 %v414
      %v727 = vunpack.c.l.b16 %v415
      %v728 = vunpack.c.l.b16 %v416
      %v729 = vunpack.c.l.b16 %v417
      %v730 = vunpack.c.l.b16 %v418
      %v731 = vunpack.c.l.b16 %v419
      %v732 = vunpack.c.l.b16 %v420
      %v733 = vunpack.c.l.b16 %v421
      %v734 = vunpack.c.l.b16 %v422
      %v735 = vunpack.c.l.b16 %v423
      %v736 = vunpack.c.l.b16 %v424
      %v737 = vunpack.c.l.b16 %v425
      %v738 = vunpack.c.l.b16 %v426
      %v739 = vunpack.c.l.b16 %v427
      %v740 = vunpack.c.l.b16 %v428
      %v741 = vunpack.c.l.b16 %v429
      %v742 = vunpack.c.l.b16 %v430
      %v743 = vunpack.c.l.b16 %v431
      %v744 = vunpack.c.l.b16 %v432
      %v745 = vunpack.c.l.b16 %v433
      %v746 = vunpack.c.l.b16 %v434
      %v747 = vunpack.c.l.b16 %v435
      %v748 = vunpack.c.l.b16 %v436
      %v749 = vpack.c.b16 %v714, %v713
      %v750 = vpack.c.b16 %v716, %v715
      %v751 = vpack.c.b16 %v718, %v717
      %v752 = vpack.c.b16 %v720, %v719
      %v753 = vpack.c.b16 %v722, %v721
      %v754 = vpack.c.b16 %v724, %v723
      %v755 = vpack.c.b16 %v726, %v725
      %v756 = vpack.c.b16 %v728, %v727
      %v757 = vpack.c.b16 %v730, %v729
      %v758 = vpack.c.b16 %v732, %v731
      %v759 = vpack.c.b16 %v734, %v733
      %v760 = vpack.c.b16 %v736, %v735
      %v761 = vpack.c.b16 %v738, %v737
      %v762 = vpack.c.b16 %v740, %v739
      %v763 = vpack.c.b16 %v742, %v741
      %v764 = vpack.c.b16 %v744, %v743
      %v765 = vpack.c.b16 %v746, %v745
      %v766 = vpack.c.b16 %v748, %v747
      %vm785 = vcmask 261120
      %v787 = vsel %vm785, %v599, 0
      %v790 = vsel %vm785, %v602, 0
      %v793 = vsel %vm785, %v605, 0
      %v796 = vsel %vm785, %v608, 0
      %v799 = vsel %vm785, %v611, 0
      %v802 = vsel %vm785, %v614, 0
      %v805 = vsel %vm785, %v617, 0
      %v808 = vsel %vm785, %v620, 0
      %v811 = vsel %vm785, %v623, 0
      %v814 = vsel %vm785, %v626, 0
      %v817 = vsel %vm785, %v629, 0
      %v820 = vsel %vm785, %v632, 0
      %v823 = vsel %vm785, %v635, 0
      %v826 = vsel %vm785, %v638, 0
      %v829 = vsel %vm785, %v641, 0
      %v832 = vsel %vm785, %v644, 0
      %834 = vmatprep.subr.bf16.mxu0 0
      %835 = vmatpush1.bf16.msra.mxu0 %v749
      %836 = vmatprep.subr.bf16.mxu0 0
      %837 = vmatpush1.bf16.msra.mxu0 %v750
      %838 = vmatprep.subr.bf16.mxu0 0
      %839 = vmatpush1.bf16.msra.mxu0 %v751
      %840 = vmatprep.subr.bf16.mxu0 0
      %841 = vmatpush1.bf16.msra.mxu0 %v752
      %842 = vmatprep.subr.bf16.mxu0 0
      %843 = vmatpush1.bf16.msra.mxu0 %v753
      %844 = vmatprep.subr.bf16.mxu0 0
      %845 = vmatpush1.bf16.msra.mxu0 %v754
      %846 = vmatprep.subr.bf16.mxu0 0
      %847 = vmatpush1.bf16.msra.mxu0 %v755
      %848 = vmatprep.subr.bf16.mxu0 0
      %849 = vmatpush1.bf16.msra.mxu0 %v756
      %850 = vmatprep.subr.bf16.mxu0 0
      %851 = vmatpush1.bf16.msra.mxu0 %v757
      %852 = vmatprep.subr.bf16.mxu0 0
      %853 = vmatpush1.bf16.msra.mxu0 %v758
      %854 = vmatprep.subr.bf16.mxu0 0
      %855 = vmatpush1.bf16.msra.mxu0 %v759
      %856 = vmatprep.subr.bf16.mxu0 0
      %857 = vmatpush1.bf16.msra.mxu0 %v760
      %858 = vmatprep.subr.bf16.mxu0 0
      %859 = vmatpush1.bf16.msra.mxu0 %v761
      %860 = vmatprep.subr.bf16.mxu0 0
      %861 = vmatpush1.bf16.msra.mxu0 %v762
      %862 = vmatprep.subr.bf16.mxu0 0
      %863 = vmatpush1.bf16.msra.mxu0 %v763
      %864 = vmatprep.subr.bf16.mxu0 0
      %865 = vmatpush1.bf16.msra.mxu0 %v764
      %866 = vmatprep.mubr.bf16.mxu0 %v598
      %867 = vmatmul.mubr.bf16.gmra.mrb[0].mxu0 %v597
      %v868 = vpop.f32.mrb[0].mxu0
      %v869 = vadd.f32 0.0, %v868
      %v870 = vpop.f32.mrb[0].mxu0
      %v871 = vpop.f32.mrb[0].mxu0
      %v872 = vadd.f32 0.0, %v871
      %v873 = vpop.f32.mrb[0].mxu0
      %874 = vmatprep.mubr.bf16.mxu0 %v601
      %875 = vmatmul.mubr.bf16.gmra.mrb[0].mxu0 %v600
      %v876 = vpop.f32.mrb[0].mxu0
      %v877 = vadd.f32 0.0, %v876
      %v878 = vpop.f32.mrb[0].mxu0
      %v879 = vpop.f32.mrb[0].mxu0
      %v880 = vadd.f32 0.0, %v879
      %v881 = vpop.f32.mrb[0].mxu0
      %882 = vmatprep.mubr.bf16.mxu0 %v604
      %883 = vmatmul.mubr.bf16.gmra.mrb[0].mxu0 %v603
      %v884 = vpop.f32.mrb[0].mxu0
      %v885 = vadd.f32 0.0, %v884
      %v886 = vpop.f32.mrb[0].mxu0
      %v887 = vpop.f32.mrb[0].mxu0
      %v888 = vadd.f32 0.0, %v887
      %v889 = vpop.f32.mrb[0].mxu0
      %890 = vmatprep.mubr.bf16.mxu0 %v607
      %891 = vmatmul.mubr.bf16.gmra.mrb[0].mxu0 %v606
      %v892 = vpop.f32.mrb[0].mxu0
      %v893 = vadd.f32 0.0, %v892
      %v894 = vpop.f32.mrb[0].mxu0
      %v895 = vpop.f32.mrb[0].mxu0
      %v896 = vadd.f32 0.0, %v895
      %v897 = vpop.f32.mrb[0].mxu0
      %898 = vmatprep.mubr.bf16.mxu0 %v610
      %899 = vmatmul.mubr.bf16.gmra.mrb[0].mxu0 %v609
      %v900 = vpop.f32.mrb[0].mxu0
      %v901 = vadd.f32 0.0, %v900
      %v902 = vpop.f32.mrb[0].mxu0
      %v903 = vpop.f32.mrb[0].mxu0
      %v904 = vadd.f32 0.0, %v903
      %v905 = vpop.f32.mrb[0].mxu0
      %906 = vmatprep.mubr.bf16.mxu0 %v613
      %907 = vmatmul.mubr.bf16.gmra.mrb[0].mxu0 %v612
      %v908 = vpop.f32.mrb[0].mxu0
      %v909 = vadd.f32 0.0, %v908
      %v910 = vpop.f32.mrb[0].mxu0
      %v911 = vpop.f32.mrb[0].mxu0
      %v912 = vadd.f32 0.0, %v911
      %v913 = vpop.f32.mrb[0].mxu0
      %914 = vmatprep.mubr.bf16.mxu0 %v616
      %915 = vmatmul.mubr.bf16.gmra.mrb[0].mxu0 %v615
      %v916 = vpop.f32.mrb[0].mxu0
      %v917 = vadd.f32 0.0, %v916
      %v918 = vpop.f32.mrb[0].mxu0
      %v919 = vpop.f32.mrb[0].mxu0
      %v920 = vadd.f32 0.0, %v919
      %v921 = vpop.f32.mrb[0].mxu0
      %922 = vmatprep.mubr.bf16.mxu0 %v619
      %923 = vmatmul.mubr.bf16.gmra.mrb[0].mxu0 %v618
      %v924 = vpop.f32.mrb[0].mxu0
      %v925 = vadd.f32 0.0, %v924
      %v926 = vpop.f32.mrb[0].mxu0
      %v927 = vpop.f32.mrb[0].mxu0
      %v928 = vadd.f32 0.0, %v927
      %v929 = vpop.f32.mrb[0].mxu0
      %930 = vmatprep.mubr.bf16.mxu0 %v622
      %931 = vmatmul.mubr.bf16.gmra.mrb[0].mxu0 %v621
      %v932 = vpop.f32.mrb[0].mxu0
      %v933 = vadd.f32 0.0, %v932
      %v934 = vpop.f32.mrb[0].mxu0
      %v935 = vpop.f32.mrb[0].mxu0
      %v936 = vadd.f32 0.0, %v935
      %v937 = vpop.f32.mrb[0].mxu0
      %938 = vmatprep.mubr.bf16.mxu0 %v625
      %939 = vmatmul.mubr.bf16.gmra.mrb[0].mxu0 %v624
      %v940 = vpop.f32.mrb[0].mxu0
      %v941 = vadd.f32 0.0, %v940
      %v942 = vpop.f32.mrb[0].mxu0
      %v943 = vpop.f32.mrb[0].mxu0
      %v944 = vadd.f32 0.0, %v943
      %v945 = vpop.f32.mrb[0].mxu0
      %946 = vmatprep.mubr.bf16.mxu0 %v628
      %947 = vmatmul.mubr.bf16.gmra.mrb[0].mxu0 %v627
      %v948 = vpop.f32.mrb[0].mxu0
      %v949 = vadd.f32 0.0, %v948
      %v950 = vpop.f32.mrb[0].mxu0
      %v951 = vpop.f32.mrb[0].mxu0
      %v952 = vadd.f32 0.0, %v951
      %v953 = vpop.f32.mrb[0].mxu0
      %954 = vmatprep.mubr.bf16.mxu0 %v631
      %955 = vmatmul.mubr.bf16.gmra.mrb[0].mxu0 %v630
      %v956 = vpop.f32.mrb[0].mxu0
      %v957 = vadd.f32 0.0, %v956
      %v958 = vpop.f32.mrb[0].mxu0
      %v959 = vpop.f32.mrb[0].mxu0
      %v960 = vadd.f32 0.0, %v959
      %v961 = vpop.f32.mrb[0].mxu0
      %962 = vmatprep.mubr.bf16.mxu0 %v634
      %963 = vmatmul.mubr.bf16.gmra.mrb[0].mxu0 %v633
      %v964 = vpop.f32.mrb[0].mxu0
      %v965 = vadd.f32 0.0, %v964
      %v966 = vpop.f32.mrb[0].mxu0
      %v967 = vpop.f32.mrb[0].mxu0
      %v968 = vadd.f32 0.0, %v967
      %v969 = vpop.f32.mrb[0].mxu0
      %970 = vmatprep.mubr.bf16.mxu0 %v637
      %971 = vmatmul.mubr.bf16.gmra.mrb[0].mxu0 %v636
      %v972 = vpop.f32.mrb[0].mxu0
      %v973 = vadd.f32 0.0, %v972
      %v974 = vpop.f32.mrb[0].mxu0
      %v975 = vpop.f32.mrb[0].mxu0
      %v976 = vadd.f32 0.0, %v975
      %v977 = vpop.f32.mrb[0].mxu0
      %978 = vmatprep.mubr.bf16.mxu0 %v640
      %979 = vmatmul.mubr.bf16.gmra.mrb[0].mxu0 %v639
      %v980 = vpop.f32.mrb[0].mxu0
      %v981 = vadd.f32 0.0, %v980
      %v982 = vpop.f32.mrb[0].mxu0
      %v983 = vpop.f32.mrb[0].mxu0
      %v984 = vadd.f32 0.0, %v983
      %v985 = vpop.f32.mrb[0].mxu0
      %986 = vmatprep.mubr.bf16.mxu0 %v643
      %987 = vmatmul.mubr.bf16.gmra.mrb[0].mxu0 %v642
      %v988 = vpop.f32.mrb[0].mxu0
      %v989 = vadd.f32 0.0, %v988
      %v990 = vpop.f32.mrb[0].mxu0
      %v991 = vpop.f32.mrb[0].mxu0
      %v992 = vadd.f32 0.0, %v991
      %v993 = vpop.f32.mrb[0].mxu0
      %994 = vdwg.mxu0
      %995 = vmatprep.subr.bf16.mxu0 0
      %996 = vmatpush1.bf16.msra.mxu0 %v765
      %997 = vmatprep.subr.bf16.mxu0 0
      %998 = vmatpush1.bf16.msra.mxu0 %v766
      %999 = vmatprep.subr.bf16.mxu0 0
      %1000 = vmatpush1.bf16.msra.mxu0 0
      %1001 = vmatprep.subr.bf16.mxu0 0
      %1002 = vmatpush1.bf16.msra.mxu0 0
      %1003 = vmatprep.subr.bf16.mxu0 0
      %1004 = vmatpush1.bf16.msra.mxu0 0
      %1005 = vmatprep.subr.bf16.mxu0 0
      %1006 = vmatpush1.bf16.msra.mxu0 0
      %1007 = vmatprep.subr.bf16.mxu0 0
      %1008 = vmatpush1.bf16.msra.mxu0 0
      %1009 = vmatprep.subr.bf16.mxu0 0
      %1010 = vmatpush1.bf16.msra.mxu0 0
      %1011 = vmatprep.subr.bf16.mxu0 0
      %1012 = vmatpush1.bf16.msra.mxu0 0
      %1013 = vmatprep.subr.bf16.mxu0 0
      %1014 = vmatpush1.bf16.msra.mxu0 0
      %1015 = vmatprep.subr.bf16.mxu0 0
      %1016 = vmatpush1.bf16.msra.mxu0 0
      %1017 = vmatprep.subr.bf16.mxu0 0
      %1018 = vmatpush1.bf16.msra.mxu0 0
      %1019 = vmatprep.subr.bf16.mxu0 0
      %1020 = vmatpush1.bf16.msra.mxu0 0
      %1021 = vmatprep.subr.bf16.mxu0 0
      %1022 = vmatpush1.bf16.msra.mxu0 0
      %1023 = vmatprep.subr.bf16.mxu0 0
      %1024 = vmatpush1.bf16.msra.mxu0 0
      %1025 = vmatprep.subr.bf16.mxu0 0
      %1026 = vmatpush1.bf16.msra.mxu0 0
      %1027 = vmatprep.mubr.bf16.mxu0 0
      %1028 = vmatmul.mubr.bf16.gmra.mrb[0].mxu0 %v787
      %v1029 = vpop.f32.mrb[0].mxu0
      %v1030 = vadd.f32 %v869, %v1029
      %v1031 = vpop.f32.mrb[0].mxu0
      %v1032 = vpop.f32.mrb[0].mxu0
      %v1033 = vadd.f32 %v872, %v1032
      %v1034 = vpop.f32.mrb[0].mxu0
      %1035 = vmatprep.mubr.bf16.mxu0 0
      %1036 = vmatmul.mubr.bf16.gmra.mrb[0].mxu0 %v790
      %v1037 = vpop.f32.mrb[0].mxu0
      %v1038 = vadd.f32 %v877, %v1037
      %v1039 = vpop.f32.mrb[0].mxu0
      %v1040 = vpop.f32.mrb[0].mxu0
      %v1041 = vadd.f32 %v880, %v1040
      %v1042 = vpop.f32.mrb[0].mxu0
      %1043 = vmatprep.mubr.bf16.mxu0 0
      %1044 = vmatmul.mubr.bf16.gmra.mrb[0].mxu0 %v793
      %v1045 = vpop.f32.mrb[0].mxu0
      %v1046 = vadd.f32 %v885, %v1045
      %v1047 = vpop.f32.mrb[0].mxu0
      %v1048 = vpop.f32.mrb[0].mxu0
      %v1049 = vadd.f32 %v888, %v1048
      %v1050 = vpop.f32.mrb[0].mxu0
      %1051 = vmatprep.mubr.bf16.mxu0 0
      %1052 = vmatmul.mubr.bf16.gmra.mrb[0].mxu0 %v796
      %v1053 = vpop.f32.mrb[0].mxu0
      %v1054 = vadd.f32 %v893, %v1053
      %v1055 = vpop.f32.mrb[0].mxu0
      %v1056 = vpop.f32.mrb[0].mxu0
      %v1057 = vadd.f32 %v896, %v1056
      %v1058 = vpop.f32.mrb[0].mxu0
      %1059 = vmatprep.mubr.bf16.mxu0 0
      %1060 = vmatmul.mubr.bf16.gmra.mrb[0].mxu0 %v799
      %v1061 = vpop.f32.mrb[0].mxu0
      %v1062 = vadd.f32 %v901, %v1061
      %v1063 = vpop.f32.mrb[0].mxu0
      %v1064 = vpop.f32.mrb[0].mxu0
      %v1065 = vadd.f32 %v904, %v1064
      %v1066 = vpop.f32.mrb[0].mxu0
      %1067 = vmatprep.mubr.bf16.mxu0 0
      %1068 = vmatmul.mubr.bf16.gmra.mrb[0].mxu0 %v802
      %v1069 = vpop.f32.mrb[0].mxu0
      %v1070 = vadd.f32 %v909, %v1069
      %v1071 = vpop.f32.mrb[0].mxu0
      %v1072 = vpop.f32.mrb[0].mxu0
      %v1073 = vadd.f32 %v912, %v1072
      %v1074 = vpop.f32.mrb[0].mxu0
      %1075 = vmatprep.mubr.bf16.mxu0 0
      %1076 = vmatmul.mubr.bf16.gmra.mrb[0].mxu0 %v805
      %v1077 = vpop.f32.mrb[0].mxu0
      %v1078 = vadd.f32 %v917, %v1077
      %v1079 = vpop.f32.mrb[0].mxu0
      %v1080 = vpop.f32.mrb[0].mxu0
      %v1081 = vadd.f32 %v920, %v1080
      %v1082 = vpop.f32.mrb[0].mxu0
      %1083 = vmatprep.mubr.bf16.mxu0 0
      %1084 = vmatmul.mubr.bf16.gmra.mrb[0].mxu0 %v808
      %v1085 = vpop.f32.mrb[0].mxu0
      %v1086 = vadd.f32 %v925, %v1085
      %v1087 = vpop.f32.mrb[0].mxu0
      %v1088 = vpop.f32.mrb[0].mxu0
      %v1089 = vadd.f32 %v928, %v1088
      %v1090 = vpop.f32.mrb[0].mxu0
      %1091 = vmatprep.mubr.bf16.mxu0 0
      %1092 = vmatmul.mubr.bf16.gmra.mrb[0].mxu0 %v811
      %v1093 = vpop.f32.mrb[0].mxu0
      %v1094 = vadd.f32 %v933, %v1093
      %v1095 = vpop.f32.mrb[0].mxu0
      %v1096 = vpop.f32.mrb[0].mxu0
      %v1097 = vadd.f32 %v936, %v1096
      %v1098 = vpop.f32.mrb[0].mxu0
      %1099 = vmatprep.mubr.bf16.mxu0 0
      %1100 = vmatmul.mubr.bf16.gmra.mrb[0].mxu0 %v814
      %v1101 = vpop.f32.mrb[0].mxu0
      %v1102 = vadd.f32 %v941, %v1101
      %v1103 = vpop.f32.mrb[0].mxu0
      %v1104 = vpop.f32.mrb[0].mxu0
      %v1105 = vadd.f32 %v944, %v1104
      %v1106 = vpop.f32.mrb[0].mxu0
      %1107 = vmatprep.mubr.bf16.mxu0 0
      %1108 = vmatmul.mubr.bf16.gmra.mrb[0].mxu0 %v817
      %v1109 = vpop.f32.mrb[0].mxu0
      %v1110 = vadd.f32 %v949, %v1109
      %v1111 = vpop.f32.mrb[0].mxu0
      %v1112 = vpop.f32.mrb[0].mxu0
      %v1113 = vadd.f32 %v952, %v1112
      %v1114 = vpop.f32.mrb[0].mxu0
      %1115 = vmatprep.mubr.bf16.mxu0 0
      %1116 = vmatmul.mubr.bf16.gmra.mrb[0].mxu0 %v820
      %v1117 = vpop.f32.mrb[0].mxu0
      %v1118 = vadd.f32 %v957, %v1117
      %v1119 = vpop.f32.mrb[0].mxu0
      %v1120 = vpop.f32.mrb[0].mxu0
      %v1121 = vadd.f32 %v960, %v1120
      %v1122 = vpop.f32.mrb[0].mxu0
      %1123 = vmatprep.mubr.bf16.mxu0 0
      %1124 = vmatmul.mubr.bf16.gmra.mrb[0].mxu0 %v823
      %v1125 = vpop.f32.mrb[0].mxu0
      %v1126 = vadd.f32 %v965, %v1125
      %v1127 = vpop.f32.mrb[0].mxu0
      %v1128 = vpop.f32.mrb[0].mxu0
      %v1129 = vadd.f32 %v968, %v1128
      %v1130 = vpop.f32.mrb[0].mxu0
      %1131 = vmatprep.mubr.bf16.mxu0 0
      %1132 = vmatmul.mubr.bf16.gmra.mrb[0].mxu0 %v826
      %v1133 = vpop.f32.mrb[0].mxu0
      %v1134 = vadd.f32 %v973, %v1133
      %v1135 = vpop.f32.mrb[0].mxu0
      %v1136 = vpop.f32.mrb[0].mxu0
      %v1137 = vadd.f32 %v976, %v1136
      %v1138 = vpop.f32.mrb[0].mxu0
      %1139 = vmatprep.mubr.bf16.mxu0 0
      %1140 = vmatmul.mubr.bf16.gmra.mrb[0].mxu0 %v829
      %v1141 = vpop.f32.mrb[0].mxu0
      %v1142 = vadd.f32 %v981, %v1141
      %v1143 = vpop.f32.mrb[0].mxu0
      %v1144 = vpop.f32.mrb[0].mxu0
      %v1145 = vadd.f32 %v984, %v1144
      %v1146 = vpop.f32.mrb[0].mxu0
      %1147 = vmatprep.mubr.bf16.mxu0 0
      %1148 = vmatmul.mubr.bf16.gmra.mrb[0].mxu0 %v832
      %v1149 = vpop.f32.mrb[0].mxu0
      %v1150 = vadd.f32 %v989, %v1149
      %v1151 = vpop.f32.mrb[0].mxu0
      %v1152 = vpop.f32.mrb[0].mxu0
      %v1153 = vadd.f32 %v992, %v1152
      %v1154 = vpop.f32.mrb[0].mxu0
      %1155 = vdwg.mxu0
      %v1156 = vadd.f32 %v305, %v1030
      %v1157 = vadd.f32 %v306, %v1033
      %v1158 = vadd.f32 %v307, %v1038
      %v1159 = vadd.f32 %v308, %v1041
      %v1160 = vadd.f32 %v309, %v1046
      %v1161 = vadd.f32 %v310, %v1049
      %v1162 = vadd.f32 %v311, %v1054
      %v1163 = vadd.f32 %v312, %v1057
      %v1164 = vadd.f32 %v313, %v1062
      %v1165 = vadd.f32 %v314, %v1065
      %v1166 = vadd.f32 %v315, %v1070
      %v1167 = vadd.f32 %v316, %v1073
      %v1168 = vadd.f32 %v317, %v1078
      %v1169 = vadd.f32 %v318, %v1081
      %v1170 = vadd.f32 %v319, %v1086
      %v1171 = vadd.f32 %v320, %v1089
      %v1172 = vadd.f32 %v321, %v1094
      %v1173 = vadd.f32 %v322, %v1097
      %v1174 = vadd.f32 %v323, %v1102
      %v1175 = vadd.f32 %v324, %v1105
      %v1176 = vadd.f32 %v325, %v1110
      %v1177 = vadd.f32 %v326, %v1113
      %v1178 = vadd.f32 %v327, %v1118
      %v1179 = vadd.f32 %v328, %v1121
      %v1180 = vadd.f32 %v329, %v1126
      %v1181 = vadd.f32 %v330, %v1129
      %v1182 = vadd.f32 %v331, %v1134
      %v1183 = vadd.f32 %v332, %v1137
      %v1184 = vadd.f32 %v333, %v1142
      %v1185 = vadd.f32 %v334, %v1145
      %v1186 = vadd.f32 %v335, %v1150
      %v1187 = vadd.f32 %v336, %v1153
      %1188 = vst.msk [vmem:[#allocation2] sm:$0xff] %vm785, %v1156
      %1189 = vst.msk [vmem:[#allocation2 + $0x8] sm:$0xff] %vm785, %v1157
      %1190 = vst.msk [vmem:[#allocation2 + $0x10] sm:$0xff] %vm785, %v1158
      %1191 = vst.msk [vmem:[#allocation2 + $0x18] sm:$0xff] %vm785, %v1159
      %1192 = vst.msk [vmem:[#allocation2 + $0x20] sm:$0xff] %vm785, %v1160
      %1193 = vst.msk [vmem:[#allocation2 + $0x28] sm:$0xff] %vm785, %v1161
      %1194 = vst.msk [vmem:[#allocation2 + $0x30] sm:$0xff] %vm785, %v1162
      %1195 = vst.msk [vmem:[#allocation2 + $0x38] sm:$0xff] %vm785, %v1163
      %1196 = vst.msk [vmem:[#allocation2 + $0x40] sm:$0xff] %vm785, %v1164
      %1197 = vst.msk [vmem:[#allocation2 + $0x48] sm:$0xff] %vm785, %v1165
      %1198 = vst.msk [vmem:[#allocation2 + $0x50] sm:$0xff] %vm785, %v1166
      %1199 = vst.msk [vmem:[#allocation2 + $0x58] sm:$0xff] %vm785, %v1167
      %1200 = vst.msk [vmem:[#allocation2 + $0x60] sm:$0xff] %vm785, %v1168
      %1201 = vst.msk [vmem:[#allocation2 + $0x68] sm:$0xff] %vm785, %v1169
      %1202 = vst.msk [vmem:[#allocation2 + $0x70] sm:$0xff] %vm785, %v1170
      %1203 = vst.msk [vmem:[#allocation2 + $0x78] sm:$0xff] %vm785, %v1171
      %1204 = vst.msk [vmem:[#allocation2 + $0x80] sm:$0xff] %vm785, %v1172
      %1205 = vst.msk [vmem:[#allocation2 + $0x88] sm:$0xff] %vm785, %v1173
      %1206 = vst.msk [vmem:[#allocation2 + $0x90] sm:$0xff] %vm785, %v1174
      %1207 = vst.msk [vmem:[#allocation2 + $0x98] sm:$0xff] %vm785, %v1175
      %1208 = vst.msk [vmem:[#allocation2 + $0xa0] sm:$0xff] %vm785, %v1176
      %1209 = vst.msk [vmem:[#allocation2 + $0xa8] sm:$0xff] %vm785, %v1177
      %1210 = vst.msk [vmem:[#allocation2 + $0xb0] sm:$0xff] %vm785, %v1178
      %1211 = vst.msk [vmem:[#allocation2 + $0xb8] sm:$0xff] %vm785, %v1179
      %1212 = vst.msk [vmem:[#allocation2 + $0xc0] sm:$0xff] %vm785, %v1180
      %1213 = vst.msk [vmem:[#allocation2 + $0xc8] sm:$0xff] %vm785, %v1181
      %1214 = vst.msk [vmem:[#allocation2 + $0xd0] sm:$0xff] %vm785, %v1182
      %1215 = vst.msk [vmem:[#allocation2 + $0xd8] sm:$0xff] %vm785, %v1183
      %1216 = vst.msk [vmem:[#allocation2 + $0xe0] sm:$0xff] %vm785, %v1184
      %1217 = vst.msk [vmem:[#allocation2 + $0xe8] sm:$0xff] %vm785, %v1185
      %1218 = vst.msk [vmem:[#allocation2 + $0xf0] sm:$0xff] %vm785, %v1186
      %1219 = vst.msk [vmem:[#allocation2 + $0xf8] sm:$0xff] %vm785, %v1187
      // Predicated region
      $region37: #{discriminator_forward.7} parent=31 // pred_check
        %p1220 = pneg %p268
      $region38: #{discriminator_forward.7} parent=31 // pred_check_branch
        %1222 = sbr.rel (%p1220) target = $region40
      $region39: #{discriminator_forward.7} parent=31 // pred_region
        %v1223 = vld [vmem:[#allocation2] sm:$0xff]
        %v1224 = vld [vmem:[#allocation2 + $0x8] sm:$0xff]
        %v1225 = vld [vmem:[#allocation2 + $0x10] sm:$0xff]
        %v1226 = vld [vmem:[#allocation2 + $0x18] sm:$0xff]
        %v1227 = vld [vmem:[#allocation2 + $0x20] sm:$0xff]
        %v1228 = vld [vmem:[#allocation2 + $0x28] sm:$0xff]
        %v1229 = vld [vmem:[#allocation2 + $0x30] sm:$0xff]
        %v1230 = vld [vmem:[#allocation2 + $0x38] sm:$0xff]
        %v1231 = vld [vmem:[#allocation2 + $0x40] sm:$0xff]
        %v1232 = vld [vmem:[#allocation2 + $0x48] sm:$0xff]
        %v1233 = vld [vmem:[#allocation2 + $0x50] sm:$0xff]
        %v1234 = vld [vmem:[#allocation2 + $0x58] sm:$0xff]
        %v1235 = vld [vmem:[#allocation2 + $0x60] sm:$0xff]
        %v1236 = vld [vmem:[#allocation2 + $0x68] sm:$0xff]
        %v1237 = vld [vmem:[#allocation2 + $0x70] sm:$0xff]
        %v1238 = vld [vmem:[#allocation2 + $0x78] sm:$0xff]
        %v1239 = vld [vmem:[#allocation2 + $0x80] sm:$0xff]
        %v1240 = vld [vmem:[#allocation2 + $0x88] sm:$0xff]
        %v1241 = vld [vmem:[#allocation2 + $0x90] sm:$0xff]
        %v1242 = vld [vmem:[#allocation2 + $0x98] sm:$0xff]
        %v1243 = vld [vmem:[#allocation2 + $0xa0] sm:$0xff]
        %v1244 = vld [vmem:[#allocation2 + $0xa8] sm:$0xff]
        %v1245 = vld [vmem:[#allocation2 + $0xb0] sm:$0xff]
        %v1246 = vld [vmem:[#allocation2 + $0xb8] sm:$0xff]
        %v1247 = vld [vmem:[#allocation2 + $0xc0] sm:$0xff]
        %v1248 = vld [vmem:[#allocation2 + $0xc8] sm:$0xff]
        %v1249 = vld [vmem:[#allocation2 + $0xd0] sm:$0xff]
        %v1250 = vld [vmem:[#allocation2 + $0xd8] sm:$0xff]
        %v1251 = vld [vmem:[#allocation2 + $0xe0] sm:$0xff]
        %v1252 = vld [vmem:[#allocation2 + $0xe8] sm:$0xff]
        %v1253 = vld [vmem:[#allocation2 + $0xf0] sm:$0xff]
        %v1254 = vld [vmem:[#allocation2 + $0xf8] sm:$0xff]
        %v1255 = vld [vmem:[%s257] sm:$0x1]
        %v1257 = vlaneseq
        %v1258 = vshrl.u32 %v1257, 7
        %v1259 = vsub.s32 0, %v1258
        %v1260 = vrot.slane %v1255, %v1259
        %v1262 = vadd.f32 %v1223, %v1260
        %v1263 = vadd.f32 %v1224, %v1260
        %v1264 = vadd.f32 %v1225, %v1260
        %v1265 = vadd.f32 %v1226, %v1260
        %v1266 = vadd.f32 %v1227, %v1260
        %v1267 = vadd.f32 %v1228, %v1260
        %v1268 = vadd.f32 %v1229, %v1260
        %v1269 = vadd.f32 %v1230, %v1260
        %v1270 = vadd.f32 %v1231, %v1260
        %v1271 = vadd.f32 %v1232, %v1260
        %v1272 = vadd.f32 %v1233, %v1260
        %v1273 = vadd.f32 %v1234, %v1260
        %v1274 = vadd.f32 %v1235, %v1260
        %v1275 = vadd.f32 %v1236, %v1260
        %v1276 = vadd.f32 %v1237, %v1260
        %v1277 = vadd.f32 %v1238, %v1260
        %v1278 = vadd.f32 %v1239, %v1260
        %v1279 = vadd.f32 %v1240, %v1260
        %v1280 = vadd.f32 %v1241, %v1260
        %v1281 = vadd.f32 %v1242, %v1260
        %v1282 = vadd.f32 %v1243, %v1260
        %v1283 = vadd.f32 %v1244, %v1260
        %v1284 = vadd.f32 %v1245, %v1260
        %v1285 = vadd.f32 %v1246, %v1260
        %v1286 = vadd.f32 %v1247, %v1260
        %v1287 = vadd.f32 %v1248, %v1260
        %v1288 = vadd.f32 %v1249, %v1260
        %v1289 = vadd.f32 %v1250, %v1260
        %v1290 = vadd.f32 %v1251, %v1260
        %v1291 = vadd.f32 %v1252, %v1260
        %v1292 = vadd.f32 %v1253, %v1260
        %v1293 = vadd.f32 %v1254, %v1260
        %vm1294 = vcmp.ge.f32.partialorder %v1262, 0.0
        %vm1295 = vcmp.ge.f32.partialorder %v1263, 0.0
        %vm1296 = vcmp.ge.f32.partialorder %v1264, 0.0
        %vm1297 = vcmp.ge.f32.partialorder %v1265, 0.0
        %vm1298 = vcmp.ge.f32.partialorder %v1266, 0.0
        %vm1299 = vcmp.ge.f32.partialorder %v1267, 0.0
        %vm1300 = vcmp.ge.f32.partialorder %v1268, 0.0
        %vm1301 = vcmp.ge.f32.partialorder %v1269, 0.0
        %vm1302 = vcmp.ge.f32.partialorder %v1270, 0.0
        %vm1303 = vcmp.ge.f32.partialorder %v1271, 0.0
        %vm1304 = vcmp.ge.f32.partialorder %v1272, 0.0
        %vm1305 = vcmp.ge.f32.partialorder %v1273, 0.0
        %vm1306 = vcmp.ge.f32.partialorder %v1274, 0.0
        %vm1307 = vcmp.ge.f32.partialorder %v1275, 0.0
        %vm1308 = vcmp.ge.f32.partialorder %v1276, 0.0
        %vm1309 = vcmp.ge.f32.partialorder %v1277, 0.0
        %vm1310 = vcmp.ge.f32.partialorder %v1278, 0.0
        %vm1311 = vcmp.ge.f32.partialorder %v1279, 0.0
        %vm1312 = vcmp.ge.f32.partialorder %v1280, 0.0
        %vm1313 = vcmp.ge.f32.partialorder %v1281, 0.0
        %vm1314 = vcmp.ge.f32.partialorder %v1282, 0.0
        %vm1315 = vcmp.ge.f32.partialorder %v1283, 0.0
        %vm1316 = vcmp.ge.f32.partialorder %v1284, 0.0
        %vm1317 = vcmp.ge.f32.partialorder %v1285, 0.0
        %vm1318 = vcmp.ge.f32.partialorder %v1286, 0.0
        %vm1319 = vcmp.ge.f32.partialorder %v1287, 0.0
        %vm1320 = vcmp.ge.f32.partialorder %v1288, 0.0
        %vm1321 = vcmp.ge.f32.partialorder %v1289, 0.0
        %vm1322 = vcmp.ge.f32.partialorder %v1290, 0.0
        %vm1323 = vcmp.ge.f32.partialorder %v1291, 0.0
        %vm1324 = vcmp.ge.f32.partialorder %v1292, 0.0
        %vm1325 = vcmp.ge.f32.partialorder %v1293, 0.0
        %v1326 = vmul.f32 %v1262, 0.2
        %v1327 = vmul.f32 %v1263, 0.2
        %v1328 = vmul.f32 %v1264, 0.2
        %v1329 = vmul.f32 %v1265, 0.2
        %v1330 = vmul.f32 %v1266, 0.2
        %v1331 = vmul.f32 %v1267, 0.2
        %v1332 = vmul.f32 %v1268, 0.2
        %v1333 = vmul.f32 %v1269, 0.2
        %v1334 = vmul.f32 %v1270, 0.2
        %v1335 = vmul.f32 %v1271, 0.2
        %v1336 = vmul.f32 %v1272, 0.2
        %v1337 = vmul.f32 %v1273, 0.2
        %v1338 = vmul.f32 %v1274, 0.2
        %v1339 = vmul.f32 %v1275, 0.2
        %v1340 = vmul.f32 %v1276, 0.2
        %v1341 = vmul.f32 %v1277, 0.2
        %v1342 = vmul.f32 %v1278, 0.2
        %v1343 = vmul.f32 %v1279, 0.2
        %v1344 = vmul.f32 %v1280, 0.2
        %v1345 = vmul.f32 %v1281, 0.2
        %v1346 = vmul.f32 %v1282, 0.2
        %v1347 = vmul.f32 %v1283, 0.2
        %v1348 = vmul.f32 %v1284, 0.2
        %v1349 = vmul.f32 %v1285, 0.2
        %v1350 = vmul.f32 %v1286, 0.2
        %v1351 = vmul.f32 %v1287, 0.2
        %v1352 = vmul.f32 %v1288, 0.2
        %v1353 = vmul.f32 %v1289, 0.2
        %v1354 = vmul.f32 %v1290, 0.2
        %v1355 = vmul.f32 %v1291, 0.2
        %v1356 = vmul.f32 %v1292, 0.2
        %v1357 = vmul.f32 %v1293, 0.2
        %v1358 = vsel %vm1294, %v1262, %v1326
        %v1359 = vsel %vm1295, %v1263, %v1327
        %v1360 = vsel %vm1296, %v1264, %v1328
        %v1361 = vsel %vm1297, %v1265, %v1329
        %v1362 = vsel %vm1298, %v1266, %v1330
        %v1363 = vsel %vm1299, %v1267, %v1331
        %v1364 = vsel %vm1300, %v1268, %v1332
        %v1365 = vsel %vm1301, %v1269, %v1333
        %v1366 = vsel %vm1302, %v1270, %v1334
        %v1367 = vsel %vm1303, %v1271, %v1335
        %v1368 = vsel %vm1304, %v1272, %v1336
        %v1369 = vsel %vm1305, %v1273, %v1337
        %v1370 = vsel %vm1306, %v1274, %v1338
        %v1371 = vsel %vm1307, %v1275, %v1339
        %v1372 = vsel %vm1308, %v1276, %v1340
        %v1373 = vsel %vm1309, %v1277, %v1341
        %v1374 = vsel %vm1310, %v1278, %v1342
        %v1375 = vsel %vm1311, %v1279, %v1343
        %v1376 = vsel %vm1312, %v1280, %v1344
        %v1377 = vsel %vm1313, %v1281, %v1345
        %v1378 = vsel %vm1314, %v1282, %v1346
        %v1379 = vsel %vm1315, %v1283, %v1347
        %v1380 = vsel %vm1316, %v1284, %v1348
        %v1381 = vsel %vm1317, %v1285, %v1349
        %v1382 = vsel %vm1318, %v1286, %v1350
        %v1383 = vsel %vm1319, %v1287, %v1351
        %v1384 = vsel %vm1320, %v1288, %v1352
        %v1385 = vsel %vm1321, %v1289, %v1353
        %v1386 = vsel %vm1322, %v1290, %v1354
        %v1387 = vsel %vm1323, %v1291, %v1355
        %v1388 = vsel %vm1324, %v1292, %v1356
        %v1389 = vsel %vm1325, %v1293, %v1357
        %v1390 = vpack.c.bf16 %v1359, %v1358
        %v1391 = vpack.c.bf16 %v1361, %v1360
        %v1392 = vpack.c.bf16 %v1363, %v1362
        %v1393 = vpack.c.bf16 %v1365, %v1364
        %v1394 = vpack.c.bf16 %v1367, %v1366
        %v1395 = vpack.c.bf16 %v1369, %v1368
        %v1396 = vpack.c.bf16 %v1371, %v1370
        %v1397 = vpack.c.bf16 %v1373, %v1372
        %v1398 = vpack.c.bf16 %v1375, %v1374
        %v1399 = vpack.c.bf16 %v1377, %v1376
        %v1400 = vpack.c.bf16 %v1379, %v1378
        %v1401 = vpack.c.bf16 %v1381, %v1380
        %v1402 = vpack.c.bf16 %v1383, %v1382
        %v1403 = vpack.c.bf16 %v1385, %v1384
        %v1404 = vpack.c.bf16 %v1387, %v1386
        %v1405 = vpack.c.bf16 %v1389, %v1388
        %v1422 = vunpack.c.l.b16 %v1390
        %v1423 = vunpack.c.h.b16 %v1390
        %v1424 = vunpack.c.l.b16 %v1391
        %v1425 = vunpack.c.h.b16 %v1391
        %v1426 = vunpack.c.l.b16 %v1392
        %v1427 = vunpack.c.h.b16 %v1392
        %v1428 = vunpack.c.l.b16 %v1393
        %v1429 = vunpack.c.h.b16 %v1393
        %v1430 = vunpack.c.l.b16 %v1394
        %v1431 = vunpack.c.h.b16 %v1394
        %v1432 = vunpack.c.l.b16 %v1395
        %v1433 = vunpack.c.h.b16 %v1395
        %v1434 = vunpack.c.l.b16 %v1396
        %v1435 = vunpack.c.h.b16 %v1396
        %v1436 = vunpack.c.l.b16 %v1397
        %v1437 = vunpack.c.h.b16 %v1397
        %v1438 = vunpack.c.l.b16 %v1398
        %v1439 = vunpack.c.h.b16 %v1398
        %v1440 = vunpack.c.l.b16 %v1399
        %v1441 = vunpack.c.h.b16 %v1399
        %v1442 = vunpack.c.l.b16 %v1400
        %v1443 = vunpack.c.h.b16 %v1400
        %v1444 = vunpack.c.l.b16 %v1401
        %v1445 = vunpack.c.h.b16 %v1401
        %v1446 = vunpack.c.l.b16 %v1402
        %v1447 = vunpack.c.h.b16 %v1402
        %v1448 = vunpack.c.l.b16 %v1403
        %v1449 = vunpack.c.h.b16 %v1403
        %v1450 = vunpack.c.l.b16 %v1404
        %v1451 = vunpack.c.h.b16 %v1404
        %v1452 = vunpack.c.l.b16 %v1405
        %v1453 = vunpack.c.h.b16 %v1405
        %v1454 = vpack.c.b16 %v1422, %v1422
        %v1455 = vpack.c.b16 %v1423, %v1423
        %v1456 = vpack.c.b16 %v1424, %v1424
        %v1457 = vpack.c.b16 %v1425, %v1425
        %v1458 = vpack.c.b16 %v1426, %v1426
        %v1459 = vpack.c.b16 %v1427, %v1427
        %v1460 = vpack.c.b16 %v1428, %v1428
        %v1461 = vpack.c.b16 %v1429, %v1429
        %v1462 = vpack.c.b16 %v1430, %v1430
        %v1463 = vpack.c.b16 %v1431, %v1431
        %v1464 = vpack.c.b16 %v1432, %v1432
        %v1465 = vpack.c.b16 %v1433, %v1433
        %v1466 = vpack.c.b16 %v1434, %v1434
        %v1467 = vpack.c.b16 %v1435, %v1435
        %v1468 = vpack.c.b16 %v1436, %v1436
        %v1469 = vpack.c.b16 %v1437, %v1437
        %v1470 = vpack.c.b16 %v1438, %v1438
        %v1471 = vpack.c.b16 %v1439, %v1439
        %v1472 = vpack.c.b16 %v1440, %v1440
        %v1473 = vpack.c.b16 %v1441, %v1441
        %v1474 = vpack.c.b16 %v1442, %v1442
        %v1475 = vpack.c.b16 %v1443, %v1443
        %v1476 = vpack.c.b16 %v1444, %v1444
        %v1477 = vpack.c.b16 %v1445, %v1445
        %v1478 = vpack.c.b16 %v1446, %v1446
        %v1479 = vpack.c.b16 %v1447, %v1447
        %v1480 = vpack.c.b16 %v1448, %v1448
        %v1481 = vpack.c.b16 %v1449, %v1449
        %v1482 = vpack.c.b16 %v1450, %v1450
        %v1483 = vpack.c.b16 %v1451, %v1451
        %v1484 = vpack.c.b16 %v1452, %v1452
        %v1485 = vpack.c.b16 %v1453, %v1453
        %vm1518 = vcmask 257024
        %1519 = vst.msk [vmem:[%s265] sm:$0xf] %vm1518, %v1454
        %1520 = vst.msk [vmem:[%s265 + $0x4] sm:$0xf] %vm1518, %v1455
        %1521 = vst.msk [vmem:[%s265 + $0x8] sm:$0xf] %vm1518, %v1456
        %1522 = vst.msk [vmem:[%s265 + $0xc] sm:$0xf] %vm1518, %v1457
        %1523 = vst.msk [vmem:[%s265 + $0x10] sm:$0xf] %vm1518, %v1458
        %1524 = vst.msk [vmem:[%s265 + $0x14] sm:$0xf] %vm1518, %v1459
        %1525 = vst.msk [vmem:[%s265 + $0x18] sm:$0xf] %vm1518, %v1460
        %1526 = vst.msk [vmem:[%s265 + $0x1c] sm:$0xf] %vm1518, %v1461
        %1527 = vst.msk [vmem:[%s265 + $0x20] sm:$0xf] %vm1518, %v1462
        %1528 = vst.msk [vmem:[%s265 + $0x24] sm:$0xf] %vm1518, %v1463
        %1529 = vst.msk [vmem:[%s265 + $0x28] sm:$0xf] %vm1518, %v1464
        %1530 = vst.msk [vmem:[%s265 + $0x2c] sm:$0xf] %vm1518, %v1465
        %1531 = vst.msk [vmem:[%s265 + $0x30] sm:$0xf] %vm1518, %v1466
        %1532 = vst.msk [vmem:[%s265 + $0x34] sm:$0xf] %vm1518, %v1467
        %1533 = vst.msk [vmem:[%s265 + $0x38] sm:$0xf] %vm1518, %v1468
        %1534 = vst.msk [vmem:[%s265 + $0x3c] sm:$0xf] %vm1518, %v1469
        %1535 = vst.msk [vmem:[%s265 + $0x40] sm:$0xf] %vm1518, %v1470
        %1536 = vst.msk [vmem:[%s265 + $0x44] sm:$0xf] %vm1518, %v1471
        %1537 = vst.msk [vmem:[%s265 + $0x48] sm:$0xf] %vm1518, %v1472
        %1538 = vst.msk [vmem:[%s265 + $0x4c] sm:$0xf] %vm1518, %v1473
        %1539 = vst.msk [vmem:[%s265 + $0x50] sm:$0xf] %vm1518, %v1474
        %1540 = vst.msk [vmem:[%s265 + $0x54] sm:$0xf] %vm1518, %v1475
        %1541 = vst.msk [vmem:[%s265 + $0x58] sm:$0xf] %vm1518, %v1476
        %1542 = vst.msk [vmem:[%s265 + $0x5c] sm:$0xf] %vm1518, %v1477
        %1543 = vst.msk [vmem:[%s265 + $0x60] sm:$0xf] %vm1518, %v1478
        %1544 = vst.msk [vmem:[%s265 + $0x64] sm:$0xf] %vm1518, %v1479
        %1545 = vst.msk [vmem:[%s265 + $0x68] sm:$0xf] %vm1518, %v1480
        %1546 = vst.msk [vmem:[%s265 + $0x6c] sm:$0xf] %vm1518, %v1481
        %1547 = vst.msk [vmem:[%s265 + $0x70] sm:$0xf] %vm1518, %v1482
        %1548 = vst.msk [vmem:[%s265 + $0x74] sm:$0xf] %vm1518, %v1483
        %1549 = vst.msk [vmem:[%s265 + $0x78] sm:$0xf] %vm1518, %v1484
        %1550 = vst.msk [vmem:[%s265 + $0x7c] sm:$0xf] %vm1518, %v1485
      $region40: #{discriminator_forward.7} parent=31 // pred_fallthru
        _
      %s1551 = smul.u32 32, %s19
      %p1552 = scmp.lt.s32.totalorder %s1551, 63
      %s1553 = scalar_select %p1552, %s1551, 63
      %p1554 = scmp.lt.s32.totalorder %s20, 0
      %s1555 = scalar_select %p1554, %s20, 0
      %s1556 = sadd.s32 %s1555, %s1553
      %s1557 = smul.addr %s1556, 4
      %s1558 = scalar_lea.vmem %s3, %s1557
      // Predicated region
      $region41: #{discriminator_forward.7} parent=31 // pred_check
        %p1559 = pneg %p135
      $region42: #{discriminator_forward.7} parent=31 // pred_check_branch
        %1561 = sbr.rel (%p1559) target = $region44
      $region43: #{discriminator_forward.7} parent=31 // pred_region
        %s1562 = smul.u32 32, %s19
      $region44: #{discriminator_forward.7} parent=31 // pred_fallthru
        _
    $region32: #{discriminator_forward.7} parent=5 // pred_fallthru
      _
    %p1563 = scmp.le.s32.totalorder 2, %s9
    // Predicated region
    $region45: #{discriminator_forward.7} parent=5 // pred_check
      %p1564 = pneg %p1563
    $region46: #{discriminator_forward.7} parent=5 // pred_check_branch
      %1566 = sbr.rel (%p1564) target = $region48
    $region47: #{discriminator_forward.7} parent=5 // pred_region
      %s1567 = ssub.s32 %s9, 2
      // Predicated region
      $region49: #{discriminator_forward.7} parent=47 // pred_check
        %p1568 = pneg %p141
      $region50: #{discriminator_forward.7} parent=47 // pred_check_branch
        %1570 = sbr.rel (%p1568) target = $region52
      $region51: #{discriminator_forward.7} parent=47 // pred_region
        %s1571 = smul.u32 32, %s22
        %p1572 = scmp.lt.s32.totalorder %s1571, 63
        %s1573 = scalar_select %p1572, %s1571, 63
        %p1574 = scmp.lt.s32.totalorder %s23, 0
        %s1575 = scalar_select %p1574, %s23, 0
        %s1576 = sadd.s32 %s1575, %s1573
        %s1577 = smul.addr %s1576, 4
        %s1578 = scalar_lea.vmem %s3, %s1577
      $region52: #{discriminator_forward.7} parent=47 // pred_fallthru
        _
    $region48: #{discriminator_forward.7} parent=5 // pred_fallthru
      _
  $region6: #{discriminator_forward.7} parent=0 // loop_footer
    %s13 = sadd.s32 1, %s9
  $region7: #{discriminator_forward.7} parent=0 // loop_footer_branch
    %8 = sbr.rel target = $region3
  $region8: #{discriminator_forward.7} parent=0 // loop_exit
    _

// kernel: discriminator_forward.8
$region0: #{discriminator_forward.8}
  #allocation0 [shape = 'u32[]', space=smem, size = 0x4, offset = 0x4, fixed_abs, tag = 'smem constant byte address 0x4 - core index']
  #allocation1 [shape = 'u32[144,128]{1,0:T(1,128)}', space=vmem, size = 0x12000, scoped, tag = 'internal scratch']
  #allocation2 [shape = 'f32[128,32]{1,0:T(8,128)}', space=vmem, size = 0x10000, scoped, tag = 'scratch operand']
  #allocation3 [shape = 'f32[128,32]{1,0:T(8,128)}', space=vmem, size = 0x10000, scoped, tag = 'scratch operand']
  %s0 = inlined_call_operand.vmem [shape: bf16[128,288], index: 0, kind: input, shape index: {}]
  %s1 = inlined_call_operand.vmem [shape: bf16[288,32], index: 1, kind: input, shape index: {}]
  %s2 = inlined_call_operand.vmem [shape: f32[1,32], index: 2, kind: input, shape index: {}]
  %s3 = inlined_call_operand.vmem [shape: bf16[128,288], index: 3, kind: input, shape index: {}]
  %s4 = inlined_call_operand.vmem [shape: bf16[288,32], index: 4, kind: input, shape index: {}]
  %s5 = inlined_call_operand.vmem [shape: f32[1,32], index: 5, kind: input, shape index: {}]
  %s6 = inlined_call_operand.vmem [shape: bf16[128,32], index: 6, kind: output, shape index: {}]
  %s7 = sld [smem:[#allocation0]]
  $region73: #{discriminator_forward.8} parent=0
    _
  %s9 = ssub.s32 1, %s7
  %s10 = scalar_select 0, %s9, %s7
  loop: start=0, step=1, limit=4
  $region2: #{discriminator_forward.8} parent=0 // loop_pre_header
    _
  $region3: #{discriminator_forward.8} parent=0 // loop_header
    %s12 = sphi 0, %s16
    %p13 = scmp.ge.s32.totalorder %s12, 4
    %s19 = sphi 0, %s38
    %s20 = sphi 0, %s34
    %s21 = sphi 0, %s30
    %s22 = sphi 0, %s19
    %s23 = sphi 0, %s20
    %s24 = sphi 0, %s21
    %s25 = sphi 0, %s22
    %s26 = sphi 0, %s23
    %s27 = sphi 0, %s24
    %s47 = sphi 0, %s49
    %s50 = sphi 0, %s47
    %s51 = sphi 0, %s50
    %s67 = sphi 0, %s51
    %s79 = sphi 0, %s81
    %s82 = sphi 0, %s79
    %s83 = sphi 0, %s82
    %s99 = sphi 0, %s83
    %s105 = sphi 0, %s107
    %s108 = sphi 0, %s105
    %s109 = sphi 0, %s108
    %s125 = sphi 0, %s109
    %s139 = sphi 0, %s141
    %s142 = sphi 0, %s139
    %s143 = sphi 0, %s142
    %s159 = sphi 0, %s143
    %s173 = sphi 0, %s175
    %s176 = sphi 0, %s173
    %s177 = sphi 0, %s176
    %s193 = sphi 0, %s177
    %s199 = sphi 0, %s201
    %s202 = sphi 0, %s199
    %s203 = sphi 0, %s202
    %s219 = sphi 0, %s203
    %s227 = sphi 0, %s229
    %s230 = sphi 0, %s227
    %s231 = sphi 0, %s230
    %s247 = sphi 0, %s231
  $region4: #{discriminator_forward.8} parent=0 // loop_header_branch
    %15 = sbr.rel (%p13) target = $region8
  $region5: #{discriminator_forward.8} parent=0 // loop_body
    %s17 = ssub.s32 %s12, 1
    %s18 = ssub.s32 %s12, 2
    %s28 = sadd.s32 1, %s21
    %p29 = scmp.ge.s32.totalorder %s28, 2
    %s30 = scalar_select %p29, 0, %s28
    %s31 = sadd.s32 1, %s20
    %s32 = scalar_select %p29, %s31, %s20
    %p33 = scmp.ge.s32.totalorder %s32, 1
    %s34 = scalar_select %p33, 0, %s32
    %s35 = sadd.s32 1, %s19
    %s36 = scalar_select %p33, %s35, %s19
    %p37 = scmp.ge.s32.totalorder %s36, 1
    %s38 = scalar_select %p37, 0, %s36
    %p39 = scmp.lt.s32.totalorder %s21, 0
    %s40 = scalar_select %p39, %s21, 0
    %p41 = scmp.lt.s32.totalorder %s30, 0
    %s42 = scalar_select %p41, %s30, 0
    %s43 = ssub.s32 %s19, %s38
    %s44 = ssub.s32 %s40, %s42
    %s45 = sor.u32 %s43, %s44
    %p46 = scmp.eq.s32.totalorder %s45, 0
    %s48 = sadd.s32 %s47, 1
    %s49 = scalar_select %p46, %s47, %s48
    %p52 = pneg %p46
    %p53 = scmp.eq.s32.totalorder %s12, 1
    %p54 = por %p52, %p53
    %p55 = scmp.ne.s32.totalorder %s47, %s50
    %p56 = scmp.eq.s32.totalorder %s12, 0
    %p57 = por %p55, %p56
    %p58 = scmp.ne.s32.totalorder %s47, %s50
    %p59 = scmp.eq.s32.totalorder %s17, 1
    %p60 = por %p58, %p59
    %p61 = scmp.ne.s32.totalorder %s50, %s51
    %p62 = scmp.eq.s32.totalorder %s17, 0
    %p63 = por %p61, %p62
    %p64 = scmp.ne.s32.totalorder %s50, %s51
    %p65 = scmp.eq.s32.totalorder %s18, 1
    %p66 = por %p64, %p65
    %p68 = scmp.ne.s32.totalorder %s51, %s67
    %p69 = scmp.eq.s32.totalorder %s18, 0
    %p70 = por %p68, %p69
    %p71 = scmp.lt.s32.totalorder %s21, 0
    %s72 = scalar_select %p71, %s21, 0
    %p73 = scmp.lt.s32.totalorder %s30, 0
    %s74 = scalar_select %p73, %s30, 0
    %s75 = ssub.s32 %s72, %s74
    %s76 = ssub.s32 %s20, %s34
    %s77 = sor.u32 %s75, %s76
    %p78 = scmp.eq.s32.totalorder %s77, 0
    %s80 = sadd.s32 %s79, 1
    %s81 = scalar_select %p78, %s79, %s80
    %p84 = pneg %p78
    %p85 = scmp.eq.s32.totalorder %s12, 1
    %p86 = por %p84, %p85
    %p87 = scmp.ne.s32.totalorder %s79, %s82
    %p88 = scmp.eq.s32.totalorder %s12, 0
    %p89 = por %p87, %p88
    %p90 = scmp.ne.s32.totalorder %s79, %s82
    %p91 = scmp.eq.s32.totalorder %s17, 1
    %p92 = por %p90, %p91
    %p93 = scmp.ne.s32.totalorder %s82, %s83
    %p94 = scmp.eq.s32.totalorder %s17, 0
    %p95 = por %p93, %p94
    %p96 = scmp.ne.s32.totalorder %s82, %s83
    %p97 = scmp.eq.s32.totalorder %s18, 1
    %p98 = por %p96, %p97
    %p100 = scmp.ne.s32.totalorder %s83, %s99
    %p101 = scmp.eq.s32.totalorder %s18, 0
    %p102 = por %p100, %p101
    %s103 = ssub.s32 %s20, %s34
    %p104 = scmp.eq.s32.totalorder %s103, 0
    %s106 = sadd.s32 %s105, 1
    %s107 = scalar_select %p104, %s105, %s106
    %p110 = pneg %p104
    %p111 = scmp.eq.s32.totalorder %s12, 1
    %p112 = por %p110, %p111
    %p113 = scmp.ne.s32.totalorder %s105, %s108
    %p114 = scmp.eq.s32.totalorder %s12, 0
    %p115 = por %p113, %p114
    %p116 = scmp.ne.s32.totalorder %s105, %s108
    %p117 = scmp.eq.s32.totalorder %s17, 1
    %p118 = por %p116, %p117
    %p119 = scmp.ne.s32.totalorder %s108, %s109
    %p120 = scmp.eq.s32.totalorder %s17, 0
    %p121 = por %p119, %p120
    %p122 = scmp.ne.s32.totalorder %s108, %s109
    %p123 = scmp.eq.s32.totalorder %s18, 1
    %p124 = por %p122, %p123
    %p126 = scmp.ne.s32.totalorder %s109, %s125
    %p127 = scmp.eq.s32.totalorder %s18, 0
    %p128 = por %p126, %p127
    %s129 = ssub.s32 %s21, 1
    %p130 = scmp.gt.s32.totalorder %s129, 0
    %s131 = scalar_select %p130, %s129, 0
    %s132 = ssub.s32 %s30, 1
    %p133 = scmp.gt.s32.totalorder %s132, 0
    %s134 = scalar_select %p133, %s132, 0
    %s135 = ssub.s32 %s19, %s38
    %s136 = ssub.s32 %s131, %s134
    %s137 = sor.u32 %s135, %s136
    %p138 = scmp.eq.s32.totalorder %s137, 0
    %s140 = sadd.s32 %s139, 1
    %s141 = scalar_select %p138, %s139, %s140
    %p144 = pneg %p138
    %p145 = scmp.eq.s32.totalorder %s12, 1
    %p146 = por %p144, %p145
    %p147 = scmp.ne.s32.totalorder %s139, %s142
    %p148 = scmp.eq.s32.totalorder %s12, 0
    %p149 = por %p147, %p148
    %p150 = scmp.ne.s32.totalorder %s139, %s142
    %p151 = scmp.eq.s32.totalorder %s17, 1
    %p152 = por %p150, %p151
    %p153 = scmp.ne.s32.totalorder %s142, %s143
    %p154 = scmp.eq.s32.totalorder %s17, 0
    %p155 = por %p153, %p154
    %p156 = scmp.ne.s32.totalorder %s142, %s143
    %p157 = scmp.eq.s32.totalorder %s18, 1
    %p158 = por %p156, %p157
    %p160 = scmp.ne.s32.totalorder %s143, %s159
    %p161 = scmp.eq.s32.totalorder %s18, 0
    %p162 = por %p160, %p161
    %s163 = ssub.s32 %s21, 1
    %p164 = scmp.gt.s32.totalorder %s163, 0
    %s165 = scalar_select %p164, %s163, 0
    %s166 = ssub.s32 %s30, 1
    %p167 = scmp.gt.s32.totalorder %s166, 0
    %s168 = scalar_select %p167, %s166, 0
    %s169 = ssub.s32 %s165, %s168
    %s170 = ssub.s32 %s20, %s34
    %s171 = sor.u32 %s169, %s170
    %p172 = scmp.eq.s32.totalorder %s171, 0
    %s174 = sadd.s32 %s173, 1
    %s175 = scalar_select %p172, %s173, %s174
    %p178 = pneg %p172
    %p179 = scmp.eq.s32.totalorder %s12, 1
    %p180 = por %p178, %p179
    %p181 = scmp.ne.s32.totalorder %s173, %s176
    %p182 = scmp.eq.s32.totalorder %s12, 0
    %p183 = por %p181, %p182
    %p184 = scmp.ne.s32.totalorder %s173, %s176
    %p185 = scmp.eq.s32.totalorder %s17, 1
    %p186 = por %p184, %p185
    %p187 = scmp.ne.s32.totalorder %s176, %s177
    %p188 = scmp.eq.s32.totalorder %s17, 0
    %p189 = por %p187, %p188
    %p190 = scmp.ne.s32.totalorder %s176, %s177
    %p191 = scmp.eq.s32.totalorder %s18, 1
    %p192 = por %p190, %p191
    %p194 = scmp.ne.s32.totalorder %s177, %s193
    %p195 = scmp.eq.s32.totalorder %s18, 0
    %p196 = por %p194, %p195
    %s197 = ssub.s32 %s20, %s34
    %p198 = scmp.eq.s32.totalorder %s197, 0
    %s200 = sadd.s32 %s199, 1
    %s201 = scalar_select %p198, %s199, %s200
    %p204 = pneg %p198
    %p205 = scmp.eq.s32.totalorder %s12, 1
    %p206 = por %p204, %p205
    %p207 = scmp.ne.s32.totalorder %s199, %s202
    %p208 = scmp.eq.s32.totalorder %s12, 0
    %p209 = por %p207, %p208
    %p210 = scmp.ne.s32.totalorder %s199, %s202
    %p211 = scmp.eq.s32.totalorder %s17, 1
    %p212 = por %p210, %p211
    %p213 = scmp.ne.s32.totalorder %s202, %s203
    %p214 = scmp.eq.s32.totalorder %s17, 0
    %p215 = por %p213, %p214
    %p216 = scmp.ne.s32.totalorder %s202, %s203
    %p217 = scmp.eq.s32.totalorder %s18, 1
    %p218 = por %p216, %p217
    %p220 = scmp.ne.s32.totalorder %s203, %s219
    %p221 = scmp.eq.s32.totalorder %s18, 0
    %p222 = por %p220, %p221
    %s223 = ssub.s32 %s19, %s38
    %s224 = ssub.s32 %s20, %s34
    %s225 = sor.u32 %s223, %s224
    %p226 = scmp.eq.s32.totalorder %s225, 0
    %s228 = sadd.s32 %s227, 1
    %s229 = scalar_select %p226, %s227, %s228
    %p232 = pneg %p226
    %p233 = scmp.eq.s32.totalorder %s12, 1
    %p234 = por %p232, %p233
    %p235 = scmp.ne.s32.totalorder %s227, %s230
    %p236 = scmp.eq.s32.totalorder %s12, 0
    %p237 = por %p235, %p236
    %p238 = scmp.ne.s32.totalorder %s227, %s230
    %p239 = scmp.eq.s32.totalorder %s17, 1
    %p240 = por %p238, %p239
    %p241 = scmp.ne.s32.totalorder %s230, %s231
    %p242 = scmp.eq.s32.totalorder %s17, 0
    %p243 = por %p241, %p242
    %p244 = scmp.ne.s32.totalorder %s230, %s231
    %p245 = scmp.eq.s32.totalorder %s18, 1
    %p246 = por %p244, %p245
    %p248 = scmp.ne.s32.totalorder %s231, %s247
    %p249 = scmp.eq.s32.totalorder %s18, 0
    %p250 = por %p248, %p249
    %p251 = scmp.le.s32.totalorder 1, %s12
    %p252 = scmp.lt.s32.totalorder %s12, 3
    %p253 = pnand %p251, %p252
    %p254 = pneg %p253
    // Predicated region
    $region9: #{discriminator_forward.8} parent=5 // pred_check
      _
    $region10: #{discriminator_forward.8} parent=5 // pred_check_branch
      %256 = sbr.rel (%p253) target = $region12
    $region11: #{discriminator_forward.8} parent=5 // pred_region
      %s257 = ssub.s32 %s12, 1
      // Predicated region
      $region13: #{discriminator_forward.8} parent=11 // pred_check
        %p258 = pneg %p121
      $region14: #{discriminator_forward.8} parent=11 // pred_check_branch
        %260 = sbr.rel (%p258) target = $region16
      $region15: #{discriminator_forward.8} parent=11 // pred_region
        %p261 = scmp.lt.s32.totalorder %s23, 0
        %s262 = scalar_select %p261, %s23, 0
        %s263 = scalar_lea.vmem %s2, %s262
      $region16: #{discriminator_forward.8} parent=11 // pred_fallthru
        _
      // Predicated region
      $region17: #{discriminator_forward.8} parent=11 // pred_check
        %p264 = pneg %p215
      $region18: #{discriminator_forward.8} parent=11 // pred_check_branch
        %266 = sbr.rel (%p264) target = $region20
      $region19: #{discriminator_forward.8} parent=11 // pred_region
        %p267 = scmp.lt.s32.totalorder %s23, 0
        %s268 = scalar_select %p267, %s23, 0
        %s269 = scalar_lea.vmem %s5, %s268
      $region20: #{discriminator_forward.8} parent=11 // pred_fallthru
        _
    $region12: #{discriminator_forward.8} parent=5 // pred_fallthru
      _
    %p270 = scmp.lt.s32.totalorder %s12, 2
    // Predicated region
    $region21: #{discriminator_forward.8} parent=5 // pred_check
      %p271 = pneg %p270
    $region22: #{discriminator_forward.8} parent=5 // pred_check_branch
      %273 = sbr.rel (%p271) target = $region24
    $region23: #{discriminator_forward.8} parent=5 // pred_region
      // Predicated region
      $region25: #{discriminator_forward.8} parent=23 // pred_check
        %p274 = pneg %p57
      $region26: #{discriminator_forward.8} parent=23 // pred_check_branch
        %276 = sbr.rel (%p274) target = $region28
      $region27: #{discriminator_forward.8} parent=23 // pred_region
        %p277 = scmp.lt.s32.totalorder %s21, 0
        %s278 = scalar_select %p277, %s21, 0
        %s279 = smul.u32 16, %s19
        %s280 = smul.u32 3, %s278
        %p281 = scmp.lt.s32.totalorder %s279, 15
        %s282 = scalar_select %p281, %s279, 15
        %p283 = scmp.lt.s32.totalorder %s280, 2
        %s284 = scalar_select %p283, %s280, 2
        %s285 = smul.addr %s282, 3
        %s286 = sadd.s32 %s284, %s285
        %s287 = smul.addr %s286, 4
        %s288 = scalar_lea.vmem %s0, %s287
        %p289 = scmp.lt.s32.totalorder %s21, 0
        %s290 = scalar_select %p289, %s21, 0
        %s291 = smul.u32 16, %s19
        %s292 = smul.u32 3, %s290
      $region28: #{discriminator_forward.8} parent=23 // pred_fallthru
        _
      // Predicated region
      $region29: #{discriminator_forward.8} parent=23 // pred_check
        %p293 = pneg %p89
      $region30: #{discriminator_forward.8} parent=23 // pred_check_branch
        %295 = sbr.rel (%p293) target = $region32
      $region31: #{discriminator_forward.8} parent=23 // pred_region
        %p296 = scmp.lt.s32.totalorder %s21, 0
        %s297 = scalar_select %p296, %s21, 0
        %s298 = smul.u32 36, %s297
        %p299 = scmp.lt.s32.totalorder %s298, 35
        %s300 = scalar_select %p299, %s298, 35
        %p301 = scmp.lt.s32.totalorder %s20, 0
        %s302 = scalar_select %p301, %s20, 0
        %s303 = sadd.s32 %s302, %s300
        %s304 = smul.addr %s303, 4
        %s305 = scalar_lea.vmem %s1, %s304
        %p306 = scmp.lt.s32.totalorder %s21, 0
        %s307 = scalar_select %p306, %s21, 0
        %s308 = smul.u32 36, %s307
      $region32: #{discriminator_forward.8} parent=23 // pred_fallthru
        _
      // Predicated region
      $region33: #{discriminator_forward.8} parent=23 // pred_check
        %p309 = pneg %p149
      $region34: #{discriminator_forward.8} parent=23 // pred_check_branch
        %311 = sbr.rel (%p309) target = $region36
      $region35: #{discriminator_forward.8} parent=23 // pred_region
        %s312 = ssub.s32 %s21, 1
        %p313 = scmp.gt.s32.totalorder %s312, 0
        %s314 = scalar_select %p313, %s312, 0
        %s315 = smul.u32 16, %s19
        %s316 = smul.u32 3, %s314
        %p317 = scmp.lt.s32.totalorder %s315, 15
        %s318 = scalar_select %p317, %s315, 15
        %p319 = scmp.lt.s32.totalorder %s316, 2
        %s320 = scalar_select %p319, %s316, 2
        %s321 = smul.addr %s318, 3
        %s322 = sadd.s32 %s320, %s321
        %s323 = smul.addr %s322, 4
        %s324 = scalar_lea.vmem %s3, %s323
        %s325 = ssub.s32 %s21, 1
        %p326 = scmp.gt.s32.totalorder %s325, 0
        %s327 = scalar_select %p326, %s325, 0
        %s328 = smul.u32 16, %s19
        %s329 = smul.u32 3, %s327
      $region36: #{discriminator_forward.8} parent=23 // pred_fallthru
        _
      // Predicated region
      $region37: #{discriminator_forward.8} parent=23 // pred_check
        %p330 = pneg %p183
      $region38: #{discriminator_forward.8} parent=23 // pred_check_branch
        %332 = sbr.rel (%p330) target = $region40
      $region39: #{discriminator_forward.8} parent=23 // pred_region
        %s333 = ssub.s32 %s21, 1
        %p334 = scmp.gt.s32.totalorder %s333, 0
        %s335 = scalar_select %p334, %s333, 0
        %s336 = smul.u32 36, %s335
        %p337 = scmp.lt.s32.totalorder %s336, 35
        %s338 = scalar_select %p337, %s336, 35
        %p339 = scmp.lt.s32.totalorder %s20, 0
        %s340 = scalar_select %p339, %s20, 0
        %s341 = sadd.s32 %s340, %s338
        %s342 = smul.addr %s341, 4
        %s343 = scalar_lea.vmem %s4, %s342
        %s344 = ssub.s32 %s21, 1
        %p345 = scmp.gt.s32.totalorder %s344, 0
        %s346 = scalar_select %p345, %s344, 0
        %s347 = smul.u32 36, %s346
      $region40: #{discriminator_forward.8} parent=23 // pred_fallthru
        _
    $region24: #{discriminator_forward.8} parent=5 // pred_fallthru
      _
    %p348 = scmp.le.s32.totalorder 1, %s12
    %p349 = scmp.lt.s32.totalorder %s12, 3
    %p350 = pnand %p348, %p349
    %p351 = pneg %p350
    // Predicated region
    $region41: #{discriminator_forward.8} parent=5 // pred_check
      _
    $region42: #{discriminator_forward.8} parent=5 // pred_check_branch
      %353 = sbr.rel (%p350) target = $region44
    $region43: #{discriminator_forward.8} parent=5 // pred_region
      %s354 = ssub.s32 %s12, 1
      %p355 = scmp.lt.s32.totalorder %s24, 0
      %s356 = scalar_select %p355, %s24, 0
      %s357 = smul.u32 16, %s22
      %s358 = smul.u32 3, %s356
      %p359 = scmp.lt.s32.totalorder %s357, 15
      %s360 = scalar_select %p359, %s357, 15
      %p361 = scmp.lt.s32.totalorder %s358, 2
      %s362 = scalar_select %p361, %s358, 2
      %s363 = smul.addr %s360, 3
      %s364 = sadd.s32 %s362, %s363
      %s365 = smul.addr %s364, 4
      %s366 = scalar_lea.vmem %s0, %s365
      %p367 = pneg %p63
      %p368 = pneg %p60
      %p369 = scmp.lt.s32.totalorder %s24, 0
      %s370 = scalar_select %p369, %s24, 0
      %s371 = smul.u32 36, %s370
      %p372 = scmp.lt.s32.totalorder %s371, 35
      %s373 = scalar_select %p372, %s371, 35
      %p374 = scmp.lt.s32.totalorder %s23, 0
      %s375 = scalar_select %p374, %s23, 0
      %s376 = sadd.s32 %s375, %s373
      %s377 = smul.addr %s376, 4
      %s378 = scalar_lea.vmem %s1, %s377
      %p379 = pneg %p95
      %p380 = pneg %p92
      %p381 = scmp.lt.s32.totalorder %s23, 0
      %s382 = scalar_select %p381, %s23, 0
      %s383 = scalar_lea.vmem %s2, %s382
      %p384 = pneg %p121
      %p385 = pneg %p118
      %s386 = ssub.s32 %s24, 1
      %p387 = scmp.gt.s32.totalorder %s386, 0
      %s388 = scalar_select %p387, %s386, 0
      %s389 = smul.u32 16, %s22
      %s390 = smul.u32 3, %s388
      %p391 = scmp.lt.s32.totalorder %s389, 15
      %s392 = scalar_select %p391, %s389, 15
      %p393 = scmp.lt.s32.totalorder %s390, 2
      %s394 = scalar_select %p393, %s390, 2
      %s395 = smul.addr %s392, 3
      %s396 = sadd.s32 %s394, %s395
      %s397 = smul.addr %s396, 4
      %s398 = scalar_lea.vmem %s3, %s397
      %p399 = pneg %p155
      %p400 = pneg %p152
      %s401 = ssub.s32 %s24, 1
      %p402 = scmp.gt.s32.totalorder %s401, 0
      %s403 = scalar_select %p402, %s401, 0
      %s404 = smul.u32 36, %s403
      %p405 = scmp.lt.s32.totalorder %s404, 35
      %s406 = scalar_select %p405, %s404, 35
      %p407 = scmp.lt.s32.totalorder %s23, 0
      %s408 = scalar_select %p407, %s23, 0
      %s409 = sadd.s32 %s408, %s406
      %s410 = smul.addr %s409, 4
      %s411 = scalar_lea.vmem %s4, %s410
      %p412 = pneg %p189
      %p413 = pneg %p186
      %p414 = scmp.lt.s32.totalorder %s23, 0
      %s415 = scalar_select %p414, %s23, 0
      %s416 = scalar_lea.vmem %s5, %s415
      %p417 = pneg %p215
      %p418 = pneg %p212
      %p419 = pneg %p243
      %p420 = pneg %p240
      %s421 = smul.u32 16, %s22
      %p422 = scmp.lt.s32.totalorder %s421, 15
      %s423 = scalar_select %p422, %s421, 15
      %p424 = scmp.lt.s32.totalorder %s23, 0
      %s425 = scalar_select %p424, %s23, 0
      %s426 = sadd.s32 %s425, %s423
      %s427 = smul.addr %s426, 4
      %s428 = scalar_lea.vmem %s6, %s427
      %p429 = scmp.lt.s32.totalorder %s24, 0
      %s430 = scalar_select %p429, %s24, 0
      %s431 = smul.u32 16, %s22
      %s432 = smul.u32 3, %s430
      %p433 = scmp.lt.s32.totalorder %s431, 15
      %s434 = scalar_select %p433, %s431, 15
      %p435 = scmp.lt.s32.totalorder %s432, 2
      %s436 = scalar_select %p435, %s432, 2
      %s437 = smul.addr %s434, 3
      %s438 = sadd.s32 %s436, %s437
      %s439 = smul.addr %s438, 4
      %s440 = scalar_lea.vmem %s0, %s439
      %p441 = scmp.lt.s32.totalorder %s24, 0
      %s442 = scalar_select %p441, %s24, 0
      %s443 = smul.u32 16, %s22
      %s444 = smul.u32 3, %s442
      %p445 = scmp.lt.s32.totalorder %s24, 0
      %s446 = scalar_select %p445, %s24, 0
      %s447 = smul.u32 36, %s446
      %p448 = scmp.lt.s32.totalorder %s447, 35
      %s449 = scalar_select %p448, %s447, 35
      %p450 = scmp.lt.s32.totalorder %s23, 0
      %s451 = scalar_select %p450, %s23, 0
      %s452 = sadd.s32 %s451, %s449
      %s453 = smul.addr %s452, 4
      %s454 = scalar_lea.vmem %s1, %s453
      %p455 = scmp.lt.s32.totalorder %s24, 0
      %s456 = scalar_select %p455, %s24, 0
      %s457 = smul.u32 36, %s456
      %p458 = scmp.lt.s32.totalorder %s23, 0
      %s459 = scalar_select %p458, %s23, 0
      %s460 = scalar_lea.vmem %s2, %s459
      %s461 = ssub.s32 %s24, 1
      %p462 = scmp.gt.s32.totalorder %s461, 0
      %s463 = scalar_select %p462, %s461, 0
      %s464 = smul.u32 16, %s22
      %s465 = smul.u32 3, %s463
      %p466 = scmp.lt.s32.totalorder %s464, 15
      %s467 = scalar_select %p466, %s464, 15
      %p468 = scmp.lt.s32.totalorder %s465, 2
      %s469 = scalar_select %p468, %s465, 2
      %s470 = smul.addr %s467, 3
      %s471 = sadd.s32 %s469, %s470
      %s472 = smul.addr %s471, 4
      %s473 = scalar_lea.vmem %s3, %s472
      %s474 = ssub.s32 %s24, 1
      %p475 = scmp.gt.s32.totalorder %s474, 0
      %s476 = scalar_select %p475, %s474, 0
      %s477 = smul.u32 16, %s22
      %s478 = smul.u32 3, %s476
      %s479 = ssub.s32 %s24, 1
      %p480 = scmp.gt.s32.totalorder %s479, 0
      %s481 = scalar_select %p480, %s479, 0
      %s482 = smul.u32 36, %s481
      %p483 = scmp.lt.s32.totalorder %s482, 35
      %s484 = scalar_select %p483, %s482, 35
      %p485 = scmp.lt.s32.totalorder %s23, 0
      %s486 = scalar_select %p485, %s23, 0
      %s487 = sadd.s32 %s486, %s484
      %s488 = smul.addr %s487, 4
      %s489 = scalar_lea.vmem %s4, %s488
      %s490 = ssub.s32 %s24, 1
      %p491 = scmp.gt.s32.totalorder %s490, 0
      %s492 = scalar_select %p491, %s490, 0
      %s493 = smul.u32 36, %s492
      %p494 = scmp.lt.s32.totalorder %s23, 0
      %s495 = scalar_select %p494, %s23, 0
      %s496 = scalar_lea.vmem %s5, %s495
      %s497 = smul.u32 16, %s22
      %p498 = scmp.lt.s32.totalorder %s497, 15
      %s499 = scalar_select %p498, %s497, 15
      %p500 = scmp.lt.s32.totalorder %s23, 0
      %s501 = scalar_select %p500, %s23, 0
      %s502 = sadd.s32 %s501, %s499
      %s503 = smul.addr %s502, 4
      %s504 = scalar_lea.vmem %s6, %s503
      %s505 = smul.u32 16, %s22
      %p507 = scmp.eq.s32.totalorder %s24, 0
      // Predicated region
      $region45: #{discriminator_forward.8} parent=43 // pred_check
        %p508 = pneg %p507
      $region46: #{discriminator_forward.8} parent=43 // pred_check_branch
        %510 = sbr.rel (%p508) target = $region48
      $region47: #{discriminator_forward.8} parent=43 // pred_region
        %vm511 = vcmask 261120
        %512 = vst.msk [vmem:[#allocation2] sm:$0xff] %vm511, 0.0
        %513 = vst.msk [vmem:[#allocation2 + $0x8] sm:$0xff] %vm511, 0.0
        %514 = vst.msk [vmem:[#allocation2 + $0x10] sm:$0xff] %vm511, 0.0
        %515 = vst.msk [vmem:[#allocation2 + $0x18] sm:$0xff] %vm511, 0.0
        %516 = vst.msk [vmem:[#allocation2 + $0x20] sm:$0xff] %vm511, 0.0
        %517 = vst.msk [vmem:[#allocation2 + $0x28] sm:$0xff] %vm511, 0.0
        %518 = vst.msk [vmem:[#allocation2 + $0x30] sm:$0xff] %vm511, 0.0
        %519 = vst.msk [vmem:[#allocation2 + $0x38] sm:$0xff] %vm511, 0.0
        %520 = vst.msk [vmem:[#allocation2 + $0x40] sm:$0xff] %vm511, 0.0
        %521 = vst.msk [vmem:[#allocation2 + $0x48] sm:$0xff] %vm511, 0.0
        %522 = vst.msk [vmem:[#allocation2 + $0x50] sm:$0xff] %vm511, 0.0
        %523 = vst.msk [vmem:[#allocation2 + $0x58] sm:$0xff] %vm511, 0.0
        %524 = vst.msk [vmem:[#allocation2 + $0x60] sm:$0xff] %vm511, 0.0
        %525 = vst.msk [vmem:[#allocation2 + $0x68] sm:$0xff] %vm511, 0.0
        %526 = vst.msk [vmem:[#allocation2 + $0x70] sm:$0xff] %vm511, 0.0
        %527 = vst.msk [vmem:[#allocation2 + $0x78] sm:$0xff] %vm511, 0.0
        %528 = vst.msk [vmem:[#allocation3] sm:$0xff] %vm511, 0.0
        %529 = vst.msk [vmem:[#allocation3 + $0x8] sm:$0xff] %vm511, 0.0
        %530 = vst.msk [vmem:[#allocation3 + $0x10] sm:$0xff] %vm511, 0.0
        %531 = vst.msk [vmem:[#allocation3 + $0x18] sm:$0xff] %vm511, 0.0
        %532 = vst.msk [vmem:[#allocation3 + $0x20] sm:$0xff] %vm511, 0.0
        %533 = vst.msk [vmem:[#allocation3 + $0x28] sm:$0xff] %vm511, 0.0
        %534 = vst.msk [vmem:[#allocation3 + $0x30] sm:$0xff] %vm511, 0.0
        %535 = vst.msk [vmem:[#allocation3 + $0x38] sm:$0xff] %vm511, 0.0
        %536 = vst.msk [vmem:[#allocation3 + $0x40] sm:$0xff] %vm511, 0.0
        %537 = vst.msk [vmem:[#allocation3 + $0x48] sm:$0xff] %vm511, 0.0
        %538 = vst.msk [vmem:[#allocation3 + $0x50] sm:$0xff] %vm511, 0.0
        %539 = vst.msk [vmem:[#allocation3 + $0x58] sm:$0xff] %vm511, 0.0
        %540 = vst.msk [vmem:[#allocation3 + $0x60] sm:$0xff] %vm511, 0.0
        %541 = vst.msk [vmem:[#allocation3 + $0x68] sm:$0xff] %vm511, 0.0
        %542 = vst.msk [vmem:[#allocation3 + $0x70] sm:$0xff] %vm511, 0.0
        %543 = vst.msk [vmem:[#allocation3 + $0x78] sm:$0xff] %vm511, 0.0
      $region48: #{discriminator_forward.8} parent=43 // pred_fallthru
        _
      %p544 = scmp.lt.s32.totalorder %s24, 1
      // Predicated region
      $region49: #{discriminator_forward.8} parent=43 // pred_check
        %p545 = pneg %p544
      $region50: #{discriminator_forward.8} parent=43 // pred_check_branch
        %547 = sbr.rel (%p545) target = $region52
      $region51: #{discriminator_forward.8} parent=43 // pred_region
        %v548 = vld [vmem:[#allocation2] sm:$0xff]
        %v549 = vld [vmem:[#allocation2 + $0x8] sm:$0xff]
        %v550 = vld [vmem:[#allocation2 + $0x10] sm:$0xff]
        %v551 = vld [vmem:[#allocation2 + $0x18] sm:$0xff]
        %v552 = vld [vmem:[#allocation2 + $0x20] sm:$0xff]
        %v553 = vld [vmem:[#allocation2 + $0x28] sm:$0xff]
        %v554 = vld [vmem:[#allocation2 + $0x30] sm:$0xff]
        %v555 = vld [vmem:[#allocation2 + $0x38] sm:$0xff]
        %v556 = vld [vmem:[#allocation2 + $0x40] sm:$0xff]
        %v557 = vld [vmem:[#allocation2 + $0x48] sm:$0xff]
        %v558 = vld [vmem:[#allocation2 + $0x50] sm:$0xff]
        %v559 = vld [vmem:[#allocation2 + $0x58] sm:$0xff]
        %v560 = vld [vmem:[#allocation2 + $0x60] sm:$0xff]
        %v561 = vld [vmem:[#allocation2 + $0x68] sm:$0xff]
        %v562 = vld [vmem:[#allocation2 + $0x70] sm:$0xff]
        %v563 = vld [vmem:[#allocation2 + $0x78] sm:$0xff]
        %v564 = vld [vmem:[%s440] sm:$0xff]
        %v565 = vld [vmem:[%s440 + $0x8] sm:$0xf]
        %v566 = vld [vmem:[%s440 + $0xc] sm:$0xff]
        %v567 = vld [vmem:[%s440 + $0x14] sm:$0xf]
        %v568 = vld [vmem:[%s440 + $0x18] sm:$0xff]
        %v569 = vld [vmem:[%s440 + $0x20] sm:$0xf]
        %v570 = vld [vmem:[%s440 + $0x24] sm:$0xff]
        %v571 = vld [vmem:[%s440 + $0x2c] sm:$0xf]
        %v572 = vld [vmem:[%s440 + $0x30] sm:$0xff]
        %v573 = vld [vmem:[%s440 + $0x38] sm:$0xf]
        %v574 = vld [vmem:[%s440 + $0x3c] sm:$0xff]
        %v575 = vld [vmem:[%s440 + $0x44] sm:$0xf]
        %v576 = vld [vmem:[%s440 + $0x48] sm:$0xff]
        %v577 = vld [vmem:[%s440 + $0x50] sm:$0xf]
        %v578 = vld [vmem:[%s440 + $0x54] sm:$0xff]
        %v579 = vld [vmem:[%s440 + $0x5c] sm:$0xf]
        %v580 = vld [vmem:[%s440 + $0x60] sm:$0xff]
        %v581 = vld [vmem:[%s440 + $0x68] sm:$0xf]
        %v582 = vld [vmem:[%s440 + $0x6c] sm:$0xff]
        %v583 = vld [vmem:[%s440 + $0x74] sm:$0xf]
        %v584 = vld [vmem:[%s440 + $0x78] sm:$0xff]
        %v585 = vld [vmem:[%s440 + $0x80] sm:$0xf]
        %v586 = vld [vmem:[%s440 + $0x84] sm:$0xff]
        %v587 = vld [vmem:[%s440 + $0x8c] sm:$0xf]
        %v588 = vld [vmem:[%s440 + $0x90] sm:$0xff]
        %v589 = vld [vmem:[%s440 + $0x98] sm:$0xf]
        %v590 = vld [vmem:[%s440 + $0x9c] sm:$0xff]
        %v591 = vld [vmem:[%s440 + $0xa4] sm:$0xf]
        %v592 = vld [vmem:[%s440 + $0xa8] sm:$0xff]
        %v593 = vld [vmem:[%s440 + $0xb0] sm:$0xf]
        %v594 = vld [vmem:[%s440 + $0xb4] sm:$0xff]
        %v595 = vld [vmem:[%s440 + $0xbc] sm:$0xf]
        %v596 = vld [vmem:[%s454] sm:$0xf]
        %v597 = vld [vmem:[%s454 + $0x4] sm:$0xf]
        %v598 = vld [vmem:[%s454 + $0x8] sm:$0xf]
        %v599 = vld [vmem:[%s454 + $0xc] sm:$0xf]
        %v600 = vld [vmem:[%s454 + $0x10] sm:$0xf]
        %v601 = vld [vmem:[%s454 + $0x14] sm:$0xf]
        %v602 = vld [vmem:[%s454 + $0x18] sm:$0xf]
        %v603 = vld [vmem:[%s454 + $0x1c] sm:$0xf]
        %v604 = vld [vmem:[%s454 + $0x20] sm:$0xf]
        %v605 = vld [vmem:[%s454 + $0x24] sm:$0xf]
        %v606 = vld [vmem:[%s454 + $0x28] sm:$0xf]
        %v607 = vld [vmem:[%s454 + $0x2c] sm:$0xf]
        %v608 = vld [vmem:[%s454 + $0x30] sm:$0xf]
        %v609 = vld [vmem:[%s454 + $0x34] sm:$0xf]
        %v610 = vld [vmem:[%s454 + $0x38] sm:$0xf]
        %v611 = vld [vmem:[%s454 + $0x3c] sm:$0xf]
        %v612 = vld [vmem:[%s454 + $0x40] sm:$0xf]
        %v613 = vld [vmem:[%s454 + $0x44] sm:$0xf]
        %v614 = vld [vmem:[%s454 + $0x48] sm:$0xf]
        %v615 = vld [vmem:[%s454 + $0x4c] sm:$0xf]
        %v616 = vld [vmem:[%s454 + $0x50] sm:$0xf]
        %v617 = vld [vmem:[%s454 + $0x54] sm:$0xf]
        %v618 = vld [vmem:[%s454 + $0x58] sm:$0xf]
        %v619 = vld [vmem:[%s454 + $0x5c] sm:$0xf]
        %v620 = vld [vmem:[%s454 + $0x60] sm:$0xf]
        %v621 = vld [vmem:[%s454 + $0x64] sm:$0xf]
        %v622 = vld [vmem:[%s454 + $0x68] sm:$0xf]
        %v623 = vld [vmem:[%s454 + $0x6c] sm:$0xf]
        %v624 = vld [vmem:[%s454 + $0x70] sm:$0xf]
        %v625 = vld [vmem:[%s454 + $0x74] sm:$0xf]
        %v626 = vld [vmem:[%s454 + $0x78] sm:$0xf]
        %v627 = vld [vmem:[%s454 + $0x7c] sm:$0xf]
        %v628 = vld [vmem:[%s454 + $0x80] sm:$0xf]
        %v629 = vld [vmem:[%s454 + $0x84] sm:$0xf]
        %v630 = vld [vmem:[%s454 + $0x88] sm:$0xf]
        %v631 = vld [vmem:[%s454 + $0x8c] sm:$0xf]
        %v664 = vunpack.c.l.b16 %v564
        %v665 = vunpack.c.h.b16 %v564
        %v666 = vunpack.c.l.b16 %v565
        %v667 = vunpack.c.l.b16 %v566
        %v668 = vunpack.c.h.b16 %v566
        %v669 = vunpack.c.l.b16 %v567
        %v670 = vunpack.c.l.b16 %v568
        %v671 = vunpack.c.h.b16 %v568
        %v672 = vunpack.c.l.b16 %v569
        %v673 = vunpack.c.l.b16 %v570
        %v674 = vunpack.c.h.b16 %v570
        %v675 = vunpack.c.l.b16 %v571
        %v676 = vunpack.c.l.b16 %v572
        %v677 = vunpack.c.h.b16 %v572
        %v678 = vunpack.c.l.b16 %v573
        %v679 = vunpack.c.l.b16 %v574
        %v680 = vunpack.c.h.b16 %v574
        %v681 = vunpack.c.l.b16 %v575
        %v682 = vunpack.c.l.b16 %v576
        %v683 = vunpack.c.h.b16 %v576
        %v684 = vunpack.c.l.b16 %v577
        %v685 = vunpack.c.l.b16 %v578
        %v686 = vunpack.c.h.b16 %v578
        %v687 = vunpack.c.l.b16 %v579
        %v688 = vunpack.c.l.b16 %v580
        %v689 = vunpack.c.h.b16 %v580
        %v690 = vunpack.c.l.b16 %v581
        %v691 = vunpack.c.l.b16 %v582
        %v692 = vunpack.c.h.b16 %v582
        %v693 = vunpack.c.l.b16 %v583
        %v694 = vunpack.c.l.b16 %v584
        %v695 = vunpack.c.h.b16 %v584
        %v696 = vunpack.c.l.b16 %v585
        %v697 = vunpack.c.l.b16 %v586
        %v698 = vunpack.c.h.b16 %v586
        %v699 = vunpack.c.l.b16 %v587
        %v700 = vunpack.c.l.b16 %v588
        %v701 = vunpack.c.h.b16 %v588
        %v702 = vunpack.c.l.b16 %v589
        %v703 = vunpack.c.l.b16 %v590
        %v704 = vunpack.c.h.b16 %v590
        %v705 = vunpack.c.l.b16 %v591
        %v706 = vunpack.c.l.b16 %v592
        %v707 = vunpack.c.h.b16 %v592
        %v708 = vunpack.c.l.b16 %v593
        %v709 = vunpack.c.l.b16 %v594
        %v710 = vunpack.c.h.b16 %v594
        %v711 = vunpack.c.l.b16 %v595
        %v712 = vpack.c.b16 %v667, %v664
        %v713 = vpack.c.b16 %v668, %v665
        %v714 = vpack.c.b16 %v669, %v666
        %v715 = vpack.c.b16 %v673, %v670
        %v716 = vpack.c.b16 %v674, %v671
        %v717 = vpack.c.b16 %v675, %v672
        %v718 = vpack.c.b16 %v679, %v676
        %v719 = vpack.c.b16 %v680, %v677
        %v720 = vpack.c.b16 %v681, %v678
        %v721 = vpack.c.b16 %v685, %v682
        %v722 = vpack.c.b16 %v686, %v683
        %v723 = vpack.c.b16 %v687, %v684
        %v724 = vpack.c.b16 %v691, %v688
        %v725 = vpack.c.b16 %v692, %v689
        %v726 = vpack.c.b16 %v693, %v690
        %v727 = vpack.c.b16 %v697, %v694
        %v728 = vpack.c.b16 %v698, %v695
        %v729 = vpack.c.b16 %v699, %v696
        %v730 = vpack.c.b16 %v703, %v700
        %v731 = vpack.c.b16 %v704, %v701
        %v732 = vpack.c.b16 %v705, %v702
        %v733 = vpack.c.b16 %v709, %v706
        %v734 = vpack.c.b16 %v710, %v707
        %v735 = vpack.c.b16 %v711, %v708
        %v788 = vunpack.c.l.b16 %v596
        %v789 = vunpack.c.l.b16 %v597
        %v790 = vunpack.c.l.b16 %v598
        %v791 = vunpack.c.l.b16 %v599
        %v792 = vunpack.c.l.b16 %v600
        %v793 = vunpack.c.l.b16 %v601
        %v794 = vunpack.c.l.b16 %v602
        %v795 = vunpack.c.l.b16 %v603
        %v796 = vunpack.c.l.b16 %v604
        %v797 = vunpack.c.l.b16 %v605
        %v798 = vunpack.c.l.b16 %v606
        %v799 = vunpack.c.l.b16 %v607
        %v800 = vunpack.c.l.b16 %v608
        %v801 = vunpack.c.l.b16 %v609
        %v802 = vunpack.c.l.b16 %v610
        %v803 = vunpack.c.l.b16 %v611
        %v804 = vunpack.c.l.b16 %v612
        %v805 = vunpack.c.l.b16 %v613
        %v806 = vunpack.c.l.b16 %v614
        %v807 = vunpack.c.l.b16 %v615
        %v808 = vunpack.c.l.b16 %v616
        %v809 = vunpack.c.l.b16 %v617
        %v810 = vunpack.c.l.b16 %v618
        %v811 = vunpack.c.l.b16 %v619
        %v812 = vunpack.c.l.b16 %v620
        %v813 = vunpack.c.l.b16 %v621
        %v814 = vunpack.c.l.b16 %v622
        %v815 = vunpack.c.l.b16 %v623
        %v816 = vunpack.c.l.b16 %v624
        %v817 = vunpack.c.l.b16 %v625
        %v818 = vunpack.c.l.b16 %v626
        %v819 = vunpack.c.l.b16 %v627
        %v820 = vunpack.c.l.b16 %v628
        %v821 = vunpack.c.l.b16 %v629
        %v822 = vunpack.c.l.b16 %v630
        %v823 = vunpack.c.l.b16 %v631
        %v824 = vpack.c.b16 %v789, %v788
        %v825 = vpack.c.b16 %v791, %v790
        %v826 = vpack.c.b16 %v793, %v792
        %v827 = vpack.c.b16 %v795, %v794
        %v828 = vpack.c.b16 %v797, %v796
        %v829 = vpack.c.b16 %v799, %v798
        %v830 = vpack.c.b16 %v801, %v800
        %v831 = vpack.c.b16 %v803, %v802
        %v832 = vpack.c.b16 %v805, %v804
        %v833 = vpack.c.b16 %v807, %v806
        %v834 = vpack.c.b16 %v809, %v808
        %v835 = vpack.c.b16 %v811, %v810
        %v836 = vpack.c.b16 %v813, %v812
        %v837 = vpack.c.b16 %v815, %v814
        %v838 = vpack.c.b16 %v817, %v816
        %v839 = vpack.c.b16 %v819, %v818
        %v840 = vpack.c.b16 %v821, %v820
        %v841 = vpack.c.b16 %v823, %v822
        %vm860 = vcmask 261120
        %v862 = vsel %vm860, %v714, 0
        %v865 = vsel %vm860, %v717, 0
        %v868 = vsel %vm860, %v720, 0
        %v871 = vsel %vm860, %v723, 0
        %v874 = vsel %vm860, %v726, 0
        %v877 = vsel %vm860, %v729, 0
        %v880 = vsel %vm860, %v732, 0
        %v883 = vsel %vm860, %v735, 0
        %885 = vmatprep.subr.bf16.mxu0 0
        %886 = vmatpush1.bf16.msra.mxu0 %v824
        %887 = vmatprep.subr.bf16.mxu0 0
        %888 = vmatpush1.bf16.msra.mxu0 %v825
        %889 = vmatprep.subr.bf16.mxu0 0
        %890 = vmatpush1.bf16.msra.mxu0 %v826
        %891 = vmatprep.subr.bf16.mxu0 0
        %892 = vmatpush1.bf16.msra.mxu0 %v827
        %893 = vmatprep.subr.bf16.mxu0 0
        %894 = vmatpush1.bf16.msra.mxu0 %v828
        %895 = vmatprep.subr.bf16.mxu0 0
        %896 = vmatpush1.bf16.msra.mxu0 %v829
        %897 = vmatprep.subr.bf16.mxu0 0
        %898 = vmatpush1.bf16.msra.mxu0 %v830
        %899 = vmatprep.subr.bf16.mxu0 0
        %900 = vmatpush1.bf16.msra.mxu0 %v831
        %901 = vmatprep.subr.bf16.mxu0 0
        %902 = vmatpush1.bf16.msra.mxu0 %v832
        %903 = vmatprep.subr.bf16.mxu0 0
        %904 = vmatpush1.bf16.msra.mxu0 %v833
        %905 = vmatprep.subr.bf16.mxu0 0
        %906 = vmatpush1.bf16.msra.mxu0 %v834
        %907 = vmatprep.subr.bf16.mxu0 0
        %908 = vmatpush1.bf16.msra.mxu0 %v835
        %909 = vmatprep.subr.bf16.mxu0 0
        %910 = vmatpush1.bf16.msra.mxu0 %v836
        %911 = vmatprep.subr.bf16.mxu0 0
        %912 = vmatpush1.bf16.msra.mxu0 %v837
        %913 = vmatprep.subr.bf16.mxu0 0
        %914 = vmatpush1.bf16.msra.mxu0 %v838
        %915 = vmatprep.subr.bf16.mxu0 0
        %916 = vmatpush1.bf16.msra.mxu0 %v839
        %917 = vmatprep.mubr.bf16.mxu0 %v713
        %918 = vmatmul.mubr.bf16.gmra.mrb[0].mxu0 %v712
        %v919 = vpop.f32.mrb[0].mxu0
        %v920 = vadd.f32 0.0, %v919
        %v921 = vpop.f32.mrb[0].mxu0
        %v922 = vpop.f32.mrb[0].mxu0
        %v923 = vadd.f32 0.0, %v922
        %v924 = vpop.f32.mrb[0].mxu0
        %925 = vmatprep.mubr.bf16.mxu0 %v716
        %926 = vmatmul.mubr.bf16.gmra.mrb[0].mxu0 %v715
        %v927 = vpop.f32.mrb[0].mxu0
        %v928 = vadd.f32 0.0, %v927
        %v929 = vpop.f32.mrb[0].mxu0
        %v930 = vpop.f32.mrb[0].mxu0
        %v931 = vadd.f32 0.0, %v930
        %v932 = vpop.f32.mrb[0].mxu0
        %933 = vmatprep.mubr.bf16.mxu0 %v719
        %934 = vmatmul.mubr.bf16.gmra.mrb[0].mxu0 %v718
        %v935 = vpop.f32.mrb[0].mxu0
        %v936 = vadd.f32 0.0, %v935
        %v937 = vpop.f32.mrb[0].mxu0
        %v938 = vpop.f32.mrb[0].mxu0
        %v939 = vadd.f32 0.0, %v938
        %v940 = vpop.f32.mrb[0].mxu0
        %941 = vmatprep.mubr.bf16.mxu0 %v722
        %942 = vmatmul.mubr.bf16.gmra.mrb[0].mxu0 %v721
        %v943 = vpop.f32.mrb[0].mxu0
        %v944 = vadd.f32 0.0, %v943
        %v945 = vpop.f32.mrb[0].mxu0
        %v946 = vpop.f32.mrb[0].mxu0
        %v947 = vadd.f32 0.0, %v946
        %v948 = vpop.f32.mrb[0].mxu0
        %949 = vmatprep.mubr.bf16.mxu0 %v725
        %950 = vmatmul.mubr.bf16.gmra.mrb[0].mxu0 %v724
        %v951 = vpop.f32.mrb[0].mxu0
        %v952 = vadd.f32 0.0, %v951
        %v953 = vpop.f32.mrb[0].mxu0
        %v954 = vpop.f32.mrb[0].mxu0
        %v955 = vadd.f32 0.0, %v954
        %v956 = vpop.f32.mrb[0].mxu0
        %957 = vmatprep.mubr.bf16.mxu0 %v728
        %958 = vmatmul.mubr.bf16.gmra.mrb[0].mxu0 %v727
        %v959 = vpop.f32.mrb[0].mxu0
        %v960 = vadd.f32 0.0, %v959
        %v961 = vpop.f32.mrb[0].mxu0
        %v962 = vpop.f32.mrb[0].mxu0
        %v963 = vadd.f32 0.0, %v962
        %v964 = vpop.f32.mrb[0].mxu0
        %965 = vmatprep.mubr.bf16.mxu0 %v731
        %966 = vmatmul.mubr.bf16.gmra.mrb[0].mxu0 %v730
        %v967 = vpop.f32.mrb[0].mxu0
        %v968 = vadd.f32 0.0, %v967
        %v969 = vpop.f32.mrb[0].mxu0
        %v970 = vpop.f32.mrb[0].mxu0
        %v971 = vadd.f32 0.0, %v970
        %v972 = vpop.f32.mrb[0].mxu0
        %973 = vmatprep.mubr.bf16.mxu0 %v734
        %974 = vmatmul.mubr.bf16.gmra.mrb[0].mxu0 %v733
        %v975 = vpop.f32.mrb[0].mxu0
        %v976 = vadd.f32 0.0, %v975
        %v977 = vpop.f32.mrb[0].mxu0
        %v978 = vpop.f32.mrb[0].mxu0
        %v979 = vadd.f32 0.0, %v978
        %v980 = vpop.f32.mrb[0].mxu0
        %981 = vdwg.mxu0
        %982 = vmatprep.subr.bf16.mxu0 0
        %983 = vmatpush1.bf16.msra.mxu0 %v840
        %984 = vmatprep.subr.bf16.mxu0 0
        %985 = vmatpush1.bf16.msra.mxu0 %v841
        %986 = vmatprep.subr.bf16.mxu0 0
        %987 = vmatpush1.bf16.msra.mxu0 0
        %988 = vmatprep.subr.bf16.mxu0 0
        %989 = vmatpush1.bf16.msra.mxu0 0
        %990 = vmatprep.subr.bf16.mxu0 0
        %991 = vmatpush1.bf16.msra.mxu0 0
        %992 = vmatprep.subr.bf16.mxu0 0
        %993 = vmatpush1.bf16.msra.mxu0 0
        %994 = vmatprep.subr.bf16.mxu0 0
        %995 = vmatpush1.bf16.msra.mxu0 0
        %996 = vmatprep.subr.bf16.mxu0 0
        %997 = vmatpush1.bf16.msra.mxu0 0
        %998 = vmatprep.subr.bf16.mxu0 0
        %999 = vmatpush1.bf16.msra.mxu0 0
        %1000 = vmatprep.subr.bf16.mxu0 0
        %1001 = vmatpush1.bf16.msra.mxu0 0
        %1002 = vmatprep.subr.bf16.mxu0 0
        %1003 = vmatpush1.bf16.msra.mxu0 0
        %1004 = vmatprep.subr.bf16.mxu0 0
        %1005 = vmatpush1.bf16.msra.mxu0 0
        %1006 = vmatprep.subr.bf16.mxu0 0
        %1007 = vmatpush1.bf16.msra.mxu0 0
        %1008 = vmatprep.subr.bf16.mxu0 0
        %1009 = vmatpush1.bf16.msra.mxu0 0
        %1010 = vmatprep.subr.bf16.mxu0 0
        %1011 = vmatpush1.bf16.msra.mxu0 0
        %1012 = vmatprep.subr.bf16.mxu0 0
        %1013 = vmatpush1.bf16.msra.mxu0 0
        %1014 = vmatprep.mubr.bf16.mxu0 0
        %1015 = vmatmul.mubr.bf16.gmra.mrb[0].mxu0 %v862
        %v1016 = vpop.f32.mrb[0].mxu0
        %v1017 = vadd.f32 %v920, %v1016
        %v1018 = vpop.f32.mrb[0].mxu0
        %v1019 = vpop.f32.mrb[0].mxu0
        %v1020 = vadd.f32 %v923, %v1019
        %v1021 = vpop.f32.mrb[0].mxu0
        %1022 = vmatprep.mubr.bf16.mxu0 0
        %1023 = vmatmul.mubr.bf16.gmra.mrb[0].mxu0 %v865
        %v1024 = vpop.f32.mrb[0].mxu0
        %v1025 = vadd.f32 %v928, %v1024
        %v1026 = vpop.f32.mrb[0].mxu0
        %v1027 = vpop.f32.mrb[0].mxu0
        %v1028 = vadd.f32 %v931, %v1027
        %v1029 = vpop.f32.mrb[0].mxu0
        %1030 = vmatprep.mubr.bf16.mxu0 0
        %1031 = vmatmul.mubr.bf16.gmra.mrb[0].mxu0 %v868
        %v1032 = vpop.f32.mrb[0].mxu0
        %v1033 = vadd.f32 %v936, %v1032
        %v1034 = vpop.f32.mrb[0].mxu0
        %v1035 = vpop.f32.mrb[0].mxu0
        %v1036 = vadd.f32 %v939, %v1035
        %v1037 = vpop.f32.mrb[0].mxu0
        %1038 = vmatprep.mubr.bf16.mxu0 0
        %1039 = vmatmul.mubr.bf16.gmra.mrb[0].mxu0 %v871
        %v1040 = vpop.f32.mrb[0].mxu0
        %v1041 = vadd.f32 %v944, %v1040
        %v1042 = vpop.f32.mrb[0].mxu0
        %v1043 = vpop.f32.mrb[0].mxu0
        %v1044 = vadd.f32 %v947, %v1043
        %v1045 = vpop.f32.mrb[0].mxu0
        %1046 = vmatprep.mubr.bf16.mxu0 0
        %1047 = vmatmul.mubr.bf16.gmra.mrb[0].mxu0 %v874
        %v1048 = vpop.f32.mrb[0].mxu0
        %v1049 = vadd.f32 %v952, %v1048
        %v1050 = vpop.f32.mrb[0].mxu0
        %v1051 = vpop.f32.mrb[0].mxu0
        %v1052 = vadd.f32 %v955, %v1051
        %v1053 = vpop.f32.mrb[0].mxu0
        %1054 = vmatprep.mubr.bf16.mxu0 0
        %1055 = vmatmul.mubr.bf16.gmra.mrb[0].mxu0 %v877
        %v1056 = vpop.f32.mrb[0].mxu0
        %v1057 = vadd.f32 %v960, %v1056
        %v1058 = vpop.f32.mrb[0].mxu0
        %v1059 = vpop.f32.mrb[0].mxu0
        %v1060 = vadd.f32 %v963, %v1059
        %v1061 = vpop.f32.mrb[0].mxu0
        %1062 = vmatprep.mubr.bf16.mxu0 0
        %1063 = vmatmul.mubr.bf16.gmra.mrb[0].mxu0 %v880
        %v1064 = vpop.f32.mrb[0].mxu0
        %v1065 = vadd.f32 %v968, %v1064
        %v1066 = vpop.f32.mrb[0].mxu0
        %v1067 = vpop.f32.mrb[0].mxu0
        %v1068 = vadd.f32 %v971, %v1067
        %v1069 = vpop.f32.mrb[0].mxu0
        %1070 = vmatprep.mubr.bf16.mxu0 0
        %1071 = vmatmul.mubr.bf16.gmra.mrb[0].mxu0 %v883
        %v1072 = vpop.f32.mrb[0].mxu0
        %v1073 = vadd.f32 %v976, %v1072
        %v1074 = vpop.f32.mrb[0].mxu0
        %v1075 = vpop.f32.mrb[0].mxu0
        %v1076 = vadd.f32 %v979, %v1075
        %v1077 = vpop.f32.mrb[0].mxu0
        %1078 = vdwg.mxu0
        %v1079 = vadd.f32 %v548, %v1017
        %v1080 = vadd.f32 %v549, %v1020
        %v1081 = vadd.f32 %v550, %v1025
        %v1082 = vadd.f32 %v551, %v1028
        %v1083 = vadd.f32 %v552, %v1033
        %v1084 = vadd.f32 %v553, %v1036
        %v1085 = vadd.f32 %v554, %v1041
        %v1086 = vadd.f32 %v555, %v1044
        %v1087 = vadd.f32 %v556, %v1049
        %v1088 = vadd.f32 %v557, %v1052
        %v1089 = vadd.f32 %v558, %v1057
        %v1090 = vadd.f32 %v559, %v1060
        %v1091 = vadd.f32 %v560, %v1065
        %v1092 = vadd.f32 %v561, %v1068
        %v1093 = vadd.f32 %v562, %v1073
        %v1094 = vadd.f32 %v563, %v1076
        %1095 = vst.msk [vmem:[#allocation2] sm:$0xff] %vm860, %v1079
        %1096 = vst.msk [vmem:[#allocation2 + $0x8] sm:$0xff] %vm860, %v1080
        %1097 = vst.msk [vmem:[#allocation2 + $0x10] sm:$0xff] %vm860, %v1081
        %1098 = vst.msk [vmem:[#allocation2 + $0x18] sm:$0xff] %vm860, %v1082
        %1099 = vst.msk [vmem:[#allocation2 + $0x20] sm:$0xff] %vm860, %v1083
        %1100 = vst.msk [vmem:[#allocation2 + $0x28] sm:$0xff] %vm860, %v1084
        %1101 = vst.msk [vmem:[#allocation2 + $0x30] sm:$0xff] %vm860, %v1085
        %1102 = vst.msk [vmem:[#allocation2 + $0x38] sm:$0xff] %vm860, %v1086
        %1103 = vst.msk [vmem:[#allocation2 + $0x40] sm:$0xff] %vm860, %v1087
        %1104 = vst.msk [vmem:[#allocation2 + $0x48] sm:$0xff] %vm860, %v1088
        %1105 = vst.msk [vmem:[#allocation2 + $0x50] sm:$0xff] %vm860, %v1089
        %1106 = vst.msk [vmem:[#allocation2 + $0x58] sm:$0xff] %vm860, %v1090
        %1107 = vst.msk [vmem:[#allocation2 + $0x60] sm:$0xff] %vm860, %v1091
        %1108 = vst.msk [vmem:[#allocation2 + $0x68] sm:$0xff] %vm860, %v1092
        %1109 = vst.msk [vmem:[#allocation2 + $0x70] sm:$0xff] %vm860, %v1093
        %1110 = vst.msk [vmem:[#allocation2 + $0x78] sm:$0xff] %vm860, %v1094
      $region52: #{discriminator_forward.8} parent=43 // pred_fallthru
        _
      %p1111 = scmp.ge.s32.totalorder %s24, 1
      // Predicated region
      $region53: #{discriminator_forward.8} parent=43 // pred_check
        %p1112 = pneg %p1111
      $region54: #{discriminator_forward.8} parent=43 // pred_check_branch
        %1114 = sbr.rel (%p1112) target = $region56
      $region55: #{discriminator_forward.8} parent=43 // pred_region
        %v1115 = vld [vmem:[#allocation3] sm:$0xff]
        %v1116 = vld [vmem:[#allocation3 + $0x8] sm:$0xff]
        %v1117 = vld [vmem:[#allocation3 + $0x10] sm:$0xff]
        %v1118 = vld [vmem:[#allocation3 + $0x18] sm:$0xff]
        %v1119 = vld [vmem:[#allocation3 + $0x20] sm:$0xff]
        %v1120 = vld [vmem:[#allocation3 + $0x28] sm:$0xff]
        %v1121 = vld [vmem:[#allocation3 + $0x30] sm:$0xff]
        %v1122 = vld [vmem:[#allocation3 + $0x38] sm:$0xff]
        %v1123 = vld [vmem:[#allocation3 + $0x40] sm:$0xff]
        %v1124 = vld [vmem:[#allocation3 + $0x48] sm:$0xff]
        %v1125 = vld [vmem:[#allocation3 + $0x50] sm:$0xff]
        %v1126 = vld [vmem:[#allocation3 + $0x58] sm:$0xff]
        %v1127 = vld [vmem:[#allocation3 + $0x60] sm:$0xff]
        %v1128 = vld [vmem:[#allocation3 + $0x68] sm:$0xff]
        %v1129 = vld [vmem:[#allocation3 + $0x70] sm:$0xff]
        %v1130 = vld [vmem:[#allocation3 + $0x78] sm:$0xff]
        %v1131 = vld [vmem:[%s473] sm:$0xff]
        %v1132 = vld [vmem:[%s473 + $0x8] sm:$0xf]
        %v1133 = vld [vmem:[%s473 + $0xc] sm:$0xff]
        %v1134 = vld [vmem:[%s473 + $0x14] sm:$0xf]
        %v1135 = vld [vmem:[%s473 + $0x18] sm:$0xff]
        %v1136 = vld [vmem:[%s473 + $0x20] sm:$0xf]
        %v1137 = vld [vmem:[%s473 + $0x24] sm:$0xff]
        %v1138 = vld [vmem:[%s473 + $0x2c] sm:$0xf]
        %v1139 = vld [vmem:[%s473 + $0x30] sm:$0xff]
        %v1140 = vld [vmem:[%s473 + $0x38] sm:$0xf]
        %v1141 = vld [vmem:[%s473 + $0x3c] sm:$0xff]
        %v1142 = vld [vmem:[%s473 + $0x44] sm:$0xf]
        %v1143 = vld [vmem:[%s473 + $0x48] sm:$0xff]
        %v1144 = vld [vmem:[%s473 + $0x50] sm:$0xf]
        %v1145 = vld [vmem:[%s473 + $0x54] sm:$0xff]
        %v1146 = vld [vmem:[%s473 + $0x5c] sm:$0xf]
        %v1147 = vld [vmem:[%s473 + $0x60] sm:$0xff]
        %v1148 = vld [vmem:[%s473 + $0x68] sm:$0xf]
        %v1149 = vld [vmem:[%s473 + $0x6c] sm:$0xff]
        %v1150 = vld [vmem:[%s473 + $0x74] sm:$0xf]
        %v1151 = vld [vmem:[%s473 + $0x78] sm:$0xff]
        %v1152 = vld [vmem:[%s473 + $0x80] sm:$0xf]
        %v1153 = vld [vmem:[%s473 + $0x84] sm:$0xff]
        %v1154 = vld [vmem:[%s473 + $0x8c] sm:$0xf]
        %v1155 = vld [vmem:[%s473 + $0x90] sm:$0xff]
        %v1156 = vld [vmem:[%s473 + $0x98] sm:$0xf]
        %v1157 = vld [vmem:[%s473 + $0x9c] sm:$0xff]
        %v1158 = vld [vmem:[%s473 + $0xa4] sm:$0xf]
        %v1159 = vld [vmem:[%s473 + $0xa8] sm:$0xff]
        %v1160 = vld [vmem:[%s473 + $0xb0] sm:$0xf]
        %v1161 = vld [vmem:[%s473 + $0xb4] sm:$0xff]
        %v1162 = vld [vmem:[%s473 + $0xbc] sm:$0xf]
        %v1163 = vld [vmem:[%s489] sm:$0xf]
        %v1164 = vld [vmem:[%s489 + $0x4] sm:$0xf]
        %v1165 = vld [vmem:[%s489 + $0x8] sm:$0xf]
        %v1166 = vld [vmem:[%s489 + $0xc] sm:$0xf]
        %v1167 = vld [vmem:[%s489 + $0x10] sm:$0xf]
        %v1168 = vld [vmem:[%s489 + $0x14] sm:$0xf]
        %v1169 = vld [vmem:[%s489 + $0x18] sm:$0xf]
        %v1170 = vld [vmem:[%s489 + $0x1c] sm:$0xf]
        %v1171 = vld [vmem:[%s489 + $0x20] sm:$0xf]
        %v1172 = vld [vmem:[%s489 + $0x24] sm:$0xf]
        %v1173 = vld [vmem:[%s489 + $0x28] sm:$0xf]
        %v1174 = vld [vmem:[%s489 + $0x2c] sm:$0xf]
        %v1175 = vld [vmem:[%s489 + $0x30] sm:$0xf]
        %v1176 = vld [vmem:[%s489 + $0x34] sm:$0xf]
        %v1177 = vld [vmem:[%s489 + $0x38] sm:$0xf]
        %v1178 = vld [vmem:[%s489 + $0x3c] sm:$0xf]
        %v1179 = vld [vmem:[%s489 + $0x40] sm:$0xf]
        %v1180 = vld [vmem:[%s489 + $0x44] sm:$0xf]
        %v1181 = vld [vmem:[%s489 + $0x48] sm:$0xf]
        %v1182 = vld [vmem:[%s489 + $0x4c] sm:$0xf]
        %v1183 = vld [vmem:[%s489 + $0x50] sm:$0xf]
        %v1184 = vld [vmem:[%s489 + $0x54] sm:$0xf]
        %v1185 = vld [vmem:[%s489 + $0x58] sm:$0xf]
        %v1186 = vld [vmem:[%s489 + $0x5c] sm:$0xf]
        %v1187 = vld [vmem:[%s489 + $0x60] sm:$0xf]
        %v1188 = vld [vmem:[%s489 + $0x64] sm:$0xf]
        %v1189 = vld [vmem:[%s489 + $0x68] sm:$0xf]
        %v1190 = vld [vmem:[%s489 + $0x6c] sm:$0xf]
        %v1191 = vld [vmem:[%s489 + $0x70] sm:$0xf]
        %v1192 = vld [vmem:[%s489 + $0x74] sm:$0xf]
        %v1193 = vld [vmem:[%s489 + $0x78] sm:$0xf]
        %v1194 = vld [vmem:[%s489 + $0x7c] sm:$0xf]
        %v1195 = vld [vmem:[%s489 + $0x80] sm:$0xf]
        %v1196 = vld [vmem:[%s489 + $0x84] sm:$0xf]
        %v1197 = vld [vmem:[%s489 + $0x88] sm:$0xf]
        %v1198 = vld [vmem:[%s489 + $0x8c] sm:$0xf]
        %v1231 = vunpack.c.l.b16 %v1131
        %v1232 = vunpack.c.h.b16 %v1131
        %v1233 = vunpack.c.l.b16 %v1132
        %v1234 = vunpack.c.l.b16 %v1133
        %v1235 = vunpack.c.h.b16 %v1133
        %v1236 = vunpack.c.l.b16 %v1134
        %v1237 = vunpack.c.l.b16 %v1135
        %v1238 = vunpack.c.h.b16 %v1135
        %v1239 = vunpack.c.l.b16 %v1136
        %v1240 = vunpack.c.l.b16 %v1137
        %v1241 = vunpack.c.h.b16 %v1137
        %v1242 = vunpack.c.l.b16 %v1138
        %v1243 = vunpack.c.l.b16 %v1139
        %v1244 = vunpack.c.h.b16 %v1139
        %v1245 = vunpack.c.l.b16 %v1140
        %v1246 = vunpack.c.l.b16 %v1141
        %v1247 = vunpack.c.h.b16 %v1141
        %v1248 = vunpack.c.l.b16 %v1142
        %v1249 = vunpack.c.l.b16 %v1143
        %v1250 = vunpack.c.h.b16 %v1143
        %v1251 = vunpack.c.l.b16 %v1144
        %v1252 = vunpack.c.l.b16 %v1145
        %v1253 = vunpack.c.h.b16 %v1145
        %v1254 = vunpack.c.l.b16 %v1146
        %v1255 = vunpack.c.l.b16 %v1147
        %v1256 = vunpack.c.h.b16 %v1147
        %v1257 = vunpack.c.l.b16 %v1148
        %v1258 = vunpack.c.l.b16 %v1149
        %v1259 = vunpack.c.h.b16 %v1149
        %v1260 = vunpack.c.l.b16 %v1150
        %v1261 = vunpack.c.l.b16 %v1151
        %v1262 = vunpack.c.h.b16 %v1151
        %v1263 = vunpack.c.l.b16 %v1152
        %v1264 = vunpack.c.l.b16 %v1153
        %v1265 = vunpack.c.h.b16 %v1153
        %v1266 = vunpack.c.l.b16 %v1154
        %v1267 = vunpack.c.l.b16 %v1155
        %v1268 = vunpack.c.h.b16 %v1155
        %v1269 = vunpack.c.l.b16 %v1156
        %v1270 = vunpack.c.l.b16 %v1157
        %v1271 = vunpack.c.h.b16 %v1157
        %v1272 = vunpack.c.l.b16 %v1158
        %v1273 = vunpack.c.l.b16 %v1159
        %v1274 = vunpack.c.h.b16 %v1159
        %v1275 = vunpack.c.l.b16 %v1160
        %v1276 = vunpack.c.l.b16 %v1161
        %v1277 = vunpack.c.h.b16 %v1161
        %v1278 = vunpack.c.l.b16 %v1162
        %v1279 = vpack.c.b16 %v1234, %v1231
        %v1280 = vpack.c.b16 %v1235, %v1232
        %v1281 = vpack.c.b16 %v1236, %v1233
        %v1282 = vpack.c.b16 %v1240, %v1237
        %v1283 = vpack.c.b16 %v1241, %v1238
        %v1284 = vpack.c.b16 %v1242, %v1239
        %v1285 = vpack.c.b16 %v1246, %v1243
        %v1286 = vpack.c.b16 %v1247, %v1244
        %v1287 = vpack.c.b16 %v1248, %v1245
        %v1288 = vpack.c.b16 %v1252, %v1249
        %v1289 = vpack.c.b16 %v1253, %v1250
        %v1290 = vpack.c.b16 %v1254, %v1251
        %v1291 = vpack.c.b16 %v1258, %v1255
        %v1292 = vpack.c.b16 %v1259, %v1256
        %v1293 = vpack.c.b16 %v1260, %v1257
        %v1294 = vpack.c.b16 %v1264, %v1261
        %v1295 = vpack.c.b16 %v1265, %v1262
        %v1296 = vpack.c.b16 %v1266, %v1263
        %v1297 = vpack.c.b16 %v1270, %v1267
        %v1298 = vpack.c.b16 %v1271, %v1268
        %v1299 = vpack.c.b16 %v1272, %v1269
        %v1300 = vpack.c.b16 %v1276, %v1273
        %v1301 = vpack.c.b16 %v1277, %v1274
        %v1302 = vpack.c.b16 %v1278, %v1275
        %v1355 = vunpack.c.l.b16 %v1163
        %v1356 = vunpack.c.l.b16 %v1164
        %v1357 = vunpack.c.l.b16 %v1165
        %v1358 = vunpack.c.l.b16 %v1166
        %v1359 = vunpack.c.l.b16 %v1167
        %v1360 = vunpack.c.l.b16 %v1168
        %v1361 = vunpack.c.l.b16 %v1169
        %v1362 = vunpack.c.l.b16 %v1170
        %v1363 = vunpack.c.l.b16 %v1171
        %v1364 = vunpack.c.l.b16 %v1172
        %v1365 = vunpack.c.l.b16 %v1173
        %v1366 = vunpack.c.l.b16 %v1174
        %v1367 = vunpack.c.l.b16 %v1175
        %v1368 = vunpack.c.l.b16 %v1176
        %v1369 = vunpack.c.l.b16 %v1177
        %v1370 = vunpack.c.l.b16 %v1178
        %v1371 = vunpack.c.l.b16 %v1179
        %v1372 = vunpack.c.l.b16 %v1180
        %v1373 = vunpack.c.l.b16 %v1181
        %v1374 = vunpack.c.l.b16 %v1182
        %v1375 = vunpack.c.l.b16 %v1183
        %v1376 = vunpack.c.l.b16 %v1184
        %v1377 = vunpack.c.l.b16 %v1185
        %v1378 = vunpack.c.l.b16 %v1186
        %v1379 = vunpack.c.l.b16 %v1187
        %v1380 = vunpack.c.l.b16 %v1188
        %v1381 = vunpack.c.l.b16 %v1189
        %v1382 = vunpack.c.l.b16 %v1190
        %v1383 = vunpack.c.l.b16 %v1191
        %v1384 = vunpack.c.l.b16 %v1192
        %v1385 = vunpack.c.l.b16 %v1193
        %v1386 = vunpack.c.l.b16 %v1194
        %v1387 = vunpack.c.l.b16 %v1195
        %v1388 = vunpack.c.l.b16 %v1196
        %v1389 = vunpack.c.l.b16 %v1197
        %v1390 = vunpack.c.l.b16 %v1198
        %v1391 = vpack.c.b16 %v1356, %v1355
        %v1392 = vpack.c.b16 %v1358, %v1357
        %v1393 = vpack.c.b16 %v1360, %v1359
        %v1394 = vpack.c.b16 %v1362, %v1361
        %v1395 = vpack.c.b16 %v1364, %v1363
        %v1396 = vpack.c.b16 %v1366, %v1365
        %v1397 = vpack.c.b16 %v1368, %v1367
        %v1398 = vpack.c.b16 %v1370, %v1369
        %v1399 = vpack.c.b16 %v1372, %v1371
        %v1400 = vpack.c.b16 %v1374, %v1373
        %v1401 = vpack.c.b16 %v1376, %v1375
        %v1402 = vpack.c.b16 %v1378, %v1377
        %v1403 = vpack.c.b16 %v1380, %v1379
        %v1404 = vpack.c.b16 %v1382, %v1381
        %v1405 = vpack.c.b16 %v1384, %v1383
        %v1406 = vpack.c.b16 %v1386, %v1385
        %v1407 = vpack.c.b16 %v1388, %v1387
        %v1408 = vpack.c.b16 %v1390, %v1389
        %vm1427 = vcmask 261120
        %v1429 = vsel %vm1427, %v1281, 0
        %v1432 = vsel %vm1427, %v1284, 0
        %v1435 = vsel %vm1427, %v1287, 0
        %v1438 = vsel %vm1427, %v1290, 0
        %v1441 = vsel %vm1427, %v1293, 0
        %v1444 = vsel %vm1427, %v1296, 0
        %v1447 = vsel %vm1427, %v1299, 0
        %v1450 = vsel %vm1427, %v1302, 0
        %1452 = vmatprep.subr.bf16.mxu0 0
        %1453 = vmatpush1.bf16.msra.mxu0 %v1391
        %1454 = vmatprep.subr.bf16.mxu0 0
        %1455 = vmatpush1.bf16.msra.mxu0 %v1392
        %1456 = vmatprep.subr.bf16.mxu0 0
        %1457 = vmatpush1.bf16.msra.mxu0 %v1393
        %1458 = vmatprep.subr.bf16.mxu0 0
        %1459 = vmatpush1.bf16.msra.mxu0 %v1394
        %1460 = vmatprep.subr.bf16.mxu0 0
        %1461 = vmatpush1.bf16.msra.mxu0 %v1395
        %1462 = vmatprep.subr.bf16.mxu0 0
        %1463 = vmatpush1.bf16.msra.mxu0 %v1396
        %1464 = vmatprep.subr.bf16.mxu0 0
        %1465 = vmatpush1.bf16.msra.mxu0 %v1397
        %1466 = vmatprep.subr.bf16.mxu0 0
        %1467 = vmatpush1.bf16.msra.mxu0 %v1398
        %1468 = vmatprep.subr.bf16.mxu0 0
        %1469 = vmatpush1.bf16.msra.mxu0 %v1399
        %1470 = vmatprep.subr.bf16.mxu0 0
        %1471 = vmatpush1.bf16.msra.mxu0 %v1400
        %1472 = vmatprep.subr.bf16.mxu0 0
        %1473 = vmatpush1.bf16.msra.mxu0 %v1401
        %1474 = vmatprep.subr.bf16.mxu0 0
        %1475 = vmatpush1.bf16.msra.mxu0 %v1402
        %1476 = vmatprep.subr.bf16.mxu0 0
        %1477 = vmatpush1.bf16.msra.mxu0 %v1403
        %1478 = vmatprep.subr.bf16.mxu0 0
        %1479 = vmatpush1.bf16.msra.mxu0 %v1404
        %1480 = vmatprep.subr.bf16.mxu0 0
        %1481 = vmatpush1.bf16.msra.mxu0 %v1405
        %1482 = vmatprep.subr.bf16.mxu0 0
        %1483 = vmatpush1.bf16.msra.mxu0 %v1406
        %1484 = vmatprep.mubr.bf16.mxu0 %v1280
        %1485 = vmatmul.mubr.bf16.gmra.mrb[0].mxu0 %v1279
        %v1486 = vpop.f32.mrb[0].mxu0
        %v1487 = vadd.f32 0.0, %v1486
        %v1488 = vpop.f32.mrb[0].mxu0
        %v1489 = vpop.f32.mrb[0].mxu0
        %v1490 = vadd.f32 0.0, %v1489
        %v1491 = vpop.f32.mrb[0].mxu0
        %1492 = vmatprep.mubr.bf16.mxu0 %v1283
        %1493 = vmatmul.mubr.bf16.gmra.mrb[0].mxu0 %v1282
        %v1494 = vpop.f32.mrb[0].mxu0
        %v1495 = vadd.f32 0.0, %v1494
        %v1496 = vpop.f32.mrb[0].mxu0
        %v1497 = vpop.f32.mrb[0].mxu0
        %v1498 = vadd.f32 0.0, %v1497
        %v1499 = vpop.f32.mrb[0].mxu0
        %1500 = vmatprep.mubr.bf16.mxu0 %v1286
        %1501 = vmatmul.mubr.bf16.gmra.mrb[0].mxu0 %v1285
        %v1502 = vpop.f32.mrb[0].mxu0
        %v1503 = vadd.f32 0.0, %v1502
        %v1504 = vpop.f32.mrb[0].mxu0
        %v1505 = vpop.f32.mrb[0].mxu0
        %v1506 = vadd.f32 0.0, %v1505
        %v1507 = vpop.f32.mrb[0].mxu0
        %1508 = vmatprep.mubr.bf16.mxu0 %v1289
        %1509 = vmatmul.mubr.bf16.gmra.mrb[0].mxu0 %v1288
        %v1510 = vpop.f32.mrb[0].mxu0
        %v1511 = vadd.f32 0.0, %v1510
        %v1512 = vpop.f32.mrb[0].mxu0
        %v1513 = vpop.f32.mrb[0].mxu0
        %v1514 = vadd.f32 0.0, %v1513
        %v1515 = vpop.f32.mrb[0].mxu0
        %1516 = vmatprep.mubr.bf16.mxu0 %v1292
        %1517 = vmatmul.mubr.bf16.gmra.mrb[0].mxu0 %v1291
        %v1518 = vpop.f32.mrb[0].mxu0
        %v1519 = vadd.f32 0.0, %v1518
        %v1520 = vpop.f32.mrb[0].mxu0
        %v1521 = vpop.f32.mrb[0].mxu0
        %v1522 = vadd.f32 0.0, %v1521
        %v1523 = vpop.f32.mrb[0].mxu0
        %1524 = vmatprep.mubr.bf16.mxu0 %v1295
        %1525 = vmatmul.mubr.bf16.gmra.mrb[0].mxu0 %v1294
        %v1526 = vpop.f32.mrb[0].mxu0
        %v1527 = vadd.f32 0.0, %v1526
        %v1528 = vpop.f32.mrb[0].mxu0
        %v1529 = vpop.f32.mrb[0].mxu0
        %v1530 = vadd.f32 0.0, %v1529
        %v1531 = vpop.f32.mrb[0].mxu0
        %1532 = vmatprep.mubr.bf16.mxu0 %v1298
        %1533 = vmatmul.mubr.bf16.gmra.mrb[0].mxu0 %v1297
        %v1534 = vpop.f32.mrb[0].mxu0
        %v1535 = vadd.f32 0.0, %v1534
        %v1536 = vpop.f32.mrb[0].mxu0
        %v1537 = vpop.f32.mrb[0].mxu0
        %v1538 = vadd.f32 0.0, %v1537
        %v1539 = vpop.f32.mrb[0].mxu0
        %1540 = vmatprep.mubr.bf16.mxu0 %v1301
        %1541 = vmatmul.mubr.bf16.gmra.mrb[0].mxu0 %v1300
        %v1542 = vpop.f32.mrb[0].mxu0
        %v1543 = vadd.f32 0.0, %v1542
        %v1544 = vpop.f32.mrb[0].mxu0
        %v1545 = vpop.f32.mrb[0].mxu0
        %v1546 = vadd.f32 0.0, %v1545
        %v1547 = vpop.f32.mrb[0].mxu0
        %1548 = vdwg.mxu0
        %1549 = vmatprep.subr.bf16.mxu0 0
        %1550 = vmatpush1.bf16.msra.mxu0 %v1407
        %1551 = vmatprep.subr.bf16.mxu0 0
        %1552 = vmatpush1.bf16.msra.mxu0 %v1408
        %1553 = vmatprep.subr.bf16.mxu0 0
        %1554 = vmatpush1.bf16.msra.mxu0 0
        %1555 = vmatprep.subr.bf16.mxu0 0
        %1556 = vmatpush1.bf16.msra.mxu0 0
        %1557 = vmatprep.subr.bf16.mxu0 0
        %1558 = vmatpush1.bf16.msra.mxu0 0
        %1559 = vmatprep.subr.bf16.mxu0 0
        %1560 = vmatpush1.bf16.msra.mxu0 0
        %1561 = vmatprep.subr.bf16.mxu0 0
        %1562 = vmatpush1.bf16.msra.mxu0 0
        %1563 = vmatprep.subr.bf16.mxu0 0
        %1564 = vmatpush1.bf16.msra.mxu0 0
        %1565 = vmatprep.subr.bf16.mxu0 0
        %1566 = vmatpush1.bf16.msra.mxu0 0
        %1567 = vmatprep.subr.bf16.mxu0 0
        %1568 = vmatpush1.bf16.msra.mxu0 0
        %1569 = vmatprep.subr.bf16.mxu0 0
        %1570 = vmatpush1.bf16.msra.mxu0 0
        %1571 = vmatprep.subr.bf16.mxu0 0
        %1572 = vmatpush1.bf16.msra.mxu0 0
        %1573 = vmatprep.subr.bf16.mxu0 0
        %1574 = vmatpush1.bf16.msra.mxu0 0
        %1575 = vmatprep.subr.bf16.mxu0 0
        %1576 = vmatpush1.bf16.msra.mxu0 0
        %1577 = vmatprep.subr.bf16.mxu0 0
        %1578 = vmatpush1.bf16.msra.mxu0 0
        %1579 = vmatprep.subr.bf16.mxu0 0
        %1580 = vmatpush1.bf16.msra.mxu0 0
        %1581 = vmatprep.mubr.bf16.mxu0 0
        %1582 = vmatmul.mubr.bf16.gmra.mrb[0].mxu0 %v1429
        %v1583 = vpop.f32.mrb[0].mxu0
        %v1584 = vadd.f32 %v1487, %v1583
        %v1585 = vpop.f32.mrb[0].mxu0
        %v1586 = vpop.f32.mrb[0].mxu0
        %v1587 = vadd.f32 %v1490, %v1586
        %v1588 = vpop.f32.mrb[0].mxu0
        %1589 = vmatprep.mubr.bf16.mxu0 0
        %1590 = vmatmul.mubr.bf16.gmra.mrb[0].mxu0 %v1432
        %v1591 = vpop.f32.mrb[0].mxu0
        %v1592 = vadd.f32 %v1495, %v1591
        %v1593 = vpop.f32.mrb[0].mxu0
        %v1594 = vpop.f32.mrb[0].mxu0
        %v1595 = vadd.f32 %v1498, %v1594
        %v1596 = vpop.f32.mrb[0].mxu0
        %1597 = vmatprep.mubr.bf16.mxu0 0
        %1598 = vmatmul.mubr.bf16.gmra.mrb[0].mxu0 %v1435
        %v1599 = vpop.f32.mrb[0].mxu0
        %v1600 = vadd.f32 %v1503, %v1599
        %v1601 = vpop.f32.mrb[0].mxu0
        %v1602 = vpop.f32.mrb[0].mxu0
        %v1603 = vadd.f32 %v1506, %v1602
        %v1604 = vpop.f32.mrb[0].mxu0
        %1605 = vmatprep.mubr.bf16.mxu0 0
        %1606 = vmatmul.mubr.bf16.gmra.mrb[0].mxu0 %v1438
        %v1607 = vpop.f32.mrb[0].mxu0
        %v1608 = vadd.f32 %v1511, %v1607
        %v1609 = vpop.f32.mrb[0].mxu0
        %v1610 = vpop.f32.mrb[0].mxu0
        %v1611 = vadd.f32 %v1514, %v1610
        %v1612 = vpop.f32.mrb[0].mxu0
        %1613 = vmatprep.mubr.bf16.mxu0 0
        %1614 = vmatmul.mubr.bf16.gmra.mrb[0].mxu0 %v1441
        %v1615 = vpop.f32.mrb[0].mxu0
        %v1616 = vadd.f32 %v1519, %v1615
        %v1617 = vpop.f32.mrb[0].mxu0
        %v1618 = vpop.f32.mrb[0].mxu0
        %v1619 = vadd.f32 %v1522, %v1618
        %v1620 = vpop.f32.mrb[0].mxu0
        %1621 = vmatprep.mubr.bf16.mxu0 0
        %1622 = vmatmul.mubr.bf16.gmra.mrb[0].mxu0 %v1444
        %v1623 = vpop.f32.mrb[0].mxu0
        %v1624 = vadd.f32 %v1527, %v1623
        %v1625 = vpop.f32.mrb[0].mxu0
        %v1626 = vpop.f32.mrb[0].mxu0
        %v1627 = vadd.f32 %v1530, %v1626
        %v1628 = vpop.f32.mrb[0].mxu0
        %1629 = vmatprep.mubr.bf16.mxu0 0
        %1630 = vmatmul.mubr.bf16.gmra.mrb[0].mxu0 %v1447
        %v1631 = vpop.f32.mrb[0].mxu0
        %v1632 = vadd.f32 %v1535, %v1631
        %v1633 = vpop.f32.mrb[0].mxu0
        %v1634 = vpop.f32.mrb[0].mxu0
        %v1635 = vadd.f32 %v1538, %v1634
        %v1636 = vpop.f32.mrb[0].mxu0
        %1637 = vmatprep.mubr.bf16.mxu0 0
        %1638 = vmatmul.mubr.bf16.gmra.mrb[0].mxu0 %v1450
        %v1639 = vpop.f32.mrb[0].mxu0
        %v1640 = vadd.f32 %v1543, %v1639
        %v1641 = vpop.f32.mrb[0].mxu0
        %v1642 = vpop.f32.mrb[0].mxu0
        %v1643 = vadd.f32 %v1546, %v1642
        %v1644 = vpop.f32.mrb[0].mxu0
        %1645 = vdwg.mxu0
        %v1646 = vadd.f32 %v1115, %v1584
        %v1647 = vadd.f32 %v1116, %v1587
        %v1648 = vadd.f32 %v1117, %v1592
        %v1649 = vadd.f32 %v1118, %v1595
        %v1650 = vadd.f32 %v1119, %v1600
        %v1651 = vadd.f32 %v1120, %v1603
        %v1652 = vadd.f32 %v1121, %v1608
        %v1653 = vadd.f32 %v1122, %v1611
        %v1654 = vadd.f32 %v1123, %v1616
        %v1655 = vadd.f32 %v1124, %v1619
        %v1656 = vadd.f32 %v1125, %v1624
        %v1657 = vadd.f32 %v1126, %v1627
        %v1658 = vadd.f32 %v1127, %v1632
        %v1659 = vadd.f32 %v1128, %v1635
        %v1660 = vadd.f32 %v1129, %v1640
        %v1661 = vadd.f32 %v1130, %v1643
        %1662 = vst.msk [vmem:[#allocation3] sm:$0xff] %vm1427, %v1646
        %1663 = vst.msk [vmem:[#allocation3 + $0x8] sm:$0xff] %vm1427, %v1647
        %1664 = vst.msk [vmem:[#allocation3 + $0x10] sm:$0xff] %vm1427, %v1648
        %1665 = vst.msk [vmem:[#allocation3 + $0x18] sm:$0xff] %vm1427, %v1649
        %1666 = vst.msk [vmem:[#allocation3 + $0x20] sm:$0xff] %vm1427, %v1650
        %1667 = vst.msk [vmem:[#allocation3 + $0x28] sm:$0xff] %vm1427, %v1651
        %1668 = vst.msk [vmem:[#allocation3 + $0x30] sm:$0xff] %vm1427, %v1652
        %1669 = vst.msk [vmem:[#allocation3 + $0x38] sm:$0xff] %vm1427, %v1653
        %1670 = vst.msk [vmem:[#allocation3 + $0x40] sm:$0xff] %vm1427, %v1654
        %1671 = vst.msk [vmem:[#allocation3 + $0x48] sm:$0xff] %vm1427, %v1655
        %1672 = vst.msk [vmem:[#allocation3 + $0x50] sm:$0xff] %vm1427, %v1656
        %1673 = vst.msk [vmem:[#allocation3 + $0x58] sm:$0xff] %vm1427, %v1657
        %1674 = vst.msk [vmem:[#allocation3 + $0x60] sm:$0xff] %vm1427, %v1658
        %1675 = vst.msk [vmem:[#allocation3 + $0x68] sm:$0xff] %vm1427, %v1659
        %1676 = vst.msk [vmem:[#allocation3 + $0x70] sm:$0xff] %vm1427, %v1660
        %1677 = vst.msk [vmem:[#allocation3 + $0x78] sm:$0xff] %vm1427, %v1661
      $region56: #{discriminator_forward.8} parent=43 // pred_fallthru
        _
      %p1678 = scmp.eq.s32.totalorder %s24, 1
      // Predicated region
      $region57: #{discriminator_forward.8} parent=43 // pred_check
        %p1679 = pneg %p1678
      $region58: #{discriminator_forward.8} parent=43 // pred_check_branch
        %1681 = sbr.rel (%p1679) target = $region60
      $region59: #{discriminator_forward.8} parent=43 // pred_region
        %v1682 = vld [vmem:[#allocation2] sm:$0xff]
        %v1683 = vld [vmem:[#allocation2 + $0x8] sm:$0xff]
        %v1684 = vld [vmem:[#allocation2 + $0x10] sm:$0xff]
        %v1685 = vld [vmem:[#allocation2 + $0x18] sm:$0xff]
        %v1686 = vld [vmem:[#allocation2 + $0x20] sm:$0xff]
        %v1687 = vld [vmem:[#allocation2 + $0x28] sm:$0xff]
        %v1688 = vld [vmem:[#allocation2 + $0x30] sm:$0xff]
        %v1689 = vld [vmem:[#allocation2 + $0x38] sm:$0xff]
        %v1690 = vld [vmem:[#allocation2 + $0x40] sm:$0xff]
        %v1691 = vld [vmem:[#allocation2 + $0x48] sm:$0xff]
        %v1692 = vld [vmem:[#allocation2 + $0x50] sm:$0xff]
        %v1693 = vld [vmem:[#allocation2 + $0x58] sm:$0xff]
        %v1694 = vld [vmem:[#allocation2 + $0x60] sm:$0xff]
        %v1695 = vld [vmem:[#allocation2 + $0x68] sm:$0xff]
        %v1696 = vld [vmem:[#allocation2 + $0x70] sm:$0xff]
        %v1697 = vld [vmem:[#allocation2 + $0x78] sm:$0xff]
        %v1698 = vld [vmem:[%s460] sm:$0x1]
        %v1700 = vlaneseq
        %v1701 = vshrl.u32 %v1700, 7
        %v1702 = vsub.s32 0, %v1701
        %v1703 = vrot.slane %v1698, %v1702
        %v1705 = vadd.f32 %v1682, %v1703
        %v1706 = vadd.f32 %v1683, %v1703
        %v1707 = vadd.f32 %v1684, %v1703
        %v1708 = vadd.f32 %v1685, %v1703
        %v1709 = vadd.f32 %v1686, %v1703
        %v1710 = vadd.f32 %v1687, %v1703
        %v1711 = vadd.f32 %v1688, %v1703
        %v1712 = vadd.f32 %v1689, %v1703
        %v1713 = vadd.f32 %v1690, %v1703
        %v1714 = vadd.f32 %v1691, %v1703
        %v1715 = vadd.f32 %v1692, %v1703
        %v1716 = vadd.f32 %v1693, %v1703
        %v1717 = vadd.f32 %v1694, %v1703
        %v1718 = vadd.f32 %v1695, %v1703
        %v1719 = vadd.f32 %v1696, %v1703
        %v1720 = vadd.f32 %v1697, %v1703
        %vm1721 = vcmp.ge.f32.partialorder %v1705, 0.0
        %vm1722 = vcmp.ge.f32.partialorder %v1706, 0.0
        %vm1723 = vcmp.ge.f32.partialorder %v1707, 0.0
        %vm1724 = vcmp.ge.f32.partialorder %v1708, 0.0
        %vm1725 = vcmp.ge.f32.partialorder %v1709, 0.0
        %vm1726 = vcmp.ge.f32.partialorder %v1710, 0.0
        %vm1727 = vcmp.ge.f32.partialorder %v1711, 0.0
        %vm1728 = vcmp.ge.f32.partialorder %v1712, 0.0
        %vm1729 = vcmp.ge.f32.partialorder %v1713, 0.0
        %vm1730 = vcmp.ge.f32.partialorder %v1714, 0.0
        %vm1731 = vcmp.ge.f32.partialorder %v1715, 0.0
        %vm1732 = vcmp.ge.f32.partialorder %v1716, 0.0
        %vm1733 = vcmp.ge.f32.partialorder %v1717, 0.0
        %vm1734 = vcmp.ge.f32.partialorder %v1718, 0.0
        %vm1735 = vcmp.ge.f32.partialorder %v1719, 0.0
        %vm1736 = vcmp.ge.f32.partialorder %v1720, 0.0
        %v1737 = vmul.f32 %v1705, 0.2
        %v1738 = vmul.f32 %v1706, 0.2
        %v1739 = vmul.f32 %v1707, 0.2
        %v1740 = vmul.f32 %v1708, 0.2
        %v1741 = vmul.f32 %v1709, 0.2
        %v1742 = vmul.f32 %v1710, 0.2
        %v1743 = vmul.f32 %v1711, 0.2
        %v1744 = vmul.f32 %v1712, 0.2
        %v1745 = vmul.f32 %v1713, 0.2
        %v1746 = vmul.f32 %v1714, 0.2
        %v1747 = vmul.f32 %v1715, 0.2
        %v1748 = vmul.f32 %v1716, 0.2
        %v1749 = vmul.f32 %v1717, 0.2
        %v1750 = vmul.f32 %v1718, 0.2
        %v1751 = vmul.f32 %v1719, 0.2
        %v1752 = vmul.f32 %v1720, 0.2
        %v1753 = vsel %vm1721, %v1705, %v1737
        %v1754 = vsel %vm1722, %v1706, %v1738
        %v1755 = vsel %vm1723, %v1707, %v1739
        %v1756 = vsel %vm1724, %v1708, %v1740
        %v1757 = vsel %vm1725, %v1709, %v1741
        %v1758 = vsel %vm1726, %v1710, %v1742
        %v1759 = vsel %vm1727, %v1711, %v1743
        %v1760 = vsel %vm1728, %v1712, %v1744
        %v1761 = vsel %vm1729, %v1713, %v1745
        %v1762 = vsel %vm1730, %v1714, %v1746
        %v1763 = vsel %vm1731, %v1715, %v1747
        %v1764 = vsel %vm1732, %v1716, %v1748
        %v1765 = vsel %vm1733, %v1717, %v1749
        %v1766 = vsel %vm1734, %v1718, %v1750
        %v1767 = vsel %vm1735, %v1719, %v1751
        %v1768 = vsel %vm1736, %v1720, %v1752
        %v1769 = vld [vmem:[#allocation3] sm:$0xff]
        %v1770 = vld [vmem:[#allocation3 + $0x8] sm:$0xff]
        %v1771 = vld [vmem:[#allocation3 + $0x10] sm:$0xff]
        %v1772 = vld [vmem:[#allocation3 + $0x18] sm:$0xff]
        %v1773 = vld [vmem:[#allocation3 + $0x20] sm:$0xff]
        %v1774 = vld [vmem:[#allocation3 + $0x28] sm:$0xff]
        %v1775 = vld [vmem:[#allocation3 + $0x30] sm:$0xff]
        %v1776 = vld [vmem:[#allocation3 + $0x38] sm:$0xff]
        %v1777 = vld [vmem:[#allocation3 + $0x40] sm:$0xff]
        %v1778 = vld [vmem:[#allocation3 + $0x48] sm:$0xff]
        %v1779 = vld [vmem:[#allocation3 + $0x50] sm:$0xff]
        %v1780 = vld [vmem:[#allocation3 + $0x58] sm:$0xff]
        %v1781 = vld [vmem:[#allocation3 + $0x60] sm:$0xff]
        %v1782 = vld [vmem:[#allocation3 + $0x68] sm:$0xff]
        %v1783 = vld [vmem:[#allocation3 + $0x70] sm:$0xff]
        %v1784 = vld [vmem:[#allocation3 + $0x78] sm:$0xff]
        %v1785 = vld [vmem:[%s496] sm:$0x1]
        %v1787 = vlaneseq
        %v1788 = vshrl.u32 %v1787, 7
        %v1789 = vsub.s32 0, %v1788
        %v1790 = vrot.slane %v1785, %v1789
        %v1792 = vadd.f32 %v1769, %v1790
        %v1793 = vadd.f32 %v1770, %v1790
        %v1794 = vadd.f32 %v1771, %v1790
        %v1795 = vadd.f32 %v1772, %v1790
        %v1796 = vadd.f32 %v1773, %v1790
        %v1797 = vadd.f32 %v1774, %v1790
        %v1798 = vadd.f32 %v1775, %v1790
        %v1799 = vadd.f32 %v1776, %v1790
        %v1800 = vadd.f32 %v1777, %v1790
        %v1801 = vadd.f32 %v1778, %v1790
        %v1802 = vadd.f32 %v1779, %v1790
        %v1803 = vadd.f32 %v1780, %v1790
        %v1804 = vadd.f32 %v1781, %v1790
        %v1805 = vadd.f32 %v1782, %v1790
        %v1806 = vadd.f32 %v1783, %v1790
        %v1807 = vadd.f32 %v1784, %v1790
        %vm1808 = vcmp.ge.f32.partialorder %v1792, 0.0
        %vm1809 = vcmp.ge.f32.partialorder %v1793, 0.0
        %vm1810 = vcmp.ge.f32.partialorder %v1794, 0.0
        %vm1811 = vcmp.ge.f32.partialorder %v1795, 0.0
        %vm1812 = vcmp.ge.f32.partialorder %v1796, 0.0
        %vm1813 = vcmp.ge.f32.partialorder %v1797, 0.0
        %vm1814 = vcmp.ge.f32.partialorder %v1798, 0.0
        %vm1815 = vcmp.ge.f32.partialorder %v1799, 0.0
        %vm1816 = vcmp.ge.f32.partialorder %v1800, 0.0
        %vm1817 = vcmp.ge.f32.partialorder %v1801, 0.0
        %vm1818 = vcmp.ge.f32.partialorder %v1802, 0.0
        %vm1819 = vcmp.ge.f32.partialorder %v1803, 0.0
        %vm1820 = vcmp.ge.f32.partialorder %v1804, 0.0
        %vm1821 = vcmp.ge.f32.partialorder %v1805, 0.0
        %vm1822 = vcmp.ge.f32.partialorder %v1806, 0.0
        %vm1823 = vcmp.ge.f32.partialorder %v1807, 0.0
        %v1824 = vmul.f32 %v1792, 0.2
        %v1825 = vmul.f32 %v1793, 0.2
        %v1826 = vmul.f32 %v1794, 0.2
        %v1827 = vmul.f32 %v1795, 0.2
        %v1828 = vmul.f32 %v1796, 0.2
        %v1829 = vmul.f32 %v1797, 0.2
        %v1830 = vmul.f32 %v1798, 0.2
        %v1831 = vmul.f32 %v1799, 0.2
        %v1832 = vmul.f32 %v1800, 0.2
        %v1833 = vmul.f32 %v1801, 0.2
        %v1834 = vmul.f32 %v1802, 0.2
        %v1835 = vmul.f32 %v1803, 0.2
        %v1836 = vmul.f32 %v1804, 0.2
        %v1837 = vmul.f32 %v1805, 0.2
        %v1838 = vmul.f32 %v1806, 0.2
        %v1839 = vmul.f32 %v1807, 0.2
        %v1840 = vsel %vm1808, %v1792, %v1824
        %v1841 = vsel %vm1809, %v1793, %v1825
        %v1842 = vsel %vm1810, %v1794, %v1826
        %v1843 = vsel %vm1811, %v1795, %v1827
        %v1844 = vsel %vm1812, %v1796, %v1828
        %v1845 = vsel %vm1813, %v1797, %v1829
        %v1846 = vsel %vm1814, %v1798, %v1830
        %v1847 = vsel %vm1815, %v1799, %v1831
        %v1848 = vsel %vm1816, %v1800, %v1832
        %v1849 = vsel %vm1817, %v1801, %v1833
        %v1850 = vsel %vm1818, %v1802, %v1834
        %v1851 = vsel %vm1819, %v1803, %v1835
        %v1852 = vsel %vm1820, %v1804, %v1836
        %v1853 = vsel %vm1821, %v1805, %v1837
        %v1854 = vsel %vm1822, %v1806, %v1838
        %v1855 = vsel %vm1823, %v1807, %v1839
        %v1856 = vadd.f32 %v1753, %v1840
        %v1857 = vadd.f32 %v1754, %v1841
        %v1858 = vadd.f32 %v1755, %v1842
        %v1859 = vadd.f32 %v1756, %v1843
        %v1860 = vadd.f32 %v1757, %v1844
        %v1861 = vadd.f32 %v1758, %v1845
        %v1862 = vadd.f32 %v1759, %v1846
        %v1863 = vadd.f32 %v1760, %v1847
        %v1864 = vadd.f32 %v1761, %v1848
        %v1865 = vadd.f32 %v1762, %v1849
        %v1866 = vadd.f32 %v1763, %v1850
        %v1867 = vadd.f32 %v1764, %v1851
        %v1868 = vadd.f32 %v1765, %v1852
        %v1869 = vadd.f32 %v1766, %v1853
        %v1870 = vadd.f32 %v1767, %v1854
        %v1871 = vadd.f32 %v1768, %v1855
        %v1872 = vpack.c.bf16 %v1857, %v1856
        %v1873 = vpack.c.bf16 %v1859, %v1858
        %v1874 = vpack.c.bf16 %v1861, %v1860
        %v1875 = vpack.c.bf16 %v1863, %v1862
        %v1876 = vpack.c.bf16 %v1865, %v1864
        %v1877 = vpack.c.bf16 %v1867, %v1866
        %v1878 = vpack.c.bf16 %v1869, %v1868
        %v1879 = vpack.c.bf16 %v1871, %v1870
        %v1888 = vunpack.c.l.b16 %v1872
        %v1889 = vunpack.c.h.b16 %v1872
        %v1890 = vunpack.c.l.b16 %v1873
        %v1891 = vunpack.c.h.b16 %v1873
        %v1892 = vunpack.c.l.b16 %v1874
        %v1893 = vunpack.c.h.b16 %v1874
        %v1894 = vunpack.c.l.b16 %v1875
        %v1895 = vunpack.c.h.b16 %v1875
        %v1896 = vunpack.c.l.b16 %v1876
        %v1897 = vunpack.c.h.b16 %v1876
        %v1898 = vunpack.c.l.b16 %v1877
        %v1899 = vunpack.c.h.b16 %v1877
        %v1900 = vunpack.c.l.b16 %v1878
        %v1901 = vunpack.c.h.b16 %v1878
        %v1902 = vunpack.c.l.b16 %v1879
        %v1903 = vunpack.c.h.b16 %v1879
        %v1904 = vpack.c.b16 %v1888, %v1888
        %v1905 = vpack.c.b16 %v1889, %v1889
        %v1906 = vpack.c.b16 %v1890, %v1890
        %v1907 = vpack.c.b16 %v1891, %v1891
        %v1908 = vpack.c.b16 %v1892, %v1892
        %v1909 = vpack.c.b16 %v1893, %v1893
        %v1910 = vpack.c.b16 %v1894, %v1894
        %v1911 = vpack.c.b16 %v1895, %v1895
        %v1912 = vpack.c.b16 %v1896, %v1896
        %v1913 = vpack.c.b16 %v1897, %v1897
        %v1914 = vpack.c.b16 %v1898, %v1898
        %v1915 = vpack.c.b16 %v1899, %v1899
        %v1916 = vpack.c.b16 %v1900, %v1900
        %v1917 = vpack.c.b16 %v1901, %v1901
        %v1918 = vpack.c.b16 %v1902, %v1902
        %v1919 = vpack.c.b16 %v1903, %v1903
        %vm1936 = vcmask 257024
        %1937 = vst.msk [vmem:[%s504] sm:$0xf] %vm1936, %v1904
        %1938 = vst.msk [vmem:[%s504 + $0x4] sm:$0xf] %vm1936, %v1905
        %1939 = vst.msk [vmem:[%s504 + $0x8] sm:$0xf] %vm1936, %v1906
        %1940 = vst.msk [vmem:[%s504 + $0xc] sm:$0xf] %vm1936, %v1907
        %1941 = vst.msk [vmem:[%s504 + $0x10] sm:$0xf] %vm1936, %v1908
        %1942 = vst.msk [vmem:[%s504 + $0x14] sm:$0xf] %vm1936, %v1909
        %1943 = vst.msk [vmem:[%s504 + $0x18] sm:$0xf] %vm1936, %v1910
        %1944 = vst.msk [vmem:[%s504 + $0x1c] sm:$0xf] %vm1936, %v1911
        %1945 = vst.msk [vmem:[%s504 + $0x20] sm:$0xf] %vm1936, %v1912
        %1946 = vst.msk [vmem:[%s504 + $0x24] sm:$0xf] %vm1936, %v1913
        %1947 = vst.msk [vmem:[%s504 + $0x28] sm:$0xf] %vm1936, %v1914
        %1948 = vst.msk [vmem:[%s504 + $0x2c] sm:$0xf] %vm1936, %v1915
        %1949 = vst.msk [vmem:[%s504 + $0x30] sm:$0xf] %vm1936, %v1916
        %1950 = vst.msk [vmem:[%s504 + $0x34] sm:$0xf] %vm1936, %v1917
        %1951 = vst.msk [vmem:[%s504 + $0x38] sm:$0xf] %vm1936, %v1918
        %1952 = vst.msk [vmem:[%s504 + $0x3c] sm:$0xf] %vm1936, %v1919
      $region60: #{discriminator_forward.8} parent=43 // pred_fallthru
        _
      %s1953 = smul.u32 16, %s22
      %p1954 = scmp.lt.s32.totalorder %s1953, 15
      %s1955 = scalar_select %p1954, %s1953, 15
      %p1956 = scmp.lt.s32.totalorder %s23, 0
      %s1957 = scalar_select %p1956, %s23, 0
      %s1958 = sadd.s32 %s1957, %s1955
      %s1959 = smul.addr %s1958, 4
      %s1960 = scalar_lea.vmem %s6, %s1959
      // Predicated region
      $region61: #{discriminator_forward.8} parent=43 // pred_check
        %p1961 = pneg %p240
      $region62: #{discriminator_forward.8} parent=43 // pred_check_branch
        %1963 = sbr.rel (%p1961) target = $region64
      $region63: #{discriminator_forward.8} parent=43 // pred_region
        %s1964 = smul.u32 16, %s22
      $region64: #{discriminator_forward.8} parent=43 // pred_fallthru
        _
      // Predicated region
      $region65: #{discriminator_forward.8} parent=43 // pred_check
        %p1965 = pneg %p240
      $region66: #{discriminator_forward.8} parent=43 // pred_check_branch
        %1967 = sbr.rel (%p1965) target = $region68
      $region67: #{discriminator_forward.8} parent=43 // pred_region
        %s1968 = smul.u32 16, %s22
        %p1969 = scmp.lt.s32.totalorder %s1968, 15
        %s1970 = scalar_select %p1969, %s1968, 15
        %p1971 = scmp.lt.s32.totalorder %s23, 0
        %s1972 = scalar_select %p1971, %s23, 0
        %s1973 = sadd.s32 %s1972, %s1970
        %s1974 = smul.addr %s1973, 4
        %s1975 = scalar_lea.vmem %s6, %s1974
      $region68: #{discriminator_forward.8} parent=43 // pred_fallthru
        _
    $region44: #{discriminator_forward.8} parent=5 // pred_fallthru
      _
    %p1976 = scmp.le.s32.totalorder 2, %s12
    // Predicated region
    $region69: #{discriminator_forward.8} parent=5 // pred_check
      %p1977 = pneg %p1976
    $region70: #{discriminator_forward.8} parent=5 // pred_check_branch
      %1979 = sbr.rel (%p1977) target = $region72
    $region71: #{discriminator_forward.8} parent=5 // pred_region
      %s1980 = ssub.s32 %s12, 2
    $region72: #{discriminator_forward.8} parent=5 // pred_fallthru
      _
  $region6: #{discriminator_forward.8} parent=0 // loop_footer
    %s16 = sadd.s32 1, %s12
  $region7: #{discriminator_forward.8} parent=0 // loop_footer_branch
    %11 = sbr.rel target = $region3
  $region8: #{discriminator_forward.8} parent=0 // loop_exit
    _

// kernel: discriminator_forward.9
$region0: #{discriminator_forward.9}
  #allocation0 [shape = 'u32[]', space=smem, size = 0x4, offset = 0x4, fixed_abs, tag = 'smem constant byte address 0x4 - core index']
  #allocation1 [shape = 'u32[144,128]{1,0:T(1,128)}', space=vmem, size = 0x12000, scoped, tag = 'internal scratch']
  #allocation2 [shape = 'f32[128,32]{1,0:T(8,128)}', space=vmem, size = 0x10000, scoped, tag = 'scratch operand']
  %s0 = inlined_call_operand.vmem [shape: bf16[128,288], index: 0, kind: input, shape index: {}]
  %s1 = inlined_call_operand.vmem [shape: bf16[288,32], index: 1, kind: input, shape index: {}]
  %s2 = inlined_call_operand.vmem [shape: f32[1,32], index: 2, kind: input, shape index: {}]
  %s3 = inlined_call_operand.vmem [shape: bf16[128,32], index: 3, kind: output, shape index: {}]
  %s4 = sld [smem:[#allocation0]]
  $region30: #{discriminator_forward.9} parent=0
    _
  %s6 = ssub.s32 1, %s4
  %s7 = scalar_select 0, %s6, %s4
  // Predicated region
  $region2: #{discriminator_forward.9} parent=0 // pred_check
    _
  $region3: #{discriminator_forward.9} parent=0 // pred_check_branch
    %9 = sbr.rel (0) target = $region5
  $region4: #{discriminator_forward.9} parent=0 // pred_region
    _
  $region5: #{discriminator_forward.9} parent=0 // pred_fallthru
    _
  // Predicated region
  $region6: #{discriminator_forward.9} parent=0 // pred_check
    _
  $region7: #{discriminator_forward.9} parent=0 // pred_check_branch
    %11 = sbr.rel (0) target = $region9
  $region8: #{discriminator_forward.9} parent=0 // pred_region
    _
  $region9: #{discriminator_forward.9} parent=0 // pred_fallthru
    _
  // Predicated region
  $region10: #{discriminator_forward.9} parent=0 // pred_check
    _
  $region11: #{discriminator_forward.9} parent=0 // pred_check_branch
    %13 = sbr.rel (0) target = $region13
  $region12: #{discriminator_forward.9} parent=0 // pred_region
    _
  $region13: #{discriminator_forward.9} parent=0 // pred_fallthru
    _
  %p15 = scmp.eq.s32.totalorder 0, 0
  // Predicated region
  $region14: #{discriminator_forward.9} parent=0 // pred_check
    %p16 = pneg %p15
  $region15: #{discriminator_forward.9} parent=0 // pred_check_branch
    %18 = sbr.rel (%p16) target = $region17
  $region16: #{discriminator_forward.9} parent=0 // pred_region
    %vm19 = vcmask 261120
    %20 = vst.msk [vmem:[#allocation2] sm:$0xff] %vm19, 0.0
    %21 = vst.msk [vmem:[#allocation2 + $0x8] sm:$0xff] %vm19, 0.0
    %22 = vst.msk [vmem:[#allocation2 + $0x10] sm:$0xff] %vm19, 0.0
    %23 = vst.msk [vmem:[#allocation2 + $0x18] sm:$0xff] %vm19, 0.0
    %24 = vst.msk [vmem:[#allocation2 + $0x20] sm:$0xff] %vm19, 0.0
    %25 = vst.msk [vmem:[#allocation2 + $0x28] sm:$0xff] %vm19, 0.0
    %26 = vst.msk [vmem:[#allocation2 + $0x30] sm:$0xff] %vm19, 0.0
    %27 = vst.msk [vmem:[#allocation2 + $0x38] sm:$0xff] %vm19, 0.0
    %28 = vst.msk [vmem:[#allocation2 + $0x40] sm:$0xff] %vm19, 0.0
    %29 = vst.msk [vmem:[#allocation2 + $0x48] sm:$0xff] %vm19, 0.0
    %30 = vst.msk [vmem:[#allocation2 + $0x50] sm:$0xff] %vm19, 0.0
    %31 = vst.msk [vmem:[#allocation2 + $0x58] sm:$0xff] %vm19, 0.0
    %32 = vst.msk [vmem:[#allocation2 + $0x60] sm:$0xff] %vm19, 0.0
    %33 = vst.msk [vmem:[#allocation2 + $0x68] sm:$0xff] %vm19, 0.0
    %34 = vst.msk [vmem:[#allocation2 + $0x70] sm:$0xff] %vm19, 0.0
    %35 = vst.msk [vmem:[#allocation2 + $0x78] sm:$0xff] %vm19, 0.0
  $region17: #{discriminator_forward.9} parent=0 // pred_fallthru
    _
  %v36 = vld [vmem:[#allocation2] sm:$0xff]
  %v37 = vld [vmem:[#allocation2 + $0x8] sm:$0xff]
  %v38 = vld [vmem:[#allocation2 + $0x10] sm:$0xff]
  %v39 = vld [vmem:[#allocation2 + $0x18] sm:$0xff]
  %v40 = vld [vmem:[#allocation2 + $0x20] sm:$0xff]
  %v41 = vld [vmem:[#allocation2 + $0x28] sm:$0xff]
  %v42 = vld [vmem:[#allocation2 + $0x30] sm:$0xff]
  %v43 = vld [vmem:[#allocation2 + $0x38] sm:$0xff]
  %v44 = vld [vmem:[#allocation2 + $0x40] sm:$0xff]
  %v45 = vld [vmem:[#allocation2 + $0x48] sm:$0xff]
  %v46 = vld [vmem:[#allocation2 + $0x50] sm:$0xff]
  %v47 = vld [vmem:[#allocation2 + $0x58] sm:$0xff]
  %v48 = vld [vmem:[#allocation2 + $0x60] sm:$0xff]
  %v49 = vld [vmem:[#allocation2 + $0x68] sm:$0xff]
  %v50 = vld [vmem:[#allocation2 + $0x70] sm:$0xff]
  %v51 = vld [vmem:[#allocation2 + $0x78] sm:$0xff]
  %v52 = vld [vmem:[%s0] sm:$0xff]
  %v53 = vld [vmem:[%s0 + $0x8] sm:$0xf]
  %v54 = vld [vmem:[%s0 + $0xc] sm:$0xff]
  %v55 = vld [vmem:[%s0 + $0x14] sm:$0xf]
  %v56 = vld [vmem:[%s0 + $0x18] sm:$0xff]
  %v57 = vld [vmem:[%s0 + $0x20] sm:$0xf]
  %v58 = vld [vmem:[%s0 + $0x24] sm:$0xff]
  %v59 = vld [vmem:[%s0 + $0x2c] sm:$0xf]
  %v60 = vld [vmem:[%s0 + $0x30] sm:$0xff]
  %v61 = vld [vmem:[%s0 + $0x38] sm:$0xf]
  %v62 = vld [vmem:[%s0 + $0x3c] sm:$0xff]
  %v63 = vld [vmem:[%s0 + $0x44] sm:$0xf]
  %v64 = vld [vmem:[%s0 + $0x48] sm:$0xff]
  %v65 = vld [vmem:[%s0 + $0x50] sm:$0xf]
  %v66 = vld [vmem:[%s0 + $0x54] sm:$0xff]
  %v67 = vld [vmem:[%s0 + $0x5c] sm:$0xf]
  %v68 = vld [vmem:[%s0 + $0x60] sm:$0xff]
  %v69 = vld [vmem:[%s0 + $0x68] sm:$0xf]
  %v70 = vld [vmem:[%s0 + $0x6c] sm:$0xff]
  %v71 = vld [vmem:[%s0 + $0x74] sm:$0xf]
  %v72 = vld [vmem:[%s0 + $0x78] sm:$0xff]
  %v73 = vld [vmem:[%s0 + $0x80] sm:$0xf]
  %v74 = vld [vmem:[%s0 + $0x84] sm:$0xff]
  %v75 = vld [vmem:[%s0 + $0x8c] sm:$0xf]
  %v76 = vld [vmem:[%s0 + $0x90] sm:$0xff]
  %v77 = vld [vmem:[%s0 + $0x98] sm:$0xf]
  %v78 = vld [vmem:[%s0 + $0x9c] sm:$0xff]
  %v79 = vld [vmem:[%s0 + $0xa4] sm:$0xf]
  %v80 = vld [vmem:[%s0 + $0xa8] sm:$0xff]
  %v81 = vld [vmem:[%s0 + $0xb0] sm:$0xf]
  %v82 = vld [vmem:[%s0 + $0xb4] sm:$0xff]
  %v83 = vld [vmem:[%s0 + $0xbc] sm:$0xf]
  %v84 = vld [vmem:[%s1] sm:$0xf]
  %v85 = vld [vmem:[%s1 + $0x4] sm:$0xf]
  %v86 = vld [vmem:[%s1 + $0x8] sm:$0xf]
  %v87 = vld [vmem:[%s1 + $0xc] sm:$0xf]
  %v88 = vld [vmem:[%s1 + $0x10] sm:$0xf]
  %v89 = vld [vmem:[%s1 + $0x14] sm:$0xf]
  %v90 = vld [vmem:[%s1 + $0x18] sm:$0xf]
  %v91 = vld [vmem:[%s1 + $0x1c] sm:$0xf]
  %v92 = vld [vmem:[%s1 + $0x20] sm:$0xf]
  %v93 = vld [vmem:[%s1 + $0x24] sm:$0xf]
  %v94 = vld [vmem:[%s1 + $0x28] sm:$0xf]
  %v95 = vld [vmem:[%s1 + $0x2c] sm:$0xf]
  %v96 = vld [vmem:[%s1 + $0x30] sm:$0xf]
  %v97 = vld [vmem:[%s1 + $0x34] sm:$0xf]
  %v98 = vld [vmem:[%s1 + $0x38] sm:$0xf]
  %v99 = vld [vmem:[%s1 + $0x3c] sm:$0xf]
  %v100 = vld [vmem:[%s1 + $0x40] sm:$0xf]
  %v101 = vld [vmem:[%s1 + $0x44] sm:$0xf]
  %v102 = vld [vmem:[%s1 + $0x48] sm:$0xf]
  %v103 = vld [vmem:[%s1 + $0x4c] sm:$0xf]
  %v104 = vld [vmem:[%s1 + $0x50] sm:$0xf]
  %v105 = vld [vmem:[%s1 + $0x54] sm:$0xf]
  %v106 = vld [vmem:[%s1 + $0x58] sm:$0xf]
  %v107 = vld [vmem:[%s1 + $0x5c] sm:$0xf]
  %v108 = vld [vmem:[%s1 + $0x60] sm:$0xf]
  %v109 = vld [vmem:[%s1 + $0x64] sm:$0xf]
  %v110 = vld [vmem:[%s1 + $0x68] sm:$0xf]
  %v111 = vld [vmem:[%s1 + $0x6c] sm:$0xf]
  %v112 = vld [vmem:[%s1 + $0x70] sm:$0xf]
  %v113 = vld [vmem:[%s1 + $0x74] sm:$0xf]
  %v114 = vld [vmem:[%s1 + $0x78] sm:$0xf]
  %v115 = vld [vmem:[%s1 + $0x7c] sm:$0xf]
  %v116 = vld [vmem:[%s1 + $0x80] sm:$0xf]
  %v117 = vld [vmem:[%s1 + $0x84] sm:$0xf]
  %v118 = vld [vmem:[%s1 + $0x88] sm:$0xf]
  %v119 = vld [vmem:[%s1 + $0x8c] sm:$0xf]
  %v152 = vunpack.c.l.b16 %v52
  %v153 = vunpack.c.h.b16 %v52
  %v154 = vunpack.c.l.b16 %v53
  %v155 = vunpack.c.l.b16 %v54
  %v156 = vunpack.c.h.b16 %v54
  %v157 = vunpack.c.l.b16 %v55
  %v158 = vunpack.c.l.b16 %v56
  %v159 = vunpack.c.h.b16 %v56
  %v160 = vunpack.c.l.b16 %v57
  %v161 = vunpack.c.l.b16 %v58
  %v162 = vunpack.c.h.b16 %v58
  %v163 = vunpack.c.l.b16 %v59
  %v164 = vunpack.c.l.b16 %v60
  %v165 = vunpack.c.h.b16 %v60
  %v166 = vunpack.c.l.b16 %v61
  %v167 = vunpack.c.l.b16 %v62
  %v168 = vunpack.c.h.b16 %v62
  %v169 = vunpack.c.l.b16 %v63
  %v170 = vunpack.c.l.b16 %v64
  %v171 = vunpack.c.h.b16 %v64
  %v172 = vunpack.c.l.b16 %v65
  %v173 = vunpack.c.l.b16 %v66
  %v174 = vunpack.c.h.b16 %v66
  %v175 = vunpack.c.l.b16 %v67
  %v176 = vunpack.c.l.b16 %v68
  %v177 = vunpack.c.h.b16 %v68
  %v178 = vunpack.c.l.b16 %v69
  %v179 = vunpack.c.l.b16 %v70
  %v180 = vunpack.c.h.b16 %v70
  %v181 = vunpack.c.l.b16 %v71
  %v182 = vunpack.c.l.b16 %v72
  %v183 = vunpack.c.h.b16 %v72
  %v184 = vunpack.c.l.b16 %v73
  %v185 = vunpack.c.l.b16 %v74
  %v186 = vunpack.c.h.b16 %v74
  %v187 = vunpack.c.l.b16 %v75
  %v188 = vunpack.c.l.b16 %v76
  %v189 = vunpack.c.h.b16 %v76
  %v190 = vunpack.c.l.b16 %v77
  %v191 = vunpack.c.l.b16 %v78
  %v192 = vunpack.c.h.b16 %v78
  %v193 = vunpack.c.l.b16 %v79
  %v194 = vunpack.c.l.b16 %v80
  %v195 = vunpack.c.h.b16 %v80
  %v196 = vunpack.c.l.b16 %v81
  %v197 = vunpack.c.l.b16 %v82
  %v198 = vunpack.c.h.b16 %v82
  %v199 = vunpack.c.l.b16 %v83
  %v200 = vpack.c.b16 %v155, %v152
  %v201 = vpack.c.b16 %v156, %v153
  %v202 = vpack.c.b16 %v157, %v154
  %v203 = vpack.c.b16 %v161, %v158
  %v204 = vpack.c.b16 %v162, %v159
  %v205 = vpack.c.b16 %v163, %v160
  %v206 = vpack.c.b16 %v167, %v164
  %v207 = vpack.c.b16 %v168, %v165
  %v208 = vpack.c.b16 %v169, %v166
  %v209 = vpack.c.b16 %v173, %v170
  %v210 = vpack.c.b16 %v174, %v171
  %v211 = vpack.c.b16 %v175, %v172
  %v212 = vpack.c.b16 %v179, %v176
  %v213 = vpack.c.b16 %v180, %v177
  %v214 = vpack.c.b16 %v181, %v178
  %v215 = vpack.c.b16 %v185, %v182
  %v216 = vpack.c.b16 %v186, %v183
  %v217 = vpack.c.b16 %v187, %v184
  %v218 = vpack.c.b16 %v191, %v188
  %v219 = vpack.c.b16 %v192, %v189
  %v220 = vpack.c.b16 %v193, %v190
  %v221 = vpack.c.b16 %v197, %v194
  %v222 = vpack.c.b16 %v198, %v195
  %v223 = vpack.c.b16 %v199, %v196
  %v276 = vunpack.c.l.b16 %v84
  %v277 = vunpack.c.l.b16 %v85
  %v278 = vunpack.c.l.b16 %v86
  %v279 = vunpack.c.l.b16 %v87
  %v280 = vunpack.c.l.b16 %v88
  %v281 = vunpack.c.l.b16 %v89
  %v282 = vunpack.c.l.b16 %v90
  %v283 = vunpack.c.l.b16 %v91
  %v284 = vunpack.c.l.b16 %v92
  %v285 = vunpack.c.l.b16 %v93
  %v286 = vunpack.c.l.b16 %v94
  %v287 = vunpack.c.l.b16 %v95
  %v288 = vunpack.c.l.b16 %v96
  %v289 = vunpack.c.l.b16 %v97
  %v290 = vunpack.c.l.b16 %v98
  %v291 = vunpack.c.l.b16 %v99
  %v292 = vunpack.c.l.b16 %v100
  %v293 = vunpack.c.l.b16 %v101
  %v294 = vunpack.c.l.b16 %v102
  %v295 = vunpack.c.l.b16 %v103
  %v296 = vunpack.c.l.b16 %v104
  %v297 = vunpack.c.l.b16 %v105
  %v298 = vunpack.c.l.b16 %v106
  %v299 = vunpack.c.l.b16 %v107
  %v300 = vunpack.c.l.b16 %v108
  %v301 = vunpack.c.l.b16 %v109
  %v302 = vunpack.c.l.b16 %v110
  %v303 = vunpack.c.l.b16 %v111
  %v304 = vunpack.c.l.b16 %v112
  %v305 = vunpack.c.l.b16 %v113
  %v306 = vunpack.c.l.b16 %v114
  %v307 = vunpack.c.l.b16 %v115
  %v308 = vunpack.c.l.b16 %v116
  %v309 = vunpack.c.l.b16 %v117
  %v310 = vunpack.c.l.b16 %v118
  %v311 = vunpack.c.l.b16 %v119
  %v312 = vpack.c.b16 %v277, %v276
  %v313 = vpack.c.b16 %v279, %v278
  %v314 = vpack.c.b16 %v281, %v280
  %v315 = vpack.c.b16 %v283, %v282
  %v316 = vpack.c.b16 %v285, %v284
  %v317 = vpack.c.b16 %v287, %v286
  %v318 = vpack.c.b16 %v289, %v288
  %v319 = vpack.c.b16 %v291, %v290
  %v320 = vpack.c.b16 %v293, %v292
  %v321 = vpack.c.b16 %v295, %v294
  %v322 = vpack.c.b16 %v297, %v296
  %v323 = vpack.c.b16 %v299, %v298
  %v324 = vpack.c.b16 %v301, %v300
  %v325 = vpack.c.b16 %v303, %v302
  %v326 = vpack.c.b16 %v305, %v304
  %v327 = vpack.c.b16 %v307, %v306
  %v328 = vpack.c.b16 %v309, %v308
  %v329 = vpack.c.b16 %v311, %v310
  %vm348 = vcmask 261120
  %v350 = vsel %vm348, %v202, 0
  %v353 = vsel %vm348, %v205, 0
  %v356 = vsel %vm348, %v208, 0
  %v359 = vsel %vm348, %v211, 0
  %v362 = vsel %vm348, %v214, 0
  %v365 = vsel %vm348, %v217, 0
  %v368 = vsel %vm348, %v220, 0
  %v371 = vsel %vm348, %v223, 0
  %373 = vmatprep.subr.bf16.mxu0 0
  %374 = vmatpush1.bf16.msra.mxu0 %v312
  %375 = vmatprep.subr.bf16.mxu0 0
  %376 = vmatpush1.bf16.msra.mxu0 %v313
  %377 = vmatprep.subr.bf16.mxu0 0
  %378 = vmatpush1.bf16.msra.mxu0 %v314
  %379 = vmatprep.subr.bf16.mxu0 0
  %380 = vmatpush1.bf16.msra.mxu0 %v315
  %381 = vmatprep.subr.bf16.mxu0 0
  %382 = vmatpush1.bf16.msra.mxu0 %v316
  %383 = vmatprep.subr.bf16.mxu0 0
  %384 = vmatpush1.bf16.msra.mxu0 %v317
  %385 = vmatprep.subr.bf16.mxu0 0
  %386 = vmatpush1.bf16.msra.mxu0 %v318
  %387 = vmatprep.subr.bf16.mxu0 0
  %388 = vmatpush1.bf16.msra.mxu0 %v319
  %389 = vmatprep.subr.bf16.mxu0 0
  %390 = vmatpush1.bf16.msra.mxu0 %v320
  %391 = vmatprep.subr.bf16.mxu0 0
  %392 = vmatpush1.bf16.msra.mxu0 %v321
  %393 = vmatprep.subr.bf16.mxu0 0
  %394 = vmatpush1.bf16.msra.mxu0 %v322
  %395 = vmatprep.subr.bf16.mxu0 0
  %396 = vmatpush1.bf16.msra.mxu0 %v323
  %397 = vmatprep.subr.bf16.mxu0 0
  %398 = vmatpush1.bf16.msra.mxu0 %v324
  %399 = vmatprep.subr.bf16.mxu0 0
  %400 = vmatpush1.bf16.msra.mxu0 %v325
  %401 = vmatprep.subr.bf16.mxu0 0
  %402 = vmatpush1.bf16.msra.mxu0 %v326
  %403 = vmatprep.subr.bf16.mxu0 0
  %404 = vmatpush1.bf16.msra.mxu0 %v327
  %405 = vmatprep.mubr.bf16.mxu0 %v201
  %406 = vmatmul.mubr.bf16.gmra.mrb[0].mxu0 %v200
  %v407 = vpop.f32.mrb[0].mxu0
  %v408 = vadd.f32 0.0, %v407
  %v409 = vpop.f32.mrb[0].mxu0
  %v410 = vpop.f32.mrb[0].mxu0
  %v411 = vadd.f32 0.0, %v410
  %v412 = vpop.f32.mrb[0].mxu0
  %413 = vmatprep.mubr.bf16.mxu0 %v204
  %414 = vmatmul.mubr.bf16.gmra.mrb[0].mxu0 %v203
  %v415 = vpop.f32.mrb[0].mxu0
  %v416 = vadd.f32 0.0, %v415
  %v417 = vpop.f32.mrb[0].mxu0
  %v418 = vpop.f32.mrb[0].mxu0
  %v419 = vadd.f32 0.0, %v418
  %v420 = vpop.f32.mrb[0].mxu0
  %421 = vmatprep.mubr.bf16.mxu0 %v207
  %422 = vmatmul.mubr.bf16.gmra.mrb[0].mxu0 %v206
  %v423 = vpop.f32.mrb[0].mxu0
  %v424 = vadd.f32 0.0, %v423
  %v425 = vpop.f32.mrb[0].mxu0
  %v426 = vpop.f32.mrb[0].mxu0
  %v427 = vadd.f32 0.0, %v426
  %v428 = vpop.f32.mrb[0].mxu0
  %429 = vmatprep.mubr.bf16.mxu0 %v210
  %430 = vmatmul.mubr.bf16.gmra.mrb[0].mxu0 %v209
  %v431 = vpop.f32.mrb[0].mxu0
  %v432 = vadd.f32 0.0, %v431
  %v433 = vpop.f32.mrb[0].mxu0
  %v434 = vpop.f32.mrb[0].mxu0
  %v435 = vadd.f32 0.0, %v434
  %v436 = vpop.f32.mrb[0].mxu0
  %437 = vmatprep.mubr.bf16.mxu0 %v213
  %438 = vmatmul.mubr.bf16.gmra.mrb[0].mxu0 %v212
  %v439 = vpop.f32.mrb[0].mxu0
  %v440 = vadd.f32 0.0, %v439
  %v441 = vpop.f32.mrb[0].mxu0
  %v442 = vpop.f32.mrb[0].mxu0
  %v443 = vadd.f32 0.0, %v442
  %v444 = vpop.f32.mrb[0].mxu0
  %445 = vmatprep.mubr.bf16.mxu0 %v216
  %446 = vmatmul.mubr.bf16.gmra.mrb[0].mxu0 %v215
  %v447 = vpop.f32.mrb[0].mxu0
  %v448 = vadd.f32 0.0, %v447
  %v449 = vpop.f32.mrb[0].mxu0
  %v450 = vpop.f32.mrb[0].mxu0
  %v451 = vadd.f32 0.0, %v450
  %v452 = vpop.f32.mrb[0].mxu0
  %453 = vmatprep.mubr.bf16.mxu0 %v219
  %454 = vmatmul.mubr.bf16.gmra.mrb[0].mxu0 %v218
  %v455 = vpop.f32.mrb[0].mxu0
  %v456 = vadd.f32 0.0, %v455
  %v457 = vpop.f32.mrb[0].mxu0
  %v458 = vpop.f32.mrb[0].mxu0
  %v459 = vadd.f32 0.0, %v458
  %v460 = vpop.f32.mrb[0].mxu0
  %461 = vmatprep.mubr.bf16.mxu0 %v222
  %462 = vmatmul.mubr.bf16.gmra.mrb[0].mxu0 %v221
  %v463 = vpop.f32.mrb[0].mxu0
  %v464 = vadd.f32 0.0, %v463
  %v465 = vpop.f32.mrb[0].mxu0
  %v466 = vpop.f32.mrb[0].mxu0
  %v467 = vadd.f32 0.0, %v466
  %v468 = vpop.f32.mrb[0].mxu0
  %469 = vdwg.mxu0
  %470 = vmatprep.subr.bf16.mxu0 0
  %471 = vmatpush1.bf16.msra.mxu0 %v328
  %472 = vmatprep.subr.bf16.mxu0 0
  %473 = vmatpush1.bf16.msra.mxu0 %v329
  %474 = vmatprep.subr.bf16.mxu0 0
  %475 = vmatpush1.bf16.msra.mxu0 0
  %476 = vmatprep.subr.bf16.mxu0 0
  %477 = vmatpush1.bf16.msra.mxu0 0
  %478 = vmatprep.subr.bf16.mxu0 0
  %479 = vmatpush1.bf16.msra.mxu0 0
  %480 = vmatprep.subr.bf16.mxu0 0
  %481 = vmatpush1.bf16.msra.mxu0 0
  %482 = vmatprep.subr.bf16.mxu0 0
  %483 = vmatpush1.bf16.msra.mxu0 0
  %484 = vmatprep.subr.bf16.mxu0 0
  %485 = vmatpush1.bf16.msra.mxu0 0
  %486 = vmatprep.subr.bf16.mxu0 0
  %487 = vmatpush1.bf16.msra.mxu0 0
  %488 = vmatprep.subr.bf16.mxu0 0
  %489 = vmatpush1.bf16.msra.mxu0 0
  %490 = vmatprep.subr.bf16.mxu0 0
  %491 = vmatpush1.bf16.msra.mxu0 0
  %492 = vmatprep.subr.bf16.mxu0 0
  %493 = vmatpush1.bf16.msra.mxu0 0
  %494 = vmatprep.subr.bf16.mxu0 0
  %495 = vmatpush1.bf16.msra.mxu0 0
  %496 = vmatprep.subr.bf16.mxu0 0
  %497 = vmatpush1.bf16.msra.mxu0 0
  %498 = vmatprep.subr.bf16.mxu0 0
  %499 = vmatpush1.bf16.msra.mxu0 0
  %500 = vmatprep.subr.bf16.mxu0 0
  %501 = vmatpush1.bf16.msra.mxu0 0
  %502 = vmatprep.mubr.bf16.mxu0 0
  %503 = vmatmul.mubr.bf16.gmra.mrb[0].mxu0 %v350
  %v504 = vpop.f32.mrb[0].mxu0
  %v505 = vadd.f32 %v408, %v504
  %v506 = vpop.f32.mrb[0].mxu0
  %v507 = vpop.f32.mrb[0].mxu0
  %v508 = vadd.f32 %v411, %v507
  %v509 = vpop.f32.mrb[0].mxu0
  %510 = vmatprep.mubr.bf16.mxu0 0
  %511 = vmatmul.mubr.bf16.gmra.mrb[0].mxu0 %v353
  %v512 = vpop.f32.mrb[0].mxu0
  %v513 = vadd.f32 %v416, %v512
  %v514 = vpop.f32.mrb[0].mxu0
  %v515 = vpop.f32.mrb[0].mxu0
  %v516 = vadd.f32 %v419, %v515
  %v517 = vpop.f32.mrb[0].mxu0
  %518 = vmatprep.mubr.bf16.mxu0 0
  %519 = vmatmul.mubr.bf16.gmra.mrb[0].mxu0 %v356
  %v520 = vpop.f32.mrb[0].mxu0
  %v521 = vadd.f32 %v424, %v520
  %v522 = vpop.f32.mrb[0].mxu0
  %v523 = vpop.f32.mrb[0].mxu0
  %v524 = vadd.f32 %v427, %v523
  %v525 = vpop.f32.mrb[0].mxu0
  %526 = vmatprep.mubr.bf16.mxu0 0
  %527 = vmatmul.mubr.bf16.gmra.mrb[0].mxu0 %v359
  %v528 = vpop.f32.mrb[0].mxu0
  %v529 = vadd.f32 %v432, %v528
  %v530 = vpop.f32.mrb[0].mxu0
  %v531 = vpop.f32.mrb[0].mxu0
  %v532 = vadd.f32 %v435, %v531
  %v533 = vpop.f32.mrb[0].mxu0
  %534 = vmatprep.mubr.bf16.mxu0 0
  %535 = vmatmul.mubr.bf16.gmra.mrb[0].mxu0 %v362
  %v536 = vpop.f32.mrb[0].mxu0
  %v537 = vadd.f32 %v440, %v536
  %v538 = vpop.f32.mrb[0].mxu0
  %v539 = vpop.f32.mrb[0].mxu0
  %v540 = vadd.f32 %v443, %v539
  %v541 = vpop.f32.mrb[0].mxu0
  %542 = vmatprep.mubr.bf16.mxu0 0
  %543 = vmatmul.mubr.bf16.gmra.mrb[0].mxu0 %v365
  %v544 = vpop.f32.mrb[0].mxu0
  %v545 = vadd.f32 %v448, %v544
  %v546 = vpop.f32.mrb[0].mxu0
  %v547 = vpop.f32.mrb[0].mxu0
  %v548 = vadd.f32 %v451, %v547
  %v549 = vpop.f32.mrb[0].mxu0
  %550 = vmatprep.mubr.bf16.mxu0 0
  %551 = vmatmul.mubr.bf16.gmra.mrb[0].mxu0 %v368
  %v552 = vpop.f32.mrb[0].mxu0
  %v553 = vadd.f32 %v456, %v552
  %v554 = vpop.f32.mrb[0].mxu0
  %v555 = vpop.f32.mrb[0].mxu0
  %v556 = vadd.f32 %v459, %v555
  %v557 = vpop.f32.mrb[0].mxu0
  %558 = vmatprep.mubr.bf16.mxu0 0
  %559 = vmatmul.mubr.bf16.gmra.mrb[0].mxu0 %v371
  %v560 = vpop.f32.mrb[0].mxu0
  %v561 = vadd.f32 %v464, %v560
  %v562 = vpop.f32.mrb[0].mxu0
  %v563 = vpop.f32.mrb[0].mxu0
  %v564 = vadd.f32 %v467, %v563
  %v565 = vpop.f32.mrb[0].mxu0
  %566 = vdwg.mxu0
  %v567 = vadd.f32 %v36, %v505
  %v568 = vadd.f32 %v37, %v508
  %v569 = vadd.f32 %v38, %v513
  %v570 = vadd.f32 %v39, %v516
  %v571 = vadd.f32 %v40, %v521
  %v572 = vadd.f32 %v41, %v524
  %v573 = vadd.f32 %v42, %v529
  %v574 = vadd.f32 %v43, %v532
  %v575 = vadd.f32 %v44, %v537
  %v576 = vadd.f32 %v45, %v540
  %v577 = vadd.f32 %v46, %v545
  %v578 = vadd.f32 %v47, %v548
  %v579 = vadd.f32 %v48, %v553
  %v580 = vadd.f32 %v49, %v556
  %v581 = vadd.f32 %v50, %v561
  %v582 = vadd.f32 %v51, %v564
  %583 = vst.msk [vmem:[#allocation2] sm:$0xff] %vm348, %v567
  %584 = vst.msk [vmem:[#allocation2 + $0x8] sm:$0xff] %vm348, %v568
  %585 = vst.msk [vmem:[#allocation2 + $0x10] sm:$0xff] %vm348, %v569
  %586 = vst.msk [vmem:[#allocation2 + $0x18] sm:$0xff] %vm348, %v570
  %587 = vst.msk [vmem:[#allocation2 + $0x20] sm:$0xff] %vm348, %v571
  %588 = vst.msk [vmem:[#allocation2 + $0x28] sm:$0xff] %vm348, %v572
  %589 = vst.msk [vmem:[#allocation2 + $0x30] sm:$0xff] %vm348, %v573
  %590 = vst.msk [vmem:[#allocation2 + $0x38] sm:$0xff] %vm348, %v574
  %591 = vst.msk [vmem:[#allocation2 + $0x40] sm:$0xff] %vm348, %v575
  %592 = vst.msk [vmem:[#allocation2 + $0x48] sm:$0xff] %vm348, %v576
  %593 = vst.msk [vmem:[#allocation2 + $0x50] sm:$0xff] %vm348, %v577
  %594 = vst.msk [vmem:[#allocation2 + $0x58] sm:$0xff] %vm348, %v578
  %595 = vst.msk [vmem:[#allocation2 + $0x60] sm:$0xff] %vm348, %v579
  %596 = vst.msk [vmem:[#allocation2 + $0x68] sm:$0xff] %vm348, %v580
  %597 = vst.msk [vmem:[#allocation2 + $0x70] sm:$0xff] %vm348, %v581
  %598 = vst.msk [vmem:[#allocation2 + $0x78] sm:$0xff] %vm348, %v582
  // Predicated region
  $region18: #{discriminator_forward.9} parent=0 // pred_check
    %p599 = pneg %p15
  $region19: #{discriminator_forward.9} parent=0 // pred_check_branch
    %601 = sbr.rel (%p599) target = $region21
  $region20: #{discriminator_forward.9} parent=0 // pred_region
    %v602 = vld [vmem:[#allocation2] sm:$0xff]
    %v603 = vld [vmem:[#allocation2 + $0x8] sm:$0xff]
    %v604 = vld [vmem:[#allocation2 + $0x10] sm:$0xff]
    %v605 = vld [vmem:[#allocation2 + $0x18] sm:$0xff]
    %v606 = vld [vmem:[#allocation2 + $0x20] sm:$0xff]
    %v607 = vld [vmem:[#allocation2 + $0x28] sm:$0xff]
    %v608 = vld [vmem:[#allocation2 + $0x30] sm:$0xff]
    %v609 = vld [vmem:[#allocation2 + $0x38] sm:$0xff]
    %v610 = vld [vmem:[#allocation2 + $0x40] sm:$0xff]
    %v611 = vld [vmem:[#allocation2 + $0x48] sm:$0xff]
    %v612 = vld [vmem:[#allocation2 + $0x50] sm:$0xff]
    %v613 = vld [vmem:[#allocation2 + $0x58] sm:$0xff]
    %v614 = vld [vmem:[#allocation2 + $0x60] sm:$0xff]
    %v615 = vld [vmem:[#allocation2 + $0x68] sm:$0xff]
    %v616 = vld [vmem:[#allocation2 + $0x70] sm:$0xff]
    %v617 = vld [vmem:[#allocation2 + $0x78] sm:$0xff]
    %v618 = vld [vmem:[%s2] sm:$0x1]
    %v620 = vlaneseq
    %v621 = vshrl.u32 %v620, 7
    %v622 = vsub.s32 0, %v621
    %v623 = vrot.slane %v618, %v622
    %v625 = vadd.f32 %v602, %v623
    %v626 = vadd.f32 %v603, %v623
    %v627 = vadd.f32 %v604, %v623
    %v628 = vadd.f32 %v605, %v623
    %v629 = vadd.f32 %v606, %v623
    %v630 = vadd.f32 %v607, %v623
    %v631 = vadd.f32 %v608, %v623
    %v632 = vadd.f32 %v609, %v623
    %v633 = vadd.f32 %v610, %v623
    %v634 = vadd.f32 %v611, %v623
    %v635 = vadd.f32 %v612, %v623
    %v636 = vadd.f32 %v613, %v623
    %v637 = vadd.f32 %v614, %v623
    %v638 = vadd.f32 %v615, %v623
    %v639 = vadd.f32 %v616, %v623
    %v640 = vadd.f32 %v617, %v623
    %vm641 = vcmp.ge.f32.partialorder %v625, 0.0
    %vm642 = vcmp.ge.f32.partialorder %v626, 0.0
    %vm643 = vcmp.ge.f32.partialorder %v627, 0.0
    %vm644 = vcmp.ge.f32.partialorder %v628, 0.0
    %vm645 = vcmp.ge.f32.partialorder %v629, 0.0
    %vm646 = vcmp.ge.f32.partialorder %v630, 0.0
    %vm647 = vcmp.ge.f32.partialorder %v631, 0.0
    %vm648 = vcmp.ge.f32.partialorder %v632, 0.0
    %vm649 = vcmp.ge.f32.partialorder %v633, 0.0
    %vm650 = vcmp.ge.f32.partialorder %v634, 0.0
    %vm651 = vcmp.ge.f32.partialorder %v635, 0.0
    %vm652 = vcmp.ge.f32.partialorder %v636, 0.0
    %vm653 = vcmp.ge.f32.partialorder %v637, 0.0
    %vm654 = vcmp.ge.f32.partialorder %v638, 0.0
    %vm655 = vcmp.ge.f32.partialorder %v639, 0.0
    %vm656 = vcmp.ge.f32.partialorder %v640, 0.0
    %v657 = vmul.f32 %v625, 0.2
    %v658 = vmul.f32 %v626, 0.2
    %v659 = vmul.f32 %v627, 0.2
    %v660 = vmul.f32 %v628, 0.2
    %v661 = vmul.f32 %v629, 0.2
    %v662 = vmul.f32 %v630, 0.2
    %v663 = vmul.f32 %v631, 0.2
    %v664 = vmul.f32 %v632, 0.2
    %v665 = vmul.f32 %v633, 0.2
    %v666 = vmul.f32 %v634, 0.2
    %v667 = vmul.f32 %v635, 0.2
    %v668 = vmul.f32 %v636, 0.2
    %v669 = vmul.f32 %v637, 0.2
    %v670 = vmul.f32 %v638, 0.2
    %v671 = vmul.f32 %v639, 0.2
    %v672 = vmul.f32 %v640, 0.2
    %v673 = vsel %vm641, %v625, %v657
    %v674 = vsel %vm642, %v626, %v658
    %v675 = vsel %vm643, %v627, %v659
    %v676 = vsel %vm644, %v628, %v660
    %v677 = vsel %vm645, %v629, %v661
    %v678 = vsel %vm646, %v630, %v662
    %v679 = vsel %vm647, %v631, %v663
    %v680 = vsel %vm648, %v632, %v664
    %v681 = vsel %vm649, %v633, %v665
    %v682 = vsel %vm650, %v634, %v666
    %v683 = vsel %vm651, %v635, %v667
    %v684 = vsel %vm652, %v636, %v668
    %v685 = vsel %vm653, %v637, %v669
    %v686 = vsel %vm654, %v638, %v670
    %v687 = vsel %vm655, %v639, %v671
    %v688 = vsel %vm656, %v640, %v672
    %v689 = vpack.c.bf16 %v674, %v673
    %v690 = vpack.c.bf16 %v676, %v675
    %v691 = vpack.c.bf16 %v678, %v677
    %v692 = vpack.c.bf16 %v680, %v679
    %v693 = vpack.c.bf16 %v682, %v681
    %v694 = vpack.c.bf16 %v684, %v683
    %v695 = vpack.c.bf16 %v686, %v685
    %v696 = vpack.c.bf16 %v688, %v687
    %v705 = vunpack.c.l.b16 %v689
    %v706 = vunpack.c.h.b16 %v689
    %v707 = vunpack.c.l.b16 %v690
    %v708 = vunpack.c.h.b16 %v690
    %v709 = vunpack.c.l.b16 %v691
    %v710 = vunpack.c.h.b16 %v691
    %v711 = vunpack.c.l.b16 %v692
    %v712 = vunpack.c.h.b16 %v692
    %v713 = vunpack.c.l.b16 %v693
    %v714 = vunpack.c.h.b16 %v693
    %v715 = vunpack.c.l.b16 %v694
    %v716 = vunpack.c.h.b16 %v694
    %v717 = vunpack.c.l.b16 %v695
    %v718 = vunpack.c.h.b16 %v695
    %v719 = vunpack.c.l.b16 %v696
    %v720 = vunpack.c.h.b16 %v696
    %v721 = vpack.c.b16 %v705, %v705
    %v722 = vpack.c.b16 %v706, %v706
    %v723 = vpack.c.b16 %v707, %v707
    %v724 = vpack.c.b16 %v708, %v708
    %v725 = vpack.c.b16 %v709, %v709
    %v726 = vpack.c.b16 %v710, %v710
    %v727 = vpack.c.b16 %v711, %v711
    %v728 = vpack.c.b16 %v712, %v712
    %v729 = vpack.c.b16 %v713, %v713
    %v730 = vpack.c.b16 %v714, %v714
    %v731 = vpack.c.b16 %v715, %v715
    %v732 = vpack.c.b16 %v716, %v716
    %v733 = vpack.c.b16 %v717, %v717
    %v734 = vpack.c.b16 %v718, %v718
    %v735 = vpack.c.b16 %v719, %v719
    %v736 = vpack.c.b16 %v720, %v720
    %vm753 = vcmask 257024
    %754 = vst.msk [vmem:[%s3] sm:$0xf] %vm753, %v721
    %755 = vst.msk [vmem:[%s3 + $0x4] sm:$0xf] %vm753, %v722
    %756 = vst.msk [vmem:[%s3 + $0x8] sm:$0xf] %vm753, %v723
    %757 = vst.msk [vmem:[%s3 + $0xc] sm:$0xf] %vm753, %v724
    %758 = vst.msk [vmem:[%s3 + $0x10] sm:$0xf] %vm753, %v725
    %759 = vst.msk [vmem:[%s3 + $0x14] sm:$0xf] %vm753, %v726
    %760 = vst.msk [vmem:[%s3 + $0x18] sm:$0xf] %vm753, %v727
    %761 = vst.msk [vmem:[%s3 + $0x1c] sm:$0xf] %vm753, %v728
    %762 = vst.msk [vmem:[%s3 + $0x20] sm:$0xf] %vm753, %v729
    %763 = vst.msk [vmem:[%s3 + $0x24] sm:$0xf] %vm753, %v730
    %764 = vst.msk [vmem:[%s3 + $0x28] sm:$0xf] %vm753, %v731
    %765 = vst.msk [vmem:[%s3 + $0x2c] sm:$0xf] %vm753, %v732
    %766 = vst.msk [vmem:[%s3 + $0x30] sm:$0xf] %vm753, %v733
    %767 = vst.msk [vmem:[%s3 + $0x34] sm:$0xf] %vm753, %v734
    %768 = vst.msk [vmem:[%s3 + $0x38] sm:$0xf] %vm753, %v735
    %769 = vst.msk [vmem:[%s3 + $0x3c] sm:$0xf] %vm753, %v736
  $region21: #{discriminator_forward.9} parent=0 // pred_fallthru
    _
  // Predicated region
  $region22: #{discriminator_forward.9} parent=0 // pred_check
    _
  $region23: #{discriminator_forward.9} parent=0 // pred_check_branch
    %771 = sbr.rel (0) target = $region25
  $region24: #{discriminator_forward.9} parent=0 // pred_region
    _
  $region25: #{discriminator_forward.9} parent=0 // pred_fallthru
    _
  // Predicated region
  $region26: #{discriminator_forward.9} parent=0 // pred_check
    _
  $region27: #{discriminator_forward.9} parent=0 // pred_check_branch
    %773 = sbr.rel (0) target = $region29
  $region28: #{discriminator_forward.9} parent=0 // pred_region
    _
  $region29: #{discriminator_forward.9} parent=0 // pred_fallthru
    _

// kernel: discriminator_forward.10
$region0: #{discriminator_forward.10}
  #allocation0 [shape = 'u32[]', space=smem, size = 0x4, offset = 0x4, fixed_abs, tag = 'smem constant byte address 0x4 - core index']
  #allocation1 [shape = 'u32[144,128]{1,0:T(1,128)}', space=vmem, size = 0x12000, scoped, tag = 'internal scratch']
  #allocation2 [shape = 'f32[32,32]{1,0:T(8,128)}', space=vmem, size = 0x4000, scoped, tag = 'scratch operand']
  #allocation3 [shape = 'f32[32,32]{1,0:T(8,128)}', space=vmem, size = 0x4000, scoped, tag = 'scratch operand']
  %s0 = inlined_call_operand.vmem [shape: bf16[32,288], index: 0, kind: input, shape index: {}]
  %s1 = inlined_call_operand.vmem [shape: bf16[288,32], index: 1, kind: input, shape index: {}]
  %s2 = inlined_call_operand.vmem [shape: f32[1,32], index: 2, kind: input, shape index: {}]
  %s3 = inlined_call_operand.vmem [shape: bf16[32,288], index: 3, kind: input, shape index: {}]
  %s4 = inlined_call_operand.vmem [shape: bf16[288,32], index: 4, kind: input, shape index: {}]
  %s5 = inlined_call_operand.vmem [shape: f32[1,32], index: 5, kind: input, shape index: {}]
  %s6 = inlined_call_operand.vmem [shape: bf16[32,32], index: 6, kind: output, shape index: {}]
  %s7 = sld [smem:[#allocation0]]
  $region73: #{discriminator_forward.10} parent=0
    _
  %s9 = ssub.s32 1, %s7
  %s10 = scalar_select 0, %s9, %s7
  loop: start=0, step=1, limit=4
  $region2: #{discriminator_forward.10} parent=0 // loop_pre_header
    _
  $region3: #{discriminator_forward.10} parent=0 // loop_header
    %s12 = sphi 0, %s16
    %p13 = scmp.ge.s32.totalorder %s12, 4
    %s19 = sphi 0, %s38
    %s20 = sphi 0, %s34
    %s21 = sphi 0, %s30
    %s22 = sphi 0, %s19
    %s23 = sphi 0, %s20
    %s24 = sphi 0, %s21
    %s25 = sphi 0, %s22
    %s26 = sphi 0, %s23
    %s27 = sphi 0, %s24
    %s47 = sphi 0, %s49
    %s50 = sphi 0, %s47
    %s51 = sphi 0, %s50
    %s67 = sphi 0, %s51
    %s79 = sphi 0, %s81
    %s82 = sphi 0, %s79
    %s83 = sphi 0, %s82
    %s99 = sphi 0, %s83
    %s105 = sphi 0, %s107
    %s108 = sphi 0, %s105
    %s109 = sphi 0, %s108
    %s125 = sphi 0, %s109
    %s139 = sphi 0, %s141
    %s142 = sphi 0, %s139
    %s143 = sphi 0, %s142
    %s159 = sphi 0, %s143
    %s173 = sphi 0, %s175
    %s176 = sphi 0, %s173
    %s177 = sphi 0, %s176
    %s193 = sphi 0, %s177
    %s199 = sphi 0, %s201
    %s202 = sphi 0, %s199
    %s203 = sphi 0, %s202
    %s219 = sphi 0, %s203
    %s227 = sphi 0, %s229
    %s230 = sphi 0, %s227
    %s231 = sphi 0, %s230
    %s247 = sphi 0, %s231
  $region4: #{discriminator_forward.10} parent=0 // loop_header_branch
    %15 = sbr.rel (%p13) target = $region8
  $region5: #{discriminator_forward.10} parent=0 // loop_body
    %s17 = ssub.s32 %s12, 1
    %s18 = ssub.s32 %s12, 2
    %s28 = sadd.s32 1, %s21
    %p29 = scmp.ge.s32.totalorder %s28, 2
    %s30 = scalar_select %p29, 0, %s28
    %s31 = sadd.s32 1, %s20
    %s32 = scalar_select %p29, %s31, %s20
    %p33 = scmp.ge.s32.totalorder %s32, 1
    %s34 = scalar_select %p33, 0, %s32
    %s35 = sadd.s32 1, %s19
    %s36 = scalar_select %p33, %s35, %s19
    %p37 = scmp.ge.s32.totalorder %s36, 1
    %s38 = scalar_select %p37, 0, %s36
    %p39 = scmp.lt.s32.totalorder %s21, 0
    %s40 = scalar_select %p39, %s21, 0
    %p41 = scmp.lt.s32.totalorder %s30, 0
    %s42 = scalar_select %p41, %s30, 0
    %s43 = ssub.s32 %s19, %s38
    %s44 = ssub.s32 %s40, %s42
    %s45 = sor.u32 %s43, %s44
    %p46 = scmp.eq.s32.totalorder %s45, 0
    %s48 = sadd.s32 %s47, 1
    %s49 = scalar_select %p46, %s47, %s48
    %p52 = pneg %p46
    %p53 = scmp.eq.s32.totalorder %s12, 1
    %p54 = por %p52, %p53
    %p55 = scmp.ne.s32.totalorder %s47, %s50
    %p56 = scmp.eq.s32.totalorder %s12, 0
    %p57 = por %p55, %p56
    %p58 = scmp.ne.s32.totalorder %s47, %s50
    %p59 = scmp.eq.s32.totalorder %s17, 1
    %p60 = por %p58, %p59
    %p61 = scmp.ne.s32.totalorder %s50, %s51
    %p62 = scmp.eq.s32.totalorder %s17, 0
    %p63 = por %p61, %p62
    %p64 = scmp.ne.s32.totalorder %s50, %s51
    %p65 = scmp.eq.s32.totalorder %s18, 1
    %p66 = por %p64, %p65
    %p68 = scmp.ne.s32.totalorder %s51, %s67
    %p69 = scmp.eq.s32.totalorder %s18, 0
    %p70 = por %p68, %p69
    %p71 = scmp.lt.s32.totalorder %s21, 0
    %s72 = scalar_select %p71, %s21, 0
    %p73 = scmp.lt.s32.totalorder %s30, 0
    %s74 = scalar_select %p73, %s30, 0
    %s75 = ssub.s32 %s72, %s74
    %s76 = ssub.s32 %s20, %s34
    %s77 = sor.u32 %s75, %s76
    %p78 = scmp.eq.s32.totalorder %s77, 0
    %s80 = sadd.s32 %s79, 1
    %s81 = scalar_select %p78, %s79, %s80
    %p84 = pneg %p78
    %p85 = scmp.eq.s32.totalorder %s12, 1
    %p86 = por %p84, %p85
    %p87 = scmp.ne.s32.totalorder %s79, %s82
    %p88 = scmp.eq.s32.totalorder %s12, 0
    %p89 = por %p87, %p88
    %p90 = scmp.ne.s32.totalorder %s79, %s82
    %p91 = scmp.eq.s32.totalorder %s17, 1
    %p92 = por %p90, %p91
    %p93 = scmp.ne.s32.totalorder %s82, %s83
    %p94 = scmp.eq.s32.totalorder %s17, 0
    %p95 = por %p93, %p94
    %p96 = scmp.ne.s32.totalorder %s82, %s83
    %p97 = scmp.eq.s32.totalorder %s18, 1
    %p98 = por %p96, %p97
    %p100 = scmp.ne.s32.totalorder %s83, %s99
    %p101 = scmp.eq.s32.totalorder %s18, 0
    %p102 = por %p100, %p101
    %s103 = ssub.s32 %s20, %s34
    %p104 = scmp.eq.s32.totalorder %s103, 0
    %s106 = sadd.s32 %s105, 1
    %s107 = scalar_select %p104, %s105, %s106
    %p110 = pneg %p104
    %p111 = scmp.eq.s32.totalorder %s12, 1
    %p112 = por %p110, %p111
    %p113 = scmp.ne.s32.totalorder %s105, %s108
    %p114 = scmp.eq.s32.totalorder %s12, 0
    %p115 = por %p113, %p114
    %p116 = scmp.ne.s32.totalorder %s105, %s108
    %p117 = scmp.eq.s32.totalorder %s17, 1
    %p118 = por %p116, %p117
    %p119 = scmp.ne.s32.totalorder %s108, %s109
    %p120 = scmp.eq.s32.totalorder %s17, 0
    %p121 = por %p119, %p120
    %p122 = scmp.ne.s32.totalorder %s108, %s109
    %p123 = scmp.eq.s32.totalorder %s18, 1
    %p124 = por %p122, %p123
    %p126 = scmp.ne.s32.totalorder %s109, %s125
    %p127 = scmp.eq.s32.totalorder %s18, 0
    %p128 = por %p126, %p127
    %s129 = ssub.s32 %s21, 1
    %p130 = scmp.gt.s32.totalorder %s129, 0
    %s131 = scalar_select %p130, %s129, 0
    %s132 = ssub.s32 %s30, 1
    %p133 = scmp.gt.s32.totalorder %s132, 0
    %s134 = scalar_select %p133, %s132, 0
    %s135 = ssub.s32 %s19, %s38
    %s136 = ssub.s32 %s131, %s134
    %s137 = sor.u32 %s135, %s136
    %p138 = scmp.eq.s32.totalorder %s137, 0
    %s140 = sadd.s32 %s139, 1
    %s141 = scalar_select %p138, %s139, %s140
    %p144 = pneg %p138
    %p145 = scmp.eq.s32.totalorder %s12, 1
    %p146 = por %p144, %p145
    %p147 = scmp.ne.s32.totalorder %s139, %s142
    %p148 = scmp.eq.s32.totalorder %s12, 0
    %p149 = por %p147, %p148
    %p150 = scmp.ne.s32.totalorder %s139, %s142
    %p151 = scmp.eq.s32.totalorder %s17, 1
    %p152 = por %p150, %p151
    %p153 = scmp.ne.s32.totalorder %s142, %s143
    %p154 = scmp.eq.s32.totalorder %s17, 0
    %p155 = por %p153, %p154
    %p156 = scmp.ne.s32.totalorder %s142, %s143
    %p157 = scmp.eq.s32.totalorder %s18, 1
    %p158 = por %p156, %p157
    %p160 = scmp.ne.s32.totalorder %s143, %s159
    %p161 = scmp.eq.s32.totalorder %s18, 0
    %p162 = por %p160, %p161
    %s163 = ssub.s32 %s21, 1
    %p164 = scmp.gt.s32.totalorder %s163, 0
    %s165 = scalar_select %p164, %s163, 0
    %s166 = ssub.s32 %s30, 1
    %p167 = scmp.gt.s32.totalorder %s166, 0
    %s168 = scalar_select %p167, %s166, 0
    %s169 = ssub.s32 %s165, %s168
    %s170 = ssub.s32 %s20, %s34
    %s171 = sor.u32 %s169, %s170
    %p172 = scmp.eq.s32.totalorder %s171, 0
    %s174 = sadd.s32 %s173, 1
    %s175 = scalar_select %p172, %s173, %s174
    %p178 = pneg %p172
    %p179 = scmp.eq.s32.totalorder %s12, 1
    %p180 = por %p178, %p179
    %p181 = scmp.ne.s32.totalorder %s173, %s176
    %p182 = scmp.eq.s32.totalorder %s12, 0
    %p183 = por %p181, %p182
    %p184 = scmp.ne.s32.totalorder %s173, %s176
    %p185 = scmp.eq.s32.totalorder %s17, 1
    %p186 = por %p184, %p185
    %p187 = scmp.ne.s32.totalorder %s176, %s177
    %p188 = scmp.eq.s32.totalorder %s17, 0
    %p189 = por %p187, %p188
    %p190 = scmp.ne.s32.totalorder %s176, %s177
    %p191 = scmp.eq.s32.totalorder %s18, 1
    %p192 = por %p190, %p191
    %p194 = scmp.ne.s32.totalorder %s177, %s193
    %p195 = scmp.eq.s32.totalorder %s18, 0
    %p196 = por %p194, %p195
    %s197 = ssub.s32 %s20, %s34
    %p198 = scmp.eq.s32.totalorder %s197, 0
    %s200 = sadd.s32 %s199, 1
    %s201 = scalar_select %p198, %s199, %s200
    %p204 = pneg %p198
    %p205 = scmp.eq.s32.totalorder %s12, 1
    %p206 = por %p204, %p205
    %p207 = scmp.ne.s32.totalorder %s199, %s202
    %p208 = scmp.eq.s32.totalorder %s12, 0
    %p209 = por %p207, %p208
    %p210 = scmp.ne.s32.totalorder %s199, %s202
    %p211 = scmp.eq.s32.totalorder %s17, 1
    %p212 = por %p210, %p211
    %p213 = scmp.ne.s32.totalorder %s202, %s203
    %p214 = scmp.eq.s32.totalorder %s17, 0
    %p215 = por %p213, %p214
    %p216 = scmp.ne.s32.totalorder %s202, %s203
    %p217 = scmp.eq.s32.totalorder %s18, 1
    %p218 = por %p216, %p217
    %p220 = scmp.ne.s32.totalorder %s203, %s219
    %p221 = scmp.eq.s32.totalorder %s18, 0
    %p222 = por %p220, %p221
    %s223 = ssub.s32 %s19, %s38
    %s224 = ssub.s32 %s20, %s34
    %s225 = sor.u32 %s223, %s224
    %p226 = scmp.eq.s32.totalorder %s225, 0
    %s228 = sadd.s32 %s227, 1
    %s229 = scalar_select %p226, %s227, %s228
    %p232 = pneg %p226
    %p233 = scmp.eq.s32.totalorder %s12, 1
    %p234 = por %p232, %p233
    %p235 = scmp.ne.s32.totalorder %s227, %s230
    %p236 = scmp.eq.s32.totalorder %s12, 0
    %p237 = por %p235, %p236
    %p238 = scmp.ne.s32.totalorder %s227, %s230
    %p239 = scmp.eq.s32.totalorder %s17, 1
    %p240 = por %p238, %p239
    %p241 = scmp.ne.s32.totalorder %s230, %s231
    %p242 = scmp.eq.s32.totalorder %s17, 0
    %p243 = por %p241, %p242
    %p244 = scmp.ne.s32.totalorder %s230, %s231
    %p245 = scmp.eq.s32.totalorder %s18, 1
    %p246 = por %p244, %p245
    %p248 = scmp.ne.s32.totalorder %s231, %s247
    %p249 = scmp.eq.s32.totalorder %s18, 0
    %p250 = por %p248, %p249
    %p251 = scmp.le.s32.totalorder 1, %s12
    %p252 = scmp.lt.s32.totalorder %s12, 3
    %p253 = pnand %p251, %p252
    %p254 = pneg %p253
    // Predicated region
    $region9: #{discriminator_forward.10} parent=5 // pred_check
      _
    $region10: #{discriminator_forward.10} parent=5 // pred_check_branch
      %256 = sbr.rel (%p253) target = $region12
    $region11: #{discriminator_forward.10} parent=5 // pred_region
      %s257 = ssub.s32 %s12, 1
      // Predicated region
      $region13: #{discriminator_forward.10} parent=11 // pred_check
        %p258 = pneg %p121
      $region14: #{discriminator_forward.10} parent=11 // pred_check_branch
        %260 = sbr.rel (%p258) target = $region16
      $region15: #{discriminator_forward.10} parent=11 // pred_region
        %p261 = scmp.lt.s32.totalorder %s23, 0
        %s262 = scalar_select %p261, %s23, 0
        %s263 = scalar_lea.vmem %s2, %s262
      $region16: #{discriminator_forward.10} parent=11 // pred_fallthru
        _
      // Predicated region
      $region17: #{discriminator_forward.10} parent=11 // pred_check
        %p264 = pneg %p215
      $region18: #{discriminator_forward.10} parent=11 // pred_check_branch
        %266 = sbr.rel (%p264) target = $region20
      $region19: #{discriminator_forward.10} parent=11 // pred_region
        %p267 = scmp.lt.s32.totalorder %s23, 0
        %s268 = scalar_select %p267, %s23, 0
        %s269 = scalar_lea.vmem %s5, %s268
      $region20: #{discriminator_forward.10} parent=11 // pred_fallthru
        _
    $region12: #{discriminator_forward.10} parent=5 // pred_fallthru
      _
    %p270 = scmp.lt.s32.totalorder %s12, 2
    // Predicated region
    $region21: #{discriminator_forward.10} parent=5 // pred_check
      %p271 = pneg %p270
    $region22: #{discriminator_forward.10} parent=5 // pred_check_branch
      %273 = sbr.rel (%p271) target = $region24
    $region23: #{discriminator_forward.10} parent=5 // pred_region
      // Predicated region
      $region25: #{discriminator_forward.10} parent=23 // pred_check
        %p274 = pneg %p57
      $region26: #{discriminator_forward.10} parent=23 // pred_check_branch
        %276 = sbr.rel (%p274) target = $region28
      $region27: #{discriminator_forward.10} parent=23 // pred_region
        %p277 = scmp.lt.s32.totalorder %s21, 0
        %s278 = scalar_select %p277, %s21, 0
        %s279 = smul.u32 4, %s19
        %s280 = smul.u32 3, %s278
        %p281 = scmp.lt.s32.totalorder %s279, 3
        %s282 = scalar_select %p281, %s279, 3
        %p283 = scmp.lt.s32.totalorder %s280, 2
        %s284 = scalar_select %p283, %s280, 2
        %s285 = smul.addr %s282, 3
        %s286 = sadd.s32 %s284, %s285
        %s287 = smul.addr %s286, 4
        %s288 = scalar_lea.vmem %s0, %s287
        %p289 = scmp.lt.s32.totalorder %s21, 0
        %s290 = scalar_select %p289, %s21, 0
        %s291 = smul.u32 4, %s19
        %s292 = smul.u32 3, %s290
      $region28: #{discriminator_forward.10} parent=23 // pred_fallthru
        _
      // Predicated region
      $region29: #{discriminator_forward.10} parent=23 // pred_check
        %p293 = pneg %p89
      $region30: #{discriminator_forward.10} parent=23 // pred_check_branch
        %295 = sbr.rel (%p293) target = $region32
      $region31: #{discriminator_forward.10} parent=23 // pred_region
        %p296 = scmp.lt.s32.totalorder %s21, 0
        %s297 = scalar_select %p296, %s21, 0
        %s298 = smul.u32 36, %s297
        %p299 = scmp.lt.s32.totalorder %s298, 35
        %s300 = scalar_select %p299, %s298, 35
        %p301 = scmp.lt.s32.totalorder %s20, 0
        %s302 = scalar_select %p301, %s20, 0
        %s303 = sadd.s32 %s302, %s300
        %s304 = smul.addr %s303, 4
        %s305 = scalar_lea.vmem %s1, %s304
        %p306 = scmp.lt.s32.totalorder %s21, 0
        %s307 = scalar_select %p306, %s21, 0
        %s308 = smul.u32 36, %s307
      $region32: #{discriminator_forward.10} parent=23 // pred_fallthru
        _
      // Predicated region
      $region33: #{discriminator_forward.10} parent=23 // pred_check
        %p309 = pneg %p149
      $region34: #{discriminator_forward.10} parent=23 // pred_check_branch
        %311 = sbr.rel (%p309) target = $region36
      $region35: #{discriminator_forward.10} parent=23 // pred_region
        %s312 = ssub.s32 %s21, 1
        %p313 = scmp.gt.s32.totalorder %s312, 0
        %s314 = scalar_select %p313, %s312, 0
        %s315 = smul.u32 4, %s19
        %s316 = smul.u32 3, %s314
        %p317 = scmp.lt.s32.totalorder %s315, 3
        %s318 = scalar_select %p317, %s315, 3
        %p319 = scmp.lt.s32.totalorder %s316, 2
        %s320 = scalar_select %p319, %s316, 2
        %s321 = smul.addr %s318, 3
        %s322 = sadd.s32 %s320, %s321
        %s323 = smul.addr %s322, 4
        %s324 = scalar_lea.vmem %s3, %s323
        %s325 = ssub.s32 %s21, 1
        %p326 = scmp.gt.s32.totalorder %s325, 0
        %s327 = scalar_select %p326, %s325, 0
        %s328 = smul.u32 4, %s19
        %s329 = smul.u32 3, %s327
      $region36: #{discriminator_forward.10} parent=23 // pred_fallthru
        _
      // Predicated region
      $region37: #{discriminator_forward.10} parent=23 // pred_check
        %p330 = pneg %p183
      $region38: #{discriminator_forward.10} parent=23 // pred_check_branch
        %332 = sbr.rel (%p330) target = $region40
      $region39: #{discriminator_forward.10} parent=23 // pred_region
        %s333 = ssub.s32 %s21, 1
        %p334 = scmp.gt.s32.totalorder %s333, 0
        %s335 = scalar_select %p334, %s333, 0
        %s336 = smul.u32 36, %s335
        %p337 = scmp.lt.s32.totalorder %s336, 35
        %s338 = scalar_select %p337, %s336, 35
        %p339 = scmp.lt.s32.totalorder %s20, 0
        %s340 = scalar_select %p339, %s20, 0
        %s341 = sadd.s32 %s340, %s338
        %s342 = smul.addr %s341, 4
        %s343 = scalar_lea.vmem %s4, %s342
        %s344 = ssub.s32 %s21, 1
        %p345 = scmp.gt.s32.totalorder %s344, 0
        %s346 = scalar_select %p345, %s344, 0
        %s347 = smul.u32 36, %s346
      $region40: #{discriminator_forward.10} parent=23 // pred_fallthru
        _
    $region24: #{discriminator_forward.10} parent=5 // pred_fallthru
      _
    %p348 = scmp.le.s32.totalorder 1, %s12
    %p349 = scmp.lt.s32.totalorder %s12, 3
    %p350 = pnand %p348, %p349
    %p351 = pneg %p350
    // Predicated region
    $region41: #{discriminator_forward.10} parent=5 // pred_check
      _
    $region42: #{discriminator_forward.10} parent=5 // pred_check_branch
      %353 = sbr.rel (%p350) target = $region44
    $region43: #{discriminator_forward.10} parent=5 // pred_region
      %s354 = ssub.s32 %s12, 1
      %p355 = scmp.lt.s32.totalorder %s24, 0
      %s356 = scalar_select %p355, %s24, 0
      %s357 = smul.u32 4, %s22
      %s358 = smul.u32 3, %s356
      %p359 = scmp.lt.s32.totalorder %s357, 3
      %s360 = scalar_select %p359, %s357, 3
      %p361 = scmp.lt.s32.totalorder %s358, 2
      %s362 = scalar_select %p361, %s358, 2
      %s363 = smul.addr %s360, 3
      %s364 = sadd.s32 %s362, %s363
      %s365 = smul.addr %s364, 4
      %s366 = scalar_lea.vmem %s0, %s365
      %p367 = pneg %p63
      %p368 = pneg %p60
      %p369 = scmp.lt.s32.totalorder %s24, 0
      %s370 = scalar_select %p369, %s24, 0
      %s371 = smul.u32 36, %s370
      %p372 = scmp.lt.s32.totalorder %s371, 35
      %s373 = scalar_select %p372, %s371, 35
      %p374 = scmp.lt.s32.totalorder %s23, 0
      %s375 = scalar_select %p374, %s23, 0
      %s376 = sadd.s32 %s375, %s373
      %s377 = smul.addr %s376, 4
      %s378 = scalar_lea.vmem %s1, %s377
      %p379 = pneg %p95
      %p380 = pneg %p92
      %p381 = scmp.lt.s32.totalorder %s23, 0
      %s382 = scalar_select %p381, %s23, 0
      %s383 = scalar_lea.vmem %s2, %s382
      %p384 = pneg %p121
      %p385 = pneg %p118
      %s386 = ssub.s32 %s24, 1
      %p387 = scmp.gt.s32.totalorder %s386, 0
      %s388 = scalar_select %p387, %s386, 0
      %s389 = smul.u32 4, %s22
      %s390 = smul.u32 3, %s388
      %p391 = scmp.lt.s32.totalorder %s389, 3
      %s392 = scalar_select %p391, %s389, 3
      %p393 = scmp.lt.s32.totalorder %s390, 2
      %s394 = scalar_select %p393, %s390, 2
      %s395 = smul.addr %s392, 3
      %s396 = sadd.s32 %s394, %s395
      %s397 = smul.addr %s396, 4
      %s398 = scalar_lea.vmem %s3, %s397
      %p399 = pneg %p155
      %p400 = pneg %p152
      %s401 = ssub.s32 %s24, 1
      %p402 = scmp.gt.s32.totalorder %s401, 0
      %s403 = scalar_select %p402, %s401, 0
      %s404 = smul.u32 36, %s403
      %p405 = scmp.lt.s32.totalorder %s404, 35
      %s406 = scalar_select %p405, %s404, 35
      %p407 = scmp.lt.s32.totalorder %s23, 0
      %s408 = scalar_select %p407, %s23, 0
      %s409 = sadd.s32 %s408, %s406
      %s410 = smul.addr %s409, 4
      %s411 = scalar_lea.vmem %s4, %s410
      %p412 = pneg %p189
      %p413 = pneg %p186
      %p414 = scmp.lt.s32.totalorder %s23, 0
      %s415 = scalar_select %p414, %s23, 0
      %s416 = scalar_lea.vmem %s5, %s415
      %p417 = pneg %p215
      %p418 = pneg %p212
      %p419 = pneg %p243
      %p420 = pneg %p240
      %s421 = smul.u32 4, %s22
      %p422 = scmp.lt.s32.totalorder %s421, 3
      %s423 = scalar_select %p422, %s421, 3
      %p424 = scmp.lt.s32.totalorder %s23, 0
      %s425 = scalar_select %p424, %s23, 0
      %s426 = sadd.s32 %s425, %s423
      %s427 = smul.addr %s426, 4
      %s428 = scalar_lea.vmem %s6, %s427
      %p429 = scmp.lt.s32.totalorder %s24, 0
      %s430 = scalar_select %p429, %s24, 0
      %s431 = smul.u32 4, %s22
      %s432 = smul.u32 3, %s430
      %p433 = scmp.lt.s32.totalorder %s431, 3
      %s434 = scalar_select %p433, %s431, 3
      %p435 = scmp.lt.s32.totalorder %s432, 2
      %s436 = scalar_select %p435, %s432, 2
      %s437 = smul.addr %s434, 3
      %s438 = sadd.s32 %s436, %s437
      %s439 = smul.addr %s438, 4
      %s440 = scalar_lea.vmem %s0, %s439
      %p441 = scmp.lt.s32.totalorder %s24, 0
      %s442 = scalar_select %p441, %s24, 0
      %s443 = smul.u32 4, %s22
      %s444 = smul.u32 3, %s442
      %p445 = scmp.lt.s32.totalorder %s24, 0
      %s446 = scalar_select %p445, %s24, 0
      %s447 = smul.u32 36, %s446
      %p448 = scmp.lt.s32.totalorder %s447, 35
      %s449 = scalar_select %p448, %s447, 35
      %p450 = scmp.lt.s32.totalorder %s23, 0
      %s451 = scalar_select %p450, %s23, 0
      %s452 = sadd.s32 %s451, %s449
      %s453 = smul.addr %s452, 4
      %s454 = scalar_lea.vmem %s1, %s453
      %p455 = scmp.lt.s32.totalorder %s24, 0
      %s456 = scalar_select %p455, %s24, 0
      %s457 = smul.u32 36, %s456
      %p458 = scmp.lt.s32.totalorder %s23, 0
      %s459 = scalar_select %p458, %s23, 0
      %s460 = scalar_lea.vmem %s2, %s459
      %s461 = ssub.s32 %s24, 1
      %p462 = scmp.gt.s32.totalorder %s461, 0
      %s463 = scalar_select %p462, %s461, 0
      %s464 = smul.u32 4, %s22
      %s465 = smul.u32 3, %s463
      %p466 = scmp.lt.s32.totalorder %s464, 3
      %s467 = scalar_select %p466, %s464, 3
      %p468 = scmp.lt.s32.totalorder %s465, 2
      %s469 = scalar_select %p468, %s465, 2
      %s470 = smul.addr %s467, 3
      %s471 = sadd.s32 %s469, %s470
      %s472 = smul.addr %s471, 4
      %s473 = scalar_lea.vmem %s3, %s472
      %s474 = ssub.s32 %s24, 1
      %p475 = scmp.gt.s32.totalorder %s474, 0
      %s476 = scalar_select %p475, %s474, 0
      %s477 = smul.u32 4, %s22
      %s478 = smul.u32 3, %s476
      %s479 = ssub.s32 %s24, 1
      %p480 = scmp.gt.s32.totalorder %s479, 0
      %s481 = scalar_select %p480, %s479, 0
      %s482 = smul.u32 36, %s481
      %p483 = scmp.lt.s32.totalorder %s482, 35
      %s484 = scalar_select %p483, %s482, 35
      %p485 = scmp.lt.s32.totalorder %s23, 0
      %s486 = scalar_select %p485, %s23, 0
      %s487 = sadd.s32 %s486, %s484
      %s488 = smul.addr %s487, 4
      %s489 = scalar_lea.vmem %s4, %s488
      %s490 = ssub.s32 %s24, 1
      %p491 = scmp.gt.s32.totalorder %s490, 0
      %s492 = scalar_select %p491, %s490, 0
      %s493 = smul.u32 36, %s492
      %p494 = scmp.lt.s32.totalorder %s23, 0
      %s495 = scalar_select %p494, %s23, 0
      %s496 = scalar_lea.vmem %s5, %s495
      %s497 = smul.u32 4, %s22
      %p498 = scmp.lt.s32.totalorder %s497, 3
      %s499 = scalar_select %p498, %s497, 3
      %p500 = scmp.lt.s32.totalorder %s23, 0
      %s501 = scalar_select %p500, %s23, 0
      %s502 = sadd.s32 %s501, %s499
      %s503 = smul.addr %s502, 4
      %s504 = scalar_lea.vmem %s6, %s503
      %s505 = smul.u32 4, %s22
      %p507 = scmp.eq.s32.totalorder %s24, 0
      // Predicated region
      $region45: #{discriminator_forward.10} parent=43 // pred_check
        %p508 = pneg %p507
      $region46: #{discriminator_forward.10} parent=43 // pred_check_branch
        %510 = sbr.rel (%p508) target = $region48
      $region47: #{discriminator_forward.10} parent=43 // pred_region
        %vm511 = vcmask 261120
        %512 = vst.msk [vmem:[#allocation2] sm:$0xff] %vm511, 0.0
        %513 = vst.msk [vmem:[#allocation2 + $0x8] sm:$0xff] %vm511, 0.0
        %514 = vst.msk [vmem:[#allocation2 + $0x10] sm:$0xff] %vm511, 0.0
        %515 = vst.msk [vmem:[#allocation2 + $0x18] sm:$0xff] %vm511, 0.0
        %516 = vst.msk [vmem:[#allocation3] sm:$0xff] %vm511, 0.0
        %517 = vst.msk [vmem:[#allocation3 + $0x8] sm:$0xff] %vm511, 0.0
        %518 = vst.msk [vmem:[#allocation3 + $0x10] sm:$0xff] %vm511, 0.0
        %519 = vst.msk [vmem:[#allocation3 + $0x18] sm:$0xff] %vm511, 0.0
      $region48: #{discriminator_forward.10} parent=43 // pred_fallthru
        _
      %p520 = scmp.lt.s32.totalorder %s24, 1
      // Predicated region
      $region49: #{discriminator_forward.10} parent=43 // pred_check
        %p521 = pneg %p520
      $region50: #{discriminator_forward.10} parent=43 // pred_check_branch
        %523 = sbr.rel (%p521) target = $region52
      $region51: #{discriminator_forward.10} parent=43 // pred_region
        %v524 = vld [vmem:[#allocation2] sm:$0xff]
        %v525 = vld [vmem:[#allocation2 + $0x8] sm:$0xff]
        %v526 = vld [vmem:[#allocation2 + $0x10] sm:$0xff]
        %v527 = vld [vmem:[#allocation2 + $0x18] sm:$0xff]
        %v528 = vld [vmem:[%s440] sm:$0xff]
        %v529 = vld [vmem:[%s440 + $0x8] sm:$0xf]
        %v530 = vld [vmem:[%s440 + $0xc] sm:$0xff]
        %v531 = vld [vmem:[%s440 + $0x14] sm:$0xf]
        %v532 = vld [vmem:[%s440 + $0x18] sm:$0xff]
        %v533 = vld [vmem:[%s440 + $0x20] sm:$0xf]
        %v534 = vld [vmem:[%s440 + $0x24] sm:$0xff]
        %v535 = vld [vmem:[%s440 + $0x2c] sm:$0xf]
        %v536 = vld [vmem:[%s454] sm:$0xf]
        %v537 = vld [vmem:[%s454 + $0x4] sm:$0xf]
        %v538 = vld [vmem:[%s454 + $0x8] sm:$0xf]
        %v539 = vld [vmem:[%s454 + $0xc] sm:$0xf]
        %v540 = vld [vmem:[%s454 + $0x10] sm:$0xf]
        %v541 = vld [vmem:[%s454 + $0x14] sm:$0xf]
        %v542 = vld [vmem:[%s454 + $0x18] sm:$0xf]
        %v543 = vld [vmem:[%s454 + $0x1c] sm:$0xf]
        %v544 = vld [vmem:[%s454 + $0x20] sm:$0xf]
        %v545 = vld [vmem:[%s454 + $0x24] sm:$0xf]
        %v546 = vld [vmem:[%s454 + $0x28] sm:$0xf]
        %v547 = vld [vmem:[%s454 + $0x2c] sm:$0xf]
        %v548 = vld [vmem:[%s454 + $0x30] sm:$0xf]
        %v549 = vld [vmem:[%s454 + $0x34] sm:$0xf]
        %v550 = vld [vmem:[%s454 + $0x38] sm:$0xf]
        %v551 = vld [vmem:[%s454 + $0x3c] sm:$0xf]
        %v552 = vld [vmem:[%s454 + $0x40] sm:$0xf]
        %v553 = vld [vmem:[%s454 + $0x44] sm:$0xf]
        %v554 = vld [vmem:[%s454 + $0x48] sm:$0xf]
        %v555 = vld [vmem:[%s454 + $0x4c] sm:$0xf]
        %v556 = vld [vmem:[%s454 + $0x50] sm:$0xf]
        %v557 = vld [vmem:[%s454 + $0x54] sm:$0xf]
        %v558 = vld [vmem:[%s454 + $0x58] sm:$0xf]
        %v559 = vld [vmem:[%s454 + $0x5c] sm:$0xf]
        %v560 = vld [vmem:[%s454 + $0x60] sm:$0xf]
        %v561 = vld [vmem:[%s454 + $0x64] sm:$0xf]
        %v562 = vld [vmem:[%s454 + $0x68] sm:$0xf]
        %v563 = vld [vmem:[%s454 + $0x6c] sm:$0xf]
        %v564 = vld [vmem:[%s454 + $0x70] sm:$0xf]
        %v565 = vld [vmem:[%s454 + $0x74] sm:$0xf]
        %v566 = vld [vmem:[%s454 + $0x78] sm:$0xf]
        %v567 = vld [vmem:[%s454 + $0x7c] sm:$0xf]
        %v568 = vld [vmem:[%s454 + $0x80] sm:$0xf]
        %v569 = vld [vmem:[%s454 + $0x84] sm:$0xf]
        %v570 = vld [vmem:[%s454 + $0x88] sm:$0xf]
        %v571 = vld [vmem:[%s454 + $0x8c] sm:$0xf]
        %v580 = vunpack.c.l.b16 %v528
        %v581 = vunpack.c.h.b16 %v528
        %v582 = vunpack.c.l.b16 %v529
        %v583 = vunpack.c.l.b16 %v530
        %v584 = vunpack.c.h.b16 %v530
        %v585 = vunpack.c.l.b16 %v531
        %v586 = vunpack.c.l.b16 %v532
        %v587 = vunpack.c.h.b16 %v532
        %v588 = vunpack.c.l.b16 %v533
        %v589 = vunpack.c.l.b16 %v534
        %v590 = vunpack.c.h.b16 %v534
        %v591 = vunpack.c.l.b16 %v535
        %v592 = vpack.c.b16 %v583, %v580
        %v593 = vpack.c.b16 %v584, %v581
        %v594 = vpack.c.b16 %v585, %v582
        %v595 = vpack.c.b16 %v589, %v586
        %v596 = vpack.c.b16 %v590, %v587
        %v597 = vpack.c.b16 %v591, %v588
        %v638 = vunpack.c.l.b16 %v536
        %v639 = vunpack.c.l.b16 %v537
        %v640 = vunpack.c.l.b16 %v538
        %v641 = vunpack.c.l.b16 %v539
        %v642 = vunpack.c.l.b16 %v540
        %v643 = vunpack.c.l.b16 %v541
        %v644 = vunpack.c.l.b16 %v542
        %v645 = vunpack.c.l.b16 %v543
        %v646 = vunpack.c.l.b16 %v544
        %v647 = vunpack.c.l.b16 %v545
        %v648 = vunpack.c.l.b16 %v546
        %v649 = vunpack.c.l.b16 %v547
        %v650 = vunpack.c.l.b16 %v548
        %v651 = vunpack.c.l.b16 %v549
        %v652 = vunpack.c.l.b16 %v550
        %v653 = vunpack.c.l.b16 %v551
        %v654 = vunpack.c.l.b16 %v552
        %v655 = vunpack.c.l.b16 %v553
        %v656 = vunpack.c.l.b16 %v554
        %v657 = vunpack.c.l.b16 %v555
        %v658 = vunpack.c.l.b16 %v556
        %v659 = vunpack.c.l.b16 %v557
        %v660 = vunpack.c.l.b16 %v558
        %v661 = vunpack.c.l.b16 %v559
        %v662 = vunpack.c.l.b16 %v560
        %v663 = vunpack.c.l.b16 %v561
        %v664 = vunpack.c.l.b16 %v562
        %v665 = vunpack.c.l.b16 %v563
        %v666 = vunpack.c.l.b16 %v564
        %v667 = vunpack.c.l.b16 %v565
        %v668 = vunpack.c.l.b16 %v566
        %v669 = vunpack.c.l.b16 %v567
        %v670 = vunpack.c.l.b16 %v568
        %v671 = vunpack.c.l.b16 %v569
        %v672 = vunpack.c.l.b16 %v570
        %v673 = vunpack.c.l.b16 %v571
        %v674 = vpack.c.b16 %v639, %v638
        %v675 = vpack.c.b16 %v641, %v640
        %v676 = vpack.c.b16 %v643, %v642
        %v677 = vpack.c.b16 %v645, %v644
        %v678 = vpack.c.b16 %v647, %v646
        %v679 = vpack.c.b16 %v649, %v648
        %v680 = vpack.c.b16 %v651, %v650
        %v681 = vpack.c.b16 %v653, %v652
        %v682 = vpack.c.b16 %v655, %v654
        %v683 = vpack.c.b16 %v657, %v656
        %v684 = vpack.c.b16 %v659, %v658
        %v685 = vpack.c.b16 %v661, %v660
        %v686 = vpack.c.b16 %v663, %v662
        %v687 = vpack.c.b16 %v665, %v664
        %v688 = vpack.c.b16 %v667, %v666
        %v689 = vpack.c.b16 %v669, %v668
        %v690 = vpack.c.b16 %v671, %v670
        %v691 = vpack.c.b16 %v673, %v672
        %vm710 = vcmask 261120
        %v712 = vsel %vm710, %v594, 0
        %v715 = vsel %vm710, %v597, 0
        %717 = vmatprep.subr.bf16.mxu0 0
        %718 = vmatpush1.bf16.msra.mxu0 %v674
        %719 = vmatprep.subr.bf16.mxu0 0
        %720 = vmatpush1.bf16.msra.mxu0 %v675
        %721 = vmatprep.subr.bf16.mxu0 0
        %722 = vmatpush1.bf16.msra.mxu0 %v676
        %723 = vmatprep.subr.bf16.mxu0 0
        %724 = vmatpush1.bf16.msra.mxu0 %v677
        %725 = vmatprep.subr.bf16.mxu0 0
        %726 = vmatpush1.bf16.msra.mxu0 %v678
        %727 = vmatprep.subr.bf16.mxu0 0
        %728 = vmatpush1.bf16.msra.mxu0 %v679
        %729 = vmatprep.subr.bf16.mxu0 0
        %730 = vmatpush1.bf16.msra.mxu0 %v680
        %731 = vmatprep.subr.bf16.mxu0 0
        %732 = vmatpush1.bf16.msra.mxu0 %v681
        %733 = vmatprep.subr.bf16.mxu0 0
        %734 = vmatpush1.bf16.msra.mxu0 %v682
        %735 = vmatprep.subr.bf16.mxu0 0
        %736 = vmatpush1.bf16.msra.mxu0 %v683
        %737 = vmatprep.subr.bf16.mxu0 0
        %738 = vmatpush1.bf16.msra.mxu0 %v684
        %739 = vmatprep.subr.bf16.mxu0 0
        %740 = vmatpush1.bf16.msra.mxu0 %v685
        %741 = vmatprep.subr.bf16.mxu0 0
        %742 = vmatpush1.bf16.msra.mxu0 %v686
        %743 = vmatprep.subr.bf16.mxu0 0
        %744 = vmatpush1.bf16.msra.mxu0 %v687
        %745 = vmatprep.subr.bf16.mxu0 0
        %746 = vmatpush1.bf16.msra.mxu0 %v688
        %747 = vmatprep.subr.bf16.mxu0 0
        %748 = vmatpush1.bf16.msra.mxu0 %v689
        %749 = vmatprep.mubr.bf16.mxu0 %v593
        %750 = vmatmul.mubr.bf16.gmra.mrb[0].mxu0 %v592
        %v751 = vpop.f32.mrb[0].mxu0
        %v752 = vadd.f32 0.0, %v751
        %v753 = vpop.f32.mrb[0].mxu0
        %v754 = vpop.f32.mrb[0].mxu0
        %v755 = vadd.f32 0.0, %v754
        %v756 = vpop.f32.mrb[0].mxu0
        %757 = vmatprep.mubr.bf16.mxu0 %v596
        %758 = vmatmul.mubr.bf16.gmra.mrb[0].mxu0 %v595
        %v759 = vpop.f32.mrb[0].mxu0
        %v760 = vadd.f32 0.0, %v759
        %v761 = vpop.f32.mrb[0].mxu0
        %v762 = vpop.f32.mrb[0].mxu0
        %v763 = vadd.f32 0.0, %v762
        %v764 = vpop.f32.mrb[0].mxu0
        %765 = vdwg.mxu0
        %766 = vmatprep.subr.bf16.mxu0 0
        %767 = vmatpush1.bf16.msra.mxu0 %v690
        %768 = vmatprep.subr.bf16.mxu0 0
        %769 = vmatpush1.bf16.msra.mxu0 %v691
        %770 = vmatprep.subr.bf16.mxu0 0
        %771 = vmatpush1.bf16.msra.mxu0 0
        %772 = vmatprep.subr.bf16.mxu0 0
        %773 = vmatpush1.bf16.msra.mxu0 0
        %774 = vmatprep.subr.bf16.mxu0 0
        %775 = vmatpush1.bf16.msra.mxu0 0
        %776 = vmatprep.subr.bf16.mxu0 0
        %777 = vmatpush1.bf16.msra.mxu0 0
        %778 = vmatprep.subr.bf16.mxu0 0
        %779 = vmatpush1.bf16.msra.mxu0 0
        %780 = vmatprep.subr.bf16.mxu0 0
        %781 = vmatpush1.bf16.msra.mxu0 0
        %782 = vmatprep.subr.bf16.mxu0 0
        %783 = vmatpush1.bf16.msra.mxu0 0
        %784 = vmatprep.subr.bf16.mxu0 0
        %785 = vmatpush1.bf16.msra.mxu0 0
        %786 = vmatprep.subr.bf16.mxu0 0
        %787 = vmatpush1.bf16.msra.mxu0 0
        %788 = vmatprep.subr.bf16.mxu0 0
        %789 = vmatpush1.bf16.msra.mxu0 0
        %790 = vmatprep.subr.bf16.mxu0 0
        %791 = vmatpush1.bf16.msra.mxu0 0
        %792 = vmatprep.subr.bf16.mxu0 0
        %793 = vmatpush1.bf16.msra.mxu0 0
        %794 = vmatprep.subr.bf16.mxu0 0
        %795 = vmatpush1.bf16.msra.mxu0 0
        %796 = vmatprep.subr.bf16.mxu0 0
        %797 = vmatpush1.bf16.msra.mxu0 0
        %798 = vmatprep.mubr.bf16.mxu0 0
        %799 = vmatmul.mubr.bf16.gmra.mrb[0].mxu0 %v712
        %v800 = vpop.f32.mrb[0].mxu0
        %v801 = vadd.f32 %v752, %v800
        %v802 = vpop.f32.mrb[0].mxu0
        %v803 = vpop.f32.mrb[0].mxu0
        %v804 = vadd.f32 %v755, %v803
        %v805 = vpop.f32.mrb[0].mxu0
        %806 = vmatprep.mubr.bf16.mxu0 0
        %807 = vmatmul.mubr.bf16.gmra.mrb[0].mxu0 %v715
        %v808 = vpop.f32.mrb[0].mxu0
        %v809 = vadd.f32 %v760, %v808
        %v810 = vpop.f32.mrb[0].mxu0
        %v811 = vpop.f32.mrb[0].mxu0
        %v812 = vadd.f32 %v763, %v811
        %v813 = vpop.f32.mrb[0].mxu0
        %814 = vdwg.mxu0
        %v815 = vadd.f32 %v524, %v801
        %v816 = vadd.f32 %v525, %v804
        %v817 = vadd.f32 %v526, %v809
        %v818 = vadd.f32 %v527, %v812
        %819 = vst.msk [vmem:[#allocation2] sm:$0xff] %vm710, %v815
        %820 = vst.msk [vmem:[#allocation2 + $0x8] sm:$0xff] %vm710, %v816
        %821 = vst.msk [vmem:[#allocation2 + $0x10] sm:$0xff] %vm710, %v817
        %822 = vst.msk [vmem:[#allocation2 + $0x18] sm:$0xff] %vm710, %v818
      $region52: #{discriminator_forward.10} parent=43 // pred_fallthru
        _
      %p823 = scmp.ge.s32.totalorder %s24, 1
      // Predicated region
      $region53: #{discriminator_forward.10} parent=43 // pred_check
        %p824 = pneg %p823
      $region54: #{discriminator_forward.10} parent=43 // pred_check_branch
        %826 = sbr.rel (%p824) target = $region56
      $region55: #{discriminator_forward.10} parent=43 // pred_region
        %v827 = vld [vmem:[#allocation3] sm:$0xff]
        %v828 = vld [vmem:[#allocation3 + $0x8] sm:$0xff]
        %v829 = vld [vmem:[#allocation3 + $0x10] sm:$0xff]
        %v830 = vld [vmem:[#allocation3 + $0x18] sm:$0xff]
        %v831 = vld [vmem:[%s473] sm:$0xff]
        %v832 = vld [vmem:[%s473 + $0x8] sm:$0xf]
        %v833 = vld [vmem:[%s473 + $0xc] sm:$0xff]
        %v834 = vld [vmem:[%s473 + $0x14] sm:$0xf]
        %v835 = vld [vmem:[%s473 + $0x18] sm:$0xff]
        %v836 = vld [vmem:[%s473 + $0x20] sm:$0xf]
        %v837 = vld [vmem:[%s473 + $0x24] sm:$0xff]
        %v838 = vld [vmem:[%s473 + $0x2c] sm:$0xf]
        %v839 = vld [vmem:[%s489] sm:$0xf]
        %v840 = vld [vmem:[%s489 + $0x4] sm:$0xf]
        %v841 = vld [vmem:[%s489 + $0x8] sm:$0xf]
        %v842 = vld [vmem:[%s489 + $0xc] sm:$0xf]
        %v843 = vld [vmem:[%s489 + $0x10] sm:$0xf]
        %v844 = vld [vmem:[%s489 + $0x14] sm:$0xf]
        %v845 = vld [vmem:[%s489 + $0x18] sm:$0xf]
        %v846 = vld [vmem:[%s489 + $0x1c] sm:$0xf]
        %v847 = vld [vmem:[%s489 + $0x20] sm:$0xf]
        %v848 = vld [vmem:[%s489 + $0x24] sm:$0xf]
        %v849 = vld [vmem:[%s489 + $0x28] sm:$0xf]
        %v850 = vld [vmem:[%s489 + $0x2c] sm:$0xf]
        %v851 = vld [vmem:[%s489 + $0x30] sm:$0xf]
        %v852 = vld [vmem:[%s489 + $0x34] sm:$0xf]
        %v853 = vld [vmem:[%s489 + $0x38] sm:$0xf]
        %v854 = vld [vmem:[%s489 + $0x3c] sm:$0xf]
        %v855 = vld [vmem:[%s489 + $0x40] sm:$0xf]
        %v856 = vld [vmem:[%s489 + $0x44] sm:$0xf]
        %v857 = vld [vmem:[%s489 + $0x48] sm:$0xf]
        %v858 = vld [vmem:[%s489 + $0x4c] sm:$0xf]
        %v859 = vld [vmem:[%s489 + $0x50] sm:$0xf]
        %v860 = vld [vmem:[%s489 + $0x54] sm:$0xf]
        %v861 = vld [vmem:[%s489 + $0x58] sm:$0xf]
        %v862 = vld [vmem:[%s489 + $0x5c] sm:$0xf]
        %v863 = vld [vmem:[%s489 + $0x60] sm:$0xf]
        %v864 = vld [vmem:[%s489 + $0x64] sm:$0xf]
        %v865 = vld [vmem:[%s489 + $0x68] sm:$0xf]
        %v866 = vld [vmem:[%s489 + $0x6c] sm:$0xf]
        %v867 = vld [vmem:[%s489 + $0x70] sm:$0xf]
        %v868 = vld [vmem:[%s489 + $0x74] sm:$0xf]
        %v869 = vld [vmem:[%s489 + $0x78] sm:$0xf]
        %v870 = vld [vmem:[%s489 + $0x7c] sm:$0xf]
        %v871 = vld [vmem:[%s489 + $0x80] sm:$0xf]
        %v872 = vld [vmem:[%s489 + $0x84] sm:$0xf]
        %v873 = vld [vmem:[%s489 + $0x88] sm:$0xf]
        %v874 = vld [vmem:[%s489 + $0x8c] sm:$0xf]
        %v883 = vunpack.c.l.b16 %v831
        %v884 = vunpack.c.h.b16 %v831
        %v885 = vunpack.c.l.b16 %v832
        %v886 = vunpack.c.l.b16 %v833
        %v887 = vunpack.c.h.b16 %v833
        %v888 = vunpack.c.l.b16 %v834
        %v889 = vunpack.c.l.b16 %v835
        %v890 = vunpack.c.h.b16 %v835
        %v891 = vunpack.c.l.b16 %v836
        %v892 = vunpack.c.l.b16 %v837
        %v893 = vunpack.c.h.b16 %v837
        %v894 = vunpack.c.l.b16 %v838
        %v895 = vpack.c.b16 %v886, %v883
        %v896 = vpack.c.b16 %v887, %v884
        %v897 = vpack.c.b16 %v888, %v885
        %v898 = vpack.c.b16 %v892, %v889
        %v899 = vpack.c.b16 %v893, %v890
        %v900 = vpack.c.b16 %v894, %v891
        %v941 = vunpack.c.l.b16 %v839
        %v942 = vunpack.c.l.b16 %v840
        %v943 = vunpack.c.l.b16 %v841
        %v944 = vunpack.c.l.b16 %v842
        %v945 = vunpack.c.l.b16 %v843
        %v946 = vunpack.c.l.b16 %v844
        %v947 = vunpack.c.l.b16 %v845
        %v948 = vunpack.c.l.b16 %v846
        %v949 = vunpack.c.l.b16 %v847
        %v950 = vunpack.c.l.b16 %v848
        %v951 = vunpack.c.l.b16 %v849
        %v952 = vunpack.c.l.b16 %v850
        %v953 = vunpack.c.l.b16 %v851
        %v954 = vunpack.c.l.b16 %v852
        %v955 = vunpack.c.l.b16 %v853
        %v956 = vunpack.c.l.b16 %v854
        %v957 = vunpack.c.l.b16 %v855
        %v958 = vunpack.c.l.b16 %v856
        %v959 = vunpack.c.l.b16 %v857
        %v960 = vunpack.c.l.b16 %v858
        %v961 = vunpack.c.l.b16 %v859
        %v962 = vunpack.c.l.b16 %v860
        %v963 = vunpack.c.l.b16 %v861
        %v964 = vunpack.c.l.b16 %v862
        %v965 = vunpack.c.l.b16 %v863
        %v966 = vunpack.c.l.b16 %v864
        %v967 = vunpack.c.l.b16 %v865
        %v968 = vunpack.c.l.b16 %v866
        %v969 = vunpack.c.l.b16 %v867
        %v970 = vunpack.c.l.b16 %v868
        %v971 = vunpack.c.l.b16 %v869
        %v972 = vunpack.c.l.b16 %v870
        %v973 = vunpack.c.l.b16 %v871
        %v974 = vunpack.c.l.b16 %v872
        %v975 = vunpack.c.l.b16 %v873
        %v976 = vunpack.c.l.b16 %v874
        %v977 = vpack.c.b16 %v942, %v941
        %v978 = vpack.c.b16 %v944, %v943
        %v979 = vpack.c.b16 %v946, %v945
        %v980 = vpack.c.b16 %v948, %v947
        %v981 = vpack.c.b16 %v950, %v949
        %v982 = vpack.c.b16 %v952, %v951
        %v983 = vpack.c.b16 %v954, %v953
        %v984 = vpack.c.b16 %v956, %v955
        %v985 = vpack.c.b16 %v958, %v957
        %v986 = vpack.c.b16 %v960, %v959
        %v987 = vpack.c.b16 %v962, %v961
        %v988 = vpack.c.b16 %v964, %v963
        %v989 = vpack.c.b16 %v966, %v965
        %v990 = vpack.c.b16 %v968, %v967
        %v991 = vpack.c.b16 %v970, %v969
        %v992 = vpack.c.b16 %v972, %v971
        %v993 = vpack.c.b16 %v974, %v973
        %v994 = vpack.c.b16 %v976, %v975
        %vm1013 = vcmask 261120
        %v1015 = vsel %vm1013, %v897, 0
        %v1018 = vsel %vm1013, %v900, 0
        %1020 = vmatprep.subr.bf16.mxu0 0
        %1021 = vmatpush1.bf16.msra.mxu0 %v977
        %1022 = vmatprep.subr.bf16.mxu0 0
        %1023 = vmatpush1.bf16.msra.mxu0 %v978
        %1024 = vmatprep.subr.bf16.mxu0 0
        %1025 = vmatpush1.bf16.msra.mxu0 %v979
        %1026 = vmatprep.subr.bf16.mxu0 0
        %1027 = vmatpush1.bf16.msra.mxu0 %v980
        %1028 = vmatprep.subr.bf16.mxu0 0
        %1029 = vmatpush1.bf16.msra.mxu0 %v981
        %1030 = vmatprep.subr.bf16.mxu0 0
        %1031 = vmatpush1.bf16.msra.mxu0 %v982
        %1032 = vmatprep.subr.bf16.mxu0 0
        %1033 = vmatpush1.bf16.msra.mxu0 %v983
        %1034 = vmatprep.subr.bf16.mxu0 0
        %1035 = vmatpush1.bf16.msra.mxu0 %v984
        %1036 = vmatprep.subr.bf16.mxu0 0
        %1037 = vmatpush1.bf16.msra.mxu0 %v985
        %1038 = vmatprep.subr.bf16.mxu0 0
        %1039 = vmatpush1.bf16.msra.mxu0 %v986
        %1040 = vmatprep.subr.bf16.mxu0 0
        %1041 = vmatpush1.bf16.msra.mxu0 %v987
        %1042 = vmatprep.subr.bf16.mxu0 0
        %1043 = vmatpush1.bf16.msra.mxu0 %v988
        %1044 = vmatprep.subr.bf16.mxu0 0
        %1045 = vmatpush1.bf16.msra.mxu0 %v989
        %1046 = vmatprep.subr.bf16.mxu0 0
        %1047 = vmatpush1.bf16.msra.mxu0 %v990
        %1048 = vmatprep.subr.bf16.mxu0 0
        %1049 = vmatpush1.bf16.msra.mxu0 %v991
        %1050 = vmatprep.subr.bf16.mxu0 0
        %1051 = vmatpush1.bf16.msra.mxu0 %v992
        %1052 = vmatprep.mubr.bf16.mxu0 %v896
        %1053 = vmatmul.mubr.bf16.gmra.mrb[0].mxu0 %v895
        %v1054 = vpop.f32.mrb[0].mxu0
        %v1055 = vadd.f32 0.0, %v1054
        %v1056 = vpop.f32.mrb[0].mxu0
        %v1057 = vpop.f32.mrb[0].mxu0
        %v1058 = vadd.f32 0.0, %v1057
        %v1059 = vpop.f32.mrb[0].mxu0
        %1060 = vmatprep.mubr.bf16.mxu0 %v899
        %1061 = vmatmul.mubr.bf16.gmra.mrb[0].mxu0 %v898
        %v1062 = vpop.f32.mrb[0].mxu0
        %v1063 = vadd.f32 0.0, %v1062
        %v1064 = vpop.f32.mrb[0].mxu0
        %v1065 = vpop.f32.mrb[0].mxu0
        %v1066 = vadd.f32 0.0, %v1065
        %v1067 = vpop.f32.mrb[0].mxu0
        %1068 = vdwg.mxu0
        %1069 = vmatprep.subr.bf16.mxu0 0
        %1070 = vmatpush1.bf16.msra.mxu0 %v993
        %1071 = vmatprep.subr.bf16.mxu0 0
        %1072 = vmatpush1.bf16.msra.mxu0 %v994
        %1073 = vmatprep.subr.bf16.mxu0 0
        %1074 = vmatpush1.bf16.msra.mxu0 0
        %1075 = vmatprep.subr.bf16.mxu0 0
        %1076 = vmatpush1.bf16.msra.mxu0 0
        %1077 = vmatprep.subr.bf16.mxu0 0
        %1078 = vmatpush1.bf16.msra.mxu0 0
        %1079 = vmatprep.subr.bf16.mxu0 0
        %1080 = vmatpush1.bf16.msra.mxu0 0
        %1081 = vmatprep.subr.bf16.mxu0 0
        %1082 = vmatpush1.bf16.msra.mxu0 0
        %1083 = vmatprep.subr.bf16.mxu0 0
        %1084 = vmatpush1.bf16.msra.mxu0 0
        %1085 = vmatprep.subr.bf16.mxu0 0
        %1086 = vmatpush1.bf16.msra.mxu0 0
        %1087 = vmatprep.subr.bf16.mxu0 0
        %1088 = vmatpush1.bf16.msra.mxu0 0
        %1089 = vmatprep.subr.bf16.mxu0 0
        %1090 = vmatpush1.bf16.msra.mxu0 0
        %1091 = vmatprep.subr.bf16.mxu0 0
        %1092 = vmatpush1.bf16.msra.mxu0 0
        %1093 = vmatprep.subr.bf16.mxu0 0
        %1094 = vmatpush1.bf16.msra.mxu0 0
        %1095 = vmatprep.subr.bf16.mxu0 0
        %1096 = vmatpush1.bf16.msra.mxu0 0
        %1097 = vmatprep.subr.bf16.mxu0 0
        %1098 = vmatpush1.bf16.msra.mxu0 0
        %1099 = vmatprep.subr.bf16.mxu0 0
        %1100 = vmatpush1.bf16.msra.mxu0 0
        %1101 = vmatprep.mubr.bf16.mxu0 0
        %1102 = vmatmul.mubr.bf16.gmra.mrb[0].mxu0 %v1015
        %v1103 = vpop.f32.mrb[0].mxu0
        %v1104 = vadd.f32 %v1055, %v1103
        %v1105 = vpop.f32.mrb[0].mxu0
        %v1106 = vpop.f32.mrb[0].mxu0
        %v1107 = vadd.f32 %v1058, %v1106
        %v1108 = vpop.f32.mrb[0].mxu0
        %1109 = vmatprep.mubr.bf16.mxu0 0
        %1110 = vmatmul.mubr.bf16.gmra.mrb[0].mxu0 %v1018
        %v1111 = vpop.f32.mrb[0].mxu0
        %v1112 = vadd.f32 %v1063, %v1111
        %v1113 = vpop.f32.mrb[0].mxu0
        %v1114 = vpop.f32.mrb[0].mxu0
        %v1115 = vadd.f32 %v1066, %v1114
        %v1116 = vpop.f32.mrb[0].mxu0
        %1117 = vdwg.mxu0
        %v1118 = vadd.f32 %v827, %v1104
        %v1119 = vadd.f32 %v828, %v1107
        %v1120 = vadd.f32 %v829, %v1112
        %v1121 = vadd.f32 %v830, %v1115
        %1122 = vst.msk [vmem:[#allocation3] sm:$0xff] %vm1013, %v1118
        %1123 = vst.msk [vmem:[#allocation3 + $0x8] sm:$0xff] %vm1013, %v1119
        %1124 = vst.msk [vmem:[#allocation3 + $0x10] sm:$0xff] %vm1013, %v1120
        %1125 = vst.msk [vmem:[#allocation3 + $0x18] sm:$0xff] %vm1013, %v1121
      $region56: #{discriminator_forward.10} parent=43 // pred_fallthru
        _
      %p1126 = scmp.eq.s32.totalorder %s24, 1
      // Predicated region
      $region57: #{discriminator_forward.10} parent=43 // pred_check
        %p1127 = pneg %p1126
      $region58: #{discriminator_forward.10} parent=43 // pred_check_branch
        %1129 = sbr.rel (%p1127) target = $region60
      $region59: #{discriminator_forward.10} parent=43 // pred_region
        %v1130 = vld [vmem:[#allocation2] sm:$0xff]
        %v1131 = vld [vmem:[#allocation2 + $0x8] sm:$0xff]
        %v1132 = vld [vmem:[#allocation2 + $0x10] sm:$0xff]
        %v1133 = vld [vmem:[#allocation2 + $0x18] sm:$0xff]
        %v1134 = vld [vmem:[%s460] sm:$0x1]
        %v1136 = vlaneseq
        %v1137 = vshrl.u32 %v1136, 7
        %v1138 = vsub.s32 0, %v1137
        %v1139 = vrot.slane %v1134, %v1138
        %v1141 = vadd.f32 %v1130, %v1139
        %v1142 = vadd.f32 %v1131, %v1139
        %v1143 = vadd.f32 %v1132, %v1139
        %v1144 = vadd.f32 %v1133, %v1139
        %vm1145 = vcmp.ge.f32.partialorder %v1141, 0.0
        %vm1146 = vcmp.ge.f32.partialorder %v1142, 0.0
        %vm1147 = vcmp.ge.f32.partialorder %v1143, 0.0
        %vm1148 = vcmp.ge.f32.partialorder %v1144, 0.0
        %v1149 = vmul.f32 %v1141, 0.2
        %v1150 = vmul.f32 %v1142, 0.2
        %v1151 = vmul.f32 %v1143, 0.2
        %v1152 = vmul.f32 %v1144, 0.2
        %v1153 = vsel %vm1145, %v1141, %v1149
        %v1154 = vsel %vm1146, %v1142, %v1150
        %v1155 = vsel %vm1147, %v1143, %v1151
        %v1156 = vsel %vm1148, %v1144, %v1152
        %v1157 = vld [vmem:[#allocation3] sm:$0xff]
        %v1158 = vld [vmem:[#allocation3 + $0x8] sm:$0xff]
        %v1159 = vld [vmem:[#allocation3 + $0x10] sm:$0xff]
        %v1160 = vld [vmem:[#allocation3 + $0x18] sm:$0xff]
        %v1161 = vld [vmem:[%s496] sm:$0x1]
        %v1163 = vlaneseq
        %v1164 = vshrl.u32 %v1163, 7
        %v1165 = vsub.s32 0, %v1164
        %v1166 = vrot.slane %v1161, %v1165
        %v1168 = vadd.f32 %v1157, %v1166
        %v1169 = vadd.f32 %v1158, %v1166
        %v1170 = vadd.f32 %v1159, %v1166
        %v1171 = vadd.f32 %v1160, %v1166
        %vm1172 = vcmp.ge.f32.partialorder %v1168, 0.0
        %vm1173 = vcmp.ge.f32.partialorder %v1169, 0.0
        %vm1174 = vcmp.ge.f32.partialorder %v1170, 0.0
        %vm1175 = vcmp.ge.f32.partialorder %v1171, 0.0
        %v1176 = vmul.f32 %v1168, 0.2
        %v1177 = vmul.f32 %v1169, 0.2
        %v1178 = vmul.f32 %v1170, 0.2
        %v1179 = vmul.f32 %v1171, 0.2
        %v1180 = vsel %vm1172, %v1168, %v1176
        %v1181 = vsel %vm1173, %v1169, %v1177
        %v1182 = vsel %vm1174, %v1170, %v1178
        %v1183 = vsel %vm1175, %v1171, %v1179
        %v1184 = vadd.f32 %v1153, %v1180
        %v1185 = vadd.f32 %v1154, %v1181
        %v1186 = vadd.f32 %v1155, %v1182
        %v1187 = vadd.f32 %v1156, %v1183
        %v1188 = vpack.c.bf16 %v1185, %v1184
        %v1189 = vpack.c.bf16 %v1187, %v1186
        %v1192 = vunpack.c.l.b16 %v1188
        %v1193 = vunpack.c.h.b16 %v1188
        %v1194 = vunpack.c.l.b16 %v1189
        %v1195 = vunpack.c.h.b16 %v1189
        %v1196 = vpack.c.b16 %v1192, %v1192
        %v1197 = vpack.c.b16 %v1193, %v1193
        %v1198 = vpack.c.b16 %v1194, %v1194
        %v1199 = vpack.c.b16 %v1195, %v1195
        %vm1204 = vcmask 257024
        %1205 = vst.msk [vmem:[%s504] sm:$0xf] %vm1204, %v1196
        %1206 = vst.msk [vmem:[%s504 + $0x4] sm:$0xf] %vm1204, %v1197
        %1207 = vst.msk [vmem:[%s504 + $0x8] sm:$0xf] %vm1204, %v1198
        %1208 = vst.msk [vmem:[%s504 + $0xc] sm:$0xf] %vm1204, %v1199
      $region60: #{discriminator_forward.10} parent=43 // pred_fallthru
        _
      %s1209 = smul.u32 4, %s22
      %p1210 = scmp.lt.s32.totalorder %s1209, 3
      %s1211 = scalar_select %p1210, %s1209, 3
      %p1212 = scmp.lt.s32.totalorder %s23, 0
      %s1213 = scalar_select %p1212, %s23, 0
      %s1214 = sadd.s32 %s1213, %s1211
      %s1215 = smul.addr %s1214, 4
      %s1216 = scalar_lea.vmem %s6, %s1215
      // Predicated region
      $region61: #{discriminator_forward.10} parent=43 // pred_check
        %p1217 = pneg %p240
      $region62: #{discriminator_forward.10} parent=43 // pred_check_branch
        %1219 = sbr.rel (%p1217) target = $region64
      $region63: #{discriminator_forward.10} parent=43 // pred_region
        %s1220 = smul.u32 4, %s22
      $region64: #{discriminator_forward.10} parent=43 // pred_fallthru
        _
      // Predicated region
      $region65: #{discriminator_forward.10} parent=43 // pred_check
        %p1221 = pneg %p240
      $region66: #{discriminator_forward.10} parent=43 // pred_check_branch
        %1223 = sbr.rel (%p1221) target = $region68
      $region67: #{discriminator_forward.10} parent=43 // pred_region
        %s1224 = smul.u32 4, %s22
        %p1225 = scmp.lt.s32.totalorder %s1224, 3
        %s1226 = scalar_select %p1225, %s1224, 3
        %p1227 = scmp.lt.s32.totalorder %s23, 0
        %s1228 = scalar_select %p1227, %s23, 0
        %s1229 = sadd.s32 %s1228, %s1226
        %s1230 = smul.addr %s1229, 4
        %s1231 = scalar_lea.vmem %s6, %s1230
      $region68: #{discriminator_forward.10} parent=43 // pred_fallthru
        _
    $region44: #{discriminator_forward.10} parent=5 // pred_fallthru
      _
    %p1232 = scmp.le.s32.totalorder 2, %s12
    // Predicated region
    $region69: #{discriminator_forward.10} parent=5 // pred_check
      %p1233 = pneg %p1232
    $region70: #{discriminator_forward.10} parent=5 // pred_check_branch
      %1235 = sbr.rel (%p1233) target = $region72
    $region71: #{discriminator_forward.10} parent=5 // pred_region
      %s1236 = ssub.s32 %s12, 2
    $region72: #{discriminator_forward.10} parent=5 // pred_fallthru
      _
  $region6: #{discriminator_forward.10} parent=0 // loop_footer
    %s16 = sadd.s32 1, %s12
  $region7: #{discriminator_forward.10} parent=0 // loop_footer_branch
    %11 = sbr.rel target = $region3
  $region8: #{discriminator_forward.10} parent=0 // loop_exit
    _

// kernel: discriminator_forward.11
$region0: #{discriminator_forward.11}
  #allocation0 [shape = 'u32[]', space=smem, size = 0x4, offset = 0x4, fixed_abs, tag = 'smem constant byte address 0x4 - core index']
  #allocation1 [shape = 'u32[144,128]{1,0:T(1,128)}', space=vmem, size = 0x12000, scoped, tag = 'internal scratch']
  #allocation2 [shape = 'f32[8,1]{1,0:T(8,128)}', space=vmem, size = 0x1000, scoped, tag = 'scratch operand']
  #allocation3 [shape = 'f32[1,1]{1,0:T(1,128)S(1)}', space=vmem, size = 0x200, scoped, tag = 'scoped memory for discriminator_forward.11']
  %s0 = inlined_call_operand.vmem [shape: bf16[8,512], index: 0, kind: input, shape index: {}]
  %s1 = inlined_call_operand.vmem [shape: bf16[512,1], index: 1, kind: input, shape index: {}]
  %s2 = inlined_call_operand.<no memory space> [shape: f32[1,1], index: 2, kind: input, shape index: {}]
  %s3 = inlined_call_operand.vmem [shape: f32[8,1], index: 3, kind: output, shape index: {}]
  %s4 = sld [smem:[#allocation0]]
  $region30: #{discriminator_forward.11} parent=0
    _
  %s6 = ssub.s32 1, %s4
  %s7 = scalar_select 0, %s6, %s4
  %v8 = vstv %s2
  %9 = vst [vmem:[#allocation3] sm:$0x1] %v8
  // Predicated region
  $region2: #{discriminator_forward.11} parent=0 // pred_check
    _
  $region3: #{discriminator_forward.11} parent=0 // pred_check_branch
    %11 = sbr.rel (0) target = $region5
  $region4: #{discriminator_forward.11} parent=0 // pred_region
    _
  $region5: #{discriminator_forward.11} parent=0 // pred_fallthru
    _
  // Predicated region
  $region6: #{discriminator_forward.11} parent=0 // pred_check
    _
  $region7: #{discriminator_forward.11} parent=0 // pred_check_branch
    %13 = sbr.rel (0) target = $region9
  $region8: #{discriminator_forward.11} parent=0 // pred_region
    _
  $region9: #{discriminator_forward.11} parent=0 // pred_fallthru
    _
  // Predicated region
  $region10: #{discriminator_forward.11} parent=0 // pred_check
    _
  $region11: #{discriminator_forward.11} parent=0 // pred_check_branch
    %15 = sbr.rel (0) target = $region13
  $region12: #{discriminator_forward.11} parent=0 // pred_region
    _
  $region13: #{discriminator_forward.11} parent=0 // pred_fallthru
    _
  %p17 = scmp.eq.s32.totalorder 0, 0
  // Predicated region
  $region14: #{discriminator_forward.11} parent=0 // pred_check
    %p18 = pneg %p17
  $region15: #{discriminator_forward.11} parent=0 // pred_check_branch
    %20 = sbr.rel (%p18) target = $region17
  $region16: #{discriminator_forward.11} parent=0 // pred_region
    %vm21 = vcmask 7168
    %22 = vst.msk [vmem:[#allocation2] sm:$0xff] %vm21, 0.0
  $region17: #{discriminator_forward.11} parent=0 // pred_fallthru
    _
  %v23 = vld [vmem:[#allocation2] sm:$0xff]
  %v24 = vld [vmem:[%s0] sm:$0xff]
  %v25 = vld [vmem:[%s0 + $0x8] sm:$0xff]
  %v26 = vld [vmem:[%s1] sm:$0xf]
  %v27 = vld [vmem:[%s1 + $0x4] sm:$0xf]
  %v28 = vld [vmem:[%s1 + $0x8] sm:$0xf]
  %v29 = vld [vmem:[%s1 + $0xc] sm:$0xf]
  %v30 = vld [vmem:[%s1 + $0x10] sm:$0xf]
  %v31 = vld [vmem:[%s1 + $0x14] sm:$0xf]
  %v32 = vld [vmem:[%s1 + $0x18] sm:$0xf]
  %v33 = vld [vmem:[%s1 + $0x1c] sm:$0xf]
  %v34 = vld [vmem:[%s1 + $0x20] sm:$0xf]
  %v35 = vld [vmem:[%s1 + $0x24] sm:$0xf]
  %v36 = vld [vmem:[%s1 + $0x28] sm:$0xf]
  %v37 = vld [vmem:[%s1 + $0x2c] sm:$0xf]
  %v38 = vld [vmem:[%s1 + $0x30] sm:$0xf]
  %v39 = vld [vmem:[%s1 + $0x34] sm:$0xf]
  %v40 = vld [vmem:[%s1 + $0x38] sm:$0xf]
  %v41 = vld [vmem:[%s1 + $0x3c] sm:$0xf]
  %v42 = vld [vmem:[%s1 + $0x40] sm:$0xf]
  %v43 = vld [vmem:[%s1 + $0x44] sm:$0xf]
  %v44 = vld [vmem:[%s1 + $0x48] sm:$0xf]
  %v45 = vld [vmem:[%s1 + $0x4c] sm:$0xf]
  %v46 = vld [vmem:[%s1 + $0x50] sm:$0xf]
  %v47 = vld [vmem:[%s1 + $0x54] sm:$0xf]
  %v48 = vld [vmem:[%s1 + $0x58] sm:$0xf]
  %v49 = vld [vmem:[%s1 + $0x5c] sm:$0xf]
  %v50 = vld [vmem:[%s1 + $0x60] sm:$0xf]
  %v51 = vld [vmem:[%s1 + $0x64] sm:$0xf]
  %v52 = vld [vmem:[%s1 + $0x68] sm:$0xf]
  %v53 = vld [vmem:[%s1 + $0x6c] sm:$0xf]
  %v54 = vld [vmem:[%s1 + $0x70] sm:$0xf]
  %v55 = vld [vmem:[%s1 + $0x74] sm:$0xf]
  %v56 = vld [vmem:[%s1 + $0x78] sm:$0xf]
  %v57 = vld [vmem:[%s1 + $0x7c] sm:$0xf]
  %v58 = vld [vmem:[%s1 + $0x80] sm:$0xf]
  %v59 = vld [vmem:[%s1 + $0x84] sm:$0xf]
  %v60 = vld [vmem:[%s1 + $0x88] sm:$0xf]
  %v61 = vld [vmem:[%s1 + $0x8c] sm:$0xf]
  %v62 = vld [vmem:[%s1 + $0x90] sm:$0xf]
  %v63 = vld [vmem:[%s1 + $0x94] sm:$0xf]
  %v64 = vld [vmem:[%s1 + $0x98] sm:$0xf]
  %v65 = vld [vmem:[%s1 + $0x9c] sm:$0xf]
  %v66 = vld [vmem:[%s1 + $0xa0] sm:$0xf]
  %v67 = vld [vmem:[%s1 + $0xa4] sm:$0xf]
  %v68 = vld [vmem:[%s1 + $0xa8] sm:$0xf]
  %v69 = vld [vmem:[%s1 + $0xac] sm:$0xf]
  %v70 = vld [vmem:[%s1 + $0xb0] sm:$0xf]
  %v71 = vld [vmem:[%s1 + $0xb4] sm:$0xf]
  %v72 = vld [vmem:[%s1 + $0xb8] sm:$0xf]
  %v73 = vld [vmem:[%s1 + $0xbc] sm:$0xf]
  %v74 = vld [vmem:[%s1 + $0xc0] sm:$0xf]
  %v75 = vld [vmem:[%s1 + $0xc4] sm:$0xf]
  %v76 = vld [vmem:[%s1 + $0xc8] sm:$0xf]
  %v77 = vld [vmem:[%s1 + $0xcc] sm:$0xf]
  %v78 = vld [vmem:[%s1 + $0xd0] sm:$0xf]
  %v79 = vld [vmem:[%s1 + $0xd4] sm:$0xf]
  %v80 = vld [vmem:[%s1 + $0xd8] sm:$0xf]
  %v81 = vld [vmem:[%s1 + $0xdc] sm:$0xf]
  %v82 = vld [vmem:[%s1 + $0xe0] sm:$0xf]
  %v83 = vld [vmem:[%s1 + $0xe4] sm:$0xf]
  %v84 = vld [vmem:[%s1 + $0xe8] sm:$0xf]
  %v85 = vld [vmem:[%s1 + $0xec] sm:$0xf]
  %v86 = vld [vmem:[%s1 + $0xf0] sm:$0xf]
  %v87 = vld [vmem:[%s1 + $0xf4] sm:$0xf]
  %v88 = vld [vmem:[%s1 + $0xf8] sm:$0xf]
  %v89 = vld [vmem:[%s1 + $0xfc] sm:$0xf]
  %v92 = vunpack.c.l.b16 %v24
  %v93 = vunpack.c.h.b16 %v24
  %v94 = vunpack.c.l.b16 %v25
  %v95 = vunpack.c.h.b16 %v25
  %v96 = vpack.c.b16 %v92, %v92
  %v97 = vpack.c.b16 %v93, %v93
  %v98 = vpack.c.b16 %v94, %v94
  %v99 = vpack.c.b16 %v95, %v95
  %v168 = vunpack.c.l.b16 %v26
  %v169 = vunpack.c.l.b16 %v27
  %v170 = vunpack.c.l.b16 %v28
  %v171 = vunpack.c.l.b16 %v29
  %v172 = vunpack.c.l.b16 %v30
  %v173 = vunpack.c.l.b16 %v31
  %v174 = vunpack.c.l.b16 %v32
  %v175 = vunpack.c.l.b16 %v33
  %v176 = vunpack.c.l.b16 %v34
  %v177 = vunpack.c.l.b16 %v35
  %v178 = vunpack.c.l.b16 %v36
  %v179 = vunpack.c.l.b16 %v37
  %v180 = vunpack.c.l.b16 %v38
  %v181 = vunpack.c.l.b16 %v39
  %v182 = vunpack.c.l.b16 %v40
  %v183 = vunpack.c.l.b16 %v41
  %v184 = vunpack.c.l.b16 %v42
  %v185 = vunpack.c.l.b16 %v43
  %v186 = vunpack.c.l.b16 %v44
  %v187 = vunpack.c.l.b16 %v45
  %v188 = vunpack.c.l.b16 %v46
  %v189 = vunpack.c.l.b16 %v47
  %v190 = vunpack.c.l.b16 %v48
  %v191 = vunpack.c.l.b16 %v49
  %v192 = vunpack.c.l.b16 %v50
  %v193 = vunpack.c.l.b16 %v51
  %v194 = vunpack.c.l.b16 %v52
  %v195 = vunpack.c.l.b16 %v53
  %v196 = vunpack.c.l.b16 %v54
  %v197 = vunpack.c.l.b16 %v55
  %v198 = vunpack.c.l.b16 %v56
  %v199 = vunpack.c.l.b16 %v57
  %v200 = vunpack.c.l.b16 %v58
  %v201 = vunpack.c.l.b16 %v59
  %v202 = vunpack.c.l.b16 %v60
  %v203 = vunpack.c.l.b16 %v61
  %v204 = vunpack.c.l.b16 %v62
  %v205 = vunpack.c.l.b16 %v63
  %v206 = vunpack.c.l.b16 %v64
  %v207 = vunpack.c.l.b16 %v65
  %v208 = vunpack.c.l.b16 %v66
  %v209 = vunpack.c.l.b16 %v67
  %v210 = vunpack.c.l.b16 %v68
  %v211 = vunpack.c.l.b16 %v69
  %v212 = vunpack.c.l.b16 %v70
  %v213 = vunpack.c.l.b16 %v71
  %v214 = vunpack.c.l.b16 %v72
  %v215 = vunpack.c.l.b16 %v73
  %v216 = vunpack.c.l.b16 %v74
  %v217 = vunpack.c.l.b16 %v75
  %v218 = vunpack.c.l.b16 %v76
  %v219 = vunpack.c.l.b16 %v77
  %v220 = vunpack.c.l.b16 %v78
  %v221 = vunpack.c.l.b16 %v79
  %v222 = vunpack.c.l.b16 %v80
  %v223 = vunpack.c.l.b16 %v81
  %v224 = vunpack.c.l.b16 %v82
  %v225 = vunpack.c.l.b16 %v83
  %v226 = vunpack.c.l.b16 %v84
  %v227 = vunpack.c.l.b16 %v85
  %v228 = vunpack.c.l.b16 %v86
  %v229 = vunpack.c.l.b16 %v87
  %v230 = vunpack.c.l.b16 %v88
  %v231 = vunpack.c.l.b16 %v89
  %v232 = vpack.c.b16 %v169, %v168
  %v233 = vpack.c.b16 %v171, %v170
  %v234 = vpack.c.b16 %v173, %v172
  %v235 = vpack.c.b16 %v175, %v174
  %v236 = vpack.c.b16 %v177, %v176
  %v237 = vpack.c.b16 %v179, %v178
  %v238 = vpack.c.b16 %v181, %v180
  %v239 = vpack.c.b16 %v183, %v182
  %v240 = vpack.c.b16 %v185, %v184
  %v241 = vpack.c.b16 %v187, %v186
  %v242 = vpack.c.b16 %v189, %v188
  %v243 = vpack.c.b16 %v191, %v190
  %v244 = vpack.c.b16 %v193, %v192
  %v245 = vpack.c.b16 %v195, %v194
  %v246 = vpack.c.b16 %v197, %v196
  %v247 = vpack.c.b16 %v199, %v198
  %v248 = vpack.c.b16 %v201, %v200
  %v249 = vpack.c.b16 %v203, %v202
  %v250 = vpack.c.b16 %v205, %v204
  %v251 = vpack.c.b16 %v207, %v206
  %v252 = vpack.c.b16 %v209, %v208
  %v253 = vpack.c.b16 %v211, %v210
  %v254 = vpack.c.b16 %v213, %v212
  %v255 = vpack.c.b16 %v215, %v214
  %v256 = vpack.c.b16 %v217, %v216
  %v257 = vpack.c.b16 %v219, %v218
  %v258 = vpack.c.b16 %v221, %v220
  %v259 = vpack.c.b16 %v223, %v222
  %v260 = vpack.c.b16 %v225, %v224
  %v261 = vpack.c.b16 %v227, %v226
  %v262 = vpack.c.b16 %v229, %v228
  %v263 = vpack.c.b16 %v231, %v230
  %296 = vmatprep.subr.bf16.mxu0 0
  %297 = vmatpush1.bf16.msra.mxu0 %v232
  %298 = vmatprep.subr.bf16.mxu0 0
  %299 = vmatpush1.bf16.msra.mxu0 %v233
  %300 = vmatprep.subr.bf16.mxu0 0
  %301 = vmatpush1.bf16.msra.mxu0 %v234
  %302 = vmatprep.subr.bf16.mxu0 0
  %303 = vmatpush1.bf16.msra.mxu0 %v235
  %304 = vmatprep.subr.bf16.mxu0 0
  %305 = vmatpush1.bf16.msra.mxu0 %v236
  %306 = vmatprep.subr.bf16.mxu0 0
  %307 = vmatpush1.bf16.msra.mxu0 %v237
  %308 = vmatprep.subr.bf16.mxu0 0
  %309 = vmatpush1.bf16.msra.mxu0 %v238
  %310 = vmatprep.subr.bf16.mxu0 0
  %311 = vmatpush1.bf16.msra.mxu0 %v239
  %312 = vmatprep.subr.bf16.mxu0 0
  %313 = vmatpush1.bf16.msra.mxu0 %v240
  %314 = vmatprep.subr.bf16.mxu0 0
  %315 = vmatpush1.bf16.msra.mxu0 %v241
  %316 = vmatprep.subr.bf16.mxu0 0
  %317 = vmatpush1.bf16.msra.mxu0 %v242
  %318 = vmatprep.subr.bf16.mxu0 0
  %319 = vmatpush1.bf16.msra.mxu0 %v243
  %320 = vmatprep.subr.bf16.mxu0 0
  %321 = vmatpush1.bf16.msra.mxu0 %v244
  %322 = vmatprep.subr.bf16.mxu0 0
  %323 = vmatpush1.bf16.msra.mxu0 %v245
  %324 = vmatprep.subr.bf16.mxu0 0
  %325 = vmatpush1.bf16.msra.mxu0 %v246
  %326 = vmatprep.subr.bf16.mxu0 0
  %327 = vmatpush1.bf16.msra.mxu0 %v247
  %328 = vmatprep.mubr.bf16.mxu0 %v97
  %329 = vmatmul.mubr.bf16.gmra.mrb[0].mxu0 %v96
  %v330 = vpop.f32.mrb[0].mxu0
  %v331 = vadd.f32 0.0, %v330
  %v332 = vpop.f32.mrb[0].mxu0
  %v333 = vpop.f32.mrb[0].mxu0
  %v334 = vpop.f32.mrb[0].mxu0
  %335 = vdwg.mxu0
  %336 = vmatprep.subr.bf16.mxu0 0
  %337 = vmatpush1.bf16.msra.mxu0 %v248
  %338 = vmatprep.subr.bf16.mxu0 0
  %339 = vmatpush1.bf16.msra.mxu0 %v249
  %340 = vmatprep.subr.bf16.mxu0 0
  %341 = vmatpush1.bf16.msra.mxu0 %v250
  %342 = vmatprep.subr.bf16.mxu0 0
  %343 = vmatpush1.bf16.msra.mxu0 %v251
  %344 = vmatprep.subr.bf16.mxu0 0
  %345 = vmatpush1.bf16.msra.mxu0 %v252
  %346 = vmatprep.subr.bf16.mxu0 0
  %347 = vmatpush1.bf16.msra.mxu0 %v253
  %348 = vmatprep.subr.bf16.mxu0 0
  %349 = vmatpush1.bf16.msra.mxu0 %v254
  %350 = vmatprep.subr.bf16.mxu0 0
  %351 = vmatpush1.bf16.msra.mxu0 %v255
  %352 = vmatprep.subr.bf16.mxu0 0
  %353 = vmatpush1.bf16.msra.mxu0 %v256
  %354 = vmatprep.subr.bf16.mxu0 0
  %355 = vmatpush1.bf16.msra.mxu0 %v257
  %356 = vmatprep.subr.bf16.mxu0 0
  %357 = vmatpush1.bf16.msra.mxu0 %v258
  %358 = vmatprep.subr.bf16.mxu0 0
  %359 = vmatpush1.bf16.msra.mxu0 %v259
  %360 = vmatprep.subr.bf16.mxu0 0
  %361 = vmatpush1.bf16.msra.mxu0 %v260
  %362 = vmatprep.subr.bf16.mxu0 0
  %363 = vmatpush1.bf16.msra.mxu0 %v261
  %364 = vmatprep.subr.bf16.mxu0 0
  %365 = vmatpush1.bf16.msra.mxu0 %v262
  %366 = vmatprep.subr.bf16.mxu0 0
  %367 = vmatpush1.bf16.msra.mxu0 %v263
  %368 = vmatprep.mubr.bf16.mxu0 %v99
  %369 = vmatmul.mubr.bf16.gmra.mrb[0].mxu0 %v98
  %v370 = vpop.f32.mrb[0].mxu0
  %v371 = vadd.f32 %v331, %v370
  %v372 = vpop.f32.mrb[0].mxu0
  %v373 = vpop.f32.mrb[0].mxu0
  %v374 = vpop.f32.mrb[0].mxu0
  %375 = vdwg.mxu0
  %v376 = vadd.f32 %v23, %v371
  %vm377 = vcmask 7168
  %378 = vst.msk [vmem:[#allocation2] sm:$0xff] %vm377, %v376
  // Predicated region
  $region18: #{discriminator_forward.11} parent=0 // pred_check
    %p379 = pneg %p17
  $region19: #{discriminator_forward.11} parent=0 // pred_check_branch
    %381 = sbr.rel (%p379) target = $region21
  $region20: #{discriminator_forward.11} parent=0 // pred_region
    %v382 = vld [vmem:[#allocation2] sm:$0xff]
    %v383 = vld [vmem:[#allocation3] sm:$0x1]
    %v385 = vlaneseq
    %v386 = vshrl.u32 %v385, 7
    %v387 = vsub.s32 0, %v386
    %v388 = vrot.slane %v383, %v387
    %v390 = vadd.f32 %v382, %v388
    %391 = vst.msk [vmem:[%s3] sm:$0xff] %vm377, %v390
  $region21: #{discriminator_forward.11} parent=0 // pred_fallthru
    _
  // Predicated region
  $region22: #{discriminator_forward.11} parent=0 // pred_check
    _
  $region23: #{discriminator_forward.11} parent=0 // pred_check_branch
    %393 = sbr.rel (0) target = $region25
  $region24: #{discriminator_forward.11} parent=0 // pred_region
    _
  $region25: #{discriminator_forward.11} parent=0 // pred_fallthru
    _
  // Predicated region
  $region26: #{discriminator_forward.11} parent=0 // pred_check
    _
  $region27: #{discriminator_forward.11} parent=0 // pred_check_branch
    %395 = sbr.rel (0) target = $region29
  $region28: #{discriminator_forward.11} parent=0 // pred_region
    _
  $region29: #{discriminator_forward.11} parent=0 // pred_fallthru
    _

</llo_original>
